<compile_context>
chip_gen: v7x
topology: tpu7x:2x2x1
jax: 0.10.0
libtpu: 0.0.40
codegen_flags: <defaults>
</compile_context>

<pallas_src>
import jax
import jax.numpy as jnp
from jax.experimental import pallas as pl
from jax.experimental.pallas import tpu as pltpu

_EPS = 1e-5  # nn.InstanceNorm2d default eps


def _round_up(n, m):
    return ((n + m - 1) // m) * m


def _make_fused_kernel(B, H, W, Cd, c_dim, repeat_num, cin0p):
    """Whole-forward fused kernel: stem + residual blocks + attention blend."""
    HW = H * W
    N = B * HW
    inv_hw = 1.0 / HW

    def inst_norm_affine(y, gamma, beta, relu):
        # y: (N, Cd) f32.  Per-(sample, channel) stats over spatial dims in a
        # single pass (sum / sum-of-squares), biased variance as in PyTorch IN.
        # gamma is folded into the rsqrt scale, beta into the shift, so the
        # per-element cost is a single FMA.
        yb = y.reshape(B, HW, Cd)
        s1 = jnp.sum(yb, axis=1, keepdims=True)
        s2 = jnp.sum(yb * yb, axis=1, keepdims=True)
        mean = s1 * inv_hw
        var = s2 * inv_hw - mean * mean
        scale = gamma[None, None, :] * jax.lax.rsqrt(var + _EPS)   # (B, 1, Cd)
        shift = beta[None, None, :] - mean * scale                 # (B, 1, Cd)
        out = yb * scale + shift
        if relu:
            out = jnp.maximum(out, 0.0)
        return out.reshape(N, Cd)

    def conv3x3(pad_ref, w_bf16, cin):
        # im2col: one (N, 9*cin) slab -> single bf16 MXU matmul, f32 accumulation.
        cols = []
        for kh in range(3):
            for kw in range(3):
                cols.append(pad_ref[:, kh:kh + H, kw:kw + W, :].reshape(N, cin))
        slab = jnp.concatenate(cols, axis=-1).astype(jnp.bfloat16)
        return jnp.dot(slab, w_bf16, preferred_element_type=jnp.float32)

    def kernel(x_ref, c_ref, w0_ref, wb_ref, g_ref, b_ref, wa_ref, out_ref,
               pad0, pad1, pad7):
        x = x_ref[...].astype(jnp.float32)                       # (B, H, W, Cd)

        # ---- stem input: concat(x, broadcast(c)); padded channels stay 0 ----
        cmap = jnp.broadcast_to(
            c_ref[...].astype(jnp.float32)[:, None, None, :], (B, H, W, c_dim))
        stem_in = jnp.concatenate([x, cmap], axis=-1)            # (B,H,W,Cd+c_dim)

        # ---- stem: conv3x3 (pad=1, no bias) + InstanceNorm(affine) + ReLU ----
        pad0[...] = jnp.zeros_like(pad0)
        pad0[:, 1:1 + H, 1:1 + W, :Cd + c_dim] = stem_in
        y = conv3x3(pad0, w0_ref[...], cin0p)
        f = inst_norm_affine(y, g_ref[0], b_ref[0], relu=True)   # (N, Cd)

        # ---- residual blocks: f = f + IN(conv(ReLU(IN(conv(f))))) ----
        pad1[...] = jnp.zeros_like(pad1)  # border stays zero; interior rewritten
        for r in range(repeat_num):
            pad1[:, 1:1 + H, 1:1 + W, :] = f.reshape(B, H, W, Cd)
            y = conv3x3(pad1, wb_ref[2 * r], Cd)
            h = inst_norm_affine(y, g_ref[1 + 2 * r], b_ref[1 + 2 * r], relu=True)

            pad1[:, 1:1 + H, 1:1 + W, :] = h.reshape(B, H, W, Cd)
            y = conv3x3(pad1, wb_ref[2 * r + 1], Cd)
            f = f + inst_norm_affine(y, g_ref[2 + 2 * r], b_ref[2 + 2 * r],
                                     relu=False)

        # ---- attention: 7x7 conv (Cout=1, pad=3) + tanh gate + blend ----
        pad7[...] = jnp.zeros_like(pad7)
        pad7[:, 3:3 + H, 3:3 + W, :] = f.reshape(B, H, W, Cd)
        acc = jnp.zeros((N, Cd), jnp.float32)
        for kh in range(7):
            for kw in range(7):
                win = pad7[:, kh:kh + H, kw:kw + W, :].reshape(N, Cd)
                acc = acc + win * wa_ref[kh * 7 + kw][None, :]   # pure VPU FMAs
        a = jnp.sum(acc, axis=-1, keepdims=True)                 # one XLU reduction
        gate = 0.5 * (1.0 + jnp.tanh(a))                         # (N, 1), EUP tanh
        xf = x.reshape(N, Cd)
        out = xf + gate * (f - xf)                               # = g*f + (1-g)*x
        out_ref[...] = out.reshape(B, H, W, Cd).astype(out_ref.dtype)

    return kernel


def transformer_forward(params, x, c):
    """x: (B, H, W, conv_dim) NHWC, c: (B, c_dim)."""
    B, H, W, Cd = x.shape
    if c.shape[0] != B:  # mirror the batch-mismatch adjustment in the reference
        c = c[:B]
    c_dim = c.shape[-1]
    cin0p = params["w0"].shape[0] // 9
    repeat_num = params["wb"].shape[0] // 2

    kernel = _make_fused_kernel(B, H, W, Cd, c_dim, repeat_num, cin0p)
    return pl.pallas_call(
        kernel,
        out_shape=jax.ShapeDtypeStruct((B, H, W, Cd), x.dtype),
        scratch_shapes=[
            pltpu.VMEM((B, H + 2, W + 2, cin0p), jnp.float32),  # stem padded input
            pltpu.VMEM((B, H + 2, W + 2, Cd), jnp.float32),     # block padded acts
            pltpu.VMEM((B, H + 6, W + 6, Cd), jnp.float32),     # attention padded f
        ],
    )(x, c, params["w0"], params["wb"], params["g"], params["b"], params["wa"])


def init_params(key, conv_dim=32, c_dim=5, repeat_num=2):
    """Deterministic synthetic parameters matching the PyTorch module's shapes,
    pre-transposed into im2col matrices (and bf16 for the MXU matmuls)."""
    Cd = conv_dim
    cin0 = conv_dim + c_dim
    cin0p = _round_up(cin0, 8)

    def conv_mat(k, cout, cin, ksz, cin_pad=None):
        w = jax.random.normal(k, (cout, cin, ksz, ksz), jnp.float32) * 0.05
        w = jnp.transpose(w, (2, 3, 1, 0))            # (kh, kw, cin, cout)
        if cin_pad is not None and cin_pad > cin:
            w = jnp.pad(w, ((0, 0), (0, 0), (0, cin_pad - cin), (0, 0)))
            cin = cin_pad
        return w.reshape(ksz * ksz * cin, cout)        # (ksz*ksz*cin, cout)

    keys = iter(jax.random.split(key, 4 + 6 * repeat_num))

    w0 = conv_mat(next(keys), Cd, cin0, 3, cin_pad=cin0p)
    g_list = [1.0 + 0.1 * jax.random.normal(next(keys), (Cd,), jnp.float32)]
    b_list = [0.1 * jax.random.normal(next(keys), (Cd,), jnp.float32)]
    wb_list = []
    for _ in range(repeat_num):
        wb_list.append(conv_mat(next(keys), Cd, Cd, 3))
        g_list.append(1.0 + 0.1 * jax.random.normal(next(keys), (Cd,), jnp.float32))
        b_list.append(0.1 * jax.random.normal(next(keys), (Cd,), jnp.float32))
        wb_list.append(conv_mat(next(keys), Cd, Cd, 3))
        g_list.append(1.0 + 0.1 * jax.random.normal(next(keys), (Cd,), jnp.float32))
        b_list.append(0.1 * jax.random.normal(next(keys), (Cd,), jnp.float32))

    # attention conv: PyTorch (1, conv_dim, 7, 7) -> (49, conv_dim) tap matrix
    wa = jax.random.normal(next(keys), (1, Cd, 7, 7), jnp.float32) * 0.05
    wa = jnp.transpose(wa, (2, 3, 1, 0)).reshape(49, Cd)

    return {
        "w0": w0.astype(jnp.bfloat16),                              # (9*cin0p, Cd)
        "wb": jnp.stack(wb_list, axis=0).astype(jnp.bfloat16),      # (2R, 9*Cd, Cd)
        "g": jnp.stack(g_list, axis=0),                             # (1+2R, Cd)
        "b": jnp.stack(b_list, axis=0),                             # (1+2R, Cd)
        "wa": wa,                                                   # (49, Cd)
    }


if __name__ == "__main__":
    conv_dim, c_dim, repeat_num = 32, 5, 2
    B, H, W = 2, 8, 8

    key = jax.random.PRNGKey(0)
    kp, kx, kc = jax.random.split(key, 3)
    params = init_params(kp, conv_dim=conv_dim, c_dim=c_dim, repeat_num=repeat_num)
    x = jax.random.normal(kx, (B, H, W, conv_dim), jnp.float32)
    c = jax.random.normal(kc, (B, c_dim), jnp.float32)

    out = jax.jit(transformer_forward)(params, x, c)
    out = jax.block_until_ready(out)
    assert out.shape == (B, H, W, conv_dim) and out.dtype == jnp.float32
    assert bool(jnp.all(jnp.isfinite(out)))
    print("KERNEL_OK")
</pallas_src>

<mosaic_0001>
module attributes {stable_mosaic.version = 11 : i64} {
  func.func @kernel(%arg0: memref<2x8x8x32xf32, #tpu.memory_space<vmem>>, %arg1: memref<2x5xf32, #tpu.memory_space<vmem>>, %arg2: memref<360x32xbf16, #tpu.memory_space<vmem>>, %arg3: memref<4x288x32xbf16, #tpu.memory_space<vmem>>, %arg4: memref<5x32xf32, #tpu.memory_space<vmem>>, %arg5: memref<5x32xf32, #tpu.memory_space<vmem>>, %arg6: memref<49x32xf32, #tpu.memory_space<vmem>>, %arg7: memref<2x8x8x32xf32, #tpu.memory_space<vmem>>, %arg8: memref<2x10x10x40xf32, #tpu.memory_space<vmem>>, %arg9: memref<2x10x10x32xf32, #tpu.memory_space<vmem>>, %arg10: memref<2x14x14x32xf32, #tpu.memory_space<vmem>>) attributes {dimension_semantics = [], scalar_prefetch = 0 : i64, scratch_operands = 3 : i64, tpu.core_type = #tpu.core_type<tc>} {
    %c0 = arith.constant 0 : index
    %c0_0 = arith.constant 0 : index
    %c0_1 = arith.constant 0 : index
    %c0_2 = arith.constant 0 : index
    %0 = vector.load %arg0[%c0, %c0_0, %c0_1, %c0_2] : memref<2x8x8x32xf32, #tpu.memory_space<vmem>>, vector<2x8x8x32xf32>
    %c0_3 = arith.constant 0 : index
    %c0_4 = arith.constant 0 : index
    %1 = vector.load %arg1[%c0_3, %c0_4] : memref<2x5xf32, #tpu.memory_space<vmem>>, vector<2x5xf32>
    %2 = vector.shape_cast %1 : vector<2x5xf32> to vector<2x1x1x5xf32>
    %3 = vector.shape_cast %2 : vector<2x1x1x5xf32> to vector<2x1x1x5xf32>
    %4 = vector.broadcast %3 : vector<2x1x1x5xf32> to vector<2x8x8x5xf32>
    %5 = tpu.concatenate %0, %4 in 3 : vector<2x8x8x32xf32>, vector<2x8x8x5xf32> -> vector<2x8x8x37xf32>
    %cst = arith.constant 0.000000e+00 : f32
    %6 = vector.broadcast %cst : f32 to vector<2x10x10x40xf32>
    %c0_5 = arith.constant 0 : index
    %c0_6 = arith.constant 0 : index
    %c0_7 = arith.constant 0 : index
    %c0_8 = arith.constant 0 : index
    %7 = vector.load %arg8[%c0_5, %c0_6, %c0_7, %c0_8] : memref<2x10x10x40xf32, #tpu.memory_space<vmem>>, vector<2x10x10x40xf32>
    tpu.vector_store %arg8[%c0_5, %c0_6, %c0_7, %c0_8], %6 {strides = array<i32>} : memref<2x10x10x40xf32, #tpu.memory_space<vmem>>, vector<2x10x10x40xf32>,
    %c0_9 = arith.constant 0 : index
    %c1 = arith.constant 1 : index
    %c1_10 = arith.constant 1 : index
    %c0_11 = arith.constant 0 : index
    %8 = vector.load %arg8[%c0_9, %c1, %c1_10, %c0_11] : memref<2x10x10x40xf32, #tpu.memory_space<vmem>>, vector<2x8x8x37xf32>
    tpu.vector_store %arg8[%c0_9, %c1, %c1_10, %c0_11], %5 {strides = array<i32>} : memref<2x10x10x40xf32, #tpu.memory_space<vmem>>, vector<2x8x8x37xf32>,
    %c0_12 = arith.constant 0 : index
    %c0_13 = arith.constant 0 : index
    %9 = vector.load %arg2[%c0_12, %c0_13] : memref<360x32xbf16, #tpu.memory_space<vmem>>, vector<360x32xbf16>
    %c0_14 = arith.constant 0 : index
    %c0_15 = arith.constant 0 : index
    %c0_16 = arith.constant 0 : index
    %c0_17 = arith.constant 0 : index
    %10 = vector.load %arg8[%c0_14, %c0_15, %c0_16, %c0_17] : memref<2x10x10x40xf32, #tpu.memory_space<vmem>>, vector<2x8x8x40xf32>
    %11 = vector.shape_cast %10 : vector<2x8x8x40xf32> to vector<128x40xf32>
    %c0_18 = arith.constant 0 : index
    %c0_19 = arith.constant 0 : index
    %c1_20 = arith.constant 1 : index
    %c0_21 = arith.constant 0 : index
    %12 = vector.load %arg8[%c0_18, %c0_19, %c1_20, %c0_21] : memref<2x10x10x40xf32, #tpu.memory_space<vmem>>, vector<2x8x8x40xf32>
    %13 = vector.shape_cast %12 : vector<2x8x8x40xf32> to vector<128x40xf32>
    %c0_22 = arith.constant 0 : index
    %c0_23 = arith.constant 0 : index
    %c2 = arith.constant 2 : index
    %c0_24 = arith.constant 0 : index
    %14 = vector.load %arg8[%c0_22, %c0_23, %c2, %c0_24] : memref<2x10x10x40xf32, #tpu.memory_space<vmem>>, vector<2x8x8x40xf32>
    %15 = vector.shape_cast %14 : vector<2x8x8x40xf32> to vector<128x40xf32>
    %c0_25 = arith.constant 0 : index
    %c1_26 = arith.constant 1 : index
    %c0_27 = arith.constant 0 : index
    %c0_28 = arith.constant 0 : index
    %16 = vector.load %arg8[%c0_25, %c1_26, %c0_27, %c0_28] : memref<2x10x10x40xf32, #tpu.memory_space<vmem>>, vector<2x8x8x40xf32>
    %17 = vector.shape_cast %16 : vector<2x8x8x40xf32> to vector<128x40xf32>
    %c0_29 = arith.constant 0 : index
    %c1_30 = arith.constant 1 : index
    %c1_31 = arith.constant 1 : index
    %c0_32 = arith.constant 0 : index
    %18 = vector.load %arg8[%c0_29, %c1_30, %c1_31, %c0_32] : memref<2x10x10x40xf32, #tpu.memory_space<vmem>>, vector<2x8x8x40xf32>
    %19 = vector.shape_cast %18 : vector<2x8x8x40xf32> to vector<128x40xf32>
    %c0_33 = arith.constant 0 : index
    %c1_34 = arith.constant 1 : index
    %c2_35 = arith.constant 2 : index
    %c0_36 = arith.constant 0 : index
    %20 = vector.load %arg8[%c0_33, %c1_34, %c2_35, %c0_36] : memref<2x10x10x40xf32, #tpu.memory_space<vmem>>, vector<2x8x8x40xf32>
    %21 = vector.shape_cast %20 : vector<2x8x8x40xf32> to vector<128x40xf32>
    %c0_37 = arith.constant 0 : index
    %c2_38 = arith.constant 2 : index
    %c0_39 = arith.constant 0 : index
    %c0_40 = arith.constant 0 : index
    %22 = vector.load %arg8[%c0_37, %c2_38, %c0_39, %c0_40] : memref<2x10x10x40xf32, #tpu.memory_space<vmem>>, vector<2x8x8x40xf32>
    %23 = vector.shape_cast %22 : vector<2x8x8x40xf32> to vector<128x40xf32>
    %c0_41 = arith.constant 0 : index
    %c2_42 = arith.constant 2 : index
    %c1_43 = arith.constant 1 : index
    %c0_44 = arith.constant 0 : index
    %24 = vector.load %arg8[%c0_41, %c2_42, %c1_43, %c0_44] : memref<2x10x10x40xf32, #tpu.memory_space<vmem>>, vector<2x8x8x40xf32>
    %25 = vector.shape_cast %24 : vector<2x8x8x40xf32> to vector<128x40xf32>
    %c0_45 = arith.constant 0 : index
    %c2_46 = arith.constant 2 : index
    %c2_47 = arith.constant 2 : index
    %c0_48 = arith.constant 0 : index
    %26 = vector.load %arg8[%c0_45, %c2_46, %c2_47, %c0_48] : memref<2x10x10x40xf32, #tpu.memory_space<vmem>>, vector<2x8x8x40xf32>
    %27 = vector.shape_cast %26 : vector<2x8x8x40xf32> to vector<128x40xf32>
    %28 = tpu.concatenate %11, %13, %15, %17, %19, %21, %23, %25, %27 in 1 : vector<128x40xf32>, vector<128x40xf32>, vector<128x40xf32>, vector<128x40xf32>, vector<128x40xf32>, vector<128x40xf32>, vector<128x40xf32>, vector<128x40xf32>, vector<128x40xf32> -> vector<128x360xf32>
    %29 = arith.truncf %28 : vector<128x360xf32> to vector<128x360xbf16>
    %cst_49 = arith.constant dense<0.000000e+00> : vector<128x32xf32>
    %30 = tpu.matmul %29, %9, %cst_49 {dimension_numbers = #tpu.dot_dimension_numbers<[1], [0], [0], [1], [0, 0, 1, 1], [], []>} : vector<128x360xbf16>, vector<360x32xbf16>, vector<128x32xf32> -> vector<128x32xf32>
    %c0_50 = arith.constant 0 : index
    %c0_51 = arith.constant 0 : index
    %31 = vector.load %arg4[%c0_50, %c0_51] : memref<5x32xf32, #tpu.memory_space<vmem>>, vector<1x32xf32>
    %32 = vector.shape_cast %31 : vector<1x32xf32> to vector<32xf32>
    %c0_52 = arith.constant 0 : index
    %c0_53 = arith.constant 0 : index
    %33 = vector.load %arg5[%c0_52, %c0_53] : memref<5x32xf32, #tpu.memory_space<vmem>>, vector<1x32xf32>
    %34 = vector.shape_cast %33 : vector<1x32xf32> to vector<32xf32>
    %35 = vector.shape_cast %30 : vector<128x32xf32> to vector<2x64x32xf32>
    %cst_54 = arith.constant dense<0.000000e+00> : vector<2x32xf32>
    %36 = vector.multi_reduction <add>, %35, %cst_54 [1] : vector<2x64x32xf32> to vector<2x32xf32>
    %37 = vector.shape_cast %36 : vector<2x32xf32> to vector<2x1x32xf32>
    %38 = arith.mulf %35, %35 : vector<2x64x32xf32>
    %cst_55 = arith.constant dense<0.000000e+00> : vector<2x32xf32>
    %39 = vector.multi_reduction <add>, %38, %cst_55 [1] : vector<2x64x32xf32> to vector<2x32xf32>
    %40 = vector.shape_cast %39 : vector<2x32xf32> to vector<2x1x32xf32>
    %cst_56 = arith.constant 1.562500e-02 : f32
    %41 = vector.broadcast %cst_56 : f32 to vector<2x1x32xf32>
    %42 = arith.mulf %37, %41 : vector<2x1x32xf32>
    %cst_57 = arith.constant 1.562500e-02 : f32
    %43 = vector.broadcast %cst_57 : f32 to vector<2x1x32xf32>
    %44 = arith.mulf %40, %43 : vector<2x1x32xf32>
    %45 = arith.mulf %42, %42 : vector<2x1x32xf32>
    %46 = arith.subf %44, %45 : vector<2x1x32xf32>
    %47 = vector.shape_cast %32 : vector<32xf32> to vector<1x1x32xf32>
    %cst_58 = arith.constant 9.99999974E-6 : f32
    %48 = vector.broadcast %cst_58 : f32 to vector<2x1x32xf32>
    %49 = arith.addf %46, %48 : vector<2x1x32xf32>
    %50 = math.rsqrt %49 : vector<2x1x32xf32>
    %51 = vector.broadcast %47 : vector<1x1x32xf32> to vector<2x1x32xf32>
    %52 = arith.mulf %51, %50 : vector<2x1x32xf32>
    %53 = vector.shape_cast %34 : vector<32xf32> to vector<1x1x32xf32>
    %54 = arith.mulf %42, %52 : vector<2x1x32xf32>
    %55 = vector.broadcast %53 : vector<1x1x32xf32> to vector<2x1x32xf32>
    %56 = arith.subf %55, %54 : vector<2x1x32xf32>
    %57 = vector.broadcast %52 : vector<2x1x32xf32> to vector<2x64x32xf32>
    %58 = arith.mulf %35, %57 : vector<2x64x32xf32>
    %59 = vector.broadcast %56 : vector<2x1x32xf32> to vector<2x64x32xf32>
    %60 = arith.addf %58, %59 : vector<2x64x32xf32>
    %cst_59 = arith.constant 0.000000e+00 : f32
    %61 = vector.broadcast %cst_59 : f32 to vector<2x64x32xf32>
    %62 = arith.maximumf %60, %61 : vector<2x64x32xf32>
    %63 = vector.shape_cast %62 : vector<2x64x32xf32> to vector<128x32xf32>
    %cst_60 = arith.constant 0.000000e+00 : f32
    %64 = vector.broadcast %cst_60 : f32 to vector<2x10x10x32xf32>
    %c0_61 = arith.constant 0 : index
    %c0_62 = arith.constant 0 : index
    %c0_63 = arith.constant 0 : index
    %c0_64 = arith.constant 0 : index
    %65 = vector.load %arg9[%c0_61, %c0_62, %c0_63, %c0_64] : memref<2x10x10x32xf32, #tpu.memory_space<vmem>>, vector<2x10x10x32xf32>
    tpu.vector_store %arg9[%c0_61, %c0_62, %c0_63, %c0_64], %64 {strides = array<i32>} : memref<2x10x10x32xf32, #tpu.memory_space<vmem>>, vector<2x10x10x32xf32>,
    %66 = vector.shape_cast %63 : vector<128x32xf32> to vector<2x8x8x32xf32>
    %c0_65 = arith.constant 0 : index
    %c1_66 = arith.constant 1 : index
    %c1_67 = arith.constant 1 : index
    %c0_68 = arith.constant 0 : index
    %67 = vector.load %arg9[%c0_65, %c1_66, %c1_67, %c0_68] : memref<2x10x10x32xf32, #tpu.memory_space<vmem>>, vector<2x8x8x32xf32>
    tpu.vector_store %arg9[%c0_65, %c1_66, %c1_67, %c0_68], %66 {strides = array<i32>} : memref<2x10x10x32xf32, #tpu.memory_space<vmem>>, vector<2x8x8x32xf32>,
    %c0_69 = arith.constant 0 : index
    %c0_70 = arith.constant 0 : index
    %c0_71 = arith.constant 0 : index
    %68 = vector.load %arg3[%c0_69, %c0_70, %c0_71] : memref<4x288x32xbf16, #tpu.memory_space<vmem>>, vector<1x288x32xbf16>
    %69 = vector.shape_cast %68 : vector<1x288x32xbf16> to vector<288x32xbf16>
    %c0_72 = arith.constant 0 : index
    %c0_73 = arith.constant 0 : index
    %c0_74 = arith.constant 0 : index
    %c0_75 = arith.constant 0 : index
    %70 = vector.load %arg9[%c0_72, %c0_73, %c0_74, %c0_75] : memref<2x10x10x32xf32, #tpu.memory_space<vmem>>, vector<2x8x8x32xf32>
    %71 = vector.shape_cast %70 : vector<2x8x8x32xf32> to vector<128x32xf32>
    %c0_76 = arith.constant 0 : index
    %c0_77 = arith.constant 0 : index
    %c1_78 = arith.constant 1 : index
    %c0_79 = arith.constant 0 : index
    %72 = vector.load %arg9[%c0_76, %c0_77, %c1_78, %c0_79] : memref<2x10x10x32xf32, #tpu.memory_space<vmem>>, vector<2x8x8x32xf32>
    %73 = vector.shape_cast %72 : vector<2x8x8x32xf32> to vector<128x32xf32>
    %c0_80 = arith.constant 0 : index
    %c0_81 = arith.constant 0 : index
    %c2_82 = arith.constant 2 : index
    %c0_83 = arith.constant 0 : index
    %74 = vector.load %arg9[%c0_80, %c0_81, %c2_82, %c0_83] : memref<2x10x10x32xf32, #tpu.memory_space<vmem>>, vector<2x8x8x32xf32>
    %75 = vector.shape_cast %74 : vector<2x8x8x32xf32> to vector<128x32xf32>
    %c0_84 = arith.constant 0 : index
    %c1_85 = arith.constant 1 : index
    %c0_86 = arith.constant 0 : index
    %c0_87 = arith.constant 0 : index
    %76 = vector.load %arg9[%c0_84, %c1_85, %c0_86, %c0_87] : memref<2x10x10x32xf32, #tpu.memory_space<vmem>>, vector<2x8x8x32xf32>
    %77 = vector.shape_cast %76 : vector<2x8x8x32xf32> to vector<128x32xf32>
    %c0_88 = arith.constant 0 : index
    %c1_89 = arith.constant 1 : index
    %c1_90 = arith.constant 1 : index
    %c0_91 = arith.constant 0 : index
    %78 = vector.load %arg9[%c0_88, %c1_89, %c1_90, %c0_91] : memref<2x10x10x32xf32, #tpu.memory_space<vmem>>, vector<2x8x8x32xf32>
    %79 = vector.shape_cast %78 : vector<2x8x8x32xf32> to vector<128x32xf32>
    %c0_92 = arith.constant 0 : index
    %c1_93 = arith.constant 1 : index
    %c2_94 = arith.constant 2 : index
    %c0_95 = arith.constant 0 : index
    %80 = vector.load %arg9[%c0_92, %c1_93, %c2_94, %c0_95] : memref<2x10x10x32xf32, #tpu.memory_space<vmem>>, vector<2x8x8x32xf32>
    %81 = vector.shape_cast %80 : vector<2x8x8x32xf32> to vector<128x32xf32>
    %c0_96 = arith.constant 0 : index
    %c2_97 = arith.constant 2 : index
    %c0_98 = arith.constant 0 : index
    %c0_99 = arith.constant 0 : index
    %82 = vector.load %arg9[%c0_96, %c2_97, %c0_98, %c0_99] : memref<2x10x10x32xf32, #tpu.memory_space<vmem>>, vector<2x8x8x32xf32>
    %83 = vector.shape_cast %82 : vector<2x8x8x32xf32> to vector<128x32xf32>
    %c0_100 = arith.constant 0 : index
    %c2_101 = arith.constant 2 : index
    %c1_102 = arith.constant 1 : index
    %c0_103 = arith.constant 0 : index
    %84 = vector.load %arg9[%c0_100, %c2_101, %c1_102, %c0_103] : memref<2x10x10x32xf32, #tpu.memory_space<vmem>>, vector<2x8x8x32xf32>
    %85 = vector.shape_cast %84 : vector<2x8x8x32xf32> to vector<128x32xf32>
    %c0_104 = arith.constant 0 : index
    %c2_105 = arith.constant 2 : index
    %c2_106 = arith.constant 2 : index
    %c0_107 = arith.constant 0 : index
    %86 = vector.load %arg9[%c0_104, %c2_105, %c2_106, %c0_107] : memref<2x10x10x32xf32, #tpu.memory_space<vmem>>, vector<2x8x8x32xf32>
    %87 = vector.shape_cast %86 : vector<2x8x8x32xf32> to vector<128x32xf32>
    %88 = tpu.concatenate %71, %73, %75, %77, %79, %81, %83, %85, %87 in 1 : vector<128x32xf32>, vector<128x32xf32>, vector<128x32xf32>, vector<128x32xf32>, vector<128x32xf32>, vector<128x32xf32>, vector<128x32xf32>, vector<128x32xf32>, vector<128x32xf32> -> vector<128x288xf32>
    %89 = arith.truncf %88 : vector<128x288xf32> to vector<128x288xbf16>
    %cst_108 = arith.constant dense<0.000000e+00> : vector<128x32xf32>
    %90 = tpu.matmul %89, %69, %cst_108 {dimension_numbers = #tpu.dot_dimension_numbers<[1], [0], [0], [1], [0, 0, 1, 1], [], []>} : vector<128x288xbf16>, vector<288x32xbf16>, vector<128x32xf32> -> vector<128x32xf32>
    %c1_109 = arith.constant 1 : index
    %c0_110 = arith.constant 0 : index
    %91 = vector.load %arg4[%c1_109, %c0_110] : memref<5x32xf32, #tpu.memory_space<vmem>>, vector<1x32xf32>
    %92 = vector.shape_cast %91 : vector<1x32xf32> to vector<32xf32>
    %c1_111 = arith.constant 1 : index
    %c0_112 = arith.constant 0 : index
    %93 = vector.load %arg5[%c1_111, %c0_112] : memref<5x32xf32, #tpu.memory_space<vmem>>, vector<1x32xf32>
    %94 = vector.shape_cast %93 : vector<1x32xf32> to vector<32xf32>
    %95 = vector.shape_cast %90 : vector<128x32xf32> to vector<2x64x32xf32>
    %cst_113 = arith.constant dense<0.000000e+00> : vector<2x32xf32>
    %96 = vector.multi_reduction <add>, %95, %cst_113 [1] : vector<2x64x32xf32> to vector<2x32xf32>
    %97 = vector.shape_cast %96 : vector<2x32xf32> to vector<2x1x32xf32>
    %98 = arith.mulf %95, %95 : vector<2x64x32xf32>
    %cst_114 = arith.constant dense<0.000000e+00> : vector<2x32xf32>
    %99 = vector.multi_reduction <add>, %98, %cst_114 [1] : vector<2x64x32xf32> to vector<2x32xf32>
    %100 = vector.shape_cast %99 : vector<2x32xf32> to vector<2x1x32xf32>
    %cst_115 = arith.constant 1.562500e-02 : f32
    %101 = vector.broadcast %cst_115 : f32 to vector<2x1x32xf32>
    %102 = arith.mulf %97, %101 : vector<2x1x32xf32>
    %cst_116 = arith.constant 1.562500e-02 : f32
    %103 = vector.broadcast %cst_116 : f32 to vector<2x1x32xf32>
    %104 = arith.mulf %100, %103 : vector<2x1x32xf32>
    %105 = arith.mulf %102, %102 : vector<2x1x32xf32>
    %106 = arith.subf %104, %105 : vector<2x1x32xf32>
    %107 = vector.shape_cast %92 : vector<32xf32> to vector<1x1x32xf32>
    %cst_117 = arith.constant 9.99999974E-6 : f32
    %108 = vector.broadcast %cst_117 : f32 to vector<2x1x32xf32>
    %109 = arith.addf %106, %108 : vector<2x1x32xf32>
    %110 = math.rsqrt %109 : vector<2x1x32xf32>
    %111 = vector.broadcast %107 : vector<1x1x32xf32> to vector<2x1x32xf32>
    %112 = arith.mulf %111, %110 : vector<2x1x32xf32>
    %113 = vector.shape_cast %94 : vector<32xf32> to vector<1x1x32xf32>
    %114 = arith.mulf %102, %112 : vector<2x1x32xf32>
    %115 = vector.broadcast %113 : vector<1x1x32xf32> to vector<2x1x32xf32>
    %116 = arith.subf %115, %114 : vector<2x1x32xf32>
    %117 = vector.broadcast %112 : vector<2x1x32xf32> to vector<2x64x32xf32>
    %118 = arith.mulf %95, %117 : vector<2x64x32xf32>
    %119 = vector.broadcast %116 : vector<2x1x32xf32> to vector<2x64x32xf32>
    %120 = arith.addf %118, %119 : vector<2x64x32xf32>
    %cst_118 = arith.constant 0.000000e+00 : f32
    %121 = vector.broadcast %cst_118 : f32 to vector<2x64x32xf32>
    %122 = arith.maximumf %120, %121 : vector<2x64x32xf32>
    %123 = vector.shape_cast %122 : vector<2x64x32xf32> to vector<128x32xf32>
    %124 = vector.shape_cast %123 : vector<128x32xf32> to vector<2x8x8x32xf32>
    %c0_119 = arith.constant 0 : index
    %c1_120 = arith.constant 1 : index
    %c1_121 = arith.constant 1 : index
    %c0_122 = arith.constant 0 : index
    %125 = vector.load %arg9[%c0_119, %c1_120, %c1_121, %c0_122] : memref<2x10x10x32xf32, #tpu.memory_space<vmem>>, vector<2x8x8x32xf32>
    tpu.vector_store %arg9[%c0_119, %c1_120, %c1_121, %c0_122], %124 {strides = array<i32>} : memref<2x10x10x32xf32, #tpu.memory_space<vmem>>, vector<2x8x8x32xf32>,
    %c1_123 = arith.constant 1 : index
    %c0_124 = arith.constant 0 : index
    %c0_125 = arith.constant 0 : index
    %126 = vector.load %arg3[%c1_123, %c0_124, %c0_125] : memref<4x288x32xbf16, #tpu.memory_space<vmem>>, vector<1x288x32xbf16>
    %127 = vector.shape_cast %126 : vector<1x288x32xbf16> to vector<288x32xbf16>
    %c0_126 = arith.constant 0 : index
    %c0_127 = arith.constant 0 : index
    %c0_128 = arith.constant 0 : index
    %c0_129 = arith.constant 0 : index
    %128 = vector.load %arg9[%c0_126, %c0_127, %c0_128, %c0_129] : memref<2x10x10x32xf32, #tpu.memory_space<vmem>>, vector<2x8x8x32xf32>
    %129 = vector.shape_cast %128 : vector<2x8x8x32xf32> to vector<128x32xf32>
    %c0_130 = arith.constant 0 : index
    %c0_131 = arith.constant 0 : index
    %c1_132 = arith.constant 1 : index
    %c0_133 = arith.constant 0 : index
    %130 = vector.load %arg9[%c0_130, %c0_131, %c1_132, %c0_133] : memref<2x10x10x32xf32, #tpu.memory_space<vmem>>, vector<2x8x8x32xf32>
    %131 = vector.shape_cast %130 : vector<2x8x8x32xf32> to vector<128x32xf32>
    %c0_134 = arith.constant 0 : index
    %c0_135 = arith.constant 0 : index
    %c2_136 = arith.constant 2 : index
    %c0_137 = arith.constant 0 : index
    %132 = vector.load %arg9[%c0_134, %c0_135, %c2_136, %c0_137] : memref<2x10x10x32xf32, #tpu.memory_space<vmem>>, vector<2x8x8x32xf32>
    %133 = vector.shape_cast %132 : vector<2x8x8x32xf32> to vector<128x32xf32>
    %c0_138 = arith.constant 0 : index
    %c1_139 = arith.constant 1 : index
    %c0_140 = arith.constant 0 : index
    %c0_141 = arith.constant 0 : index
    %134 = vector.load %arg9[%c0_138, %c1_139, %c0_140, %c0_141] : memref<2x10x10x32xf32, #tpu.memory_space<vmem>>, vector<2x8x8x32xf32>
    %135 = vector.shape_cast %134 : vector<2x8x8x32xf32> to vector<128x32xf32>
    %c0_142 = arith.constant 0 : index
    %c1_143 = arith.constant 1 : index
    %c1_144 = arith.constant 1 : index
    %c0_145 = arith.constant 0 : index
    %136 = vector.load %arg9[%c0_142, %c1_143, %c1_144, %c0_145] : memref<2x10x10x32xf32, #tpu.memory_space<vmem>>, vector<2x8x8x32xf32>
    %137 = vector.shape_cast %136 : vector<2x8x8x32xf32> to vector<128x32xf32>
    %c0_146 = arith.constant 0 : index
    %c1_147 = arith.constant 1 : index
    %c2_148 = arith.constant 2 : index
    %c0_149 = arith.constant 0 : index
    %138 = vector.load %arg9[%c0_146, %c1_147, %c2_148, %c0_149] : memref<2x10x10x32xf32, #tpu.memory_space<vmem>>, vector<2x8x8x32xf32>
    %139 = vector.shape_cast %138 : vector<2x8x8x32xf32> to vector<128x32xf32>
    %c0_150 = arith.constant 0 : index
    %c2_151 = arith.constant 2 : index
    %c0_152 = arith.constant 0 : index
    %c0_153 = arith.constant 0 : index
    %140 = vector.load %arg9[%c0_150, %c2_151, %c0_152, %c0_153] : memref<2x10x10x32xf32, #tpu.memory_space<vmem>>, vector<2x8x8x32xf32>
    %141 = vector.shape_cast %140 : vector<2x8x8x32xf32> to vector<128x32xf32>
    %c0_154 = arith.constant 0 : index
    %c2_155 = arith.constant 2 : index
    %c1_156 = arith.constant 1 : index
    %c0_157 = arith.constant 0 : index
    %142 = vector.load %arg9[%c0_154, %c2_155, %c1_156, %c0_157] : memref<2x10x10x32xf32, #tpu.memory_space<vmem>>, vector<2x8x8x32xf32>
    %143 = vector.shape_cast %142 : vector<2x8x8x32xf32> to vector<128x32xf32>
    %c0_158 = arith.constant 0 : index
    %c2_159 = arith.constant 2 : index
    %c2_160 = arith.constant 2 : index
    %c0_161 = arith.constant 0 : index
    %144 = vector.load %arg9[%c0_158, %c2_159, %c2_160, %c0_161] : memref<2x10x10x32xf32, #tpu.memory_space<vmem>>, vector<2x8x8x32xf32>
    %145 = vector.shape_cast %144 : vector<2x8x8x32xf32> to vector<128x32xf32>
    %146 = tpu.concatenate %129, %131, %133, %135, %137, %139, %141, %143, %145 in 1 : vector<128x32xf32>, vector<128x32xf32>, vector<128x32xf32>, vector<128x32xf32>, vector<128x32xf32>, vector<128x32xf32>, vector<128x32xf32>, vector<128x32xf32>, vector<128x32xf32> -> vector<128x288xf32>
    %147 = arith.truncf %146 : vector<128x288xf32> to vector<128x288xbf16>
    %cst_162 = arith.constant dense<0.000000e+00> : vector<128x32xf32>
    %148 = tpu.matmul %147, %127, %cst_162 {dimension_numbers = #tpu.dot_dimension_numbers<[1], [0], [0], [1], [0, 0, 1, 1], [], []>} : vector<128x288xbf16>, vector<288x32xbf16>, vector<128x32xf32> -> vector<128x32xf32>
    %c2_163 = arith.constant 2 : index
    %c0_164 = arith.constant 0 : index
    %149 = vector.load %arg4[%c2_163, %c0_164] : memref<5x32xf32, #tpu.memory_space<vmem>>, vector<1x32xf32>
    %150 = vector.shape_cast %149 : vector<1x32xf32> to vector<32xf32>
    %c2_165 = arith.constant 2 : index
    %c0_166 = arith.constant 0 : index
    %151 = vector.load %arg5[%c2_165, %c0_166] : memref<5x32xf32, #tpu.memory_space<vmem>>, vector<1x32xf32>
    %152 = vector.shape_cast %151 : vector<1x32xf32> to vector<32xf32>
    %153 = vector.shape_cast %148 : vector<128x32xf32> to vector<2x64x32xf32>
    %cst_167 = arith.constant dense<0.000000e+00> : vector<2x32xf32>
    %154 = vector.multi_reduction <add>, %153, %cst_167 [1] : vector<2x64x32xf32> to vector<2x32xf32>
    %155 = vector.shape_cast %154 : vector<2x32xf32> to vector<2x1x32xf32>
    %156 = arith.mulf %153, %153 : vector<2x64x32xf32>
    %cst_168 = arith.constant dense<0.000000e+00> : vector<2x32xf32>
    %157 = vector.multi_reduction <add>, %156, %cst_168 [1] : vector<2x64x32xf32> to vector<2x32xf32>
    %158 = vector.shape_cast %157 : vector<2x32xf32> to vector<2x1x32xf32>
    %cst_169 = arith.constant 1.562500e-02 : f32
    %159 = vector.broadcast %cst_169 : f32 to vector<2x1x32xf32>
    %160 = arith.mulf %155, %159 : vector<2x1x32xf32>
    %cst_170 = arith.constant 1.562500e-02 : f32
    %161 = vector.broadcast %cst_170 : f32 to vector<2x1x32xf32>
    %162 = arith.mulf %158, %161 : vector<2x1x32xf32>
    %163 = arith.mulf %160, %160 : vector<2x1x32xf32>
    %164 = arith.subf %162, %163 : vector<2x1x32xf32>
    %165 = vector.shape_cast %150 : vector<32xf32> to vector<1x1x32xf32>
    %cst_171 = arith.constant 9.99999974E-6 : f32
    %166 = vector.broadcast %cst_171 : f32 to vector<2x1x32xf32>
    %167 = arith.addf %164, %166 : vector<2x1x32xf32>
    %168 = math.rsqrt %167 : vector<2x1x32xf32>
    %169 = vector.broadcast %165 : vector<1x1x32xf32> to vector<2x1x32xf32>
    %170 = arith.mulf %169, %168 : vector<2x1x32xf32>
    %171 = vector.shape_cast %152 : vector<32xf32> to vector<1x1x32xf32>
    %172 = arith.mulf %160, %170 : vector<2x1x32xf32>
    %173 = vector.broadcast %171 : vector<1x1x32xf32> to vector<2x1x32xf32>
    %174 = arith.subf %173, %172 : vector<2x1x32xf32>
    %175 = vector.broadcast %170 : vector<2x1x32xf32> to vector<2x64x32xf32>
    %176 = arith.mulf %153, %175 : vector<2x64x32xf32>
    %177 = vector.broadcast %174 : vector<2x1x32xf32> to vector<2x64x32xf32>
    %178 = arith.addf %176, %177 : vector<2x64x32xf32>
    %179 = vector.shape_cast %178 : vector<2x64x32xf32> to vector<128x32xf32>
    %180 = arith.addf %63, %179 : vector<128x32xf32>
    %181 = vector.shape_cast %180 : vector<128x32xf32> to vector<2x8x8x32xf32>
    %c0_172 = arith.constant 0 : index
    %c1_173 = arith.constant 1 : index
    %c1_174 = arith.constant 1 : index
    %c0_175 = arith.constant 0 : index
    %182 = vector.load %arg9[%c0_172, %c1_173, %c1_174, %c0_175] : memref<2x10x10x32xf32, #tpu.memory_space<vmem>>, vector<2x8x8x32xf32>
    tpu.vector_store %arg9[%c0_172, %c1_173, %c1_174, %c0_175], %181 {strides = array<i32>} : memref<2x10x10x32xf32, #tpu.memory_space<vmem>>, vector<2x8x8x32xf32>,
    %c2_176 = arith.constant 2 : index
    %c0_177 = arith.constant 0 : index
    %c0_178 = arith.constant 0 : index
    %183 = vector.load %arg3[%c2_176, %c0_177, %c0_178] : memref<4x288x32xbf16, #tpu.memory_space<vmem>>, vector<1x288x32xbf16>
    %184 = vector.shape_cast %183 : vector<1x288x32xbf16> to vector<288x32xbf16>
    %c0_179 = arith.constant 0 : index
    %c0_180 = arith.constant 0 : index
    %c0_181 = arith.constant 0 : index
    %c0_182 = arith.constant 0 : index
    %185 = vector.load %arg9[%c0_179, %c0_180, %c0_181, %c0_182] : memref<2x10x10x32xf32, #tpu.memory_space<vmem>>, vector<2x8x8x32xf32>
    %186 = vector.shape_cast %185 : vector<2x8x8x32xf32> to vector<128x32xf32>
    %c0_183 = arith.constant 0 : index
    %c0_184 = arith.constant 0 : index
    %c1_185 = arith.constant 1 : index
    %c0_186 = arith.constant 0 : index
    %187 = vector.load %arg9[%c0_183, %c0_184, %c1_185, %c0_186] : memref<2x10x10x32xf32, #tpu.memory_space<vmem>>, vector<2x8x8x32xf32>
    %188 = vector.shape_cast %187 : vector<2x8x8x32xf32> to vector<128x32xf32>
    %c0_187 = arith.constant 0 : index
    %c0_188 = arith.constant 0 : index
    %c2_189 = arith.constant 2 : index
    %c0_190 = arith.constant 0 : index
    %189 = vector.load %arg9[%c0_187, %c0_188, %c2_189, %c0_190] : memref<2x10x10x32xf32, #tpu.memory_space<vmem>>, vector<2x8x8x32xf32>
    %190 = vector.shape_cast %189 : vector<2x8x8x32xf32> to vector<128x32xf32>
    %c0_191 = arith.constant 0 : index
    %c1_192 = arith.constant 1 : index
    %c0_193 = arith.constant 0 : index
    %c0_194 = arith.constant 0 : index
    %191 = vector.load %arg9[%c0_191, %c1_192, %c0_193, %c0_194] : memref<2x10x10x32xf32, #tpu.memory_space<vmem>>, vector<2x8x8x32xf32>
    %192 = vector.shape_cast %191 : vector<2x8x8x32xf32> to vector<128x32xf32>
    %c0_195 = arith.constant 0 : index
    %c1_196 = arith.constant 1 : index
    %c1_197 = arith.constant 1 : index
    %c0_198 = arith.constant 0 : index
    %193 = vector.load %arg9[%c0_195, %c1_196, %c1_197, %c0_198] : memref<2x10x10x32xf32, #tpu.memory_space<vmem>>, vector<2x8x8x32xf32>
    %194 = vector.shape_cast %193 : vector<2x8x8x32xf32> to vector<128x32xf32>
    %c0_199 = arith.constant 0 : index
    %c1_200 = arith.constant 1 : index
    %c2_201 = arith.constant 2 : index
    %c0_202 = arith.constant 0 : index
    %195 = vector.load %arg9[%c0_199, %c1_200, %c2_201, %c0_202] : memref<2x10x10x32xf32, #tpu.memory_space<vmem>>, vector<2x8x8x32xf32>
    %196 = vector.shape_cast %195 : vector<2x8x8x32xf32> to vector<128x32xf32>
    %c0_203 = arith.constant 0 : index
    %c2_204 = arith.constant 2 : index
    %c0_205 = arith.constant 0 : index
    %c0_206 = arith.constant 0 : index
    %197 = vector.load %arg9[%c0_203, %c2_204, %c0_205, %c0_206] : memref<2x10x10x32xf32, #tpu.memory_space<vmem>>, vector<2x8x8x32xf32>
    %198 = vector.shape_cast %197 : vector<2x8x8x32xf32> to vector<128x32xf32>
    %c0_207 = arith.constant 0 : index
    %c2_208 = arith.constant 2 : index
    %c1_209 = arith.constant 1 : index
    %c0_210 = arith.constant 0 : index
    %199 = vector.load %arg9[%c0_207, %c2_208, %c1_209, %c0_210] : memref<2x10x10x32xf32, #tpu.memory_space<vmem>>, vector<2x8x8x32xf32>
    %200 = vector.shape_cast %199 : vector<2x8x8x32xf32> to vector<128x32xf32>
    %c0_211 = arith.constant 0 : index
    %c2_212 = arith.constant 2 : index
    %c2_213 = arith.constant 2 : index
    %c0_214 = arith.constant 0 : index
    %201 = vector.load %arg9[%c0_211, %c2_212, %c2_213, %c0_214] : memref<2x10x10x32xf32, #tpu.memory_space<vmem>>, vector<2x8x8x32xf32>
    %202 = vector.shape_cast %201 : vector<2x8x8x32xf32> to vector<128x32xf32>
    %203 = tpu.concatenate %186, %188, %190, %192, %194, %196, %198, %200, %202 in 1 : vector<128x32xf32>, vector<128x32xf32>, vector<128x32xf32>, vector<128x32xf32>, vector<128x32xf32>, vector<128x32xf32>, vector<128x32xf32>, vector<128x32xf32>, vector<128x32xf32> -> vector<128x288xf32>
    %204 = arith.truncf %203 : vector<128x288xf32> to vector<128x288xbf16>
    %cst_215 = arith.constant dense<0.000000e+00> : vector<128x32xf32>
    %205 = tpu.matmul %204, %184, %cst_215 {dimension_numbers = #tpu.dot_dimension_numbers<[1], [0], [0], [1], [0, 0, 1, 1], [], []>} : vector<128x288xbf16>, vector<288x32xbf16>, vector<128x32xf32> -> vector<128x32xf32>
    %c3 = arith.constant 3 : index
    %c0_216 = arith.constant 0 : index
    %206 = vector.load %arg4[%c3, %c0_216] : memref<5x32xf32, #tpu.memory_space<vmem>>, vector<1x32xf32>
    %207 = vector.shape_cast %206 : vector<1x32xf32> to vector<32xf32>
    %c3_217 = arith.constant 3 : index
    %c0_218 = arith.constant 0 : index
    %208 = vector.load %arg5[%c3_217, %c0_218] : memref<5x32xf32, #tpu.memory_space<vmem>>, vector<1x32xf32>
    %209 = vector.shape_cast %208 : vector<1x32xf32> to vector<32xf32>
    %210 = vector.shape_cast %205 : vector<128x32xf32> to vector<2x64x32xf32>
    %cst_219 = arith.constant dense<0.000000e+00> : vector<2x32xf32>
    %211 = vector.multi_reduction <add>, %210, %cst_219 [1] : vector<2x64x32xf32> to vector<2x32xf32>
    %212 = vector.shape_cast %211 : vector<2x32xf32> to vector<2x1x32xf32>
    %213 = arith.mulf %210, %210 : vector<2x64x32xf32>
    %cst_220 = arith.constant dense<0.000000e+00> : vector<2x32xf32>
    %214 = vector.multi_reduction <add>, %213, %cst_220 [1] : vector<2x64x32xf32> to vector<2x32xf32>
    %215 = vector.shape_cast %214 : vector<2x32xf32> to vector<2x1x32xf32>
    %cst_221 = arith.constant 1.562500e-02 : f32
    %216 = vector.broadcast %cst_221 : f32 to vector<2x1x32xf32>
    %217 = arith.mulf %212, %216 : vector<2x1x32xf32>
    %cst_222 = arith.constant 1.562500e-02 : f32
    %218 = vector.broadcast %cst_222 : f32 to vector<2x1x32xf32>
    %219 = arith.mulf %215, %218 : vector<2x1x32xf32>
    %220 = arith.mulf %217, %217 : vector<2x1x32xf32>
    %221 = arith.subf %219, %220 : vector<2x1x32xf32>
    %222 = vector.shape_cast %207 : vector<32xf32> to vector<1x1x32xf32>
    %cst_223 = arith.constant 9.99999974E-6 : f32
    %223 = vector.broadcast %cst_223 : f32 to vector<2x1x32xf32>
    %224 = arith.addf %221, %223 : vector<2x1x32xf32>
    %225 = math.rsqrt %224 : vector<2x1x32xf32>
    %226 = vector.broadcast %222 : vector<1x1x32xf32> to vector<2x1x32xf32>
    %227 = arith.mulf %226, %225 : vector<2x1x32xf32>
    %228 = vector.shape_cast %209 : vector<32xf32> to vector<1x1x32xf32>
    %229 = arith.mulf %217, %227 : vector<2x1x32xf32>
    %230 = vector.broadcast %228 : vector<1x1x32xf32> to vector<2x1x32xf32>
    %231 = arith.subf %230, %229 : vector<2x1x32xf32>
    %232 = vector.broadcast %227 : vector<2x1x32xf32> to vector<2x64x32xf32>
    %233 = arith.mulf %210, %232 : vector<2x64x32xf32>
    %234 = vector.broadcast %231 : vector<2x1x32xf32> to vector<2x64x32xf32>
    %235 = arith.addf %233, %234 : vector<2x64x32xf32>
    %cst_224 = arith.constant 0.000000e+00 : f32
    %236 = vector.broadcast %cst_224 : f32 to vector<2x64x32xf32>
    %237 = arith.maximumf %235, %236 : vector<2x64x32xf32>
    %238 = vector.shape_cast %237 : vector<2x64x32xf32> to vector<128x32xf32>
    %239 = vector.shape_cast %238 : vector<128x32xf32> to vector<2x8x8x32xf32>
    %c0_225 = arith.constant 0 : index
    %c1_226 = arith.constant 1 : index
    %c1_227 = arith.constant 1 : index
    %c0_228 = arith.constant 0 : index
    %240 = vector.load %arg9[%c0_225, %c1_226, %c1_227, %c0_228] : memref<2x10x10x32xf32, #tpu.memory_space<vmem>>, vector<2x8x8x32xf32>
    tpu.vector_store %arg9[%c0_225, %c1_226, %c1_227, %c0_228], %239 {strides = array<i32>} : memref<2x10x10x32xf32, #tpu.memory_space<vmem>>, vector<2x8x8x32xf32>,
    %c3_229 = arith.constant 3 : index
    %c0_230 = arith.constant 0 : index
    %c0_231 = arith.constant 0 : index
    %241 = vector.load %arg3[%c3_229, %c0_230, %c0_231] : memref<4x288x32xbf16, #tpu.memory_space<vmem>>, vector<1x288x32xbf16>
    %242 = vector.shape_cast %241 : vector<1x288x32xbf16> to vector<288x32xbf16>
    %c0_232 = arith.constant 0 : index
    %c0_233 = arith.constant 0 : index
    %c0_234 = arith.constant 0 : index
    %c0_235 = arith.constant 0 : index
    %243 = vector.load %arg9[%c0_232, %c0_233, %c0_234, %c0_235] : memref<2x10x10x32xf32, #tpu.memory_space<vmem>>, vector<2x8x8x32xf32>
    %244 = vector.shape_cast %243 : vector<2x8x8x32xf32> to vector<128x32xf32>
    %c0_236 = arith.constant 0 : index
    %c0_237 = arith.constant 0 : index
    %c1_238 = arith.constant 1 : index
    %c0_239 = arith.constant 0 : index
    %245 = vector.load %arg9[%c0_236, %c0_237, %c1_238, %c0_239] : memref<2x10x10x32xf32, #tpu.memory_space<vmem>>, vector<2x8x8x32xf32>
    %246 = vector.shape_cast %245 : vector<2x8x8x32xf32> to vector<128x32xf32>
    %c0_240 = arith.constant 0 : index
    %c0_241 = arith.constant 0 : index
    %c2_242 = arith.constant 2 : index
    %c0_243 = arith.constant 0 : index
    %247 = vector.load %arg9[%c0_240, %c0_241, %c2_242, %c0_243] : memref<2x10x10x32xf32, #tpu.memory_space<vmem>>, vector<2x8x8x32xf32>
    %248 = vector.shape_cast %247 : vector<2x8x8x32xf32> to vector<128x32xf32>
    %c0_244 = arith.constant 0 : index
    %c1_245 = arith.constant 1 : index
    %c0_246 = arith.constant 0 : index
    %c0_247 = arith.constant 0 : index
    %249 = vector.load %arg9[%c0_244, %c1_245, %c0_246, %c0_247] : memref<2x10x10x32xf32, #tpu.memory_space<vmem>>, vector<2x8x8x32xf32>
    %250 = vector.shape_cast %249 : vector<2x8x8x32xf32> to vector<128x32xf32>
    %c0_248 = arith.constant 0 : index
    %c1_249 = arith.constant 1 : index
    %c1_250 = arith.constant 1 : index
    %c0_251 = arith.constant 0 : index
    %251 = vector.load %arg9[%c0_248, %c1_249, %c1_250, %c0_251] : memref<2x10x10x32xf32, #tpu.memory_space<vmem>>, vector<2x8x8x32xf32>
    %252 = vector.shape_cast %251 : vector<2x8x8x32xf32> to vector<128x32xf32>
    %c0_252 = arith.constant 0 : index
    %c1_253 = arith.constant 1 : index
    %c2_254 = arith.constant 2 : index
    %c0_255 = arith.constant 0 : index
    %253 = vector.load %arg9[%c0_252, %c1_253, %c2_254, %c0_255] : memref<2x10x10x32xf32, #tpu.memory_space<vmem>>, vector<2x8x8x32xf32>
    %254 = vector.shape_cast %253 : vector<2x8x8x32xf32> to vector<128x32xf32>
    %c0_256 = arith.constant 0 : index
    %c2_257 = arith.constant 2 : index
    %c0_258 = arith.constant 0 : index
    %c0_259 = arith.constant 0 : index
    %255 = vector.load %arg9[%c0_256, %c2_257, %c0_258, %c0_259] : memref<2x10x10x32xf32, #tpu.memory_space<vmem>>, vector<2x8x8x32xf32>
    %256 = vector.shape_cast %255 : vector<2x8x8x32xf32> to vector<128x32xf32>
    %c0_260 = arith.constant 0 : index
    %c2_261 = arith.constant 2 : index
    %c1_262 = arith.constant 1 : index
    %c0_263 = arith.constant 0 : index
    %257 = vector.load %arg9[%c0_260, %c2_261, %c1_262, %c0_263] : memref<2x10x10x32xf32, #tpu.memory_space<vmem>>, vector<2x8x8x32xf32>
    %258 = vector.shape_cast %257 : vector<2x8x8x32xf32> to vector<128x32xf32>
    %c0_264 = arith.constant 0 : index
    %c2_265 = arith.constant 2 : index
    %c2_266 = arith.constant 2 : index
    %c0_267 = arith.constant 0 : index
    %259 = vector.load %arg9[%c0_264, %c2_265, %c2_266, %c0_267] : memref<2x10x10x32xf32, #tpu.memory_space<vmem>>, vector<2x8x8x32xf32>
    %260 = vector.shape_cast %259 : vector<2x8x8x32xf32> to vector<128x32xf32>
    %261 = tpu.concatenate %244, %246, %248, %250, %252, %254, %256, %258, %260 in 1 : vector<128x32xf32>, vector<128x32xf32>, vector<128x32xf32>, vector<128x32xf32>, vector<128x32xf32>, vector<128x32xf32>, vector<128x32xf32>, vector<128x32xf32>, vector<128x32xf32> -> vector<128x288xf32>
    %262 = arith.truncf %261 : vector<128x288xf32> to vector<128x288xbf16>
    %cst_268 = arith.constant dense<0.000000e+00> : vector<128x32xf32>
    %263 = tpu.matmul %262, %242, %cst_268 {dimension_numbers = #tpu.dot_dimension_numbers<[1], [0], [0], [1], [0, 0, 1, 1], [], []>} : vector<128x288xbf16>, vector<288x32xbf16>, vector<128x32xf32> -> vector<128x32xf32>
    %c4 = arith.constant 4 : index
    %c0_269 = arith.constant 0 : index
    %264 = vector.load %arg4[%c4, %c0_269] : memref<5x32xf32, #tpu.memory_space<vmem>>, vector<1x32xf32>
    %265 = vector.shape_cast %264 : vector<1x32xf32> to vector<32xf32>
    %c4_270 = arith.constant 4 : index
    %c0_271 = arith.constant 0 : index
    %266 = vector.load %arg5[%c4_270, %c0_271] : memref<5x32xf32, #tpu.memory_space<vmem>>, vector<1x32xf32>
    %267 = vector.shape_cast %266 : vector<1x32xf32> to vector<32xf32>
    %268 = vector.shape_cast %263 : vector<128x32xf32> to vector<2x64x32xf32>
    %cst_272 = arith.constant dense<0.000000e+00> : vector<2x32xf32>
    %269 = vector.multi_reduction <add>, %268, %cst_272 [1] : vector<2x64x32xf32> to vector<2x32xf32>
    %270 = vector.shape_cast %269 : vector<2x32xf32> to vector<2x1x32xf32>
    %271 = arith.mulf %268, %268 : vector<2x64x32xf32>
    %cst_273 = arith.constant dense<0.000000e+00> : vector<2x32xf32>
    %272 = vector.multi_reduction <add>, %271, %cst_273 [1] : vector<2x64x32xf32> to vector<2x32xf32>
    %273 = vector.shape_cast %272 : vector<2x32xf32> to vector<2x1x32xf32>
    %cst_274 = arith.constant 1.562500e-02 : f32
    %274 = vector.broadcast %cst_274 : f32 to vector<2x1x32xf32>
    %275 = arith.mulf %270, %274 : vector<2x1x32xf32>
    %cst_275 = arith.constant 1.562500e-02 : f32
    %276 = vector.broadcast %cst_275 : f32 to vector<2x1x32xf32>
    %277 = arith.mulf %273, %276 : vector<2x1x32xf32>
    %278 = arith.mulf %275, %275 : vector<2x1x32xf32>
    %279 = arith.subf %277, %278 : vector<2x1x32xf32>
    %280 = vector.shape_cast %265 : vector<32xf32> to vector<1x1x32xf32>
    %cst_276 = arith.constant 9.99999974E-6 : f32
    %281 = vector.broadcast %cst_276 : f32 to vector<2x1x32xf32>
    %282 = arith.addf %279, %281 : vector<2x1x32xf32>
    %283 = math.rsqrt %282 : vector<2x1x32xf32>
    %284 = vector.broadcast %280 : vector<1x1x32xf32> to vector<2x1x32xf32>
    %285 = arith.mulf %284, %283 : vector<2x1x32xf32>
    %286 = vector.shape_cast %267 : vector<32xf32> to vector<1x1x32xf32>
    %287 = arith.mulf %275, %285 : vector<2x1x32xf32>
    %288 = vector.broadcast %286 : vector<1x1x32xf32> to vector<2x1x32xf32>
    %289 = arith.subf %288, %287 : vector<2x1x32xf32>
    %290 = vector.broadcast %285 : vector<2x1x32xf32> to vector<2x64x32xf32>
    %291 = arith.mulf %268, %290 : vector<2x64x32xf32>
    %292 = vector.broadcast %289 : vector<2x1x32xf32> to vector<2x64x32xf32>
    %293 = arith.addf %291, %292 : vector<2x64x32xf32>
    %294 = vector.shape_cast %293 : vector<2x64x32xf32> to vector<128x32xf32>
    %295 = arith.addf %180, %294 : vector<128x32xf32>
    %cst_277 = arith.constant 0.000000e+00 : f32
    %296 = vector.broadcast %cst_277 : f32 to vector<2x14x14x32xf32>
    %c0_278 = arith.constant 0 : index
    %c0_279 = arith.constant 0 : index
    %c0_280 = arith.constant 0 : index
    %c0_281 = arith.constant 0 : index
    %297 = vector.load %arg10[%c0_278, %c0_279, %c0_280, %c0_281] : memref<2x14x14x32xf32, #tpu.memory_space<vmem>>, vector<2x14x14x32xf32>
    tpu.vector_store %arg10[%c0_278, %c0_279, %c0_280, %c0_281], %296 {strides = array<i32>} : memref<2x14x14x32xf32, #tpu.memory_space<vmem>>, vector<2x14x14x32xf32>,
    %298 = vector.shape_cast %295 : vector<128x32xf32> to vector<2x8x8x32xf32>
    %c0_282 = arith.constant 0 : index
    %c3_283 = arith.constant 3 : index
    %c3_284 = arith.constant 3 : index
    %c0_285 = arith.constant 0 : index
    %299 = vector.load %arg10[%c0_282, %c3_283, %c3_284, %c0_285] : memref<2x14x14x32xf32, #tpu.memory_space<vmem>>, vector<2x8x8x32xf32>
    tpu.vector_store %arg10[%c0_282, %c3_283, %c3_284, %c0_285], %298 {strides = array<i32>} : memref<2x14x14x32xf32, #tpu.memory_space<vmem>>, vector<2x8x8x32xf32>,
    %cst_286 = arith.constant 0.000000e+00 : f32
    %300 = vector.broadcast %cst_286 : f32 to vector<128x32xf32>
    %c0_287 = arith.constant 0 : index
    %c0_288 = arith.constant 0 : index
    %c0_289 = arith.constant 0 : index
    %c0_290 = arith.constant 0 : index
    %301 = vector.load %arg10[%c0_287, %c0_288, %c0_289, %c0_290] : memref<2x14x14x32xf32, #tpu.memory_space<vmem>>, vector<2x8x8x32xf32>
    %302 = vector.shape_cast %301 : vector<2x8x8x32xf32> to vector<128x32xf32>
    %c0_291 = arith.constant 0 : index
    %c0_292 = arith.constant 0 : index
    %303 = vector.load %arg6[%c0_291, %c0_292] : memref<49x32xf32, #tpu.memory_space<vmem>>, vector<1x32xf32>
    %304 = vector.shape_cast %303 : vector<1x32xf32> to vector<32xf32>
    %305 = vector.shape_cast %304 : vector<32xf32> to vector<1x32xf32>
    %306 = vector.broadcast %305 : vector<1x32xf32> to vector<128x32xf32>
    %307 = arith.mulf %302, %306 : vector<128x32xf32>
    %308 = arith.addf %300, %307 : vector<128x32xf32>
    %c0_293 = arith.constant 0 : index
    %c0_294 = arith.constant 0 : index
    %c1_295 = arith.constant 1 : index
    %c0_296 = arith.constant 0 : index
    %309 = vector.load %arg10[%c0_293, %c0_294, %c1_295, %c0_296] : memref<2x14x14x32xf32, #tpu.memory_space<vmem>>, vector<2x8x8x32xf32>
    %310 = vector.shape_cast %309 : vector<2x8x8x32xf32> to vector<128x32xf32>
    %c1_297 = arith.constant 1 : index
    %c0_298 = arith.constant 0 : index
    %311 = vector.load %arg6[%c1_297, %c0_298] : memref<49x32xf32, #tpu.memory_space<vmem>>, vector<1x32xf32>
    %312 = vector.shape_cast %311 : vector<1x32xf32> to vector<32xf32>
    %313 = vector.shape_cast %312 : vector<32xf32> to vector<1x32xf32>
    %314 = vector.broadcast %313 : vector<1x32xf32> to vector<128x32xf32>
    %315 = arith.mulf %310, %314 : vector<128x32xf32>
    %316 = arith.addf %308, %315 : vector<128x32xf32>
    %c0_299 = arith.constant 0 : index
    %c0_300 = arith.constant 0 : index
    %c2_301 = arith.constant 2 : index
    %c0_302 = arith.constant 0 : index
    %317 = vector.load %arg10[%c0_299, %c0_300, %c2_301, %c0_302] : memref<2x14x14x32xf32, #tpu.memory_space<vmem>>, vector<2x8x8x32xf32>
    %318 = vector.shape_cast %317 : vector<2x8x8x32xf32> to vector<128x32xf32>
    %c2_303 = arith.constant 2 : index
    %c0_304 = arith.constant 0 : index
    %319 = vector.load %arg6[%c2_303, %c0_304] : memref<49x32xf32, #tpu.memory_space<vmem>>, vector<1x32xf32>
    %320 = vector.shape_cast %319 : vector<1x32xf32> to vector<32xf32>
    %321 = vector.shape_cast %320 : vector<32xf32> to vector<1x32xf32>
    %322 = vector.broadcast %321 : vector<1x32xf32> to vector<128x32xf32>
    %323 = arith.mulf %318, %322 : vector<128x32xf32>
    %324 = arith.addf %316, %323 : vector<128x32xf32>
    %c0_305 = arith.constant 0 : index
    %c0_306 = arith.constant 0 : index
    %c3_307 = arith.constant 3 : index
    %c0_308 = arith.constant 0 : index
    %325 = vector.load %arg10[%c0_305, %c0_306, %c3_307, %c0_308] : memref<2x14x14x32xf32, #tpu.memory_space<vmem>>, vector<2x8x8x32xf32>
    %326 = vector.shape_cast %325 : vector<2x8x8x32xf32> to vector<128x32xf32>
    %c3_309 = arith.constant 3 : index
    %c0_310 = arith.constant 0 : index
    %327 = vector.load %arg6[%c3_309, %c0_310] : memref<49x32xf32, #tpu.memory_space<vmem>>, vector<1x32xf32>
    %328 = vector.shape_cast %327 : vector<1x32xf32> to vector<32xf32>
    %329 = vector.shape_cast %328 : vector<32xf32> to vector<1x32xf32>
    %330 = vector.broadcast %329 : vector<1x32xf32> to vector<128x32xf32>
    %331 = arith.mulf %326, %330 : vector<128x32xf32>
    %332 = arith.addf %324, %331 : vector<128x32xf32>
    %c0_311 = arith.constant 0 : index
    %c0_312 = arith.constant 0 : index
    %c4_313 = arith.constant 4 : index
    %c0_314 = arith.constant 0 : index
    %333 = vector.load %arg10[%c0_311, %c0_312, %c4_313, %c0_314] : memref<2x14x14x32xf32, #tpu.memory_space<vmem>>, vector<2x8x8x32xf32>
    %334 = vector.shape_cast %333 : vector<2x8x8x32xf32> to vector<128x32xf32>
    %c4_315 = arith.constant 4 : index
    %c0_316 = arith.constant 0 : index
    %335 = vector.load %arg6[%c4_315, %c0_316] : memref<49x32xf32, #tpu.memory_space<vmem>>, vector<1x32xf32>
    %336 = vector.shape_cast %335 : vector<1x32xf32> to vector<32xf32>
    %337 = vector.shape_cast %336 : vector<32xf32> to vector<1x32xf32>
    %338 = vector.broadcast %337 : vector<1x32xf32> to vector<128x32xf32>
    %339 = arith.mulf %334, %338 : vector<128x32xf32>
    %340 = arith.addf %332, %339 : vector<128x32xf32>
    %c0_317 = arith.constant 0 : index
    %c0_318 = arith.constant 0 : index
    %c5 = arith.constant 5 : index
    %c0_319 = arith.constant 0 : index
    %341 = vector.load %arg10[%c0_317, %c0_318, %c5, %c0_319] : memref<2x14x14x32xf32, #tpu.memory_space<vmem>>, vector<2x8x8x32xf32>
    %342 = vector.shape_cast %341 : vector<2x8x8x32xf32> to vector<128x32xf32>
    %c5_320 = arith.constant 5 : index
    %c0_321 = arith.constant 0 : index
    %343 = vector.load %arg6[%c5_320, %c0_321] : memref<49x32xf32, #tpu.memory_space<vmem>>, vector<1x32xf32>
    %344 = vector.shape_cast %343 : vector<1x32xf32> to vector<32xf32>
    %345 = vector.shape_cast %344 : vector<32xf32> to vector<1x32xf32>
    %346 = vector.broadcast %345 : vector<1x32xf32> to vector<128x32xf32>
    %347 = arith.mulf %342, %346 : vector<128x32xf32>
    %348 = arith.addf %340, %347 : vector<128x32xf32>
    %c0_322 = arith.constant 0 : index
    %c0_323 = arith.constant 0 : index
    %c6 = arith.constant 6 : index
    %c0_324 = arith.constant 0 : index
    %349 = vector.load %arg10[%c0_322, %c0_323, %c6, %c0_324] : memref<2x14x14x32xf32, #tpu.memory_space<vmem>>, vector<2x8x8x32xf32>
    %350 = vector.shape_cast %349 : vector<2x8x8x32xf32> to vector<128x32xf32>
    %c6_325 = arith.constant 6 : index
    %c0_326 = arith.constant 0 : index
    %351 = vector.load %arg6[%c6_325, %c0_326] : memref<49x32xf32, #tpu.memory_space<vmem>>, vector<1x32xf32>
    %352 = vector.shape_cast %351 : vector<1x32xf32> to vector<32xf32>
    %353 = vector.shape_cast %352 : vector<32xf32> to vector<1x32xf32>
    %354 = vector.broadcast %353 : vector<1x32xf32> to vector<128x32xf32>
    %355 = arith.mulf %350, %354 : vector<128x32xf32>
    %356 = arith.addf %348, %355 : vector<128x32xf32>
    %c0_327 = arith.constant 0 : index
    %c1_328 = arith.constant 1 : index
    %c0_329 = arith.constant 0 : index
    %c0_330 = arith.constant 0 : index
    %357 = vector.load %arg10[%c0_327, %c1_328, %c0_329, %c0_330] : memref<2x14x14x32xf32, #tpu.memory_space<vmem>>, vector<2x8x8x32xf32>
    %358 = vector.shape_cast %357 : vector<2x8x8x32xf32> to vector<128x32xf32>
    %c7 = arith.constant 7 : index
    %c0_331 = arith.constant 0 : index
    %359 = vector.load %arg6[%c7, %c0_331] : memref<49x32xf32, #tpu.memory_space<vmem>>, vector<1x32xf32>
    %360 = vector.shape_cast %359 : vector<1x32xf32> to vector<32xf32>
    %361 = vector.shape_cast %360 : vector<32xf32> to vector<1x32xf32>
    %362 = vector.broadcast %361 : vector<1x32xf32> to vector<128x32xf32>
    %363 = arith.mulf %358, %362 : vector<128x32xf32>
    %364 = arith.addf %356, %363 : vector<128x32xf32>
    %c0_332 = arith.constant 0 : index
    %c1_333 = arith.constant 1 : index
    %c1_334 = arith.constant 1 : index
    %c0_335 = arith.constant 0 : index
    %365 = vector.load %arg10[%c0_332, %c1_333, %c1_334, %c0_335] : memref<2x14x14x32xf32, #tpu.memory_space<vmem>>, vector<2x8x8x32xf32>
    %366 = vector.shape_cast %365 : vector<2x8x8x32xf32> to vector<128x32xf32>
    %c8 = arith.constant 8 : index
    %c0_336 = arith.constant 0 : index
    %367 = vector.load %arg6[%c8, %c0_336] : memref<49x32xf32, #tpu.memory_space<vmem>>, vector<1x32xf32>
    %368 = vector.shape_cast %367 : vector<1x32xf32> to vector<32xf32>
    %369 = vector.shape_cast %368 : vector<32xf32> to vector<1x32xf32>
    %370 = vector.broadcast %369 : vector<1x32xf32> to vector<128x32xf32>
    %371 = arith.mulf %366, %370 : vector<128x32xf32>
    %372 = arith.addf %364, %371 : vector<128x32xf32>
    %c0_337 = arith.constant 0 : index
    %c1_338 = arith.constant 1 : index
    %c2_339 = arith.constant 2 : index
    %c0_340 = arith.constant 0 : index
    %373 = vector.load %arg10[%c0_337, %c1_338, %c2_339, %c0_340] : memref<2x14x14x32xf32, #tpu.memory_space<vmem>>, vector<2x8x8x32xf32>
    %374 = vector.shape_cast %373 : vector<2x8x8x32xf32> to vector<128x32xf32>
    %c9 = arith.constant 9 : index
    %c0_341 = arith.constant 0 : index
    %375 = vector.load %arg6[%c9, %c0_341] : memref<49x32xf32, #tpu.memory_space<vmem>>, vector<1x32xf32>
    %376 = vector.shape_cast %375 : vector<1x32xf32> to vector<32xf32>
    %377 = vector.shape_cast %376 : vector<32xf32> to vector<1x32xf32>
    %378 = vector.broadcast %377 : vector<1x32xf32> to vector<128x32xf32>
    %379 = arith.mulf %374, %378 : vector<128x32xf32>
    %380 = arith.addf %372, %379 : vector<128x32xf32>
    %c0_342 = arith.constant 0 : index
    %c1_343 = arith.constant 1 : index
    %c3_344 = arith.constant 3 : index
    %c0_345 = arith.constant 0 : index
    %381 = vector.load %arg10[%c0_342, %c1_343, %c3_344, %c0_345] : memref<2x14x14x32xf32, #tpu.memory_space<vmem>>, vector<2x8x8x32xf32>
    %382 = vector.shape_cast %381 : vector<2x8x8x32xf32> to vector<128x32xf32>
    %c10 = arith.constant 10 : index
    %c0_346 = arith.constant 0 : index
    %383 = vector.load %arg6[%c10, %c0_346] : memref<49x32xf32, #tpu.memory_space<vmem>>, vector<1x32xf32>
    %384 = vector.shape_cast %383 : vector<1x32xf32> to vector<32xf32>
    %385 = vector.shape_cast %384 : vector<32xf32> to vector<1x32xf32>
    %386 = vector.broadcast %385 : vector<1x32xf32> to vector<128x32xf32>
    %387 = arith.mulf %382, %386 : vector<128x32xf32>
    %388 = arith.addf %380, %387 : vector<128x32xf32>
    %c0_347 = arith.constant 0 : index
    %c1_348 = arith.constant 1 : index
    %c4_349 = arith.constant 4 : index
    %c0_350 = arith.constant 0 : index
    %389 = vector.load %arg10[%c0_347, %c1_348, %c4_349, %c0_350] : memref<2x14x14x32xf32, #tpu.memory_space<vmem>>, vector<2x8x8x32xf32>
    %390 = vector.shape_cast %389 : vector<2x8x8x32xf32> to vector<128x32xf32>
    %c11 = arith.constant 11 : index
    %c0_351 = arith.constant 0 : index
    %391 = vector.load %arg6[%c11, %c0_351] : memref<49x32xf32, #tpu.memory_space<vmem>>, vector<1x32xf32>
    %392 = vector.shape_cast %391 : vector<1x32xf32> to vector<32xf32>
    %393 = vector.shape_cast %392 : vector<32xf32> to vector<1x32xf32>
    %394 = vector.broadcast %393 : vector<1x32xf32> to vector<128x32xf32>
    %395 = arith.mulf %390, %394 : vector<128x32xf32>
    %396 = arith.addf %388, %395 : vector<128x32xf32>
    %c0_352 = arith.constant 0 : index
    %c1_353 = arith.constant 1 : index
    %c5_354 = arith.constant 5 : index
    %c0_355 = arith.constant 0 : index
    %397 = vector.load %arg10[%c0_352, %c1_353, %c5_354, %c0_355] : memref<2x14x14x32xf32, #tpu.memory_space<vmem>>, vector<2x8x8x32xf32>
    %398 = vector.shape_cast %397 : vector<2x8x8x32xf32> to vector<128x32xf32>
    %c12 = arith.constant 12 : index
    %c0_356 = arith.constant 0 : index
    %399 = vector.load %arg6[%c12, %c0_356] : memref<49x32xf32, #tpu.memory_space<vmem>>, vector<1x32xf32>
    %400 = vector.shape_cast %399 : vector<1x32xf32> to vector<32xf32>
    %401 = vector.shape_cast %400 : vector<32xf32> to vector<1x32xf32>
    %402 = vector.broadcast %401 : vector<1x32xf32> to vector<128x32xf32>
    %403 = arith.mulf %398, %402 : vector<128x32xf32>
    %404 = arith.addf %396, %403 : vector<128x32xf32>
    %c0_357 = arith.constant 0 : index
    %c1_358 = arith.constant 1 : index
    %c6_359 = arith.constant 6 : index
    %c0_360 = arith.constant 0 : index
    %405 = vector.load %arg10[%c0_357, %c1_358, %c6_359, %c0_360] : memref<2x14x14x32xf32, #tpu.memory_space<vmem>>, vector<2x8x8x32xf32>
    %406 = vector.shape_cast %405 : vector<2x8x8x32xf32> to vector<128x32xf32>
    %c13 = arith.constant 13 : index
    %c0_361 = arith.constant 0 : index
    %407 = vector.load %arg6[%c13, %c0_361] : memref<49x32xf32, #tpu.memory_space<vmem>>, vector<1x32xf32>
    %408 = vector.shape_cast %407 : vector<1x32xf32> to vector<32xf32>
    %409 = vector.shape_cast %408 : vector<32xf32> to vector<1x32xf32>
    %410 = vector.broadcast %409 : vector<1x32xf32> to vector<128x32xf32>
    %411 = arith.mulf %406, %410 : vector<128x32xf32>
    %412 = arith.addf %404, %411 : vector<128x32xf32>
    %c0_362 = arith.constant 0 : index
    %c2_363 = arith.constant 2 : index
    %c0_364 = arith.constant 0 : index
    %c0_365 = arith.constant 0 : index
    %413 = vector.load %arg10[%c0_362, %c2_363, %c0_364, %c0_365] : memref<2x14x14x32xf32, #tpu.memory_space<vmem>>, vector<2x8x8x32xf32>
    %414 = vector.shape_cast %413 : vector<2x8x8x32xf32> to vector<128x32xf32>
    %c14 = arith.constant 14 : index
    %c0_366 = arith.constant 0 : index
    %415 = vector.load %arg6[%c14, %c0_366] : memref<49x32xf32, #tpu.memory_space<vmem>>, vector<1x32xf32>
    %416 = vector.shape_cast %415 : vector<1x32xf32> to vector<32xf32>
    %417 = vector.shape_cast %416 : vector<32xf32> to vector<1x32xf32>
    %418 = vector.broadcast %417 : vector<1x32xf32> to vector<128x32xf32>
    %419 = arith.mulf %414, %418 : vector<128x32xf32>
    %420 = arith.addf %412, %419 : vector<128x32xf32>
    %c0_367 = arith.constant 0 : index
    %c2_368 = arith.constant 2 : index
    %c1_369 = arith.constant 1 : index
    %c0_370 = arith.constant 0 : index
    %421 = vector.load %arg10[%c0_367, %c2_368, %c1_369, %c0_370] : memref<2x14x14x32xf32, #tpu.memory_space<vmem>>, vector<2x8x8x32xf32>
    %422 = vector.shape_cast %421 : vector<2x8x8x32xf32> to vector<128x32xf32>
    %c15 = arith.constant 15 : index
    %c0_371 = arith.constant 0 : index
    %423 = vector.load %arg6[%c15, %c0_371] : memref<49x32xf32, #tpu.memory_space<vmem>>, vector<1x32xf32>
    %424 = vector.shape_cast %423 : vector<1x32xf32> to vector<32xf32>
    %425 = vector.shape_cast %424 : vector<32xf32> to vector<1x32xf32>
    %426 = vector.broadcast %425 : vector<1x32xf32> to vector<128x32xf32>
    %427 = arith.mulf %422, %426 : vector<128x32xf32>
    %428 = arith.addf %420, %427 : vector<128x32xf32>
    %c0_372 = arith.constant 0 : index
    %c2_373 = arith.constant 2 : index
    %c2_374 = arith.constant 2 : index
    %c0_375 = arith.constant 0 : index
    %429 = vector.load %arg10[%c0_372, %c2_373, %c2_374, %c0_375] : memref<2x14x14x32xf32, #tpu.memory_space<vmem>>, vector<2x8x8x32xf32>
    %430 = vector.shape_cast %429 : vector<2x8x8x32xf32> to vector<128x32xf32>
    %c16 = arith.constant 16 : index
    %c0_376 = arith.constant 0 : index
    %431 = vector.load %arg6[%c16, %c0_376] : memref<49x32xf32, #tpu.memory_space<vmem>>, vector<1x32xf32>
    %432 = vector.shape_cast %431 : vector<1x32xf32> to vector<32xf32>
    %433 = vector.shape_cast %432 : vector<32xf32> to vector<1x32xf32>
    %434 = vector.broadcast %433 : vector<1x32xf32> to vector<128x32xf32>
    %435 = arith.mulf %430, %434 : vector<128x32xf32>
    %436 = arith.addf %428, %435 : vector<128x32xf32>
    %c0_377 = arith.constant 0 : index
    %c2_378 = arith.constant 2 : index
    %c3_379 = arith.constant 3 : index
    %c0_380 = arith.constant 0 : index
    %437 = vector.load %arg10[%c0_377, %c2_378, %c3_379, %c0_380] : memref<2x14x14x32xf32, #tpu.memory_space<vmem>>, vector<2x8x8x32xf32>
    %438 = vector.shape_cast %437 : vector<2x8x8x32xf32> to vector<128x32xf32>
    %c17 = arith.constant 17 : index
    %c0_381 = arith.constant 0 : index
    %439 = vector.load %arg6[%c17, %c0_381] : memref<49x32xf32, #tpu.memory_space<vmem>>, vector<1x32xf32>
    %440 = vector.shape_cast %439 : vector<1x32xf32> to vector<32xf32>
    %441 = vector.shape_cast %440 : vector<32xf32> to vector<1x32xf32>
    %442 = vector.broadcast %441 : vector<1x32xf32> to vector<128x32xf32>
    %443 = arith.mulf %438, %442 : vector<128x32xf32>
    %444 = arith.addf %436, %443 : vector<128x32xf32>
    %c0_382 = arith.constant 0 : index
    %c2_383 = arith.constant 2 : index
    %c4_384 = arith.constant 4 : index
    %c0_385 = arith.constant 0 : index
    %445 = vector.load %arg10[%c0_382, %c2_383, %c4_384, %c0_385] : memref<2x14x14x32xf32, #tpu.memory_space<vmem>>, vector<2x8x8x32xf32>
    %446 = vector.shape_cast %445 : vector<2x8x8x32xf32> to vector<128x32xf32>
    %c18 = arith.constant 18 : index
    %c0_386 = arith.constant 0 : index
    %447 = vector.load %arg6[%c18, %c0_386] : memref<49x32xf32, #tpu.memory_space<vmem>>, vector<1x32xf32>
    %448 = vector.shape_cast %447 : vector<1x32xf32> to vector<32xf32>
    %449 = vector.shape_cast %448 : vector<32xf32> to vector<1x32xf32>
    %450 = vector.broadcast %449 : vector<1x32xf32> to vector<128x32xf32>
    %451 = arith.mulf %446, %450 : vector<128x32xf32>
    %452 = arith.addf %444, %451 : vector<128x32xf32>
    %c0_387 = arith.constant 0 : index
    %c2_388 = arith.constant 2 : index
    %c5_389 = arith.constant 5 : index
    %c0_390 = arith.constant 0 : index
    %453 = vector.load %arg10[%c0_387, %c2_388, %c5_389, %c0_390] : memref<2x14x14x32xf32, #tpu.memory_space<vmem>>, vector<2x8x8x32xf32>
    %454 = vector.shape_cast %453 : vector<2x8x8x32xf32> to vector<128x32xf32>
    %c19 = arith.constant 19 : index
    %c0_391 = arith.constant 0 : index
    %455 = vector.load %arg6[%c19, %c0_391] : memref<49x32xf32, #tpu.memory_space<vmem>>, vector<1x32xf32>
    %456 = vector.shape_cast %455 : vector<1x32xf32> to vector<32xf32>
    %457 = vector.shape_cast %456 : vector<32xf32> to vector<1x32xf32>
    %458 = vector.broadcast %457 : vector<1x32xf32> to vector<128x32xf32>
    %459 = arith.mulf %454, %458 : vector<128x32xf32>
    %460 = arith.addf %452, %459 : vector<128x32xf32>
    %c0_392 = arith.constant 0 : index
    %c2_393 = arith.constant 2 : index
    %c6_394 = arith.constant 6 : index
    %c0_395 = arith.constant 0 : index
    %461 = vector.load %arg10[%c0_392, %c2_393, %c6_394, %c0_395] : memref<2x14x14x32xf32, #tpu.memory_space<vmem>>, vector<2x8x8x32xf32>
    %462 = vector.shape_cast %461 : vector<2x8x8x32xf32> to vector<128x32xf32>
    %c20 = arith.constant 20 : index
    %c0_396 = arith.constant 0 : index
    %463 = vector.load %arg6[%c20, %c0_396] : memref<49x32xf32, #tpu.memory_space<vmem>>, vector<1x32xf32>
    %464 = vector.shape_cast %463 : vector<1x32xf32> to vector<32xf32>
    %465 = vector.shape_cast %464 : vector<32xf32> to vector<1x32xf32>
    %466 = vector.broadcast %465 : vector<1x32xf32> to vector<128x32xf32>
    %467 = arith.mulf %462, %466 : vector<128x32xf32>
    %468 = arith.addf %460, %467 : vector<128x32xf32>
    %c0_397 = arith.constant 0 : index
    %c3_398 = arith.constant 3 : index
    %c0_399 = arith.constant 0 : index
    %c0_400 = arith.constant 0 : index
    %469 = vector.load %arg10[%c0_397, %c3_398, %c0_399, %c0_400] : memref<2x14x14x32xf32, #tpu.memory_space<vmem>>, vector<2x8x8x32xf32>
    %470 = vector.shape_cast %469 : vector<2x8x8x32xf32> to vector<128x32xf32>
    %c21 = arith.constant 21 : index
    %c0_401 = arith.constant 0 : index
    %471 = vector.load %arg6[%c21, %c0_401] : memref<49x32xf32, #tpu.memory_space<vmem>>, vector<1x32xf32>
    %472 = vector.shape_cast %471 : vector<1x32xf32> to vector<32xf32>
    %473 = vector.shape_cast %472 : vector<32xf32> to vector<1x32xf32>
    %474 = vector.broadcast %473 : vector<1x32xf32> to vector<128x32xf32>
    %475 = arith.mulf %470, %474 : vector<128x32xf32>
    %476 = arith.addf %468, %475 : vector<128x32xf32>
    %c0_402 = arith.constant 0 : index
    %c3_403 = arith.constant 3 : index
    %c1_404 = arith.constant 1 : index
    %c0_405 = arith.constant 0 : index
    %477 = vector.load %arg10[%c0_402, %c3_403, %c1_404, %c0_405] : memref<2x14x14x32xf32, #tpu.memory_space<vmem>>, vector<2x8x8x32xf32>
    %478 = vector.shape_cast %477 : vector<2x8x8x32xf32> to vector<128x32xf32>
    %c22 = arith.constant 22 : index
    %c0_406 = arith.constant 0 : index
    %479 = vector.load %arg6[%c22, %c0_406] : memref<49x32xf32, #tpu.memory_space<vmem>>, vector<1x32xf32>
    %480 = vector.shape_cast %479 : vector<1x32xf32> to vector<32xf32>
    %481 = vector.shape_cast %480 : vector<32xf32> to vector<1x32xf32>
    %482 = vector.broadcast %481 : vector<1x32xf32> to vector<128x32xf32>
    %483 = arith.mulf %478, %482 : vector<128x32xf32>
    %484 = arith.addf %476, %483 : vector<128x32xf32>
    %c0_407 = arith.constant 0 : index
    %c3_408 = arith.constant 3 : index
    %c2_409 = arith.constant 2 : index
    %c0_410 = arith.constant 0 : index
    %485 = vector.load %arg10[%c0_407, %c3_408, %c2_409, %c0_410] : memref<2x14x14x32xf32, #tpu.memory_space<vmem>>, vector<2x8x8x32xf32>
    %486 = vector.shape_cast %485 : vector<2x8x8x32xf32> to vector<128x32xf32>
    %c23 = arith.constant 23 : index
    %c0_411 = arith.constant 0 : index
    %487 = vector.load %arg6[%c23, %c0_411] : memref<49x32xf32, #tpu.memory_space<vmem>>, vector<1x32xf32>
    %488 = vector.shape_cast %487 : vector<1x32xf32> to vector<32xf32>
    %489 = vector.shape_cast %488 : vector<32xf32> to vector<1x32xf32>
    %490 = vector.broadcast %489 : vector<1x32xf32> to vector<128x32xf32>
    %491 = arith.mulf %486, %490 : vector<128x32xf32>
    %492 = arith.addf %484, %491 : vector<128x32xf32>
    %c0_412 = arith.constant 0 : index
    %c3_413 = arith.constant 3 : index
    %c3_414 = arith.constant 3 : index
    %c0_415 = arith.constant 0 : index
    %493 = vector.load %arg10[%c0_412, %c3_413, %c3_414, %c0_415] : memref<2x14x14x32xf32, #tpu.memory_space<vmem>>, vector<2x8x8x32xf32>
    %494 = vector.shape_cast %493 : vector<2x8x8x32xf32> to vector<128x32xf32>
    %c24 = arith.constant 24 : index
    %c0_416 = arith.constant 0 : index
    %495 = vector.load %arg6[%c24, %c0_416] : memref<49x32xf32, #tpu.memory_space<vmem>>, vector<1x32xf32>
    %496 = vector.shape_cast %495 : vector<1x32xf32> to vector<32xf32>
    %497 = vector.shape_cast %496 : vector<32xf32> to vector<1x32xf32>
    %498 = vector.broadcast %497 : vector<1x32xf32> to vector<128x32xf32>
    %499 = arith.mulf %494, %498 : vector<128x32xf32>
    %500 = arith.addf %492, %499 : vector<128x32xf32>
    %c0_417 = arith.constant 0 : index
    %c3_418 = arith.constant 3 : index
    %c4_419 = arith.constant 4 : index
    %c0_420 = arith.constant 0 : index
    %501 = vector.load %arg10[%c0_417, %c3_418, %c4_419, %c0_420] : memref<2x14x14x32xf32, #tpu.memory_space<vmem>>, vector<2x8x8x32xf32>
    %502 = vector.shape_cast %501 : vector<2x8x8x32xf32> to vector<128x32xf32>
    %c25 = arith.constant 25 : index
    %c0_421 = arith.constant 0 : index
    %503 = vector.load %arg6[%c25, %c0_421] : memref<49x32xf32, #tpu.memory_space<vmem>>, vector<1x32xf32>
    %504 = vector.shape_cast %503 : vector<1x32xf32> to vector<32xf32>
    %505 = vector.shape_cast %504 : vector<32xf32> to vector<1x32xf32>
    %506 = vector.broadcast %505 : vector<1x32xf32> to vector<128x32xf32>
    %507 = arith.mulf %502, %506 : vector<128x32xf32>
    %508 = arith.addf %500, %507 : vector<128x32xf32>
    %c0_422 = arith.constant 0 : index
    %c3_423 = arith.constant 3 : index
    %c5_424 = arith.constant 5 : index
    %c0_425 = arith.constant 0 : index
    %509 = vector.load %arg10[%c0_422, %c3_423, %c5_424, %c0_425] : memref<2x14x14x32xf32, #tpu.memory_space<vmem>>, vector<2x8x8x32xf32>
    %510 = vector.shape_cast %509 : vector<2x8x8x32xf32> to vector<128x32xf32>
    %c26 = arith.constant 26 : index
    %c0_426 = arith.constant 0 : index
    %511 = vector.load %arg6[%c26, %c0_426] : memref<49x32xf32, #tpu.memory_space<vmem>>, vector<1x32xf32>
    %512 = vector.shape_cast %511 : vector<1x32xf32> to vector<32xf32>
    %513 = vector.shape_cast %512 : vector<32xf32> to vector<1x32xf32>
    %514 = vector.broadcast %513 : vector<1x32xf32> to vector<128x32xf32>
    %515 = arith.mulf %510, %514 : vector<128x32xf32>
    %516 = arith.addf %508, %515 : vector<128x32xf32>
    %c0_427 = arith.constant 0 : index
    %c3_428 = arith.constant 3 : index
    %c6_429 = arith.constant 6 : index
    %c0_430 = arith.constant 0 : index
    %517 = vector.load %arg10[%c0_427, %c3_428, %c6_429, %c0_430] : memref<2x14x14x32xf32, #tpu.memory_space<vmem>>, vector<2x8x8x32xf32>
    %518 = vector.shape_cast %517 : vector<2x8x8x32xf32> to vector<128x32xf32>
    %c27 = arith.constant 27 : index
    %c0_431 = arith.constant 0 : index
    %519 = vector.load %arg6[%c27, %c0_431] : memref<49x32xf32, #tpu.memory_space<vmem>>, vector<1x32xf32>
    %520 = vector.shape_cast %519 : vector<1x32xf32> to vector<32xf32>
    %521 = vector.shape_cast %520 : vector<32xf32> to vector<1x32xf32>
    %522 = vector.broadcast %521 : vector<1x32xf32> to vector<128x32xf32>
    %523 = arith.mulf %518, %522 : vector<128x32xf32>
    %524 = arith.addf %516, %523 : vector<128x32xf32>
    %c0_432 = arith.constant 0 : index
    %c4_433 = arith.constant 4 : index
    %c0_434 = arith.constant 0 : index
    %c0_435 = arith.constant 0 : index
    %525 = vector.load %arg10[%c0_432, %c4_433, %c0_434, %c0_435] : memref<2x14x14x32xf32, #tpu.memory_space<vmem>>, vector<2x8x8x32xf32>
    %526 = vector.shape_cast %525 : vector<2x8x8x32xf32> to vector<128x32xf32>
    %c28 = arith.constant 28 : index
    %c0_436 = arith.constant 0 : index
    %527 = vector.load %arg6[%c28, %c0_436] : memref<49x32xf32, #tpu.memory_space<vmem>>, vector<1x32xf32>
    %528 = vector.shape_cast %527 : vector<1x32xf32> to vector<32xf32>
    %529 = vector.shape_cast %528 : vector<32xf32> to vector<1x32xf32>
    %530 = vector.broadcast %529 : vector<1x32xf32> to vector<128x32xf32>
    %531 = arith.mulf %526, %530 : vector<128x32xf32>
    %532 = arith.addf %524, %531 : vector<128x32xf32>
    %c0_437 = arith.constant 0 : index
    %c4_438 = arith.constant 4 : index
    %c1_439 = arith.constant 1 : index
    %c0_440 = arith.constant 0 : index
    %533 = vector.load %arg10[%c0_437, %c4_438, %c1_439, %c0_440] : memref<2x14x14x32xf32, #tpu.memory_space<vmem>>, vector<2x8x8x32xf32>
    %534 = vector.shape_cast %533 : vector<2x8x8x32xf32> to vector<128x32xf32>
    %c29 = arith.constant 29 : index
    %c0_441 = arith.constant 0 : index
    %535 = vector.load %arg6[%c29, %c0_441] : memref<49x32xf32, #tpu.memory_space<vmem>>, vector<1x32xf32>
    %536 = vector.shape_cast %535 : vector<1x32xf32> to vector<32xf32>
    %537 = vector.shape_cast %536 : vector<32xf32> to vector<1x32xf32>
    %538 = vector.broadcast %537 : vector<1x32xf32> to vector<128x32xf32>
    %539 = arith.mulf %534, %538 : vector<128x32xf32>
    %540 = arith.addf %532, %539 : vector<128x32xf32>
    %c0_442 = arith.constant 0 : index
    %c4_443 = arith.constant 4 : index
    %c2_444 = arith.constant 2 : index
    %c0_445 = arith.constant 0 : index
    %541 = vector.load %arg10[%c0_442, %c4_443, %c2_444, %c0_445] : memref<2x14x14x32xf32, #tpu.memory_space<vmem>>, vector<2x8x8x32xf32>
    %542 = vector.shape_cast %541 : vector<2x8x8x32xf32> to vector<128x32xf32>
    %c30 = arith.constant 30 : index
    %c0_446 = arith.constant 0 : index
    %543 = vector.load %arg6[%c30, %c0_446] : memref<49x32xf32, #tpu.memory_space<vmem>>, vector<1x32xf32>
    %544 = vector.shape_cast %543 : vector<1x32xf32> to vector<32xf32>
    %545 = vector.shape_cast %544 : vector<32xf32> to vector<1x32xf32>
    %546 = vector.broadcast %545 : vector<1x32xf32> to vector<128x32xf32>
    %547 = arith.mulf %542, %546 : vector<128x32xf32>
    %548 = arith.addf %540, %547 : vector<128x32xf32>
    %c0_447 = arith.constant 0 : index
    %c4_448 = arith.constant 4 : index
    %c3_449 = arith.constant 3 : index
    %c0_450 = arith.constant 0 : index
    %549 = vector.load %arg10[%c0_447, %c4_448, %c3_449, %c0_450] : memref<2x14x14x32xf32, #tpu.memory_space<vmem>>, vector<2x8x8x32xf32>
    %550 = vector.shape_cast %549 : vector<2x8x8x32xf32> to vector<128x32xf32>
    %c31 = arith.constant 31 : index
    %c0_451 = arith.constant 0 : index
    %551 = vector.load %arg6[%c31, %c0_451] : memref<49x32xf32, #tpu.memory_space<vmem>>, vector<1x32xf32>
    %552 = vector.shape_cast %551 : vector<1x32xf32> to vector<32xf32>
    %553 = vector.shape_cast %552 : vector<32xf32> to vector<1x32xf32>
    %554 = vector.broadcast %553 : vector<1x32xf32> to vector<128x32xf32>
    %555 = arith.mulf %550, %554 : vector<128x32xf32>
    %556 = arith.addf %548, %555 : vector<128x32xf32>
    %c0_452 = arith.constant 0 : index
    %c4_453 = arith.constant 4 : index
    %c4_454 = arith.constant 4 : index
    %c0_455 = arith.constant 0 : index
    %557 = vector.load %arg10[%c0_452, %c4_453, %c4_454, %c0_455] : memref<2x14x14x32xf32, #tpu.memory_space<vmem>>, vector<2x8x8x32xf32>
    %558 = vector.shape_cast %557 : vector<2x8x8x32xf32> to vector<128x32xf32>
    %c32 = arith.constant 32 : index
    %c0_456 = arith.constant 0 : index
    %559 = vector.load %arg6[%c32, %c0_456] : memref<49x32xf32, #tpu.memory_space<vmem>>, vector<1x32xf32>
    %560 = vector.shape_cast %559 : vector<1x32xf32> to vector<32xf32>
    %561 = vector.shape_cast %560 : vector<32xf32> to vector<1x32xf32>
    %562 = vector.broadcast %561 : vector<1x32xf32> to vector<128x32xf32>
    %563 = arith.mulf %558, %562 : vector<128x32xf32>
    %564 = arith.addf %556, %563 : vector<128x32xf32>
    %c0_457 = arith.constant 0 : index
    %c4_458 = arith.constant 4 : index
    %c5_459 = arith.constant 5 : index
    %c0_460 = arith.constant 0 : index
    %565 = vector.load %arg10[%c0_457, %c4_458, %c5_459, %c0_460] : memref<2x14x14x32xf32, #tpu.memory_space<vmem>>, vector<2x8x8x32xf32>
    %566 = vector.shape_cast %565 : vector<2x8x8x32xf32> to vector<128x32xf32>
    %c33 = arith.constant 33 : index
    %c0_461 = arith.constant 0 : index
    %567 = vector.load %arg6[%c33, %c0_461] : memref<49x32xf32, #tpu.memory_space<vmem>>, vector<1x32xf32>
    %568 = vector.shape_cast %567 : vector<1x32xf32> to vector<32xf32>
    %569 = vector.shape_cast %568 : vector<32xf32> to vector<1x32xf32>
    %570 = vector.broadcast %569 : vector<1x32xf32> to vector<128x32xf32>
    %571 = arith.mulf %566, %570 : vector<128x32xf32>
    %572 = arith.addf %564, %571 : vector<128x32xf32>
    %c0_462 = arith.constant 0 : index
    %c4_463 = arith.constant 4 : index
    %c6_464 = arith.constant 6 : index
    %c0_465 = arith.constant 0 : index
    %573 = vector.load %arg10[%c0_462, %c4_463, %c6_464, %c0_465] : memref<2x14x14x32xf32, #tpu.memory_space<vmem>>, vector<2x8x8x32xf32>
    %574 = vector.shape_cast %573 : vector<2x8x8x32xf32> to vector<128x32xf32>
    %c34 = arith.constant 34 : index
    %c0_466 = arith.constant 0 : index
    %575 = vector.load %arg6[%c34, %c0_466] : memref<49x32xf32, #tpu.memory_space<vmem>>, vector<1x32xf32>
    %576 = vector.shape_cast %575 : vector<1x32xf32> to vector<32xf32>
    %577 = vector.shape_cast %576 : vector<32xf32> to vector<1x32xf32>
    %578 = vector.broadcast %577 : vector<1x32xf32> to vector<128x32xf32>
    %579 = arith.mulf %574, %578 : vector<128x32xf32>
    %580 = arith.addf %572, %579 : vector<128x32xf32>
    %c0_467 = arith.constant 0 : index
    %c5_468 = arith.constant 5 : index
    %c0_469 = arith.constant 0 : index
    %c0_470 = arith.constant 0 : index
    %581 = vector.load %arg10[%c0_467, %c5_468, %c0_469, %c0_470] : memref<2x14x14x32xf32, #tpu.memory_space<vmem>>, vector<2x8x8x32xf32>
    %582 = vector.shape_cast %581 : vector<2x8x8x32xf32> to vector<128x32xf32>
    %c35 = arith.constant 35 : index
    %c0_471 = arith.constant 0 : index
    %583 = vector.load %arg6[%c35, %c0_471] : memref<49x32xf32, #tpu.memory_space<vmem>>, vector<1x32xf32>
    %584 = vector.shape_cast %583 : vector<1x32xf32> to vector<32xf32>
    %585 = vector.shape_cast %584 : vector<32xf32> to vector<1x32xf32>
    %586 = vector.broadcast %585 : vector<1x32xf32> to vector<128x32xf32>
    %587 = arith.mulf %582, %586 : vector<128x32xf32>
    %588 = arith.addf %580, %587 : vector<128x32xf32>
    %c0_472 = arith.constant 0 : index
    %c5_473 = arith.constant 5 : index
    %c1_474 = arith.constant 1 : index
    %c0_475 = arith.constant 0 : index
    %589 = vector.load %arg10[%c0_472, %c5_473, %c1_474, %c0_475] : memref<2x14x14x32xf32, #tpu.memory_space<vmem>>, vector<2x8x8x32xf32>
    %590 = vector.shape_cast %589 : vector<2x8x8x32xf32> to vector<128x32xf32>
    %c36 = arith.constant 36 : index
    %c0_476 = arith.constant 0 : index
    %591 = vector.load %arg6[%c36, %c0_476] : memref<49x32xf32, #tpu.memory_space<vmem>>, vector<1x32xf32>
    %592 = vector.shape_cast %591 : vector<1x32xf32> to vector<32xf32>
    %593 = vector.shape_cast %592 : vector<32xf32> to vector<1x32xf32>
    %594 = vector.broadcast %593 : vector<1x32xf32> to vector<128x32xf32>
    %595 = arith.mulf %590, %594 : vector<128x32xf32>
    %596 = arith.addf %588, %595 : vector<128x32xf32>
    %c0_477 = arith.constant 0 : index
    %c5_478 = arith.constant 5 : index
    %c2_479 = arith.constant 2 : index
    %c0_480 = arith.constant 0 : index
    %597 = vector.load %arg10[%c0_477, %c5_478, %c2_479, %c0_480] : memref<2x14x14x32xf32, #tpu.memory_space<vmem>>, vector<2x8x8x32xf32>
    %598 = vector.shape_cast %597 : vector<2x8x8x32xf32> to vector<128x32xf32>
    %c37 = arith.constant 37 : index
    %c0_481 = arith.constant 0 : index
    %599 = vector.load %arg6[%c37, %c0_481] : memref<49x32xf32, #tpu.memory_space<vmem>>, vector<1x32xf32>
    %600 = vector.shape_cast %599 : vector<1x32xf32> to vector<32xf32>
    %601 = vector.shape_cast %600 : vector<32xf32> to vector<1x32xf32>
    %602 = vector.broadcast %601 : vector<1x32xf32> to vector<128x32xf32>
    %603 = arith.mulf %598, %602 : vector<128x32xf32>
    %604 = arith.addf %596, %603 : vector<128x32xf32>
    %c0_482 = arith.constant 0 : index
    %c5_483 = arith.constant 5 : index
    %c3_484 = arith.constant 3 : index
    %c0_485 = arith.constant 0 : index
    %605 = vector.load %arg10[%c0_482, %c5_483, %c3_484, %c0_485] : memref<2x14x14x32xf32, #tpu.memory_space<vmem>>, vector<2x8x8x32xf32>
    %606 = vector.shape_cast %605 : vector<2x8x8x32xf32> to vector<128x32xf32>
    %c38 = arith.constant 38 : index
    %c0_486 = arith.constant 0 : index
    %607 = vector.load %arg6[%c38, %c0_486] : memref<49x32xf32, #tpu.memory_space<vmem>>, vector<1x32xf32>
    %608 = vector.shape_cast %607 : vector<1x32xf32> to vector<32xf32>
    %609 = vector.shape_cast %608 : vector<32xf32> to vector<1x32xf32>
    %610 = vector.broadcast %609 : vector<1x32xf32> to vector<128x32xf32>
    %611 = arith.mulf %606, %610 : vector<128x32xf32>
    %612 = arith.addf %604, %611 : vector<128x32xf32>
    %c0_487 = arith.constant 0 : index
    %c5_488 = arith.constant 5 : index
    %c4_489 = arith.constant 4 : index
    %c0_490 = arith.constant 0 : index
    %613 = vector.load %arg10[%c0_487, %c5_488, %c4_489, %c0_490] : memref<2x14x14x32xf32, #tpu.memory_space<vmem>>, vector<2x8x8x32xf32>
    %614 = vector.shape_cast %613 : vector<2x8x8x32xf32> to vector<128x32xf32>
    %c39 = arith.constant 39 : index
    %c0_491 = arith.constant 0 : index
    %615 = vector.load %arg6[%c39, %c0_491] : memref<49x32xf32, #tpu.memory_space<vmem>>, vector<1x32xf32>
    %616 = vector.shape_cast %615 : vector<1x32xf32> to vector<32xf32>
    %617 = vector.shape_cast %616 : vector<32xf32> to vector<1x32xf32>
    %618 = vector.broadcast %617 : vector<1x32xf32> to vector<128x32xf32>
    %619 = arith.mulf %614, %618 : vector<128x32xf32>
    %620 = arith.addf %612, %619 : vector<128x32xf32>
    %c0_492 = arith.constant 0 : index
    %c5_493 = arith.constant 5 : index
    %c5_494 = arith.constant 5 : index
    %c0_495 = arith.constant 0 : index
    %621 = vector.load %arg10[%c0_492, %c5_493, %c5_494, %c0_495] : memref<2x14x14x32xf32, #tpu.memory_space<vmem>>, vector<2x8x8x32xf32>
    %622 = vector.shape_cast %621 : vector<2x8x8x32xf32> to vector<128x32xf32>
    %c40 = arith.constant 40 : index
    %c0_496 = arith.constant 0 : index
    %623 = vector.load %arg6[%c40, %c0_496] : memref<49x32xf32, #tpu.memory_space<vmem>>, vector<1x32xf32>
    %624 = vector.shape_cast %623 : vector<1x32xf32> to vector<32xf32>
    %625 = vector.shape_cast %624 : vector<32xf32> to vector<1x32xf32>
    %626 = vector.broadcast %625 : vector<1x32xf32> to vector<128x32xf32>
    %627 = arith.mulf %622, %626 : vector<128x32xf32>
    %628 = arith.addf %620, %627 : vector<128x32xf32>
    %c0_497 = arith.constant 0 : index
    %c5_498 = arith.constant 5 : index
    %c6_499 = arith.constant 6 : index
    %c0_500 = arith.constant 0 : index
    %629 = vector.load %arg10[%c0_497, %c5_498, %c6_499, %c0_500] : memref<2x14x14x32xf32, #tpu.memory_space<vmem>>, vector<2x8x8x32xf32>
    %630 = vector.shape_cast %629 : vector<2x8x8x32xf32> to vector<128x32xf32>
    %c41 = arith.constant 41 : index
    %c0_501 = arith.constant 0 : index
    %631 = vector.load %arg6[%c41, %c0_501] : memref<49x32xf32, #tpu.memory_space<vmem>>, vector<1x32xf32>
    %632 = vector.shape_cast %631 : vector<1x32xf32> to vector<32xf32>
    %633 = vector.shape_cast %632 : vector<32xf32> to vector<1x32xf32>
    %634 = vector.broadcast %633 : vector<1x32xf32> to vector<128x32xf32>
    %635 = arith.mulf %630, %634 : vector<128x32xf32>
    %636 = arith.addf %628, %635 : vector<128x32xf32>
    %c0_502 = arith.constant 0 : index
    %c6_503 = arith.constant 6 : index
    %c0_504 = arith.constant 0 : index
    %c0_505 = arith.constant 0 : index
    %637 = vector.load %arg10[%c0_502, %c6_503, %c0_504, %c0_505] : memref<2x14x14x32xf32, #tpu.memory_space<vmem>>, vector<2x8x8x32xf32>
    %638 = vector.shape_cast %637 : vector<2x8x8x32xf32> to vector<128x32xf32>
    %c42 = arith.constant 42 : index
    %c0_506 = arith.constant 0 : index
    %639 = vector.load %arg6[%c42, %c0_506] : memref<49x32xf32, #tpu.memory_space<vmem>>, vector<1x32xf32>
    %640 = vector.shape_cast %639 : vector<1x32xf32> to vector<32xf32>
    %641 = vector.shape_cast %640 : vector<32xf32> to vector<1x32xf32>
    %642 = vector.broadcast %641 : vector<1x32xf32> to vector<128x32xf32>
    %643 = arith.mulf %638, %642 : vector<128x32xf32>
    %644 = arith.addf %636, %643 : vector<128x32xf32>
    %c0_507 = arith.constant 0 : index
    %c6_508 = arith.constant 6 : index
    %c1_509 = arith.constant 1 : index
    %c0_510 = arith.constant 0 : index
    %645 = vector.load %arg10[%c0_507, %c6_508, %c1_509, %c0_510] : memref<2x14x14x32xf32, #tpu.memory_space<vmem>>, vector<2x8x8x32xf32>
    %646 = vector.shape_cast %645 : vector<2x8x8x32xf32> to vector<128x32xf32>
    %c43 = arith.constant 43 : index
    %c0_511 = arith.constant 0 : index
    %647 = vector.load %arg6[%c43, %c0_511] : memref<49x32xf32, #tpu.memory_space<vmem>>, vector<1x32xf32>
    %648 = vector.shape_cast %647 : vector<1x32xf32> to vector<32xf32>
    %649 = vector.shape_cast %648 : vector<32xf32> to vector<1x32xf32>
    %650 = vector.broadcast %649 : vector<1x32xf32> to vector<128x32xf32>
    %651 = arith.mulf %646, %650 : vector<128x32xf32>
    %652 = arith.addf %644, %651 : vector<128x32xf32>
    %c0_512 = arith.constant 0 : index
    %c6_513 = arith.constant 6 : index
    %c2_514 = arith.constant 2 : index
    %c0_515 = arith.constant 0 : index
    %653 = vector.load %arg10[%c0_512, %c6_513, %c2_514, %c0_515] : memref<2x14x14x32xf32, #tpu.memory_space<vmem>>, vector<2x8x8x32xf32>
    %654 = vector.shape_cast %653 : vector<2x8x8x32xf32> to vector<128x32xf32>
    %c44 = arith.constant 44 : index
    %c0_516 = arith.constant 0 : index
    %655 = vector.load %arg6[%c44, %c0_516] : memref<49x32xf32, #tpu.memory_space<vmem>>, vector<1x32xf32>
    %656 = vector.shape_cast %655 : vector<1x32xf32> to vector<32xf32>
    %657 = vector.shape_cast %656 : vector<32xf32> to vector<1x32xf32>
    %658 = vector.broadcast %657 : vector<1x32xf32> to vector<128x32xf32>
    %659 = arith.mulf %654, %658 : vector<128x32xf32>
    %660 = arith.addf %652, %659 : vector<128x32xf32>
    %c0_517 = arith.constant 0 : index
    %c6_518 = arith.constant 6 : index
    %c3_519 = arith.constant 3 : index
    %c0_520 = arith.constant 0 : index
    %661 = vector.load %arg10[%c0_517, %c6_518, %c3_519, %c0_520] : memref<2x14x14x32xf32, #tpu.memory_space<vmem>>, vector<2x8x8x32xf32>
    %662 = vector.shape_cast %661 : vector<2x8x8x32xf32> to vector<128x32xf32>
    %c45 = arith.constant 45 : index
    %c0_521 = arith.constant 0 : index
    %663 = vector.load %arg6[%c45, %c0_521] : memref<49x32xf32, #tpu.memory_space<vmem>>, vector<1x32xf32>
    %664 = vector.shape_cast %663 : vector<1x32xf32> to vector<32xf32>
    %665 = vector.shape_cast %664 : vector<32xf32> to vector<1x32xf32>
    %666 = vector.broadcast %665 : vector<1x32xf32> to vector<128x32xf32>
    %667 = arith.mulf %662, %666 : vector<128x32xf32>
    %668 = arith.addf %660, %667 : vector<128x32xf32>
    %c0_522 = arith.constant 0 : index
    %c6_523 = arith.constant 6 : index
    %c4_524 = arith.constant 4 : index
    %c0_525 = arith.constant 0 : index
    %669 = vector.load %arg10[%c0_522, %c6_523, %c4_524, %c0_525] : memref<2x14x14x32xf32, #tpu.memory_space<vmem>>, vector<2x8x8x32xf32>
    %670 = vector.shape_cast %669 : vector<2x8x8x32xf32> to vector<128x32xf32>
    %c46 = arith.constant 46 : index
    %c0_526 = arith.constant 0 : index
    %671 = vector.load %arg6[%c46, %c0_526] : memref<49x32xf32, #tpu.memory_space<vmem>>, vector<1x32xf32>
    %672 = vector.shape_cast %671 : vector<1x32xf32> to vector<32xf32>
    %673 = vector.shape_cast %672 : vector<32xf32> to vector<1x32xf32>
    %674 = vector.broadcast %673 : vector<1x32xf32> to vector<128x32xf32>
    %675 = arith.mulf %670, %674 : vector<128x32xf32>
    %676 = arith.addf %668, %675 : vector<128x32xf32>
    %c0_527 = arith.constant 0 : index
    %c6_528 = arith.constant 6 : index
    %c5_529 = arith.constant 5 : index
    %c0_530 = arith.constant 0 : index
    %677 = vector.load %arg10[%c0_527, %c6_528, %c5_529, %c0_530] : memref<2x14x14x32xf32, #tpu.memory_space<vmem>>, vector<2x8x8x32xf32>
    %678 = vector.shape_cast %677 : vector<2x8x8x32xf32> to vector<128x32xf32>
    %c47 = arith.constant 47 : index
    %c0_531 = arith.constant 0 : index
    %679 = vector.load %arg6[%c47, %c0_531] : memref<49x32xf32, #tpu.memory_space<vmem>>, vector<1x32xf32>
    %680 = vector.shape_cast %679 : vector<1x32xf32> to vector<32xf32>
    %681 = vector.shape_cast %680 : vector<32xf32> to vector<1x32xf32>
    %682 = vector.broadcast %681 : vector<1x32xf32> to vector<128x32xf32>
    %683 = arith.mulf %678, %682 : vector<128x32xf32>
    %684 = arith.addf %676, %683 : vector<128x32xf32>
    %c0_532 = arith.constant 0 : index
    %c6_533 = arith.constant 6 : index
    %c6_534 = arith.constant 6 : index
    %c0_535 = arith.constant 0 : index
    %685 = vector.load %arg10[%c0_532, %c6_533, %c6_534, %c0_535] : memref<2x14x14x32xf32, #tpu.memory_space<vmem>>, vector<2x8x8x32xf32>
    %686 = vector.shape_cast %685 : vector<2x8x8x32xf32> to vector<128x32xf32>
    %c48 = arith.constant 48 : index
    %c0_536 = arith.constant 0 : index
    %687 = vector.load %arg6[%c48, %c0_536] : memref<49x32xf32, #tpu.memory_space<vmem>>, vector<1x32xf32>
    %688 = vector.shape_cast %687 : vector<1x32xf32> to vector<32xf32>
    %689 = vector.shape_cast %688 : vector<32xf32> to vector<1x32xf32>
    %690 = vector.broadcast %689 : vector<1x32xf32> to vector<128x32xf32>
    %691 = arith.mulf %686, %690 : vector<128x32xf32>
    %692 = arith.addf %684, %691 : vector<128x32xf32>
    %cst_537 = arith.constant dense<0.000000e+00> : vector<128xf32>
    %693 = vector.multi_reduction <add>, %692, %cst_537 [1] : vector<128x32xf32> to vector<128xf32>
    %694 = vector.shape_cast %693 : vector<128xf32> to vector<128x1xf32>
    %695 = math.tanh %694 : vector<128x1xf32>
    %cst_538 = arith.constant 1.000000e+00 : f32
    %696 = vector.broadcast %cst_538 : f32 to vector<128x1xf32>
    %697 = arith.addf %696, %695 : vector<128x1xf32>
    %cst_539 = arith.constant 5.000000e-01 : f32
    %698 = vector.broadcast %cst_539 : f32 to vector<128x1xf32>
    %699 = arith.mulf %698, %697 : vector<128x1xf32>
    %700 = vector.shape_cast %0 : vector<2x8x8x32xf32> to vector<128x32xf32>
    %701 = arith.subf %295, %700 : vector<128x32xf32>
    %702 = vector.broadcast %699 : vector<128x1xf32> to vector<128x32xf32>
    %703 = arith.mulf %702, %701 : vector<128x32xf32>
    %704 = arith.addf %700, %703 : vector<128x32xf32>
    %705 = vector.shape_cast %704 : vector<128x32xf32> to vector<2x8x8x32xf32>
    %c0_540 = arith.constant 0 : index
    %c0_541 = arith.constant 0 : index
    %c0_542 = arith.constant 0 : index
    %c0_543 = arith.constant 0 : index
    %706 = vector.load %arg7[%c0_540, %c0_541, %c0_542, %c0_543] : memref<2x8x8x32xf32, #tpu.memory_space<vmem>>, vector<2x8x8x32xf32>
    tpu.vector_store %arg7[%c0_540, %c0_541, %c0_542, %c0_543], %705 {strides = array<i32>} : memref<2x8x8x32xf32, #tpu.memory_space<vmem>>, vector<2x8x8x32xf32>,
    return
  }
}

</mosaic_0001>

<llo_original>
// kernel: transformer_forward.1
$region0: #{transformer_forward.1}
  #allocation0 [shape = 'u32[]', space=smem, size = 0x4, offset = 0x4, fixed_abs, tag = 'smem constant byte address 0x4 - core index']
  #allocation1 [shape = 'u32[144,128]{1,0:T(1,128)}', space=vmem, size = 0x12000, scoped, tag = 'internal scratch']
  #allocation2 [shape = 'f32[2,10,10,40]{3,2,1,0:T(8,128)}', space=vmem, size = 0x28000, scoped, tag = 'scratch operand']
  #allocation3 [shape = 'f32[2,10,10,32]{3,2,1,0:T(8,128)}', space=vmem, size = 0x28000, scoped, tag = 'scratch operand']
  #allocation4 [shape = 'f32[2,14,14,32]{3,2,1,0:T(8,128)}', space=vmem, size = 0x38000, scoped, tag = 'scratch operand']
  %s0 = inlined_call_operand.vmem [shape: f32[2,8,8,32], index: 0, kind: input, shape index: {}]
  %s1 = inlined_call_operand.vmem [shape: f32[2,5], index: 1, kind: input, shape index: {}]
  %s2 = inlined_call_operand.vmem [shape: bf16[360,32], index: 2, kind: input, shape index: {}]
  %s3 = inlined_call_operand.vmem [shape: bf16[4,288,32], index: 3, kind: input, shape index: {}]
  %s4 = inlined_call_operand.vmem [shape: f32[5,32], index: 4, kind: input, shape index: {}]
  %s5 = inlined_call_operand.vmem [shape: f32[5,32], index: 5, kind: input, shape index: {}]
  %s6 = inlined_call_operand.vmem [shape: f32[49,32], index: 6, kind: input, shape index: {}]
  %s7 = inlined_call_operand.hbm [shape: f32[2,8,8,32], index: 7, kind: output, shape index: {}]
  %s8 = sld [smem:[#allocation0]]
  $region38: #{transformer_forward.1} parent=0
    _
  %s10 = ssub.s32 1, %s8
  %s11 = scalar_select 0, %s10, %s8
  $region1: #{transformer_forward.1} parent=0
    #allocation5 [shape = 'u8[65536]{0}', space=vmem, size = 0x10000, scoped, tag = 'output window, operand 0, single buffered']
    #allocation6 [shape = 's32[1]{0}', space=sflag, size = 0x4, scoped, tag = 'scoped memory for transformer_forward.1']
    %12 = vsyncpa [#allocation6], 0
    // Predicated region
    $region2: #{transformer_forward.1} parent=1 // pred_check
      _
    $region3: #{transformer_forward.1} parent=1 // pred_check_branch
      %14 = sbr.rel (0) target = $region5
    $region4: #{transformer_forward.1} parent=1 // pred_region
      _
    $region5: #{transformer_forward.1} parent=1 // pred_fallthru
      _
    // Predicated region
    $region6: #{transformer_forward.1} parent=1 // pred_check
      _
    $region7: #{transformer_forward.1} parent=1 // pred_check_branch
      %16 = sbr.rel (0) target = $region9
    $region8: #{transformer_forward.1} parent=1 // pred_region
      _
    $region9: #{transformer_forward.1} parent=1 // pred_fallthru
      _
    // Predicated region
    $region10: #{transformer_forward.1} parent=1 // pred_check
      _
    $region11: #{transformer_forward.1} parent=1 // pred_check_branch
      %18 = sbr.rel (0) target = $region13
    $region12: #{transformer_forward.1} parent=1 // pred_region
      _
    $region13: #{transformer_forward.1} parent=1 // pred_fallthru
      _
    // Predicated region
    $region14: #{transformer_forward.1} parent=1 // pred_check
      _
    $region15: #{transformer_forward.1} parent=1 // pred_check_branch
      %20 = sbr.rel (0) target = $region17
    $region16: #{transformer_forward.1} parent=1 // pred_region
      _
    $region17: #{transformer_forward.1} parent=1 // pred_fallthru
      _
    // Predicated region
    $region18: #{transformer_forward.1} parent=1 // pred_check
      _
    $region19: #{transformer_forward.1} parent=1 // pred_check_branch
      %22 = sbr.rel (0) target = $region21
    $region20: #{transformer_forward.1} parent=1 // pred_region
      _
    $region21: #{transformer_forward.1} parent=1 // pred_fallthru
      _
    // Predicated region
    $region22: #{transformer_forward.1} parent=1 // pred_check
      _
    $region23: #{transformer_forward.1} parent=1 // pred_check_branch
      %24 = sbr.rel (0) target = $region25
    $region24: #{transformer_forward.1} parent=1 // pred_region
      _
    $region25: #{transformer_forward.1} parent=1 // pred_fallthru
      _
    // Predicated region
    $region26: #{transformer_forward.1} parent=1 // pred_check
      _
    $region27: #{transformer_forward.1} parent=1 // pred_check_branch
      %26 = sbr.rel (0) target = $region29
    $region28: #{transformer_forward.1} parent=1 // pred_region
      _
    $region29: #{transformer_forward.1} parent=1 // pred_fallthru
      _
    %v28 = vld [vmem:[%s0] sm:$0xff]
    %v29 = vld [vmem:[%s0 + $0x8] sm:$0xff]
    %v30 = vld [vmem:[%s0 + $0x10] sm:$0xff]
    %v31 = vld [vmem:[%s0 + $0x18] sm:$0xff]
    %v32 = vld [vmem:[%s0 + $0x20] sm:$0xff]
    %v33 = vld [vmem:[%s0 + $0x28] sm:$0xff]
    %v34 = vld [vmem:[%s0 + $0x30] sm:$0xff]
    %v35 = vld [vmem:[%s0 + $0x38] sm:$0xff]
    %v36 = vld [vmem:[%s0 + $0x40] sm:$0xff]
    %v37 = vld [vmem:[%s0 + $0x48] sm:$0xff]
    %v38 = vld [vmem:[%s0 + $0x50] sm:$0xff]
    %v39 = vld [vmem:[%s0 + $0x58] sm:$0xff]
    %v40 = vld [vmem:[%s0 + $0x60] sm:$0xff]
    %v41 = vld [vmem:[%s0 + $0x68] sm:$0xff]
    %v42 = vld [vmem:[%s0 + $0x70] sm:$0xff]
    %v43 = vld [vmem:[%s0 + $0x78] sm:$0xff]
    %v44 = vld [vmem:[%s1] sm:$0x3]
    %v47 = vunpack.c.l.s4 1966171168
    %v48 = vunpack.c.0.s8 %v47
    %v49 = vlaneseq
    %v50 = vshrl.u32 %v49, 7
    %v51 = vsub.s32 %v48, %v50
    %v52 = vrot.slane %v44, %v51
    %v53 = vcombine.high %v52, %v52
    %v55 = vunpack.c.l.s4 1966171168
    %v56 = vunpack.c.0.s8 %v55
    %v57 = vlaneseq
    %v58 = vshrl.u32 %v57, 7
    %v59 = vsub.s32 %v56, %v58
    %v60 = vrot.slane %v52, %v59
    %v62 = vunpack.c.l.s4 1966171168
    %v63 = vunpack.c.0.s8 %v62
    %v64 = vlaneseq
    %v65 = vshrl.u32 %v64, 7
    %v66 = vsub.s32 %v63, %v65
    %v67 = vrot.slane %v53, %v66
    %v68 = vlaneseq
    %v69 = vshrl.u32 %v68, 7
    %v70 = vsub.s32 0, %v69
    %v71 = vrot.slane %v60, %v70
    %v72 = vlaneseq
    %v73 = vshrl.u32 %v72, 7
    %v74 = vsub.s32 0, %v73
    %v75 = vrot.slane %v67, %v74
    %76 = vrot.lane.b32.xlu0 %v71, 32
    %v77 = vpop.permute.xlu0 %76
    %78 = vrot.lane.b32.xlu0 %v75, 32
    %v79 = vpop.permute.xlu0 %78
    %vm82 = vcmask 261120
    %v83 = vsel %vm82, %v28, %v77
    %v84 = vsel %vm82, %v29, %v77
    %v85 = vsel %vm82, %v30, %v77
    %v86 = vsel %vm82, %v31, %v77
    %v87 = vsel %vm82, %v32, %v77
    %v88 = vsel %vm82, %v33, %v77
    %v89 = vsel %vm82, %v34, %v77
    %v90 = vsel %vm82, %v35, %v77
    %v91 = vsel %vm82, %v36, %v79
    %v92 = vsel %vm82, %v37, %v79
    %v93 = vsel %vm82, %v38, %v79
    %v94 = vsel %vm82, %v39, %v79
    %v95 = vsel %vm82, %v40, %v79
    %v96 = vsel %vm82, %v41, %v79
    %v97 = vsel %vm82, %v42, %v79
    %v98 = vsel %vm82, %v43, %v79
    %vm99 = vcmask 326656
    %100 = vst.msk [vmem:[#allocation2] sm:$0xff] %vm99, 0.0
    %vm101 = vcmask 320512
    %102 = vst.msk [vmem:[#allocation2 + $0x8] sm:$0x3] %vm101, 0.0
    %103 = vst.msk [vmem:[#allocation2 + $0x10] sm:$0xff] %vm99, 0.0
    %104 = vst.msk [vmem:[#allocation2 + $0x18] sm:$0x3] %vm101, 0.0
    %105 = vst.msk [vmem:[#allocation2 + $0x20] sm:$0xff] %vm99, 0.0
    %106 = vst.msk [vmem:[#allocation2 + $0x28] sm:$0x3] %vm101, 0.0
    %107 = vst.msk [vmem:[#allocation2 + $0x30] sm:$0xff] %vm99, 0.0
    %108 = vst.msk [vmem:[#allocation2 + $0x38] sm:$0x3] %vm101, 0.0
    %109 = vst.msk [vmem:[#allocation2 + $0x40] sm:$0xff] %vm99, 0.0
    %110 = vst.msk [vmem:[#allocation2 + $0x48] sm:$0x3] %vm101, 0.0
    %111 = vst.msk [vmem:[#allocation2 + $0x50] sm:$0xff] %vm99, 0.0
    %112 = vst.msk [vmem:[#allocation2 + $0x58] sm:$0x3] %vm101, 0.0
    %113 = vst.msk [vmem:[#allocation2 + $0x60] sm:$0xff] %vm99, 0.0
    %114 = vst.msk [vmem:[#allocation2 + $0x68] sm:$0x3] %vm101, 0.0
    %115 = vst.msk [vmem:[#allocation2 + $0x70] sm:$0xff] %vm99, 0.0
    %116 = vst.msk [vmem:[#allocation2 + $0x78] sm:$0x3] %vm101, 0.0
    %117 = vst.msk [vmem:[#allocation2 + $0x80] sm:$0xff] %vm99, 0.0
    %118 = vst.msk [vmem:[#allocation2 + $0x88] sm:$0x3] %vm101, 0.0
    %119 = vst.msk [vmem:[#allocation2 + $0x90] sm:$0xff] %vm99, 0.0
    %120 = vst.msk [vmem:[#allocation2 + $0x98] sm:$0x3] %vm101, 0.0
    %121 = vst.msk [vmem:[#allocation2 + $0xa0] sm:$0xff] %vm99, 0.0
    %122 = vst.msk [vmem:[#allocation2 + $0xa8] sm:$0x3] %vm101, 0.0
    %123 = vst.msk [vmem:[#allocation2 + $0xb0] sm:$0xff] %vm99, 0.0
    %124 = vst.msk [vmem:[#allocation2 + $0xb8] sm:$0x3] %vm101, 0.0
    %125 = vst.msk [vmem:[#allocation2 + $0xc0] sm:$0xff] %vm99, 0.0
    %126 = vst.msk [vmem:[#allocation2 + $0xc8] sm:$0x3] %vm101, 0.0
    %127 = vst.msk [vmem:[#allocation2 + $0xd0] sm:$0xff] %vm99, 0.0
    %128 = vst.msk [vmem:[#allocation2 + $0xd8] sm:$0x3] %vm101, 0.0
    %129 = vst.msk [vmem:[#allocation2 + $0xe0] sm:$0xff] %vm99, 0.0
    %130 = vst.msk [vmem:[#allocation2 + $0xe8] sm:$0x3] %vm101, 0.0
    %131 = vst.msk [vmem:[#allocation2 + $0xf0] sm:$0xff] %vm99, 0.0
    %132 = vst.msk [vmem:[#allocation2 + $0xf8] sm:$0x3] %vm101, 0.0
    %133 = vst.msk [vmem:[#allocation2 + $0x100] sm:$0xff] %vm99, 0.0
    %134 = vst.msk [vmem:[#allocation2 + $0x108] sm:$0x3] %vm101, 0.0
    %135 = vst.msk [vmem:[#allocation2 + $0x110] sm:$0xff] %vm99, 0.0
    %136 = vst.msk [vmem:[#allocation2 + $0x118] sm:$0x3] %vm101, 0.0
    %137 = vst.msk [vmem:[#allocation2 + $0x120] sm:$0xff] %vm99, 0.0
    %138 = vst.msk [vmem:[#allocation2 + $0x128] sm:$0x3] %vm101, 0.0
    %139 = vst.msk [vmem:[#allocation2 + $0x130] sm:$0xff] %vm99, 0.0
    %140 = vst.msk [vmem:[#allocation2 + $0x138] sm:$0x3] %vm101, 0.0
    %s141 = scalar_lea.vmem [#allocation2], 16
    %vm142 = vcmask 302080
    %143 = vst.msk [vmem:[%s141 + $0x1] sm:$0xff] %vm142, %v83
    %144 = vst.msk [vmem:[%s141 + $0x11] sm:$0xff] %vm142, %v84
    %145 = vst.msk [vmem:[%s141 + $0x21] sm:$0xff] %vm142, %v85
    %146 = vst.msk [vmem:[%s141 + $0x31] sm:$0xff] %vm142, %v86
    %147 = vst.msk [vmem:[%s141 + $0x41] sm:$0xff] %vm142, %v87
    %148 = vst.msk [vmem:[%s141 + $0x51] sm:$0xff] %vm142, %v88
    %149 = vst.msk [vmem:[%s141 + $0x61] sm:$0xff] %vm142, %v89
    %150 = vst.msk [vmem:[%s141 + $0x71] sm:$0xff] %vm142, %v90
    %151 = vst.msk [vmem:[%s141 + $0xa1] sm:$0xff] %vm142, %v91
    %152 = vst.msk [vmem:[%s141 + $0xb1] sm:$0xff] %vm142, %v92
    %153 = vst.msk [vmem:[%s141 + $0xc1] sm:$0xff] %vm142, %v93
    %154 = vst.msk [vmem:[%s141 + $0xd1] sm:$0xff] %vm142, %v94
    %155 = vst.msk [vmem:[%s141 + $0xe1] sm:$0xff] %vm142, %v95
    %156 = vst.msk [vmem:[%s141 + $0xf1] sm:$0xff] %vm142, %v96
    %157 = vst.msk [vmem:[%s141 + $0x101] sm:$0xff] %vm142, %v97
    %158 = vst.msk [vmem:[%s141 + $0x111] sm:$0xff] %vm142, %v98
    %v159 = vld [vmem:[%s2] sm:$0xf]
    %v160 = vld [vmem:[%s2 + $0x4] sm:$0xf]
    %v161 = vld [vmem:[%s2 + $0x8] sm:$0xf]
    %v162 = vld [vmem:[%s2 + $0xc] sm:$0xf]
    %v163 = vld [vmem:[%s2 + $0x10] sm:$0xf]
    %v164 = vld [vmem:[%s2 + $0x14] sm:$0xf]
    %v165 = vld [vmem:[%s2 + $0x18] sm:$0xf]
    %v166 = vld [vmem:[%s2 + $0x1c] sm:$0xf]
    %v167 = vld [vmem:[%s2 + $0x20] sm:$0xf]
    %v168 = vld [vmem:[%s2 + $0x24] sm:$0xf]
    %v169 = vld [vmem:[%s2 + $0x28] sm:$0xf]
    %v170 = vld [vmem:[%s2 + $0x2c] sm:$0xf]
    %v171 = vld [vmem:[%s2 + $0x30] sm:$0xf]
    %v172 = vld [vmem:[%s2 + $0x34] sm:$0xf]
    %v173 = vld [vmem:[%s2 + $0x38] sm:$0xf]
    %v174 = vld [vmem:[%s2 + $0x3c] sm:$0xf]
    %v175 = vld [vmem:[%s2 + $0x40] sm:$0xf]
    %v176 = vld [vmem:[%s2 + $0x44] sm:$0xf]
    %v177 = vld [vmem:[%s2 + $0x48] sm:$0xf]
    %v178 = vld [vmem:[%s2 + $0x4c] sm:$0xf]
    %v179 = vld [vmem:[%s2 + $0x50] sm:$0xf]
    %v180 = vld [vmem:[%s2 + $0x54] sm:$0xf]
    %v181 = vld [vmem:[%s2 + $0x58] sm:$0xf]
    %v182 = vld [vmem:[%s2 + $0x5c] sm:$0xf]
    %v183 = vld [vmem:[%s2 + $0x60] sm:$0xf]
    %v184 = vld [vmem:[%s2 + $0x64] sm:$0xf]
    %v185 = vld [vmem:[%s2 + $0x68] sm:$0xf]
    %v186 = vld [vmem:[%s2 + $0x6c] sm:$0xf]
    %v187 = vld [vmem:[%s2 + $0x70] sm:$0xf]
    %v188 = vld [vmem:[%s2 + $0x74] sm:$0xf]
    %v189 = vld [vmem:[%s2 + $0x78] sm:$0xf]
    %v190 = vld [vmem:[%s2 + $0x7c] sm:$0xf]
    %v191 = vld [vmem:[%s2 + $0x80] sm:$0xf]
    %v192 = vld [vmem:[%s2 + $0x84] sm:$0xf]
    %v193 = vld [vmem:[%s2 + $0x88] sm:$0xf]
    %v194 = vld [vmem:[%s2 + $0x8c] sm:$0xf]
    %v195 = vld [vmem:[%s2 + $0x90] sm:$0xf]
    %v196 = vld [vmem:[%s2 + $0x94] sm:$0xf]
    %v197 = vld [vmem:[%s2 + $0x98] sm:$0xf]
    %v198 = vld [vmem:[%s2 + $0x9c] sm:$0xf]
    %v199 = vld [vmem:[%s2 + $0xa0] sm:$0xf]
    %v200 = vld [vmem:[%s2 + $0xa4] sm:$0xf]
    %v201 = vld [vmem:[%s2 + $0xa8] sm:$0xf]
    %v202 = vld [vmem:[%s2 + $0xac] sm:$0xf]
    %v203 = vld [vmem:[%s2 + $0xb0] sm:$0xf]
    %v204 = vld [vmem:[#allocation2] sm:$0xff]
    %v205 = vld [vmem:[#allocation2 + $0x10] sm:$0xff]
    %v206 = vld [vmem:[#allocation2 + $0x20] sm:$0xff]
    %v207 = vld [vmem:[#allocation2 + $0x30] sm:$0xff]
    %v208 = vld [vmem:[#allocation2 + $0x40] sm:$0xff]
    %v209 = vld [vmem:[#allocation2 + $0x50] sm:$0xff]
    %v210 = vld [vmem:[#allocation2 + $0x60] sm:$0xff]
    %v211 = vld [vmem:[#allocation2 + $0x70] sm:$0xff]
    %v212 = vld [vmem:[#allocation2 + $0xa0] sm:$0xff]
    %v213 = vld [vmem:[#allocation2 + $0xb0] sm:$0xff]
    %v214 = vld [vmem:[#allocation2 + $0xc0] sm:$0xff]
    %v215 = vld [vmem:[#allocation2 + $0xd0] sm:$0xff]
    %v216 = vld [vmem:[#allocation2 + $0xe0] sm:$0xff]
    %v217 = vld [vmem:[#allocation2 + $0xf0] sm:$0xff]
    %v218 = vld [vmem:[#allocation2 + $0x100] sm:$0xff]
    %v219 = vld [vmem:[#allocation2 + $0x110] sm:$0xff]
    %v220 = vld [vmem:[#allocation2 + $0x1] sm:$0xff]
    %v221 = vld [vmem:[#allocation2 + $0x11] sm:$0xff]
    %v222 = vld [vmem:[#allocation2 + $0x21] sm:$0xff]
    %v223 = vld [vmem:[#allocation2 + $0x31] sm:$0xff]
    %v224 = vld [vmem:[#allocation2 + $0x41] sm:$0xff]
    %v225 = vld [vmem:[#allocation2 + $0x51] sm:$0xff]
    %v226 = vld [vmem:[#allocation2 + $0x61] sm:$0xff]
    %v227 = vld [vmem:[#allocation2 + $0x71] sm:$0xff]
    %v228 = vld [vmem:[#allocation2 + $0xa1] sm:$0xff]
    %v229 = vld [vmem:[#allocation2 + $0xb1] sm:$0xff]
    %v230 = vld [vmem:[#allocation2 + $0xc1] sm:$0xff]
    %v231 = vld [vmem:[#allocation2 + $0xd1] sm:$0xff]
    %v232 = vld [vmem:[#allocation2 + $0xe1] sm:$0xff]
    %v233 = vld [vmem:[#allocation2 + $0xf1] sm:$0xff]
    %v234 = vld [vmem:[#allocation2 + $0x101] sm:$0xff]
    %v235 = vld [vmem:[#allocation2 + $0x111] sm:$0xff]
    %v236 = vld [vmem:[#allocation2 + $0x2] sm:$0xff]
    %v237 = vld [vmem:[#allocation2 + $0x12] sm:$0xff]
    %v238 = vld [vmem:[#allocation2 + $0x22] sm:$0xff]
    %v239 = vld [vmem:[#allocation2 + $0x32] sm:$0xff]
    %v240 = vld [vmem:[#allocation2 + $0x42] sm:$0xff]
    %v241 = vld [vmem:[#allocation2 + $0x52] sm:$0xff]
    %v242 = vld [vmem:[#allocation2 + $0x62] sm:$0xff]
    %v243 = vld [vmem:[#allocation2 + $0x72] sm:$0xff]
    %v244 = vld [vmem:[#allocation2 + $0xa2] sm:$0xff]
    %v245 = vld [vmem:[#allocation2 + $0xb2] sm:$0xff]
    %v246 = vld [vmem:[#allocation2 + $0xc2] sm:$0xff]
    %v247 = vld [vmem:[#allocation2 + $0xd2] sm:$0xff]
    %v248 = vld [vmem:[#allocation2 + $0xe2] sm:$0xff]
    %v249 = vld [vmem:[#allocation2 + $0xf2] sm:$0xff]
    %v250 = vld [vmem:[#allocation2 + $0x102] sm:$0xff]
    %v251 = vld [vmem:[#allocation2 + $0x112] sm:$0xff]
    %v252 = vld [vmem:[%s141] sm:$0xff]
    %v253 = vld [vmem:[%s141 + $0x10] sm:$0xff]
    %v254 = vld [vmem:[%s141 + $0x20] sm:$0xff]
    %v255 = vld [vmem:[%s141 + $0x30] sm:$0xff]
    %v256 = vld [vmem:[%s141 + $0x40] sm:$0xff]
    %v257 = vld [vmem:[%s141 + $0x50] sm:$0xff]
    %v258 = vld [vmem:[%s141 + $0x60] sm:$0xff]
    %v259 = vld [vmem:[%s141 + $0x70] sm:$0xff]
    %v260 = vld [vmem:[%s141 + $0xa0] sm:$0xff]
    %v261 = vld [vmem:[%s141 + $0xb0] sm:$0xff]
    %v262 = vld [vmem:[%s141 + $0xc0] sm:$0xff]
    %v263 = vld [vmem:[%s141 + $0xd0] sm:$0xff]
    %v264 = vld [vmem:[%s141 + $0xe0] sm:$0xff]
    %v265 = vld [vmem:[%s141 + $0xf0] sm:$0xff]
    %v266 = vld [vmem:[%s141 + $0x100] sm:$0xff]
    %v267 = vld [vmem:[%s141 + $0x110] sm:$0xff]
    %v268 = vld [vmem:[%s141 + $0x1] sm:$0xff]
    %v269 = vld [vmem:[%s141 + $0x11] sm:$0xff]
    %v270 = vld [vmem:[%s141 + $0x21] sm:$0xff]
    %v271 = vld [vmem:[%s141 + $0x31] sm:$0xff]
    %v272 = vld [vmem:[%s141 + $0x41] sm:$0xff]
    %v273 = vld [vmem:[%s141 + $0x51] sm:$0xff]
    %v274 = vld [vmem:[%s141 + $0x61] sm:$0xff]
    %v275 = vld [vmem:[%s141 + $0x71] sm:$0xff]
    %v276 = vld [vmem:[%s141 + $0xa1] sm:$0xff]
    %v277 = vld [vmem:[%s141 + $0xb1] sm:$0xff]
    %v278 = vld [vmem:[%s141 + $0xc1] sm:$0xff]
    %v279 = vld [vmem:[%s141 + $0xd1] sm:$0xff]
    %v280 = vld [vmem:[%s141 + $0xe1] sm:$0xff]
    %v281 = vld [vmem:[%s141 + $0xf1] sm:$0xff]
    %v282 = vld [vmem:[%s141 + $0x101] sm:$0xff]
    %v283 = vld [vmem:[%s141 + $0x111] sm:$0xff]
    %v284 = vld [vmem:[%s141 + $0x2] sm:$0xff]
    %v285 = vld [vmem:[%s141 + $0x12] sm:$0xff]
    %v286 = vld [vmem:[%s141 + $0x22] sm:$0xff]
    %v287 = vld [vmem:[%s141 + $0x32] sm:$0xff]
    %v288 = vld [vmem:[%s141 + $0x42] sm:$0xff]
    %v289 = vld [vmem:[%s141 + $0x52] sm:$0xff]
    %v290 = vld [vmem:[%s141 + $0x62] sm:$0xff]
    %v291 = vld [vmem:[%s141 + $0x72] sm:$0xff]
    %v292 = vld [vmem:[%s141 + $0xa2] sm:$0xff]
    %v293 = vld [vmem:[%s141 + $0xb2] sm:$0xff]
    %v294 = vld [vmem:[%s141 + $0xc2] sm:$0xff]
    %v295 = vld [vmem:[%s141 + $0xd2] sm:$0xff]
    %v296 = vld [vmem:[%s141 + $0xe2] sm:$0xff]
    %v297 = vld [vmem:[%s141 + $0xf2] sm:$0xff]
    %v298 = vld [vmem:[%s141 + $0x102] sm:$0xff]
    %v299 = vld [vmem:[%s141 + $0x112] sm:$0xff]
    %s300 = scalar_lea.vmem [#allocation2], 32
    %v301 = vld [vmem:[%s300] sm:$0xff]
    %v302 = vld [vmem:[%s300 + $0x10] sm:$0xff]
    %v303 = vld [vmem:[%s300 + $0x20] sm:$0xff]
    %v304 = vld [vmem:[%s300 + $0x30] sm:$0xff]
    %v305 = vld [vmem:[%s300 + $0x40] sm:$0xff]
    %v306 = vld [vmem:[%s300 + $0x50] sm:$0xff]
    %v307 = vld [vmem:[%s300 + $0x60] sm:$0xff]
    %v308 = vld [vmem:[%s300 + $0x70] sm:$0xff]
    %v309 = vld [vmem:[%s300 + $0xa0] sm:$0xff]
    %v310 = vld [vmem:[%s300 + $0xb0] sm:$0xff]
    %v311 = vld [vmem:[%s300 + $0xc0] sm:$0xff]
    %v312 = vld [vmem:[%s300 + $0xd0] sm:$0xff]
    %v313 = vld [vmem:[%s300 + $0xe0] sm:$0xff]
    %v314 = vld [vmem:[%s300 + $0xf0] sm:$0xff]
    %v315 = vld [vmem:[%s300 + $0x100] sm:$0xff]
    %v316 = vld [vmem:[%s300 + $0x110] sm:$0xff]
    %v317 = vld [vmem:[%s300 + $0x1] sm:$0xff]
    %v318 = vld [vmem:[%s300 + $0x11] sm:$0xff]
    %v319 = vld [vmem:[%s300 + $0x21] sm:$0xff]
    %v320 = vld [vmem:[%s300 + $0x31] sm:$0xff]
    %v321 = vld [vmem:[%s300 + $0x41] sm:$0xff]
    %v322 = vld [vmem:[%s300 + $0x51] sm:$0xff]
    %v323 = vld [vmem:[%s300 + $0x61] sm:$0xff]
    %v324 = vld [vmem:[%s300 + $0x71] sm:$0xff]
    %v325 = vld [vmem:[%s300 + $0xa1] sm:$0xff]
    %v326 = vld [vmem:[%s300 + $0xb1] sm:$0xff]
    %v327 = vld [vmem:[%s300 + $0xc1] sm:$0xff]
    %v328 = vld [vmem:[%s300 + $0xd1] sm:$0xff]
    %v329 = vld [vmem:[%s300 + $0xe1] sm:$0xff]
    %v330 = vld [vmem:[%s300 + $0xf1] sm:$0xff]
    %v331 = vld [vmem:[%s300 + $0x101] sm:$0xff]
    %v332 = vld [vmem:[%s300 + $0x111] sm:$0xff]
    %v333 = vld [vmem:[%s300 + $0x2] sm:$0xff]
    %v334 = vld [vmem:[%s300 + $0x12] sm:$0xff]
    %v335 = vld [vmem:[%s300 + $0x22] sm:$0xff]
    %v336 = vld [vmem:[%s300 + $0x32] sm:$0xff]
    %v337 = vld [vmem:[%s300 + $0x42] sm:$0xff]
    %v338 = vld [vmem:[%s300 + $0x52] sm:$0xff]
    %v339 = vld [vmem:[%s300 + $0x62] sm:$0xff]
    %v340 = vld [vmem:[%s300 + $0x72] sm:$0xff]
    %v341 = vld [vmem:[%s300 + $0xa2] sm:$0xff]
    %v342 = vld [vmem:[%s300 + $0xb2] sm:$0xff]
    %v343 = vld [vmem:[%s300 + $0xc2] sm:$0xff]
    %v344 = vld [vmem:[%s300 + $0xd2] sm:$0xff]
    %v345 = vld [vmem:[%s300 + $0xe2] sm:$0xff]
    %v346 = vld [vmem:[%s300 + $0xf2] sm:$0xff]
    %v347 = vld [vmem:[%s300 + $0x102] sm:$0xff]
    %v348 = vld [vmem:[%s300 + $0x112] sm:$0xff]
    %365 = vrot.lane.b32.xlu0 %v220, 40
    %v366 = vpop.permute.xlu0 %365
    %367 = vrot.lane.b32.xlu0 %v221, 40
    %v368 = vpop.permute.xlu0 %367
    %369 = vrot.lane.b32.xlu0 %v222, 40
    %v370 = vpop.permute.xlu0 %369
    %371 = vrot.lane.b32.xlu0 %v223, 40
    %v372 = vpop.permute.xlu0 %371
    %373 = vrot.lane.b32.xlu0 %v224, 40
    %v374 = vpop.permute.xlu0 %373
    %375 = vrot.lane.b32.xlu0 %v225, 40
    %v376 = vpop.permute.xlu0 %375
    %377 = vrot.lane.b32.xlu0 %v226, 40
    %v378 = vpop.permute.xlu0 %377
    %379 = vrot.lane.b32.xlu0 %v227, 40
    %v380 = vpop.permute.xlu0 %379
    %381 = vrot.lane.b32.xlu0 %v228, 40
    %v382 = vpop.permute.xlu0 %381
    %383 = vrot.lane.b32.xlu0 %v229, 40
    %v384 = vpop.permute.xlu0 %383
    %385 = vrot.lane.b32.xlu0 %v230, 40
    %v386 = vpop.permute.xlu0 %385
    %387 = vrot.lane.b32.xlu0 %v231, 40
    %v388 = vpop.permute.xlu0 %387
    %389 = vrot.lane.b32.xlu0 %v232, 40
    %v390 = vpop.permute.xlu0 %389
    %391 = vrot.lane.b32.xlu0 %v233, 40
    %v392 = vpop.permute.xlu0 %391
    %393 = vrot.lane.b32.xlu0 %v234, 40
    %v394 = vpop.permute.xlu0 %393
    %395 = vrot.lane.b32.xlu0 %v235, 40
    %v396 = vpop.permute.xlu0 %395
    %429 = vrot.lane.b32.xlu0 %v236, 80
    %v430 = vpop.permute.xlu0 %429
    %431 = vrot.lane.b32.xlu0 %v237, 80
    %v432 = vpop.permute.xlu0 %431
    %433 = vrot.lane.b32.xlu0 %v238, 80
    %v434 = vpop.permute.xlu0 %433
    %435 = vrot.lane.b32.xlu0 %v239, 80
    %v436 = vpop.permute.xlu0 %435
    %437 = vrot.lane.b32.xlu0 %v240, 80
    %v438 = vpop.permute.xlu0 %437
    %439 = vrot.lane.b32.xlu0 %v241, 80
    %v440 = vpop.permute.xlu0 %439
    %441 = vrot.lane.b32.xlu0 %v242, 80
    %v442 = vpop.permute.xlu0 %441
    %443 = vrot.lane.b32.xlu0 %v243, 80
    %v444 = vpop.permute.xlu0 %443
    %445 = vrot.lane.b32.xlu0 %v244, 80
    %v446 = vpop.permute.xlu0 %445
    %447 = vrot.lane.b32.xlu0 %v245, 80
    %v448 = vpop.permute.xlu0 %447
    %449 = vrot.lane.b32.xlu0 %v246, 80
    %v450 = vpop.permute.xlu0 %449
    %451 = vrot.lane.b32.xlu0 %v247, 80
    %v452 = vpop.permute.xlu0 %451
    %453 = vrot.lane.b32.xlu0 %v248, 80
    %v454 = vpop.permute.xlu0 %453
    %455 = vrot.lane.b32.xlu0 %v249, 80
    %v456 = vpop.permute.xlu0 %455
    %457 = vrot.lane.b32.xlu0 %v250, 80
    %v458 = vpop.permute.xlu0 %457
    %459 = vrot.lane.b32.xlu0 %v251, 80
    %v460 = vpop.permute.xlu0 %459
    %493 = vrot.lane.b32.xlu0 %v252, 120
    %v494 = vpop.permute.xlu0 %493
    %495 = vrot.lane.b32.xlu0 %v253, 120
    %v496 = vpop.permute.xlu0 %495
    %497 = vrot.lane.b32.xlu0 %v254, 120
    %v498 = vpop.permute.xlu0 %497
    %499 = vrot.lane.b32.xlu0 %v255, 120
    %v500 = vpop.permute.xlu0 %499
    %501 = vrot.lane.b32.xlu0 %v256, 120
    %v502 = vpop.permute.xlu0 %501
    %503 = vrot.lane.b32.xlu0 %v257, 120
    %v504 = vpop.permute.xlu0 %503
    %505 = vrot.lane.b32.xlu0 %v258, 120
    %v506 = vpop.permute.xlu0 %505
    %507 = vrot.lane.b32.xlu0 %v259, 120
    %v508 = vpop.permute.xlu0 %507
    %509 = vrot.lane.b32.xlu0 %v260, 120
    %v510 = vpop.permute.xlu0 %509
    %511 = vrot.lane.b32.xlu0 %v261, 120
    %v512 = vpop.permute.xlu0 %511
    %513 = vrot.lane.b32.xlu0 %v262, 120
    %v514 = vpop.permute.xlu0 %513
    %515 = vrot.lane.b32.xlu0 %v263, 120
    %v516 = vpop.permute.xlu0 %515
    %517 = vrot.lane.b32.xlu0 %v264, 120
    %v518 = vpop.permute.xlu0 %517
    %519 = vrot.lane.b32.xlu0 %v265, 120
    %v520 = vpop.permute.xlu0 %519
    %521 = vrot.lane.b32.xlu0 %v266, 120
    %v522 = vpop.permute.xlu0 %521
    %523 = vrot.lane.b32.xlu0 %v267, 120
    %v524 = vpop.permute.xlu0 %523
    %557 = vrot.lane.b32.xlu0 %v268, 32
    %v558 = vpop.permute.xlu0 %557
    %559 = vrot.lane.b32.xlu0 %v269, 32
    %v560 = vpop.permute.xlu0 %559
    %561 = vrot.lane.b32.xlu0 %v270, 32
    %v562 = vpop.permute.xlu0 %561
    %563 = vrot.lane.b32.xlu0 %v271, 32
    %v564 = vpop.permute.xlu0 %563
    %565 = vrot.lane.b32.xlu0 %v272, 32
    %v566 = vpop.permute.xlu0 %565
    %567 = vrot.lane.b32.xlu0 %v273, 32
    %v568 = vpop.permute.xlu0 %567
    %569 = vrot.lane.b32.xlu0 %v274, 32
    %v570 = vpop.permute.xlu0 %569
    %571 = vrot.lane.b32.xlu0 %v275, 32
    %v572 = vpop.permute.xlu0 %571
    %573 = vrot.lane.b32.xlu0 %v276, 32
    %v574 = vpop.permute.xlu0 %573
    %575 = vrot.lane.b32.xlu0 %v277, 32
    %v576 = vpop.permute.xlu0 %575
    %577 = vrot.lane.b32.xlu0 %v278, 32
    %v578 = vpop.permute.xlu0 %577
    %579 = vrot.lane.b32.xlu0 %v279, 32
    %v580 = vpop.permute.xlu0 %579
    %581 = vrot.lane.b32.xlu0 %v280, 32
    %v582 = vpop.permute.xlu0 %581
    %583 = vrot.lane.b32.xlu0 %v281, 32
    %v584 = vpop.permute.xlu0 %583
    %585 = vrot.lane.b32.xlu0 %v282, 32
    %v586 = vpop.permute.xlu0 %585
    %587 = vrot.lane.b32.xlu0 %v283, 32
    %v588 = vpop.permute.xlu0 %587
    %621 = vrot.lane.b32.xlu0 %v284, 72
    %v622 = vpop.permute.xlu0 %621
    %623 = vrot.lane.b32.xlu0 %v285, 72
    %v624 = vpop.permute.xlu0 %623
    %625 = vrot.lane.b32.xlu0 %v286, 72
    %v626 = vpop.permute.xlu0 %625
    %627 = vrot.lane.b32.xlu0 %v287, 72
    %v628 = vpop.permute.xlu0 %627
    %629 = vrot.lane.b32.xlu0 %v288, 72
    %v630 = vpop.permute.xlu0 %629
    %631 = vrot.lane.b32.xlu0 %v289, 72
    %v632 = vpop.permute.xlu0 %631
    %633 = vrot.lane.b32.xlu0 %v290, 72
    %v634 = vpop.permute.xlu0 %633
    %635 = vrot.lane.b32.xlu0 %v291, 72
    %v636 = vpop.permute.xlu0 %635
    %637 = vrot.lane.b32.xlu0 %v292, 72
    %v638 = vpop.permute.xlu0 %637
    %639 = vrot.lane.b32.xlu0 %v293, 72
    %v640 = vpop.permute.xlu0 %639
    %641 = vrot.lane.b32.xlu0 %v294, 72
    %v642 = vpop.permute.xlu0 %641
    %643 = vrot.lane.b32.xlu0 %v295, 72
    %v644 = vpop.permute.xlu0 %643
    %645 = vrot.lane.b32.xlu0 %v296, 72
    %v646 = vpop.permute.xlu0 %645
    %647 = vrot.lane.b32.xlu0 %v297, 72
    %v648 = vpop.permute.xlu0 %647
    %649 = vrot.lane.b32.xlu0 %v298, 72
    %v650 = vpop.permute.xlu0 %649
    %651 = vrot.lane.b32.xlu0 %v299, 72
    %v652 = vpop.permute.xlu0 %651
    %685 = vrot.lane.b32.xlu0 %v301, 112
    %v686 = vpop.permute.xlu0 %685
    %687 = vrot.lane.b32.xlu0 %v302, 112
    %v688 = vpop.permute.xlu0 %687
    %689 = vrot.lane.b32.xlu0 %v303, 112
    %v690 = vpop.permute.xlu0 %689
    %691 = vrot.lane.b32.xlu0 %v304, 112
    %v692 = vpop.permute.xlu0 %691
    %693 = vrot.lane.b32.xlu0 %v305, 112
    %v694 = vpop.permute.xlu0 %693
    %695 = vrot.lane.b32.xlu0 %v306, 112
    %v696 = vpop.permute.xlu0 %695
    %697 = vrot.lane.b32.xlu0 %v307, 112
    %v698 = vpop.permute.xlu0 %697
    %699 = vrot.lane.b32.xlu0 %v308, 112
    %v700 = vpop.permute.xlu0 %699
    %701 = vrot.lane.b32.xlu0 %v309, 112
    %v702 = vpop.permute.xlu0 %701
    %703 = vrot.lane.b32.xlu0 %v310, 112
    %v704 = vpop.permute.xlu0 %703
    %705 = vrot.lane.b32.xlu0 %v311, 112
    %v706 = vpop.permute.xlu0 %705
    %707 = vrot.lane.b32.xlu0 %v312, 112
    %v708 = vpop.permute.xlu0 %707
    %709 = vrot.lane.b32.xlu0 %v313, 112
    %v710 = vpop.permute.xlu0 %709
    %711 = vrot.lane.b32.xlu0 %v314, 112
    %v712 = vpop.permute.xlu0 %711
    %713 = vrot.lane.b32.xlu0 %v315, 112
    %v714 = vpop.permute.xlu0 %713
    %715 = vrot.lane.b32.xlu0 %v316, 112
    %v716 = vpop.permute.xlu0 %715
    %749 = vrot.lane.b32.xlu0 %v317, 24
    %v750 = vpop.permute.xlu0 %749
    %751 = vrot.lane.b32.xlu0 %v318, 24
    %v752 = vpop.permute.xlu0 %751
    %753 = vrot.lane.b32.xlu0 %v319, 24
    %v754 = vpop.permute.xlu0 %753
    %755 = vrot.lane.b32.xlu0 %v320, 24
    %v756 = vpop.permute.xlu0 %755
    %757 = vrot.lane.b32.xlu0 %v321, 24
    %v758 = vpop.permute.xlu0 %757
    %759 = vrot.lane.b32.xlu0 %v322, 24
    %v760 = vpop.permute.xlu0 %759
    %761 = vrot.lane.b32.xlu0 %v323, 24
    %v762 = vpop.permute.xlu0 %761
    %763 = vrot.lane.b32.xlu0 %v324, 24
    %v764 = vpop.permute.xlu0 %763
    %765 = vrot.lane.b32.xlu0 %v325, 24
    %v766 = vpop.permute.xlu0 %765
    %767 = vrot.lane.b32.xlu0 %v326, 24
    %v768 = vpop.permute.xlu0 %767
    %769 = vrot.lane.b32.xlu0 %v327, 24
    %v770 = vpop.permute.xlu0 %769
    %771 = vrot.lane.b32.xlu0 %v328, 24
    %v772 = vpop.permute.xlu0 %771
    %773 = vrot.lane.b32.xlu0 %v329, 24
    %v774 = vpop.permute.xlu0 %773
    %775 = vrot.lane.b32.xlu0 %v330, 24
    %v776 = vpop.permute.xlu0 %775
    %777 = vrot.lane.b32.xlu0 %v331, 24
    %v778 = vpop.permute.xlu0 %777
    %779 = vrot.lane.b32.xlu0 %v332, 24
    %v780 = vpop.permute.xlu0 %779
    %813 = vrot.lane.b32.xlu0 %v333, 64
    %v814 = vpop.permute.xlu0 %813
    %815 = vrot.lane.b32.xlu0 %v334, 64
    %v816 = vpop.permute.xlu0 %815
    %817 = vrot.lane.b32.xlu0 %v335, 64
    %v818 = vpop.permute.xlu0 %817
    %819 = vrot.lane.b32.xlu0 %v336, 64
    %v820 = vpop.permute.xlu0 %819
    %821 = vrot.lane.b32.xlu0 %v337, 64
    %v822 = vpop.permute.xlu0 %821
    %823 = vrot.lane.b32.xlu0 %v338, 64
    %v824 = vpop.permute.xlu0 %823
    %825 = vrot.lane.b32.xlu0 %v339, 64
    %v826 = vpop.permute.xlu0 %825
    %827 = vrot.lane.b32.xlu0 %v340, 64
    %v828 = vpop.permute.xlu0 %827
    %829 = vrot.lane.b32.xlu0 %v341, 64
    %v830 = vpop.permute.xlu0 %829
    %831 = vrot.lane.b32.xlu0 %v342, 64
    %v832 = vpop.permute.xlu0 %831
    %833 = vrot.lane.b32.xlu0 %v343, 64
    %v834 = vpop.permute.xlu0 %833
    %835 = vrot.lane.b32.xlu0 %v344, 64
    %v836 = vpop.permute.xlu0 %835
    %837 = vrot.lane.b32.xlu0 %v345, 64
    %v838 = vpop.permute.xlu0 %837
    %839 = vrot.lane.b32.xlu0 %v346, 64
    %v840 = vpop.permute.xlu0 %839
    %841 = vrot.lane.b32.xlu0 %v347, 64
    %v842 = vpop.permute.xlu0 %841
    %843 = vrot.lane.b32.xlu0 %v348, 64
    %v844 = vpop.permute.xlu0 %843
    %v861 = vsel %vm99, %v204, %v366
    %v862 = vsel %vm99, %v205, %v368
    %v863 = vsel %vm99, %v206, %v370
    %v864 = vsel %vm99, %v207, %v372
    %v865 = vsel %vm99, %v208, %v374
    %v866 = vsel %vm99, %v209, %v376
    %v867 = vsel %vm99, %v210, %v378
    %v868 = vsel %vm99, %v211, %v380
    %v869 = vsel %vm99, %v212, %v382
    %v870 = vsel %vm99, %v213, %v384
    %v871 = vsel %vm99, %v214, %v386
    %v872 = vsel %vm99, %v215, %v388
    %v873 = vsel %vm99, %v216, %v390
    %v874 = vsel %vm99, %v217, %v392
    %v875 = vsel %vm99, %v218, %v394
    %v876 = vsel %vm99, %v219, %v396
    %vm877 = vcmask 654336
    %v878 = vsel %vm877, %v861, %v430
    %v879 = vsel %vm877, %v862, %v432
    %v880 = vsel %vm877, %v863, %v434
    %v881 = vsel %vm877, %v864, %v436
    %v882 = vsel %vm877, %v865, %v438
    %v883 = vsel %vm877, %v866, %v440
    %v884 = vsel %vm877, %v867, %v442
    %v885 = vsel %vm877, %v868, %v444
    %v886 = vsel %vm877, %v869, %v446
    %v887 = vsel %vm877, %v870, %v448
    %v888 = vsel %vm877, %v871, %v450
    %v889 = vsel %vm877, %v872, %v452
    %v890 = vsel %vm877, %v873, %v454
    %v891 = vsel %vm877, %v874, %v456
    %v892 = vsel %vm877, %v875, %v458
    %v893 = vsel %vm877, %v876, %v460
    %vm894 = vcmask 982016
    %v895 = vsel %vm894, %v878, %v494
    %v896 = vsel %vm894, %v879, %v496
    %v897 = vsel %vm894, %v880, %v498
    %v898 = vsel %vm894, %v881, %v500
    %v899 = vsel %vm894, %v882, %v502
    %v900 = vsel %vm894, %v883, %v504
    %v901 = vsel %vm894, %v884, %v506
    %v902 = vsel %vm894, %v885, %v508
    %v903 = vsel %vm894, %v886, %v510
    %v904 = vsel %vm894, %v887, %v512
    %v905 = vsel %vm894, %v888, %v514
    %v906 = vsel %vm894, %v889, %v516
    %v907 = vsel %vm894, %v890, %v518
    %v908 = vsel %vm894, %v891, %v520
    %v909 = vsel %vm894, %v892, %v522
    %v910 = vsel %vm894, %v893, %v524
    %v911 = vsel %vm82, %v494, %v558
    %v912 = vsel %vm82, %v496, %v560
    %v913 = vsel %vm82, %v498, %v562
    %v914 = vsel %vm82, %v500, %v564
    %v915 = vsel %vm82, %v502, %v566
    %v916 = vsel %vm82, %v504, %v568
    %v917 = vsel %vm82, %v506, %v570
    %v918 = vsel %vm82, %v508, %v572
    %v919 = vsel %vm82, %v510, %v574
    %v920 = vsel %vm82, %v512, %v576
    %v921 = vsel %vm82, %v514, %v578
    %v922 = vsel %vm82, %v516, %v580
    %v923 = vsel %vm82, %v518, %v582
    %v924 = vsel %vm82, %v520, %v584
    %v925 = vsel %vm82, %v522, %v586
    %v926 = vsel %vm82, %v524, %v588
    %vm927 = vcmask 588800
    %v928 = vsel %vm927, %v911, %v622
    %v929 = vsel %vm927, %v912, %v624
    %v930 = vsel %vm927, %v913, %v626
    %v931 = vsel %vm927, %v914, %v628
    %v932 = vsel %vm927, %v915, %v630
    %v933 = vsel %vm927, %v916, %v632
    %v934 = vsel %vm927, %v917, %v634
    %v935 = vsel %vm927, %v918, %v636
    %v936 = vsel %vm927, %v919, %v638
    %v937 = vsel %vm927, %v920, %v640
    %v938 = vsel %vm927, %v921, %v642
    %v939 = vsel %vm927, %v922, %v644
    %v940 = vsel %vm927, %v923, %v646
    %v941 = vsel %vm927, %v924, %v648
    %v942 = vsel %vm927, %v925, %v650
    %v943 = vsel %vm927, %v926, %v652
    %vm944 = vcmask 916480
    %v945 = vsel %vm944, %v928, %v686
    %v946 = vsel %vm944, %v929, %v688
    %v947 = vsel %vm944, %v930, %v690
    %v948 = vsel %vm944, %v931, %v692
    %v949 = vsel %vm944, %v932, %v694
    %v950 = vsel %vm944, %v933, %v696
    %v951 = vsel %vm944, %v934, %v698
    %v952 = vsel %vm944, %v935, %v700
    %v953 = vsel %vm944, %v936, %v702
    %v954 = vsel %vm944, %v937, %v704
    %v955 = vsel %vm944, %v938, %v706
    %v956 = vsel %vm944, %v939, %v708
    %v957 = vsel %vm944, %v940, %v710
    %v958 = vsel %vm944, %v941, %v712
    %v959 = vsel %vm944, %v942, %v714
    %v960 = vsel %vm944, %v943, %v716
    %vm961 = vcmask 195584
    %v962 = vsel %vm961, %v686, %v750
    %v963 = vsel %vm961, %v688, %v752
    %v964 = vsel %vm961, %v690, %v754
    %v965 = vsel %vm961, %v692, %v756
    %v966 = vsel %vm961, %v694, %v758
    %v967 = vsel %vm961, %v696, %v760
    %v968 = vsel %vm961, %v698, %v762
    %v969 = vsel %vm961, %v700, %v764
    %v970 = vsel %vm961, %v702, %v766
    %v971 = vsel %vm961, %v704, %v768
    %v972 = vsel %vm961, %v706, %v770
    %v973 = vsel %vm961, %v708, %v772
    %v974 = vsel %vm961, %v710, %v774
    %v975 = vsel %vm961, %v712, %v776
    %v976 = vsel %vm961, %v714, %v778
    %v977 = vsel %vm961, %v716, %v780
    %vm978 = vcmask 523264
    %v979 = vsel %vm978, %v962, %v814
    %v980 = vsel %vm978, %v963, %v816
    %v981 = vsel %vm978, %v964, %v818
    %v982 = vsel %vm978, %v965, %v820
    %v983 = vsel %vm978, %v966, %v822
    %v984 = vsel %vm978, %v967, %v824
    %v985 = vsel %vm978, %v968, %v826
    %v986 = vsel %vm978, %v969, %v828
    %v987 = vsel %vm978, %v970, %v830
    %v988 = vsel %vm978, %v971, %v832
    %v989 = vsel %vm978, %v972, %v834
    %v990 = vsel %vm978, %v973, %v836
    %v991 = vsel %vm978, %v974, %v838
    %v992 = vsel %vm978, %v975, %v840
    %v993 = vsel %vm978, %v976, %v842
    %v994 = vsel %vm978, %v977, %v844
    %v995 = vpack.c.bf16 %v896, %v895
    %v996 = vpack.c.bf16 %v946, %v945
    %v997 = vpack.c.bf16 %v980, %v979
    %v998 = vpack.c.bf16 %v898, %v897
    %v999 = vpack.c.bf16 %v948, %v947
    %v1000 = vpack.c.bf16 %v982, %v981
    %v1001 = vpack.c.bf16 %v900, %v899
    %v1002 = vpack.c.bf16 %v950, %v949
    %v1003 = vpack.c.bf16 %v984, %v983
    %v1004 = vpack.c.bf16 %v902, %v901
    %v1005 = vpack.c.bf16 %v952, %v951
    %v1006 = vpack.c.bf16 %v986, %v985
    %v1007 = vpack.c.bf16 %v904, %v903
    %v1008 = vpack.c.bf16 %v954, %v953
    %v1009 = vpack.c.bf16 %v988, %v987
    %v1010 = vpack.c.bf16 %v906, %v905
    %v1011 = vpack.c.bf16 %v956, %v955
    %v1012 = vpack.c.bf16 %v990, %v989
    %v1013 = vpack.c.bf16 %v908, %v907
    %v1014 = vpack.c.bf16 %v958, %v957
    %v1015 = vpack.c.bf16 %v992, %v991
    %v1016 = vpack.c.bf16 %v910, %v909
    %v1017 = vpack.c.bf16 %v960, %v959
    %v1018 = vpack.c.bf16 %v994, %v993
    %v1064 = vunpack.c.l.b16 %v159
    %v1065 = vunpack.c.l.b16 %v160
    %v1066 = vunpack.c.l.b16 %v161
    %v1067 = vunpack.c.l.b16 %v162
    %v1068 = vunpack.c.l.b16 %v163
    %v1069 = vunpack.c.l.b16 %v164
    %v1070 = vunpack.c.l.b16 %v165
    %v1071 = vunpack.c.l.b16 %v166
    %v1072 = vunpack.c.l.b16 %v167
    %v1073 = vunpack.c.l.b16 %v168
    %v1074 = vunpack.c.l.b16 %v169
    %v1075 = vunpack.c.l.b16 %v170
    %v1076 = vunpack.c.l.b16 %v171
    %v1077 = vunpack.c.l.b16 %v172
    %v1078 = vunpack.c.l.b16 %v173
    %v1079 = vunpack.c.l.b16 %v174
    %v1080 = vunpack.c.l.b16 %v175
    %v1081 = vunpack.c.l.b16 %v176
    %v1082 = vunpack.c.l.b16 %v177
    %v1083 = vunpack.c.l.b16 %v178
    %v1084 = vunpack.c.l.b16 %v179
    %v1085 = vunpack.c.l.b16 %v180
    %v1086 = vunpack.c.l.b16 %v181
    %v1087 = vunpack.c.l.b16 %v182
    %v1088 = vunpack.c.l.b16 %v183
    %v1089 = vunpack.c.l.b16 %v184
    %v1090 = vunpack.c.l.b16 %v185
    %v1091 = vunpack.c.l.b16 %v186
    %v1092 = vunpack.c.l.b16 %v187
    %v1093 = vunpack.c.l.b16 %v188
    %v1094 = vunpack.c.l.b16 %v189
    %v1095 = vunpack.c.l.b16 %v190
    %v1096 = vunpack.c.l.b16 %v191
    %v1097 = vunpack.c.l.b16 %v192
    %v1098 = vunpack.c.l.b16 %v193
    %v1099 = vunpack.c.l.b16 %v194
    %v1100 = vunpack.c.l.b16 %v195
    %v1101 = vunpack.c.l.b16 %v196
    %v1102 = vunpack.c.l.b16 %v197
    %v1103 = vunpack.c.l.b16 %v198
    %v1104 = vunpack.c.l.b16 %v199
    %v1105 = vunpack.c.l.b16 %v200
    %v1106 = vunpack.c.l.b16 %v201
    %v1107 = vunpack.c.l.b16 %v202
    %v1108 = vunpack.c.l.b16 %v203
    %v1109 = vpack.c.b16 %v1065, %v1064
    %v1110 = vpack.c.b16 %v1067, %v1066
    %v1111 = vpack.c.b16 %v1069, %v1068
    %v1112 = vpack.c.b16 %v1071, %v1070
    %v1113 = vpack.c.b16 %v1073, %v1072
    %v1114 = vpack.c.b16 %v1075, %v1074
    %v1115 = vpack.c.b16 %v1077, %v1076
    %v1116 = vpack.c.b16 %v1079, %v1078
    %v1117 = vpack.c.b16 %v1081, %v1080
    %v1118 = vpack.c.b16 %v1083, %v1082
    %v1119 = vpack.c.b16 %v1085, %v1084
    %v1120 = vpack.c.b16 %v1087, %v1086
    %v1121 = vpack.c.b16 %v1089, %v1088
    %v1122 = vpack.c.b16 %v1091, %v1090
    %v1123 = vpack.c.b16 %v1093, %v1092
    %v1124 = vpack.c.b16 %v1095, %v1094
    %v1125 = vpack.c.b16 %v1097, %v1096
    %v1126 = vpack.c.b16 %v1099, %v1098
    %v1127 = vpack.c.b16 %v1101, %v1100
    %v1128 = vpack.c.b16 %v1103, %v1102
    %v1129 = vpack.c.b16 %v1105, %v1104
    %v1130 = vpack.c.b16 %v1107, %v1106
    %v1131 = vpack.c.b16 %v1108, %v1108
    %vm1154 = vcmask 850944
    %v1156 = vsel %vm1154, %v997, 0
    %v1159 = vsel %vm1154, %v1000, 0
    %v1162 = vsel %vm1154, %v1003, 0
    %v1165 = vsel %vm1154, %v1006, 0
    %v1168 = vsel %vm1154, %v1009, 0
    %v1171 = vsel %vm1154, %v1012, 0
    %v1174 = vsel %vm1154, %v1015, 0
    %v1177 = vsel %vm1154, %v1018, 0
    %vm1179 = vcmask 1043456
    %v1181 = vsel %vm1179, %v1131, 0
    %1183 = vmatprep.subr.bf16.mxu0 0
    %1184 = vmatpush1.bf16.msra.mxu0 %v1109
    %1185 = vmatprep.subr.bf16.mxu0 0
    %1186 = vmatpush1.bf16.msra.mxu0 %v1110
    %1187 = vmatprep.subr.bf16.mxu0 0
    %1188 = vmatpush1.bf16.msra.mxu0 %v1111
    %1189 = vmatprep.subr.bf16.mxu0 0
    %1190 = vmatpush1.bf16.msra.mxu0 %v1112
    %1191 = vmatprep.subr.bf16.mxu0 0
    %1192 = vmatpush1.bf16.msra.mxu0 %v1113
    %1193 = vmatprep.subr.bf16.mxu0 0
    %1194 = vmatpush1.bf16.msra.mxu0 %v1114
    %1195 = vmatprep.subr.bf16.mxu0 0
    %1196 = vmatpush1.bf16.msra.mxu0 %v1115
    %1197 = vmatprep.subr.bf16.mxu0 0
    %1198 = vmatpush1.bf16.msra.mxu0 %v1116
    %1199 = vmatprep.subr.bf16.mxu0 0
    %1200 = vmatpush1.bf16.msra.mxu0 %v1117
    %1201 = vmatprep.subr.bf16.mxu0 0
    %1202 = vmatpush1.bf16.msra.mxu0 %v1118
    %1203 = vmatprep.subr.bf16.mxu0 0
    %1204 = vmatpush1.bf16.msra.mxu0 %v1119
    %1205 = vmatprep.subr.bf16.mxu0 0
    %1206 = vmatpush1.bf16.msra.mxu0 %v1120
    %1207 = vmatprep.subr.bf16.mxu0 0
    %1208 = vmatpush1.bf16.msra.mxu0 %v1121
    %1209 = vmatprep.subr.bf16.mxu0 0
    %1210 = vmatpush1.bf16.msra.mxu0 %v1122
    %1211 = vmatprep.subr.bf16.mxu0 0
    %1212 = vmatpush1.bf16.msra.mxu0 %v1123
    %1213 = vmatprep.subr.bf16.mxu0 0
    %1214 = vmatpush1.bf16.msra.mxu0 %v1124
    %1215 = vmatprep.mubr.bf16.mxu0 %v996
    %1216 = vmatmul.mubr.bf16.gmra.mrb[0].mxu0 %v995
    %v1217 = vpop.f32.mrb[0].mxu0
    %v1218 = vadd.f32 0.0, %v1217
    %v1219 = vpop.f32.mrb[0].mxu0
    %v1220 = vpop.f32.mrb[0].mxu0
    %v1221 = vadd.f32 0.0, %v1220
    %v1222 = vpop.f32.mrb[0].mxu0
    %1223 = vmatprep.mubr.bf16.mxu0 %v999
    %1224 = vmatmul.mubr.bf16.gmra.mrb[0].mxu0 %v998
    %v1225 = vpop.f32.mrb[0].mxu0
    %v1226 = vadd.f32 0.0, %v1225
    %v1227 = vpop.f32.mrb[0].mxu0
    %v1228 = vpop.f32.mrb[0].mxu0
    %v1229 = vadd.f32 0.0, %v1228
    %v1230 = vpop.f32.mrb[0].mxu0
    %1231 = vmatprep.mubr.bf16.mxu0 %v1002
    %1232 = vmatmul.mubr.bf16.gmra.mrb[0].mxu0 %v1001
    %v1233 = vpop.f32.mrb[0].mxu0
    %v1234 = vadd.f32 0.0, %v1233
    %v1235 = vpop.f32.mrb[0].mxu0
    %v1236 = vpop.f32.mrb[0].mxu0
    %v1237 = vadd.f32 0.0, %v1236
    %v1238 = vpop.f32.mrb[0].mxu0
    %1239 = vmatprep.mubr.bf16.mxu0 %v1005
    %1240 = vmatmul.mubr.bf16.gmra.mrb[0].mxu0 %v1004
    %v1241 = vpop.f32.mrb[0].mxu0
    %v1242 = vadd.f32 0.0, %v1241
    %v1243 = vpop.f32.mrb[0].mxu0
    %v1244 = vpop.f32.mrb[0].mxu0
    %v1245 = vadd.f32 0.0, %v1244
    %v1246 = vpop.f32.mrb[0].mxu0
    %1247 = vmatprep.mubr.bf16.mxu0 %v1008
    %1248 = vmatmul.mubr.bf16.gmra.mrb[0].mxu0 %v1007
    %v1249 = vpop.f32.mrb[0].mxu0
    %v1250 = vadd.f32 0.0, %v1249
    %v1251 = vpop.f32.mrb[0].mxu0
    %v1252 = vpop.f32.mrb[0].mxu0
    %v1253 = vadd.f32 0.0, %v1252
    %v1254 = vpop.f32.mrb[0].mxu0
    %1255 = vmatprep.mubr.bf16.mxu0 %v1011
    %1256 = vmatmul.mubr.bf16.gmra.mrb[0].mxu0 %v1010
    %v1257 = vpop.f32.mrb[0].mxu0
    %v1258 = vadd.f32 0.0, %v1257
    %v1259 = vpop.f32.mrb[0].mxu0
    %v1260 = vpop.f32.mrb[0].mxu0
    %v1261 = vadd.f32 0.0, %v1260
    %v1262 = vpop.f32.mrb[0].mxu0
    %1263 = vmatprep.mubr.bf16.mxu0 %v1014
    %1264 = vmatmul.mubr.bf16.gmra.mrb[0].mxu0 %v1013
    %v1265 = vpop.f32.mrb[0].mxu0
    %v1266 = vadd.f32 0.0, %v1265
    %v1267 = vpop.f32.mrb[0].mxu0
    %v1268 = vpop.f32.mrb[0].mxu0
    %v1269 = vadd.f32 0.0, %v1268
    %v1270 = vpop.f32.mrb[0].mxu0
    %1271 = vmatprep.mubr.bf16.mxu0 %v1017
    %1272 = vmatmul.mubr.bf16.gmra.mrb[0].mxu0 %v1016
    %v1273 = vpop.f32.mrb[0].mxu0
    %v1274 = vadd.f32 0.0, %v1273
    %v1275 = vpop.f32.mrb[0].mxu0
    %v1276 = vpop.f32.mrb[0].mxu0
    %v1277 = vadd.f32 0.0, %v1276
    %v1278 = vpop.f32.mrb[0].mxu0
    %1279 = vdwg.mxu0
    %1280 = vmatprep.subr.bf16.mxu0 0
    %1281 = vmatpush1.bf16.msra.mxu0 %v1125
    %1282 = vmatprep.subr.bf16.mxu0 0
    %1283 = vmatpush1.bf16.msra.mxu0 %v1126
    %1284 = vmatprep.subr.bf16.mxu0 0
    %1285 = vmatpush1.bf16.msra.mxu0 %v1127
    %1286 = vmatprep.subr.bf16.mxu0 0
    %1287 = vmatpush1.bf16.msra.mxu0 %v1128
    %1288 = vmatprep.subr.bf16.mxu0 0
    %1289 = vmatpush1.bf16.msra.mxu0 %v1129
    %1290 = vmatprep.subr.bf16.mxu0 0
    %1291 = vmatpush1.bf16.msra.mxu0 %v1130
    %1292 = vmatprep.subr.bf16.mxu0 0
    %1293 = vmatpush1.bf16.msra.mxu0 %v1181
    %1294 = vmatprep.subr.bf16.mxu0 0
    %1295 = vmatpush1.bf16.msra.mxu0 0
    %1296 = vmatprep.subr.bf16.mxu0 0
    %1297 = vmatpush1.bf16.msra.mxu0 0
    %1298 = vmatprep.subr.bf16.mxu0 0
    %1299 = vmatpush1.bf16.msra.mxu0 0
    %1300 = vmatprep.subr.bf16.mxu0 0
    %1301 = vmatpush1.bf16.msra.mxu0 0
    %1302 = vmatprep.subr.bf16.mxu0 0
    %1303 = vmatpush1.bf16.msra.mxu0 0
    %1304 = vmatprep.subr.bf16.mxu0 0
    %1305 = vmatpush1.bf16.msra.mxu0 0
    %1306 = vmatprep.subr.bf16.mxu0 0
    %1307 = vmatpush1.bf16.msra.mxu0 0
    %1308 = vmatprep.subr.bf16.mxu0 0
    %1309 = vmatpush1.bf16.msra.mxu0 0
    %1310 = vmatprep.subr.bf16.mxu0 0
    %1311 = vmatpush1.bf16.msra.mxu0 0
    %1312 = vmatprep.mubr.bf16.mxu0 0
    %1313 = vmatmul.mubr.bf16.gmra.mrb[0].mxu0 %v1156
    %v1314 = vpop.f32.mrb[0].mxu0
    %v1315 = vadd.f32 %v1218, %v1314
    %v1316 = vpop.f32.mrb[0].mxu0
    %v1317 = vpop.f32.mrb[0].mxu0
    %v1318 = vadd.f32 %v1221, %v1317
    %v1319 = vpop.f32.mrb[0].mxu0
    %1320 = vmatprep.mubr.bf16.mxu0 0
    %1321 = vmatmul.mubr.bf16.gmra.mrb[0].mxu0 %v1159
    %v1322 = vpop.f32.mrb[0].mxu0
    %v1323 = vadd.f32 %v1226, %v1322
    %v1324 = vpop.f32.mrb[0].mxu0
    %v1325 = vpop.f32.mrb[0].mxu0
    %v1326 = vadd.f32 %v1229, %v1325
    %v1327 = vpop.f32.mrb[0].mxu0
    %1328 = vmatprep.mubr.bf16.mxu0 0
    %1329 = vmatmul.mubr.bf16.gmra.mrb[0].mxu0 %v1162
    %v1330 = vpop.f32.mrb[0].mxu0
    %v1331 = vadd.f32 %v1234, %v1330
    %v1332 = vpop.f32.mrb[0].mxu0
    %v1333 = vpop.f32.mrb[0].mxu0
    %v1334 = vadd.f32 %v1237, %v1333
    %v1335 = vpop.f32.mrb[0].mxu0
    %1336 = vmatprep.mubr.bf16.mxu0 0
    %1337 = vmatmul.mubr.bf16.gmra.mrb[0].mxu0 %v1165
    %v1338 = vpop.f32.mrb[0].mxu0
    %v1339 = vadd.f32 %v1242, %v1338
    %v1340 = vpop.f32.mrb[0].mxu0
    %v1341 = vpop.f32.mrb[0].mxu0
    %v1342 = vadd.f32 %v1245, %v1341
    %v1343 = vpop.f32.mrb[0].mxu0
    %1344 = vmatprep.mubr.bf16.mxu0 0
    %1345 = vmatmul.mubr.bf16.gmra.mrb[0].mxu0 %v1168
    %v1346 = vpop.f32.mrb[0].mxu0
    %v1347 = vadd.f32 %v1250, %v1346
    %v1348 = vpop.f32.mrb[0].mxu0
    %v1349 = vpop.f32.mrb[0].mxu0
    %v1350 = vadd.f32 %v1253, %v1349
    %v1351 = vpop.f32.mrb[0].mxu0
    %1352 = vmatprep.mubr.bf16.mxu0 0
    %1353 = vmatmul.mubr.bf16.gmra.mrb[0].mxu0 %v1171
    %v1354 = vpop.f32.mrb[0].mxu0
    %v1355 = vadd.f32 %v1258, %v1354
    %v1356 = vpop.f32.mrb[0].mxu0
    %v1357 = vpop.f32.mrb[0].mxu0
    %v1358 = vadd.f32 %v1261, %v1357
    %v1359 = vpop.f32.mrb[0].mxu0
    %1360 = vmatprep.mubr.bf16.mxu0 0
    %1361 = vmatmul.mubr.bf16.gmra.mrb[0].mxu0 %v1174
    %v1362 = vpop.f32.mrb[0].mxu0
    %v1363 = vadd.f32 %v1266, %v1362
    %v1364 = vpop.f32.mrb[0].mxu0
    %v1365 = vpop.f32.mrb[0].mxu0
    %v1366 = vadd.f32 %v1269, %v1365
    %v1367 = vpop.f32.mrb[0].mxu0
    %1368 = vmatprep.mubr.bf16.mxu0 0
    %1369 = vmatmul.mubr.bf16.gmra.mrb[0].mxu0 %v1177
    %v1370 = vpop.f32.mrb[0].mxu0
    %v1371 = vadd.f32 %v1274, %v1370
    %v1372 = vpop.f32.mrb[0].mxu0
    %v1373 = vpop.f32.mrb[0].mxu0
    %v1374 = vadd.f32 %v1277, %v1373
    %v1375 = vpop.f32.mrb[0].mxu0
    %1376 = vdwg.mxu0
    %v1377 = vld [vmem:[%s4] sm:$0x1]
    %v1378 = vld [vmem:[%s5] sm:$0x1]
    %v1379 = vsel %vm82, %v1315, 0.0
    %v1380 = vsel %vm82, %v1318, 0.0
    %v1381 = vadd.f32 %v1379, %v1380
    %v1382 = vsel %vm82, %v1323, 0.0
    %v1383 = vadd.f32 %v1381, %v1382
    %v1384 = vsel %vm82, %v1326, 0.0
    %v1385 = vadd.f32 %v1383, %v1384
    %v1386 = vsel %vm82, %v1331, 0.0
    %v1387 = vadd.f32 %v1385, %v1386
    %v1388 = vsel %vm82, %v1334, 0.0
    %v1389 = vadd.f32 %v1387, %v1388
    %v1390 = vsel %vm82, %v1339, 0.0
    %v1391 = vadd.f32 %v1389, %v1390
    %v1392 = vsel %vm82, %v1342, 0.0
    %v1393 = vadd.f32 %v1391, %v1392
    %v1394 = vrot.slane %v1393, 4
    %v1395 = vadd.f32 %v1393, %v1394
    %v1396 = vrot.slane %v1395, 2
    %v1397 = vadd.f32 %v1395, %v1396
    %v1398 = vrot.slane %v1397, 1
    %v1399 = vadd.f32 %v1397, %v1398
    %v1400 = vsel %vm82, %v1347, 0.0
    %v1401 = vsel %vm82, %v1350, 0.0
    %v1402 = vadd.f32 %v1400, %v1401
    %v1403 = vsel %vm82, %v1355, 0.0
    %v1404 = vadd.f32 %v1402, %v1403
    %v1405 = vsel %vm82, %v1358, 0.0
    %v1406 = vadd.f32 %v1404, %v1405
    %v1407 = vsel %vm82, %v1363, 0.0
    %v1408 = vadd.f32 %v1406, %v1407
    %v1409 = vsel %vm82, %v1366, 0.0
    %v1410 = vadd.f32 %v1408, %v1409
    %v1411 = vsel %vm82, %v1371, 0.0
    %v1412 = vadd.f32 %v1410, %v1411
    %v1413 = vsel %vm82, %v1374, 0.0
    %v1414 = vadd.f32 %v1412, %v1413
    %v1415 = vrot.slane %v1414, 4
    %v1416 = vadd.f32 %v1414, %v1415
    %v1417 = vrot.slane %v1416, 2
    %v1418 = vadd.f32 %v1416, %v1417
    %v1419 = vrot.slane %v1418, 1
    %v1420 = vadd.f32 %v1418, %v1419
    %v1421 = vmul.f32 %v1315, %v1315
    %v1422 = vmul.f32 %v1318, %v1318
    %v1423 = vmul.f32 %v1323, %v1323
    %v1424 = vmul.f32 %v1326, %v1326
    %v1425 = vmul.f32 %v1331, %v1331
    %v1426 = vmul.f32 %v1334, %v1334
    %v1427 = vmul.f32 %v1339, %v1339
    %v1428 = vmul.f32 %v1342, %v1342
    %v1429 = vmul.f32 %v1347, %v1347
    %v1430 = vmul.f32 %v1350, %v1350
    %v1431 = vmul.f32 %v1355, %v1355
    %v1432 = vmul.f32 %v1358, %v1358
    %v1433 = vmul.f32 %v1363, %v1363
    %v1434 = vmul.f32 %v1366, %v1366
    %v1435 = vmul.f32 %v1371, %v1371
    %v1436 = vmul.f32 %v1374, %v1374
    %v1437 = vsel %vm82, %v1421, 0.0
    %v1438 = vsel %vm82, %v1422, 0.0
    %v1439 = vadd.f32 %v1437, %v1438
    %v1440 = vsel %vm82, %v1423, 0.0
    %v1441 = vadd.f32 %v1439, %v1440
    %v1442 = vsel %vm82, %v1424, 0.0
    %v1443 = vadd.f32 %v1441, %v1442
    %v1444 = vsel %vm82, %v1425, 0.0
    %v1445 = vadd.f32 %v1443, %v1444
    %v1446 = vsel %vm82, %v1426, 0.0
    %v1447 = vadd.f32 %v1445, %v1446
    %v1448 = vsel %vm82, %v1427, 0.0
    %v1449 = vadd.f32 %v1447, %v1448
    %v1450 = vsel %vm82, %v1428, 0.0
    %v1451 = vadd.f32 %v1449, %v1450
    %v1452 = vrot.slane %v1451, 4
    %v1453 = vadd.f32 %v1451, %v1452
    %v1454 = vrot.slane %v1453, 2
    %v1455 = vadd.f32 %v1453, %v1454
    %v1456 = vrot.slane %v1455, 1
    %v1457 = vadd.f32 %v1455, %v1456
    %v1458 = vsel %vm82, %v1429, 0.0
    %v1459 = vsel %vm82, %v1430, 0.0
    %v1460 = vadd.f32 %v1458, %v1459
    %v1461 = vsel %vm82, %v1431, 0.0
    %v1462 = vadd.f32 %v1460, %v1461
    %v1463 = vsel %vm82, %v1432, 0.0
    %v1464 = vadd.f32 %v1462, %v1463
    %v1465 = vsel %vm82, %v1433, 0.0
    %v1466 = vadd.f32 %v1464, %v1465
    %v1467 = vsel %vm82, %v1434, 0.0
    %v1468 = vadd.f32 %v1466, %v1467
    %v1469 = vsel %vm82, %v1435, 0.0
    %v1470 = vadd.f32 %v1468, %v1469
    %v1471 = vsel %vm82, %v1436, 0.0
    %v1472 = vadd.f32 %v1470, %v1471
    %v1473 = vrot.slane %v1472, 4
    %v1474 = vadd.f32 %v1472, %v1473
    %v1475 = vrot.slane %v1474, 2
    %v1476 = vadd.f32 %v1474, %v1475
    %v1477 = vrot.slane %v1476, 1
    %v1478 = vadd.f32 %v1476, %v1477
    %v1479 = vmul.f32 %v1399, 0.015625
    %v1480 = vmul.f32 %v1420, 0.015625
    %v1481 = vmul.f32 %v1457, 0.015625
    %v1482 = vmul.f32 %v1478, 0.015625
    %v1483 = vmul.f32 %v1479, %v1479
    %v1484 = vmul.f32 %v1480, %v1480
    %v1485 = vsub.f32 %v1481, %v1483
    %v1486 = vsub.f32 %v1482, %v1484
    %v1487 = vadd.f32 %v1485, 1e-05
    %v1488 = vadd.f32 %v1486, 1e-05
    %v1489 = vrsqrt.pop %v1487
    %v1490 = vrsqrt.pop %v1488
    %v1491 = vmul.f32 %v1377, %v1489
    %v1492 = vmul.f32 %v1377, %v1490
    %v1493 = vmul.f32 %v1479, %v1491
    %v1494 = vmul.f32 %v1480, %v1492
    %v1495 = vsub.f32 %v1378, %v1493
    %v1496 = vsub.f32 %v1378, %v1494
    %v1497 = vlaneseq
    %v1498 = vshrl.u32 %v1497, 7
    %v1499 = vsub.s32 0, %v1498
    %v1500 = vrot.slane %v1491, %v1499
    %v1501 = vlaneseq
    %v1502 = vshrl.u32 %v1501, 7
    %v1503 = vsub.s32 0, %v1502
    %v1504 = vrot.slane %v1492, %v1503
    %v1505 = vmul.f32 %v1315, %v1500
    %v1506 = vmul.f32 %v1318, %v1500
    %v1507 = vmul.f32 %v1323, %v1500
    %v1508 = vmul.f32 %v1326, %v1500
    %v1509 = vmul.f32 %v1331, %v1500
    %v1510 = vmul.f32 %v1334, %v1500
    %v1511 = vmul.f32 %v1339, %v1500
    %v1512 = vmul.f32 %v1342, %v1500
    %v1513 = vmul.f32 %v1347, %v1504
    %v1514 = vmul.f32 %v1350, %v1504
    %v1515 = vmul.f32 %v1355, %v1504
    %v1516 = vmul.f32 %v1358, %v1504
    %v1517 = vmul.f32 %v1363, %v1504
    %v1518 = vmul.f32 %v1366, %v1504
    %v1519 = vmul.f32 %v1371, %v1504
    %v1520 = vmul.f32 %v1374, %v1504
    %v1521 = vlaneseq
    %v1522 = vshrl.u32 %v1521, 7
    %v1523 = vsub.s32 0, %v1522
    %v1524 = vrot.slane %v1495, %v1523
    %v1525 = vlaneseq
    %v1526 = vshrl.u32 %v1525, 7
    %v1527 = vsub.s32 0, %v1526
    %v1528 = vrot.slane %v1496, %v1527
    %v1529 = vadd.f32 %v1505, %v1524
    %v1530 = vadd.f32 %v1506, %v1524
    %v1531 = vadd.f32 %v1507, %v1524
    %v1532 = vadd.f32 %v1508, %v1524
    %v1533 = vadd.f32 %v1509, %v1524
    %v1534 = vadd.f32 %v1510, %v1524
    %v1535 = vadd.f32 %v1511, %v1524
    %v1536 = vadd.f32 %v1512, %v1524
    %v1537 = vadd.f32 %v1513, %v1528
    %v1538 = vadd.f32 %v1514, %v1528
    %v1539 = vadd.f32 %v1515, %v1528
    %v1540 = vadd.f32 %v1516, %v1528
    %v1541 = vadd.f32 %v1517, %v1528
    %v1542 = vadd.f32 %v1518, %v1528
    %v1543 = vadd.f32 %v1519, %v1528
    %v1544 = vadd.f32 %v1520, %v1528
    %v1545 = vmax.f32 %v1529, 0.0
    %v1546 = vmax.f32 %v1530, 0.0
    %v1547 = vmax.f32 %v1531, 0.0
    %v1548 = vmax.f32 %v1532, 0.0
    %v1549 = vmax.f32 %v1533, 0.0
    %v1550 = vmax.f32 %v1534, 0.0
    %v1551 = vmax.f32 %v1535, 0.0
    %v1552 = vmax.f32 %v1536, 0.0
    %v1553 = vmax.f32 %v1537, 0.0
    %v1554 = vmax.f32 %v1538, 0.0
    %v1555 = vmax.f32 %v1539, 0.0
    %v1556 = vmax.f32 %v1540, 0.0
    %v1557 = vmax.f32 %v1541, 0.0
    %v1558 = vmax.f32 %v1542, 0.0
    %v1559 = vmax.f32 %v1543, 0.0
    %v1560 = vmax.f32 %v1544, 0.0
    %1561 = vst.msk [vmem:[#allocation3] sm:$0xff] %vm82, 0.0
    %vm1562 = vcmask 254976
    %1563 = vst.msk [vmem:[#allocation3 + $0x8] sm:$0x3] %vm1562, 0.0
    %1564 = vst.msk [vmem:[#allocation3 + $0x10] sm:$0xff] %vm82, 0.0
    %1565 = vst.msk [vmem:[#allocation3 + $0x18] sm:$0x3] %vm1562, 0.0
    %1566 = vst.msk [vmem:[#allocation3 + $0x20] sm:$0xff] %vm82, 0.0
    %1567 = vst.msk [vmem:[#allocation3 + $0x28] sm:$0x3] %vm1562, 0.0
    %1568 = vst.msk [vmem:[#allocation3 + $0x30] sm:$0xff] %vm82, 0.0
    %1569 = vst.msk [vmem:[#allocation3 + $0x38] sm:$0x3] %vm1562, 0.0
    %1570 = vst.msk [vmem:[#allocation3 + $0x40] sm:$0xff] %vm82, 0.0
    %1571 = vst.msk [vmem:[#allocation3 + $0x48] sm:$0x3] %vm1562, 0.0
    %1572 = vst.msk [vmem:[#allocation3 + $0x50] sm:$0xff] %vm82, 0.0
    %1573 = vst.msk [vmem:[#allocation3 + $0x58] sm:$0x3] %vm1562, 0.0
    %1574 = vst.msk [vmem:[#allocation3 + $0x60] sm:$0xff] %vm82, 0.0
    %1575 = vst.msk [vmem:[#allocation3 + $0x68] sm:$0x3] %vm1562, 0.0
    %1576 = vst.msk [vmem:[#allocation3 + $0x70] sm:$0xff] %vm82, 0.0
    %1577 = vst.msk [vmem:[#allocation3 + $0x78] sm:$0x3] %vm1562, 0.0
    %1578 = vst.msk [vmem:[#allocation3 + $0x80] sm:$0xff] %vm82, 0.0
    %1579 = vst.msk [vmem:[#allocation3 + $0x88] sm:$0x3] %vm1562, 0.0
    %1580 = vst.msk [vmem:[#allocation3 + $0x90] sm:$0xff] %vm82, 0.0
    %1581 = vst.msk [vmem:[#allocation3 + $0x98] sm:$0x3] %vm1562, 0.0
    %1582 = vst.msk [vmem:[#allocation3 + $0xa0] sm:$0xff] %vm82, 0.0
    %1583 = vst.msk [vmem:[#allocation3 + $0xa8] sm:$0x3] %vm1562, 0.0
    %1584 = vst.msk [vmem:[#allocation3 + $0xb0] sm:$0xff] %vm82, 0.0
    %1585 = vst.msk [vmem:[#allocation3 + $0xb8] sm:$0x3] %vm1562, 0.0
    %1586 = vst.msk [vmem:[#allocation3 + $0xc0] sm:$0xff] %vm82, 0.0
    %1587 = vst.msk [vmem:[#allocation3 + $0xc8] sm:$0x3] %vm1562, 0.0
    %1588 = vst.msk [vmem:[#allocation3 + $0xd0] sm:$0xff] %vm82, 0.0
    %1589 = vst.msk [vmem:[#allocation3 + $0xd8] sm:$0x3] %vm1562, 0.0
    %1590 = vst.msk [vmem:[#allocation3 + $0xe0] sm:$0xff] %vm82, 0.0
    %1591 = vst.msk [vmem:[#allocation3 + $0xe8] sm:$0x3] %vm1562, 0.0
    %1592 = vst.msk [vmem:[#allocation3 + $0xf0] sm:$0xff] %vm82, 0.0
    %1593 = vst.msk [vmem:[#allocation3 + $0xf8] sm:$0x3] %vm1562, 0.0
    %1594 = vst.msk [vmem:[#allocation3 + $0x100] sm:$0xff] %vm82, 0.0
    %1595 = vst.msk [vmem:[#allocation3 + $0x108] sm:$0x3] %vm1562, 0.0
    %1596 = vst.msk [vmem:[#allocation3 + $0x110] sm:$0xff] %vm82, 0.0
    %1597 = vst.msk [vmem:[#allocation3 + $0x118] sm:$0x3] %vm1562, 0.0
    %1598 = vst.msk [vmem:[#allocation3 + $0x120] sm:$0xff] %vm82, 0.0
    %1599 = vst.msk [vmem:[#allocation3 + $0x128] sm:$0x3] %vm1562, 0.0
    %1600 = vst.msk [vmem:[#allocation3 + $0x130] sm:$0xff] %vm82, 0.0
    %1601 = vst.msk [vmem:[#allocation3 + $0x138] sm:$0x3] %vm1562, 0.0
    %s1602 = scalar_lea.vmem [#allocation3], 16
    %1603 = vst.msk [vmem:[%s1602 + $0x1] sm:$0xff] %vm82, %v1545
    %1604 = vst.msk [vmem:[%s1602 + $0x11] sm:$0xff] %vm82, %v1546
    %1605 = vst.msk [vmem:[%s1602 + $0x21] sm:$0xff] %vm82, %v1547
    %1606 = vst.msk [vmem:[%s1602 + $0x31] sm:$0xff] %vm82, %v1548
    %1607 = vst.msk [vmem:[%s1602 + $0x41] sm:$0xff] %vm82, %v1549
    %1608 = vst.msk [vmem:[%s1602 + $0x51] sm:$0xff] %vm82, %v1550
    %1609 = vst.msk [vmem:[%s1602 + $0x61] sm:$0xff] %vm82, %v1551
    %1610 = vst.msk [vmem:[%s1602 + $0x71] sm:$0xff] %vm82, %v1552
    %1611 = vst.msk [vmem:[%s1602 + $0xa1] sm:$0xff] %vm82, %v1553
    %1612 = vst.msk [vmem:[%s1602 + $0xb1] sm:$0xff] %vm82, %v1554
    %1613 = vst.msk [vmem:[%s1602 + $0xc1] sm:$0xff] %vm82, %v1555
    %1614 = vst.msk [vmem:[%s1602 + $0xd1] sm:$0xff] %vm82, %v1556
    %1615 = vst.msk [vmem:[%s1602 + $0xe1] sm:$0xff] %vm82, %v1557
    %1616 = vst.msk [vmem:[%s1602 + $0xf1] sm:$0xff] %vm82, %v1558
    %1617 = vst.msk [vmem:[%s1602 + $0x101] sm:$0xff] %vm82, %v1559
    %1618 = vst.msk [vmem:[%s1602 + $0x111] sm:$0xff] %vm82, %v1560
    %v1619 = vld [vmem:[%s3] sm:$0xf]
    %v1620 = vld [vmem:[%s3 + $0x4] sm:$0xf]
    %v1621 = vld [vmem:[%s3 + $0x8] sm:$0xf]
    %v1622 = vld [vmem:[%s3 + $0xc] sm:$0xf]
    %v1623 = vld [vmem:[%s3 + $0x10] sm:$0xf]
    %v1624 = vld [vmem:[%s3 + $0x14] sm:$0xf]
    %v1625 = vld [vmem:[%s3 + $0x18] sm:$0xf]
    %v1626 = vld [vmem:[%s3 + $0x1c] sm:$0xf]
    %v1627 = vld [vmem:[%s3 + $0x20] sm:$0xf]
    %v1628 = vld [vmem:[%s3 + $0x24] sm:$0xf]
    %v1629 = vld [vmem:[%s3 + $0x28] sm:$0xf]
    %v1630 = vld [vmem:[%s3 + $0x2c] sm:$0xf]
    %v1631 = vld [vmem:[%s3 + $0x30] sm:$0xf]
    %v1632 = vld [vmem:[%s3 + $0x34] sm:$0xf]
    %v1633 = vld [vmem:[%s3 + $0x38] sm:$0xf]
    %v1634 = vld [vmem:[%s3 + $0x3c] sm:$0xf]
    %v1635 = vld [vmem:[%s3 + $0x40] sm:$0xf]
    %v1636 = vld [vmem:[%s3 + $0x44] sm:$0xf]
    %v1637 = vld [vmem:[%s3 + $0x48] sm:$0xf]
    %v1638 = vld [vmem:[%s3 + $0x4c] sm:$0xf]
    %v1639 = vld [vmem:[%s3 + $0x50] sm:$0xf]
    %v1640 = vld [vmem:[%s3 + $0x54] sm:$0xf]
    %v1641 = vld [vmem:[%s3 + $0x58] sm:$0xf]
    %v1642 = vld [vmem:[%s3 + $0x5c] sm:$0xf]
    %v1643 = vld [vmem:[%s3 + $0x60] sm:$0xf]
    %v1644 = vld [vmem:[%s3 + $0x64] sm:$0xf]
    %v1645 = vld [vmem:[%s3 + $0x68] sm:$0xf]
    %v1646 = vld [vmem:[%s3 + $0x6c] sm:$0xf]
    %v1647 = vld [vmem:[%s3 + $0x70] sm:$0xf]
    %v1648 = vld [vmem:[%s3 + $0x74] sm:$0xf]
    %v1649 = vld [vmem:[%s3 + $0x78] sm:$0xf]
    %v1650 = vld [vmem:[%s3 + $0x7c] sm:$0xf]
    %v1651 = vld [vmem:[%s3 + $0x80] sm:$0xf]
    %v1652 = vld [vmem:[%s3 + $0x84] sm:$0xf]
    %v1653 = vld [vmem:[%s3 + $0x88] sm:$0xf]
    %v1654 = vld [vmem:[%s3 + $0x8c] sm:$0xf]
    %v1655 = vld [vmem:[#allocation3] sm:$0xff]
    %v1656 = vld [vmem:[#allocation3 + $0x10] sm:$0xff]
    %v1657 = vld [vmem:[#allocation3 + $0x20] sm:$0xff]
    %v1658 = vld [vmem:[#allocation3 + $0x30] sm:$0xff]
    %v1659 = vld [vmem:[#allocation3 + $0x40] sm:$0xff]
    %v1660 = vld [vmem:[#allocation3 + $0x50] sm:$0xff]
    %v1661 = vld [vmem:[#allocation3 + $0x60] sm:$0xff]
    %v1662 = vld [vmem:[#allocation3 + $0x70] sm:$0xff]
    %v1663 = vld [vmem:[#allocation3 + $0xa0] sm:$0xff]
    %v1664 = vld [vmem:[#allocation3 + $0xb0] sm:$0xff]
    %v1665 = vld [vmem:[#allocation3 + $0xc0] sm:$0xff]
    %v1666 = vld [vmem:[#allocation3 + $0xd0] sm:$0xff]
    %v1667 = vld [vmem:[#allocation3 + $0xe0] sm:$0xff]
    %v1668 = vld [vmem:[#allocation3 + $0xf0] sm:$0xff]
    %v1669 = vld [vmem:[#allocation3 + $0x100] sm:$0xff]
    %v1670 = vld [vmem:[#allocation3 + $0x110] sm:$0xff]
    %v1671 = vld [vmem:[#allocation3 + $0x1] sm:$0xff]
    %v1672 = vld [vmem:[#allocation3 + $0x11] sm:$0xff]
    %v1673 = vld [vmem:[#allocation3 + $0x21] sm:$0xff]
    %v1674 = vld [vmem:[#allocation3 + $0x31] sm:$0xff]
    %v1675 = vld [vmem:[#allocation3 + $0x41] sm:$0xff]
    %v1676 = vld [vmem:[#allocation3 + $0x51] sm:$0xff]
    %v1677 = vld [vmem:[#allocation3 + $0x61] sm:$0xff]
    %v1678 = vld [vmem:[#allocation3 + $0x71] sm:$0xff]
    %v1679 = vld [vmem:[#allocation3 + $0xa1] sm:$0xff]
    %v1680 = vld [vmem:[#allocation3 + $0xb1] sm:$0xff]
    %v1681 = vld [vmem:[#allocation3 + $0xc1] sm:$0xff]
    %v1682 = vld [vmem:[#allocation3 + $0xd1] sm:$0xff]
    %v1683 = vld [vmem:[#allocation3 + $0xe1] sm:$0xff]
    %v1684 = vld [vmem:[#allocation3 + $0xf1] sm:$0xff]
    %v1685 = vld [vmem:[#allocation3 + $0x101] sm:$0xff]
    %v1686 = vld [vmem:[#allocation3 + $0x111] sm:$0xff]
    %v1687 = vld [vmem:[#allocation3 + $0x2] sm:$0xff]
    %v1688 = vld [vmem:[#allocation3 + $0x12] sm:$0xff]
    %v1689 = vld [vmem:[#allocation3 + $0x22] sm:$0xff]
    %v1690 = vld [vmem:[#allocation3 + $0x32] sm:$0xff]
    %v1691 = vld [vmem:[#allocation3 + $0x42] sm:$0xff]
    %v1692 = vld [vmem:[#allocation3 + $0x52] sm:$0xff]
    %v1693 = vld [vmem:[#allocation3 + $0x62] sm:$0xff]
    %v1694 = vld [vmem:[#allocation3 + $0x72] sm:$0xff]
    %v1695 = vld [vmem:[#allocation3 + $0xa2] sm:$0xff]
    %v1696 = vld [vmem:[#allocation3 + $0xb2] sm:$0xff]
    %v1697 = vld [vmem:[#allocation3 + $0xc2] sm:$0xff]
    %v1698 = vld [vmem:[#allocation3 + $0xd2] sm:$0xff]
    %v1699 = vld [vmem:[#allocation3 + $0xe2] sm:$0xff]
    %v1700 = vld [vmem:[#allocation3 + $0xf2] sm:$0xff]
    %v1701 = vld [vmem:[#allocation3 + $0x102] sm:$0xff]
    %v1702 = vld [vmem:[#allocation3 + $0x112] sm:$0xff]
    %v1703 = vld [vmem:[%s1602] sm:$0xff]
    %v1704 = vld [vmem:[%s1602 + $0x10] sm:$0xff]
    %v1705 = vld [vmem:[%s1602 + $0x20] sm:$0xff]
    %v1706 = vld [vmem:[%s1602 + $0x30] sm:$0xff]
    %v1707 = vld [vmem:[%s1602 + $0x40] sm:$0xff]
    %v1708 = vld [vmem:[%s1602 + $0x50] sm:$0xff]
    %v1709 = vld [vmem:[%s1602 + $0x60] sm:$0xff]
    %v1710 = vld [vmem:[%s1602 + $0x70] sm:$0xff]
    %v1711 = vld [vmem:[%s1602 + $0xa0] sm:$0xff]
    %v1712 = vld [vmem:[%s1602 + $0xb0] sm:$0xff]
    %v1713 = vld [vmem:[%s1602 + $0xc0] sm:$0xff]
    %v1714 = vld [vmem:[%s1602 + $0xd0] sm:$0xff]
    %v1715 = vld [vmem:[%s1602 + $0xe0] sm:$0xff]
    %v1716 = vld [vmem:[%s1602 + $0xf0] sm:$0xff]
    %v1717 = vld [vmem:[%s1602 + $0x100] sm:$0xff]
    %v1718 = vld [vmem:[%s1602 + $0x110] sm:$0xff]
    %v1719 = vld [vmem:[%s1602 + $0x1] sm:$0xff]
    %v1720 = vld [vmem:[%s1602 + $0x11] sm:$0xff]
    %v1721 = vld [vmem:[%s1602 + $0x21] sm:$0xff]
    %v1722 = vld [vmem:[%s1602 + $0x31] sm:$0xff]
    %v1723 = vld [vmem:[%s1602 + $0x41] sm:$0xff]
    %v1724 = vld [vmem:[%s1602 + $0x51] sm:$0xff]
    %v1725 = vld [vmem:[%s1602 + $0x61] sm:$0xff]
    %v1726 = vld [vmem:[%s1602 + $0x71] sm:$0xff]
    %v1727 = vld [vmem:[%s1602 + $0xa1] sm:$0xff]
    %v1728 = vld [vmem:[%s1602 + $0xb1] sm:$0xff]
    %v1729 = vld [vmem:[%s1602 + $0xc1] sm:$0xff]
    %v1730 = vld [vmem:[%s1602 + $0xd1] sm:$0xff]
    %v1731 = vld [vmem:[%s1602 + $0xe1] sm:$0xff]
    %v1732 = vld [vmem:[%s1602 + $0xf1] sm:$0xff]
    %v1733 = vld [vmem:[%s1602 + $0x101] sm:$0xff]
    %v1734 = vld [vmem:[%s1602 + $0x111] sm:$0xff]
    %v1735 = vld [vmem:[%s1602 + $0x2] sm:$0xff]
    %v1736 = vld [vmem:[%s1602 + $0x12] sm:$0xff]
    %v1737 = vld [vmem:[%s1602 + $0x22] sm:$0xff]
    %v1738 = vld [vmem:[%s1602 + $0x32] sm:$0xff]
    %v1739 = vld [vmem:[%s1602 + $0x42] sm:$0xff]
    %v1740 = vld [vmem:[%s1602 + $0x52] sm:$0xff]
    %v1741 = vld [vmem:[%s1602 + $0x62] sm:$0xff]
    %v1742 = vld [vmem:[%s1602 + $0x72] sm:$0xff]
    %v1743 = vld [vmem:[%s1602 + $0xa2] sm:$0xff]
    %v1744 = vld [vmem:[%s1602 + $0xb2] sm:$0xff]
    %v1745 = vld [vmem:[%s1602 + $0xc2] sm:$0xff]
    %v1746 = vld [vmem:[%s1602 + $0xd2] sm:$0xff]
    %v1747 = vld [vmem:[%s1602 + $0xe2] sm:$0xff]
    %v1748 = vld [vmem:[%s1602 + $0xf2] sm:$0xff]
    %v1749 = vld [vmem:[%s1602 + $0x102] sm:$0xff]
    %v1750 = vld [vmem:[%s1602 + $0x112] sm:$0xff]
    %s1751 = scalar_lea.vmem [#allocation3], 32
    %v1752 = vld [vmem:[%s1751] sm:$0xff]
    %v1753 = vld [vmem:[%s1751 + $0x10] sm:$0xff]
    %v1754 = vld [vmem:[%s1751 + $0x20] sm:$0xff]
    %v1755 = vld [vmem:[%s1751 + $0x30] sm:$0xff]
    %v1756 = vld [vmem:[%s1751 + $0x40] sm:$0xff]
    %v1757 = vld [vmem:[%s1751 + $0x50] sm:$0xff]
    %v1758 = vld [vmem:[%s1751 + $0x60] sm:$0xff]
    %v1759 = vld [vmem:[%s1751 + $0x70] sm:$0xff]
    %v1760 = vld [vmem:[%s1751 + $0xa0] sm:$0xff]
    %v1761 = vld [vmem:[%s1751 + $0xb0] sm:$0xff]
    %v1762 = vld [vmem:[%s1751 + $0xc0] sm:$0xff]
    %v1763 = vld [vmem:[%s1751 + $0xd0] sm:$0xff]
    %v1764 = vld [vmem:[%s1751 + $0xe0] sm:$0xff]
    %v1765 = vld [vmem:[%s1751 + $0xf0] sm:$0xff]
    %v1766 = vld [vmem:[%s1751 + $0x100] sm:$0xff]
    %v1767 = vld [vmem:[%s1751 + $0x110] sm:$0xff]
    %v1768 = vld [vmem:[%s1751 + $0x1] sm:$0xff]
    %v1769 = vld [vmem:[%s1751 + $0x11] sm:$0xff]
    %v1770 = vld [vmem:[%s1751 + $0x21] sm:$0xff]
    %v1771 = vld [vmem:[%s1751 + $0x31] sm:$0xff]
    %v1772 = vld [vmem:[%s1751 + $0x41] sm:$0xff]
    %v1773 = vld [vmem:[%s1751 + $0x51] sm:$0xff]
    %v1774 = vld [vmem:[%s1751 + $0x61] sm:$0xff]
    %v1775 = vld [vmem:[%s1751 + $0x71] sm:$0xff]
    %v1776 = vld [vmem:[%s1751 + $0xa1] sm:$0xff]
    %v1777 = vld [vmem:[%s1751 + $0xb1] sm:$0xff]
    %v1778 = vld [vmem:[%s1751 + $0xc1] sm:$0xff]
    %v1779 = vld [vmem:[%s1751 + $0xd1] sm:$0xff]
    %v1780 = vld [vmem:[%s1751 + $0xe1] sm:$0xff]
    %v1781 = vld [vmem:[%s1751 + $0xf1] sm:$0xff]
    %v1782 = vld [vmem:[%s1751 + $0x101] sm:$0xff]
    %v1783 = vld [vmem:[%s1751 + $0x111] sm:$0xff]
    %v1784 = vld [vmem:[%s1751 + $0x2] sm:$0xff]
    %v1785 = vld [vmem:[%s1751 + $0x12] sm:$0xff]
    %v1786 = vld [vmem:[%s1751 + $0x22] sm:$0xff]
    %v1787 = vld [vmem:[%s1751 + $0x32] sm:$0xff]
    %v1788 = vld [vmem:[%s1751 + $0x42] sm:$0xff]
    %v1789 = vld [vmem:[%s1751 + $0x52] sm:$0xff]
    %v1790 = vld [vmem:[%s1751 + $0x62] sm:$0xff]
    %v1791 = vld [vmem:[%s1751 + $0x72] sm:$0xff]
    %v1792 = vld [vmem:[%s1751 + $0xa2] sm:$0xff]
    %v1793 = vld [vmem:[%s1751 + $0xb2] sm:$0xff]
    %v1794 = vld [vmem:[%s1751 + $0xc2] sm:$0xff]
    %v1795 = vld [vmem:[%s1751 + $0xd2] sm:$0xff]
    %v1796 = vld [vmem:[%s1751 + $0xe2] sm:$0xff]
    %v1797 = vld [vmem:[%s1751 + $0xf2] sm:$0xff]
    %v1798 = vld [vmem:[%s1751 + $0x102] sm:$0xff]
    %v1799 = vld [vmem:[%s1751 + $0x112] sm:$0xff]
    %1816 = vrot.lane.b32.xlu0 %v1671, 32
    %v1817 = vpop.permute.xlu0 %1816
    %1818 = vrot.lane.b32.xlu0 %v1672, 32
    %v1819 = vpop.permute.xlu0 %1818
    %1820 = vrot.lane.b32.xlu0 %v1673, 32
    %v1821 = vpop.permute.xlu0 %1820
    %1822 = vrot.lane.b32.xlu0 %v1674, 32
    %v1823 = vpop.permute.xlu0 %1822
    %1824 = vrot.lane.b32.xlu0 %v1675, 32
    %v1825 = vpop.permute.xlu0 %1824
    %1826 = vrot.lane.b32.xlu0 %v1676, 32
    %v1827 = vpop.permute.xlu0 %1826
    %1828 = vrot.lane.b32.xlu0 %v1677, 32
    %v1829 = vpop.permute.xlu0 %1828
    %1830 = vrot.lane.b32.xlu0 %v1678, 32
    %v1831 = vpop.permute.xlu0 %1830
    %1832 = vrot.lane.b32.xlu0 %v1679, 32
    %v1833 = vpop.permute.xlu0 %1832
    %1834 = vrot.lane.b32.xlu0 %v1680, 32
    %v1835 = vpop.permute.xlu0 %1834
    %1836 = vrot.lane.b32.xlu0 %v1681, 32
    %v1837 = vpop.permute.xlu0 %1836
    %1838 = vrot.lane.b32.xlu0 %v1682, 32
    %v1839 = vpop.permute.xlu0 %1838
    %1840 = vrot.lane.b32.xlu0 %v1683, 32
    %v1841 = vpop.permute.xlu0 %1840
    %1842 = vrot.lane.b32.xlu0 %v1684, 32
    %v1843 = vpop.permute.xlu0 %1842
    %1844 = vrot.lane.b32.xlu0 %v1685, 32
    %v1845 = vpop.permute.xlu0 %1844
    %1846 = vrot.lane.b32.xlu0 %v1686, 32
    %v1847 = vpop.permute.xlu0 %1846
    %1880 = vrot.lane.b32.xlu0 %v1687, 64
    %v1881 = vpop.permute.xlu0 %1880
    %1882 = vrot.lane.b32.xlu0 %v1688, 64
    %v1883 = vpop.permute.xlu0 %1882
    %1884 = vrot.lane.b32.xlu0 %v1689, 64
    %v1885 = vpop.permute.xlu0 %1884
    %1886 = vrot.lane.b32.xlu0 %v1690, 64
    %v1887 = vpop.permute.xlu0 %1886
    %1888 = vrot.lane.b32.xlu0 %v1691, 64
    %v1889 = vpop.permute.xlu0 %1888
    %1890 = vrot.lane.b32.xlu0 %v1692, 64
    %v1891 = vpop.permute.xlu0 %1890
    %1892 = vrot.lane.b32.xlu0 %v1693, 64
    %v1893 = vpop.permute.xlu0 %1892
    %1894 = vrot.lane.b32.xlu0 %v1694, 64
    %v1895 = vpop.permute.xlu0 %1894
    %1896 = vrot.lane.b32.xlu0 %v1695, 64
    %v1897 = vpop.permute.xlu0 %1896
    %1898 = vrot.lane.b32.xlu0 %v1696, 64
    %v1899 = vpop.permute.xlu0 %1898
    %1900 = vrot.lane.b32.xlu0 %v1697, 64
    %v1901 = vpop.permute.xlu0 %1900
    %1902 = vrot.lane.b32.xlu0 %v1698, 64
    %v1903 = vpop.permute.xlu0 %1902
    %1904 = vrot.lane.b32.xlu0 %v1699, 64
    %v1905 = vpop.permute.xlu0 %1904
    %1906 = vrot.lane.b32.xlu0 %v1700, 64
    %v1907 = vpop.permute.xlu0 %1906
    %1908 = vrot.lane.b32.xlu0 %v1701, 64
    %v1909 = vpop.permute.xlu0 %1908
    %1910 = vrot.lane.b32.xlu0 %v1702, 64
    %v1911 = vpop.permute.xlu0 %1910
    %1944 = vrot.lane.b32.xlu0 %v1703, 96
    %v1945 = vpop.permute.xlu0 %1944
    %1946 = vrot.lane.b32.xlu0 %v1704, 96
    %v1947 = vpop.permute.xlu0 %1946
    %1948 = vrot.lane.b32.xlu0 %v1705, 96
    %v1949 = vpop.permute.xlu0 %1948
    %1950 = vrot.lane.b32.xlu0 %v1706, 96
    %v1951 = vpop.permute.xlu0 %1950
    %1952 = vrot.lane.b32.xlu0 %v1707, 96
    %v1953 = vpop.permute.xlu0 %1952
    %1954 = vrot.lane.b32.xlu0 %v1708, 96
    %v1955 = vpop.permute.xlu0 %1954
    %1956 = vrot.lane.b32.xlu0 %v1709, 96
    %v1957 = vpop.permute.xlu0 %1956
    %1958 = vrot.lane.b32.xlu0 %v1710, 96
    %v1959 = vpop.permute.xlu0 %1958
    %1960 = vrot.lane.b32.xlu0 %v1711, 96
    %v1961 = vpop.permute.xlu0 %1960
    %1962 = vrot.lane.b32.xlu0 %v1712, 96
    %v1963 = vpop.permute.xlu0 %1962
    %1964 = vrot.lane.b32.xlu0 %v1713, 96
    %v1965 = vpop.permute.xlu0 %1964
    %1966 = vrot.lane.b32.xlu0 %v1714, 96
    %v1967 = vpop.permute.xlu0 %1966
    %1968 = vrot.lane.b32.xlu0 %v1715, 96
    %v1969 = vpop.permute.xlu0 %1968
    %1970 = vrot.lane.b32.xlu0 %v1716, 96
    %v1971 = vpop.permute.xlu0 %1970
    %1972 = vrot.lane.b32.xlu0 %v1717, 96
    %v1973 = vpop.permute.xlu0 %1972
    %1974 = vrot.lane.b32.xlu0 %v1718, 96
    %v1975 = vpop.permute.xlu0 %1974
    %2008 = vrot.lane.b32.xlu0 %v1735, 32
    %v2009 = vpop.permute.xlu0 %2008
    %2010 = vrot.lane.b32.xlu0 %v1736, 32
    %v2011 = vpop.permute.xlu0 %2010
    %2012 = vrot.lane.b32.xlu0 %v1737, 32
    %v2013 = vpop.permute.xlu0 %2012
    %2014 = vrot.lane.b32.xlu0 %v1738, 32
    %v2015 = vpop.permute.xlu0 %2014
    %2016 = vrot.lane.b32.xlu0 %v1739, 32
    %v2017 = vpop.permute.xlu0 %2016
    %2018 = vrot.lane.b32.xlu0 %v1740, 32
    %v2019 = vpop.permute.xlu0 %2018
    %2020 = vrot.lane.b32.xlu0 %v1741, 32
    %v2021 = vpop.permute.xlu0 %2020
    %2022 = vrot.lane.b32.xlu0 %v1742, 32
    %v2023 = vpop.permute.xlu0 %2022
    %2024 = vrot.lane.b32.xlu0 %v1743, 32
    %v2025 = vpop.permute.xlu0 %2024
    %2026 = vrot.lane.b32.xlu0 %v1744, 32
    %v2027 = vpop.permute.xlu0 %2026
    %2028 = vrot.lane.b32.xlu0 %v1745, 32
    %v2029 = vpop.permute.xlu0 %2028
    %2030 = vrot.lane.b32.xlu0 %v1746, 32
    %v2031 = vpop.permute.xlu0 %2030
    %2032 = vrot.lane.b32.xlu0 %v1747, 32
    %v2033 = vpop.permute.xlu0 %2032
    %2034 = vrot.lane.b32.xlu0 %v1748, 32
    %v2035 = vpop.permute.xlu0 %2034
    %2036 = vrot.lane.b32.xlu0 %v1749, 32
    %v2037 = vpop.permute.xlu0 %2036
    %2038 = vrot.lane.b32.xlu0 %v1750, 32
    %v2039 = vpop.permute.xlu0 %2038
    %2072 = vrot.lane.b32.xlu0 %v1752, 64
    %v2073 = vpop.permute.xlu0 %2072
    %2074 = vrot.lane.b32.xlu0 %v1753, 64
    %v2075 = vpop.permute.xlu0 %2074
    %2076 = vrot.lane.b32.xlu0 %v1754, 64
    %v2077 = vpop.permute.xlu0 %2076
    %2078 = vrot.lane.b32.xlu0 %v1755, 64
    %v2079 = vpop.permute.xlu0 %2078
    %2080 = vrot.lane.b32.xlu0 %v1756, 64
    %v2081 = vpop.permute.xlu0 %2080
    %2082 = vrot.lane.b32.xlu0 %v1757, 64
    %v2083 = vpop.permute.xlu0 %2082
    %2084 = vrot.lane.b32.xlu0 %v1758, 64
    %v2085 = vpop.permute.xlu0 %2084
    %2086 = vrot.lane.b32.xlu0 %v1759, 64
    %v2087 = vpop.permute.xlu0 %2086
    %2088 = vrot.lane.b32.xlu0 %v1760, 64
    %v2089 = vpop.permute.xlu0 %2088
    %2090 = vrot.lane.b32.xlu0 %v1761, 64
    %v2091 = vpop.permute.xlu0 %2090
    %2092 = vrot.lane.b32.xlu0 %v1762, 64
    %v2093 = vpop.permute.xlu0 %2092
    %2094 = vrot.lane.b32.xlu0 %v1763, 64
    %v2095 = vpop.permute.xlu0 %2094
    %2096 = vrot.lane.b32.xlu0 %v1764, 64
    %v2097 = vpop.permute.xlu0 %2096
    %2098 = vrot.lane.b32.xlu0 %v1765, 64
    %v2099 = vpop.permute.xlu0 %2098
    %2100 = vrot.lane.b32.xlu0 %v1766, 64
    %v2101 = vpop.permute.xlu0 %2100
    %2102 = vrot.lane.b32.xlu0 %v1767, 64
    %v2103 = vpop.permute.xlu0 %2102
    %2136 = vrot.lane.b32.xlu0 %v1768, 96
    %v2137 = vpop.permute.xlu0 %2136
    %2138 = vrot.lane.b32.xlu0 %v1769, 96
    %v2139 = vpop.permute.xlu0 %2138
    %2140 = vrot.lane.b32.xlu0 %v1770, 96
    %v2141 = vpop.permute.xlu0 %2140
    %2142 = vrot.lane.b32.xlu0 %v1771, 96
    %v2143 = vpop.permute.xlu0 %2142
    %2144 = vrot.lane.b32.xlu0 %v1772, 96
    %v2145 = vpop.permute.xlu0 %2144
    %2146 = vrot.lane.b32.xlu0 %v1773, 96
    %v2147 = vpop.permute.xlu0 %2146
    %2148 = vrot.lane.b32.xlu0 %v1774, 96
    %v2149 = vpop.permute.xlu0 %2148
    %2150 = vrot.lane.b32.xlu0 %v1775, 96
    %v2151 = vpop.permute.xlu0 %2150
    %2152 = vrot.lane.b32.xlu0 %v1776, 96
    %v2153 = vpop.permute.xlu0 %2152
    %2154 = vrot.lane.b32.xlu0 %v1777, 96
    %v2155 = vpop.permute.xlu0 %2154
    %2156 = vrot.lane.b32.xlu0 %v1778, 96
    %v2157 = vpop.permute.xlu0 %2156
    %2158 = vrot.lane.b32.xlu0 %v1779, 96
    %v2159 = vpop.permute.xlu0 %2158
    %2160 = vrot.lane.b32.xlu0 %v1780, 96
    %v2161 = vpop.permute.xlu0 %2160
    %2162 = vrot.lane.b32.xlu0 %v1781, 96
    %v2163 = vpop.permute.xlu0 %2162
    %2164 = vrot.lane.b32.xlu0 %v1782, 96
    %v2165 = vpop.permute.xlu0 %2164
    %2166 = vrot.lane.b32.xlu0 %v1783, 96
    %v2167 = vpop.permute.xlu0 %2166
    %v2184 = vsel %vm82, %v1655, %v1817
    %v2185 = vsel %vm82, %v1656, %v1819
    %v2186 = vsel %vm82, %v1657, %v1821
    %v2187 = vsel %vm82, %v1658, %v1823
    %v2188 = vsel %vm82, %v1659, %v1825
    %v2189 = vsel %vm82, %v1660, %v1827
    %v2190 = vsel %vm82, %v1661, %v1829
    %v2191 = vsel %vm82, %v1662, %v1831
    %v2192 = vsel %vm82, %v1663, %v1833
    %v2193 = vsel %vm82, %v1664, %v1835
    %v2194 = vsel %vm82, %v1665, %v1837
    %v2195 = vsel %vm82, %v1666, %v1839
    %v2196 = vsel %vm82, %v1667, %v1841
    %v2197 = vsel %vm82, %v1668, %v1843
    %v2198 = vsel %vm82, %v1669, %v1845
    %v2199 = vsel %vm82, %v1670, %v1847
    %v2200 = vsel %vm978, %v2184, %v1881
    %v2201 = vsel %vm978, %v2185, %v1883
    %v2202 = vsel %vm978, %v2186, %v1885
    %v2203 = vsel %vm978, %v2187, %v1887
    %v2204 = vsel %vm978, %v2188, %v1889
    %v2205 = vsel %vm978, %v2189, %v1891
    %v2206 = vsel %vm978, %v2190, %v1893
    %v2207 = vsel %vm978, %v2191, %v1895
    %v2208 = vsel %vm978, %v2192, %v1897
    %v2209 = vsel %vm978, %v2193, %v1899
    %v2210 = vsel %vm978, %v2194, %v1901
    %v2211 = vsel %vm978, %v2195, %v1903
    %v2212 = vsel %vm978, %v2196, %v1905
    %v2213 = vsel %vm978, %v2197, %v1907
    %v2214 = vsel %vm978, %v2198, %v1909
    %v2215 = vsel %vm978, %v2199, %v1911
    %vm2216 = vcmask 785408
    %v2217 = vsel %vm2216, %v2200, %v1945
    %v2218 = vsel %vm2216, %v2201, %v1947
    %v2219 = vsel %vm2216, %v2202, %v1949
    %v2220 = vsel %vm2216, %v2203, %v1951
    %v2221 = vsel %vm2216, %v2204, %v1953
    %v2222 = vsel %vm2216, %v2205, %v1955
    %v2223 = vsel %vm2216, %v2206, %v1957
    %v2224 = vsel %vm2216, %v2207, %v1959
    %v2225 = vsel %vm2216, %v2208, %v1961
    %v2226 = vsel %vm2216, %v2209, %v1963
    %v2227 = vsel %vm2216, %v2210, %v1965
    %v2228 = vsel %vm2216, %v2211, %v1967
    %v2229 = vsel %vm2216, %v2212, %v1969
    %v2230 = vsel %vm2216, %v2213, %v1971
    %v2231 = vsel %vm2216, %v2214, %v1973
    %v2232 = vsel %vm2216, %v2215, %v1975
    %v2233 = vsel %vm82, %v1719, %v2009
    %v2234 = vsel %vm82, %v1720, %v2011
    %v2235 = vsel %vm82, %v1721, %v2013
    %v2236 = vsel %vm82, %v1722, %v2015
    %v2237 = vsel %vm82, %v1723, %v2017
    %v2238 = vsel %vm82, %v1724, %v2019
    %v2239 = vsel %vm82, %v1725, %v2021
    %v2240 = vsel %vm82, %v1726, %v2023
    %v2241 = vsel %vm82, %v1727, %v2025
    %v2242 = vsel %vm82, %v1728, %v2027
    %v2243 = vsel %vm82, %v1729, %v2029
    %v2244 = vsel %vm82, %v1730, %v2031
    %v2245 = vsel %vm82, %v1731, %v2033
    %v2246 = vsel %vm82, %v1732, %v2035
    %v2247 = vsel %vm82, %v1733, %v2037
    %v2248 = vsel %vm82, %v1734, %v2039
    %v2249 = vsel %vm978, %v2233, %v2073
    %v2250 = vsel %vm978, %v2234, %v2075
    %v2251 = vsel %vm978, %v2235, %v2077
    %v2252 = vsel %vm978, %v2236, %v2079
    %v2253 = vsel %vm978, %v2237, %v2081
    %v2254 = vsel %vm978, %v2238, %v2083
    %v2255 = vsel %vm978, %v2239, %v2085
    %v2256 = vsel %vm978, %v2240, %v2087
    %v2257 = vsel %vm978, %v2241, %v2089
    %v2258 = vsel %vm978, %v2242, %v2091
    %v2259 = vsel %vm978, %v2243, %v2093
    %v2260 = vsel %vm978, %v2244, %v2095
    %v2261 = vsel %vm978, %v2245, %v2097
    %v2262 = vsel %vm978, %v2246, %v2099
    %v2263 = vsel %vm978, %v2247, %v2101
    %v2264 = vsel %vm978, %v2248, %v2103
    %v2265 = vsel %vm2216, %v2249, %v2137
    %v2266 = vsel %vm2216, %v2250, %v2139
    %v2267 = vsel %vm2216, %v2251, %v2141
    %v2268 = vsel %vm2216, %v2252, %v2143
    %v2269 = vsel %vm2216, %v2253, %v2145
    %v2270 = vsel %vm2216, %v2254, %v2147
    %v2271 = vsel %vm2216, %v2255, %v2149
    %v2272 = vsel %vm2216, %v2256, %v2151
    %v2273 = vsel %vm2216, %v2257, %v2153
    %v2274 = vsel %vm2216, %v2258, %v2155
    %v2275 = vsel %vm2216, %v2259, %v2157
    %v2276 = vsel %vm2216, %v2260, %v2159
    %v2277 = vsel %vm2216, %v2261, %v2161
    %v2278 = vsel %vm2216, %v2262, %v2163
    %v2279 = vsel %vm2216, %v2263, %v2165
    %v2280 = vsel %vm2216, %v2264, %v2167
    %v2281 = vpack.c.bf16 %v2218, %v2217
    %v2282 = vpack.c.bf16 %v2266, %v2265
    %v2283 = vpack.c.bf16 %v1785, %v1784
    %v2284 = vpack.c.bf16 %v2220, %v2219
    %v2285 = vpack.c.bf16 %v2268, %v2267
    %v2286 = vpack.c.bf16 %v1787, %v1786
    %v2287 = vpack.c.bf16 %v2222, %v2221
    %v2288 = vpack.c.bf16 %v2270, %v2269
    %v2289 = vpack.c.bf16 %v1789, %v1788
    %v2290 = vpack.c.bf16 %v2224, %v2223
    %v2291 = vpack.c.bf16 %v2272, %v2271
    %v2292 = vpack.c.bf16 %v1791, %v1790
    %v2293 = vpack.c.bf16 %v2226, %v2225
    %v2294 = vpack.c.bf16 %v2274, %v2273
    %v2295 = vpack.c.bf16 %v1793, %v1792
    %v2296 = vpack.c.bf16 %v2228, %v2227
    %v2297 = vpack.c.bf16 %v2276, %v2275
    %v2298 = vpack.c.bf16 %v1795, %v1794
    %v2299 = vpack.c.bf16 %v2230, %v2229
    %v2300 = vpack.c.bf16 %v2278, %v2277
    %v2301 = vpack.c.bf16 %v1797, %v1796
    %v2302 = vpack.c.bf16 %v2232, %v2231
    %v2303 = vpack.c.bf16 %v2280, %v2279
    %v2304 = vpack.c.bf16 %v1799, %v1798
    %v2341 = vunpack.c.l.b16 %v1619
    %v2342 = vunpack.c.l.b16 %v1620
    %v2343 = vunpack.c.l.b16 %v1621
    %v2344 = vunpack.c.l.b16 %v1622
    %v2345 = vunpack.c.l.b16 %v1623
    %v2346 = vunpack.c.l.b16 %v1624
    %v2347 = vunpack.c.l.b16 %v1625
    %v2348 = vunpack.c.l.b16 %v1626
    %v2349 = vunpack.c.l.b16 %v1627
    %v2350 = vunpack.c.l.b16 %v1628
    %v2351 = vunpack.c.l.b16 %v1629
    %v2352 = vunpack.c.l.b16 %v1630
    %v2353 = vunpack.c.l.b16 %v1631
    %v2354 = vunpack.c.l.b16 %v1632
    %v2355 = vunpack.c.l.b16 %v1633
    %v2356 = vunpack.c.l.b16 %v1634
    %v2357 = vunpack.c.l.b16 %v1635
    %v2358 = vunpack.c.l.b16 %v1636
    %v2359 = vunpack.c.l.b16 %v1637
    %v2360 = vunpack.c.l.b16 %v1638
    %v2361 = vunpack.c.l.b16 %v1639
    %v2362 = vunpack.c.l.b16 %v1640
    %v2363 = vunpack.c.l.b16 %v1641
    %v2364 = vunpack.c.l.b16 %v1642
    %v2365 = vunpack.c.l.b16 %v1643
    %v2366 = vunpack.c.l.b16 %v1644
    %v2367 = vunpack.c.l.b16 %v1645
    %v2368 = vunpack.c.l.b16 %v1646
    %v2369 = vunpack.c.l.b16 %v1647
    %v2370 = vunpack.c.l.b16 %v1648
    %v2371 = vunpack.c.l.b16 %v1649
    %v2372 = vunpack.c.l.b16 %v1650
    %v2373 = vunpack.c.l.b16 %v1651
    %v2374 = vunpack.c.l.b16 %v1652
    %v2375 = vunpack.c.l.b16 %v1653
    %v2376 = vunpack.c.l.b16 %v1654
    %v2377 = vpack.c.b16 %v2342, %v2341
    %v2378 = vpack.c.b16 %v2344, %v2343
    %v2379 = vpack.c.b16 %v2346, %v2345
    %v2380 = vpack.c.b16 %v2348, %v2347
    %v2381 = vpack.c.b16 %v2350, %v2349
    %v2382 = vpack.c.b16 %v2352, %v2351
    %v2383 = vpack.c.b16 %v2354, %v2353
    %v2384 = vpack.c.b16 %v2356, %v2355
    %v2385 = vpack.c.b16 %v2358, %v2357
    %v2386 = vpack.c.b16 %v2360, %v2359
    %v2387 = vpack.c.b16 %v2362, %v2361
    %v2388 = vpack.c.b16 %v2364, %v2363
    %v2389 = vpack.c.b16 %v2366, %v2365
    %v2390 = vpack.c.b16 %v2368, %v2367
    %v2391 = vpack.c.b16 %v2370, %v2369
    %v2392 = vpack.c.b16 %v2372, %v2371
    %v2393 = vpack.c.b16 %v2374, %v2373
    %v2394 = vpack.c.b16 %v2376, %v2375
    %v2414 = vsel %vm82, %v2283, 0
    %v2417 = vsel %vm82, %v2286, 0
    %v2420 = vsel %vm82, %v2289, 0
    %v2423 = vsel %vm82, %v2292, 0
    %v2426 = vsel %vm82, %v2295, 0
    %v2429 = vsel %vm82, %v2298, 0
    %v2432 = vsel %vm82, %v2301, 0
    %v2435 = vsel %vm82, %v2304, 0
    %2437 = vmatprep.subr.bf16.mxu0 0
    %2438 = vmatpush1.bf16.msra.mxu0 %v2377
    %2439 = vmatprep.subr.bf16.mxu0 0
    %2440 = vmatpush1.bf16.msra.mxu0 %v2378
    %2441 = vmatprep.subr.bf16.mxu0 0
    %2442 = vmatpush1.bf16.msra.mxu0 %v2379
    %2443 = vmatprep.subr.bf16.mxu0 0
    %2444 = vmatpush1.bf16.msra.mxu0 %v2380
    %2445 = vmatprep.subr.bf16.mxu0 0
    %2446 = vmatpush1.bf16.msra.mxu0 %v2381
    %2447 = vmatprep.subr.bf16.mxu0 0
    %2448 = vmatpush1.bf16.msra.mxu0 %v2382
    %2449 = vmatprep.subr.bf16.mxu0 0
    %2450 = vmatpush1.bf16.msra.mxu0 %v2383
    %2451 = vmatprep.subr.bf16.mxu0 0
    %2452 = vmatpush1.bf16.msra.mxu0 %v2384
    %2453 = vmatprep.subr.bf16.mxu0 0
    %2454 = vmatpush1.bf16.msra.mxu0 %v2385
    %2455 = vmatprep.subr.bf16.mxu0 0
    %2456 = vmatpush1.bf16.msra.mxu0 %v2386
    %2457 = vmatprep.subr.bf16.mxu0 0
    %2458 = vmatpush1.bf16.msra.mxu0 %v2387
    %2459 = vmatprep.subr.bf16.mxu0 0
    %2460 = vmatpush1.bf16.msra.mxu0 %v2388
    %2461 = vmatprep.subr.bf16.mxu0 0
    %2462 = vmatpush1.bf16.msra.mxu0 %v2389
    %2463 = vmatprep.subr.bf16.mxu0 0
    %2464 = vmatpush1.bf16.msra.mxu0 %v2390
    %2465 = vmatprep.subr.bf16.mxu0 0
    %2466 = vmatpush1.bf16.msra.mxu0 %v2391
    %2467 = vmatprep.subr.bf16.mxu0 0
    %2468 = vmatpush1.bf16.msra.mxu0 %v2392
    %2469 = vmatprep.mubr.bf16.mxu0 %v2282
    %2470 = vmatmul.mubr.bf16.gmra.mrb[0].mxu0 %v2281
    %v2471 = vpop.f32.mrb[0].mxu0
    %v2472 = vadd.f32 0.0, %v2471
    %v2473 = vpop.f32.mrb[0].mxu0
    %v2474 = vpop.f32.mrb[0].mxu0
    %v2475 = vadd.f32 0.0, %v2474
    %v2476 = vpop.f32.mrb[0].mxu0
    %2477 = vmatprep.mubr.bf16.mxu0 %v2285
    %2478 = vmatmul.mubr.bf16.gmra.mrb[0].mxu0 %v2284
    %v2479 = vpop.f32.mrb[0].mxu0
    %v2480 = vadd.f32 0.0, %v2479
    %v2481 = vpop.f32.mrb[0].mxu0
    %v2482 = vpop.f32.mrb[0].mxu0
    %v2483 = vadd.f32 0.0, %v2482
    %v2484 = vpop.f32.mrb[0].mxu0
    %2485 = vmatprep.mubr.bf16.mxu0 %v2288
    %2486 = vmatmul.mubr.bf16.gmra.mrb[0].mxu0 %v2287
    %v2487 = vpop.f32.mrb[0].mxu0
    %v2488 = vadd.f32 0.0, %v2487
    %v2489 = vpop.f32.mrb[0].mxu0
    %v2490 = vpop.f32.mrb[0].mxu0
    %v2491 = vadd.f32 0.0, %v2490
    %v2492 = vpop.f32.mrb[0].mxu0
    %2493 = vmatprep.mubr.bf16.mxu0 %v2291
    %2494 = vmatmul.mubr.bf16.gmra.mrb[0].mxu0 %v2290
    %v2495 = vpop.f32.mrb[0].mxu0
    %v2496 = vadd.f32 0.0, %v2495
    %v2497 = vpop.f32.mrb[0].mxu0
    %v2498 = vpop.f32.mrb[0].mxu0
    %v2499 = vadd.f32 0.0, %v2498
    %v2500 = vpop.f32.mrb[0].mxu0
    %2501 = vmatprep.mubr.bf16.mxu0 %v2294
    %2502 = vmatmul.mubr.bf16.gmra.mrb[0].mxu0 %v2293
    %v2503 = vpop.f32.mrb[0].mxu0
    %v2504 = vadd.f32 0.0, %v2503
    %v2505 = vpop.f32.mrb[0].mxu0
    %v2506 = vpop.f32.mrb[0].mxu0
    %v2507 = vadd.f32 0.0, %v2506
    %v2508 = vpop.f32.mrb[0].mxu0
    %2509 = vmatprep.mubr.bf16.mxu0 %v2297
    %2510 = vmatmul.mubr.bf16.gmra.mrb[0].mxu0 %v2296
    %v2511 = vpop.f32.mrb[0].mxu0
    %v2512 = vadd.f32 0.0, %v2511
    %v2513 = vpop.f32.mrb[0].mxu0
    %v2514 = vpop.f32.mrb[0].mxu0
    %v2515 = vadd.f32 0.0, %v2514
    %v2516 = vpop.f32.mrb[0].mxu0
    %2517 = vmatprep.mubr.bf16.mxu0 %v2300
    %2518 = vmatmul.mubr.bf16.gmra.mrb[0].mxu0 %v2299
    %v2519 = vpop.f32.mrb[0].mxu0
    %v2520 = vadd.f32 0.0, %v2519
    %v2521 = vpop.f32.mrb[0].mxu0
    %v2522 = vpop.f32.mrb[0].mxu0
    %v2523 = vadd.f32 0.0, %v2522
    %v2524 = vpop.f32.mrb[0].mxu0
    %2525 = vmatprep.mubr.bf16.mxu0 %v2303
    %2526 = vmatmul.mubr.bf16.gmra.mrb[0].mxu0 %v2302
    %v2527 = vpop.f32.mrb[0].mxu0
    %v2528 = vadd.f32 0.0, %v2527
    %v2529 = vpop.f32.mrb[0].mxu0
    %v2530 = vpop.f32.mrb[0].mxu0
    %v2531 = vadd.f32 0.0, %v2530
    %v2532 = vpop.f32.mrb[0].mxu0
    %2533 = vdwg.mxu0
    %2534 = vmatprep.subr.bf16.mxu0 0
    %2535 = vmatpush1.bf16.msra.mxu0 %v2393
    %2536 = vmatprep.subr.bf16.mxu0 0
    %2537 = vmatpush1.bf16.msra.mxu0 %v2394
    %2538 = vmatprep.subr.bf16.mxu0 0
    %2539 = vmatpush1.bf16.msra.mxu0 0
    %2540 = vmatprep.subr.bf16.mxu0 0
    %2541 = vmatpush1.bf16.msra.mxu0 0
    %2542 = vmatprep.subr.bf16.mxu0 0
    %2543 = vmatpush1.bf16.msra.mxu0 0
    %2544 = vmatprep.subr.bf16.mxu0 0
    %2545 = vmatpush1.bf16.msra.mxu0 0
    %2546 = vmatprep.subr.bf16.mxu0 0
    %2547 = vmatpush1.bf16.msra.mxu0 0
    %2548 = vmatprep.subr.bf16.mxu0 0
    %2549 = vmatpush1.bf16.msra.mxu0 0
    %2550 = vmatprep.subr.bf16.mxu0 0
    %2551 = vmatpush1.bf16.msra.mxu0 0
    %2552 = vmatprep.subr.bf16.mxu0 0
    %2553 = vmatpush1.bf16.msra.mxu0 0
    %2554 = vmatprep.subr.bf16.mxu0 0
    %2555 = vmatpush1.bf16.msra.mxu0 0
    %2556 = vmatprep.subr.bf16.mxu0 0
    %2557 = vmatpush1.bf16.msra.mxu0 0
    %2558 = vmatprep.subr.bf16.mxu0 0
    %2559 = vmatpush1.bf16.msra.mxu0 0
    %2560 = vmatprep.subr.bf16.mxu0 0
    %2561 = vmatpush1.bf16.msra.mxu0 0
    %2562 = vmatprep.subr.bf16.mxu0 0
    %2563 = vmatpush1.bf16.msra.mxu0 0
    %2564 = vmatprep.subr.bf16.mxu0 0
    %2565 = vmatpush1.bf16.msra.mxu0 0
    %2566 = vmatprep.mubr.bf16.mxu0 0
    %2567 = vmatmul.mubr.bf16.gmra.mrb[0].mxu0 %v2414
    %v2568 = vpop.f32.mrb[0].mxu0
    %v2569 = vadd.f32 %v2472, %v2568
    %v2570 = vpop.f32.mrb[0].mxu0
    %v2571 = vpop.f32.mrb[0].mxu0
    %v2572 = vadd.f32 %v2475, %v2571
    %v2573 = vpop.f32.mrb[0].mxu0
    %2574 = vmatprep.mubr.bf16.mxu0 0
    %2575 = vmatmul.mubr.bf16.gmra.mrb[0].mxu0 %v2417
    %v2576 = vpop.f32.mrb[0].mxu0
    %v2577 = vadd.f32 %v2480, %v2576
    %v2578 = vpop.f32.mrb[0].mxu0
    %v2579 = vpop.f32.mrb[0].mxu0
    %v2580 = vadd.f32 %v2483, %v2579
    %v2581 = vpop.f32.mrb[0].mxu0
    %2582 = vmatprep.mubr.bf16.mxu0 0
    %2583 = vmatmul.mubr.bf16.gmra.mrb[0].mxu0 %v2420
    %v2584 = vpop.f32.mrb[0].mxu0
    %v2585 = vadd.f32 %v2488, %v2584
    %v2586 = vpop.f32.mrb[0].mxu0
    %v2587 = vpop.f32.mrb[0].mxu0
    %v2588 = vadd.f32 %v2491, %v2587
    %v2589 = vpop.f32.mrb[0].mxu0
    %2590 = vmatprep.mubr.bf16.mxu0 0
    %2591 = vmatmul.mubr.bf16.gmra.mrb[0].mxu0 %v2423
    %v2592 = vpop.f32.mrb[0].mxu0
    %v2593 = vadd.f32 %v2496, %v2592
    %v2594 = vpop.f32.mrb[0].mxu0
    %v2595 = vpop.f32.mrb[0].mxu0
    %v2596 = vadd.f32 %v2499, %v2595
    %v2597 = vpop.f32.mrb[0].mxu0
    %2598 = vmatprep.mubr.bf16.mxu0 0
    %2599 = vmatmul.mubr.bf16.gmra.mrb[0].mxu0 %v2426
    %v2600 = vpop.f32.mrb[0].mxu0
    %v2601 = vadd.f32 %v2504, %v2600
    %v2602 = vpop.f32.mrb[0].mxu0
    %v2603 = vpop.f32.mrb[0].mxu0
    %v2604 = vadd.f32 %v2507, %v2603
    %v2605 = vpop.f32.mrb[0].mxu0
    %2606 = vmatprep.mubr.bf16.mxu0 0
    %2607 = vmatmul.mubr.bf16.gmra.mrb[0].mxu0 %v2429
    %v2608 = vpop.f32.mrb[0].mxu0
    %v2609 = vadd.f32 %v2512, %v2608
    %v2610 = vpop.f32.mrb[0].mxu0
    %v2611 = vpop.f32.mrb[0].mxu0
    %v2612 = vadd.f32 %v2515, %v2611
    %v2613 = vpop.f32.mrb[0].mxu0
    %2614 = vmatprep.mubr.bf16.mxu0 0
    %2615 = vmatmul.mubr.bf16.gmra.mrb[0].mxu0 %v2432
    %v2616 = vpop.f32.mrb[0].mxu0
    %v2617 = vadd.f32 %v2520, %v2616
    %v2618 = vpop.f32.mrb[0].mxu0
    %v2619 = vpop.f32.mrb[0].mxu0
    %v2620 = vadd.f32 %v2523, %v2619
    %v2621 = vpop.f32.mrb[0].mxu0
    %2622 = vmatprep.mubr.bf16.mxu0 0
    %2623 = vmatmul.mubr.bf16.gmra.mrb[0].mxu0 %v2435
    %v2624 = vpop.f32.mrb[0].mxu0
    %v2625 = vadd.f32 %v2528, %v2624
    %v2626 = vpop.f32.mrb[0].mxu0
    %v2627 = vpop.f32.mrb[0].mxu0
    %v2628 = vadd.f32 %v2531, %v2627
    %v2629 = vpop.f32.mrb[0].mxu0
    %2630 = vdwg.mxu0
    %v2631 = vld [vmem:[%s4 + $0x1] sm:$0x1]
    %v2632 = vld [vmem:[%s5 + $0x1] sm:$0x1]
    %v2633 = vsel %vm82, %v2569, 0.0
    %v2634 = vsel %vm82, %v2572, 0.0
    %v2635 = vadd.f32 %v2633, %v2634
    %v2636 = vsel %vm82, %v2577, 0.0
    %v2637 = vadd.f32 %v2635, %v2636
    %v2638 = vsel %vm82, %v2580, 0.0
    %v2639 = vadd.f32 %v2637, %v2638
    %v2640 = vsel %vm82, %v2585, 0.0
    %v2641 = vadd.f32 %v2639, %v2640
    %v2642 = vsel %vm82, %v2588, 0.0
    %v2643 = vadd.f32 %v2641, %v2642
    %v2644 = vsel %vm82, %v2593, 0.0
    %v2645 = vadd.f32 %v2643, %v2644
    %v2646 = vsel %vm82, %v2596, 0.0
    %v2647 = vadd.f32 %v2645, %v2646
    %v2648 = vrot.slane %v2647, 4
    %v2649 = vadd.f32 %v2647, %v2648
    %v2650 = vrot.slane %v2649, 2
    %v2651 = vadd.f32 %v2649, %v2650
    %v2652 = vrot.slane %v2651, 1
    %v2653 = vadd.f32 %v2651, %v2652
    %v2654 = vsel %vm82, %v2601, 0.0
    %v2655 = vsel %vm82, %v2604, 0.0
    %v2656 = vadd.f32 %v2654, %v2655
    %v2657 = vsel %vm82, %v2609, 0.0
    %v2658 = vadd.f32 %v2656, %v2657
    %v2659 = vsel %vm82, %v2612, 0.0
    %v2660 = vadd.f32 %v2658, %v2659
    %v2661 = vsel %vm82, %v2617, 0.0
    %v2662 = vadd.f32 %v2660, %v2661
    %v2663 = vsel %vm82, %v2620, 0.0
    %v2664 = vadd.f32 %v2662, %v2663
    %v2665 = vsel %vm82, %v2625, 0.0
    %v2666 = vadd.f32 %v2664, %v2665
    %v2667 = vsel %vm82, %v2628, 0.0
    %v2668 = vadd.f32 %v2666, %v2667
    %v2669 = vrot.slane %v2668, 4
    %v2670 = vadd.f32 %v2668, %v2669
    %v2671 = vrot.slane %v2670, 2
    %v2672 = vadd.f32 %v2670, %v2671
    %v2673 = vrot.slane %v2672, 1
    %v2674 = vadd.f32 %v2672, %v2673
    %v2675 = vmul.f32 %v2569, %v2569
    %v2676 = vmul.f32 %v2572, %v2572
    %v2677 = vmul.f32 %v2577, %v2577
    %v2678 = vmul.f32 %v2580, %v2580
    %v2679 = vmul.f32 %v2585, %v2585
    %v2680 = vmul.f32 %v2588, %v2588
    %v2681 = vmul.f32 %v2593, %v2593
    %v2682 = vmul.f32 %v2596, %v2596
    %v2683 = vmul.f32 %v2601, %v2601
    %v2684 = vmul.f32 %v2604, %v2604
    %v2685 = vmul.f32 %v2609, %v2609
    %v2686 = vmul.f32 %v2612, %v2612
    %v2687 = vmul.f32 %v2617, %v2617
    %v2688 = vmul.f32 %v2620, %v2620
    %v2689 = vmul.f32 %v2625, %v2625
    %v2690 = vmul.f32 %v2628, %v2628
    %v2691 = vsel %vm82, %v2675, 0.0
    %v2692 = vsel %vm82, %v2676, 0.0
    %v2693 = vadd.f32 %v2691, %v2692
    %v2694 = vsel %vm82, %v2677, 0.0
    %v2695 = vadd.f32 %v2693, %v2694
    %v2696 = vsel %vm82, %v2678, 0.0
    %v2697 = vadd.f32 %v2695, %v2696
    %v2698 = vsel %vm82, %v2679, 0.0
    %v2699 = vadd.f32 %v2697, %v2698
    %v2700 = vsel %vm82, %v2680, 0.0
    %v2701 = vadd.f32 %v2699, %v2700
    %v2702 = vsel %vm82, %v2681, 0.0
    %v2703 = vadd.f32 %v2701, %v2702
    %v2704 = vsel %vm82, %v2682, 0.0
    %v2705 = vadd.f32 %v2703, %v2704
    %v2706 = vrot.slane %v2705, 4
    %v2707 = vadd.f32 %v2705, %v2706
    %v2708 = vrot.slane %v2707, 2
    %v2709 = vadd.f32 %v2707, %v2708
    %v2710 = vrot.slane %v2709, 1
    %v2711 = vadd.f32 %v2709, %v2710
    %v2712 = vsel %vm82, %v2683, 0.0
    %v2713 = vsel %vm82, %v2684, 0.0
    %v2714 = vadd.f32 %v2712, %v2713
    %v2715 = vsel %vm82, %v2685, 0.0
    %v2716 = vadd.f32 %v2714, %v2715
    %v2717 = vsel %vm82, %v2686, 0.0
    %v2718 = vadd.f32 %v2716, %v2717
    %v2719 = vsel %vm82, %v2687, 0.0
    %v2720 = vadd.f32 %v2718, %v2719
    %v2721 = vsel %vm82, %v2688, 0.0
    %v2722 = vadd.f32 %v2720, %v2721
    %v2723 = vsel %vm82, %v2689, 0.0
    %v2724 = vadd.f32 %v2722, %v2723
    %v2725 = vsel %vm82, %v2690, 0.0
    %v2726 = vadd.f32 %v2724, %v2725
    %v2727 = vrot.slane %v2726, 4
    %v2728 = vadd.f32 %v2726, %v2727
    %v2729 = vrot.slane %v2728, 2
    %v2730 = vadd.f32 %v2728, %v2729
    %v2731 = vrot.slane %v2730, 1
    %v2732 = vadd.f32 %v2730, %v2731
    %v2733 = vmul.f32 %v2653, 0.015625
    %v2734 = vmul.f32 %v2674, 0.015625
    %v2735 = vmul.f32 %v2711, 0.015625
    %v2736 = vmul.f32 %v2732, 0.015625
    %v2737 = vmul.f32 %v2733, %v2733
    %v2738 = vmul.f32 %v2734, %v2734
    %v2739 = vsub.f32 %v2735, %v2737
    %v2740 = vsub.f32 %v2736, %v2738
    %v2741 = vadd.f32 %v2739, 1e-05
    %v2742 = vadd.f32 %v2740, 1e-05
    %v2743 = vrsqrt.pop %v2741
    %v2744 = vrsqrt.pop %v2742
    %v2745 = vmul.f32 %v2631, %v2743
    %v2746 = vmul.f32 %v2631, %v2744
    %v2747 = vmul.f32 %v2733, %v2745
    %v2748 = vmul.f32 %v2734, %v2746
    %v2749 = vsub.f32 %v2632, %v2747
    %v2750 = vsub.f32 %v2632, %v2748
    %v2751 = vlaneseq
    %v2752 = vshrl.u32 %v2751, 7
    %v2753 = vsub.s32 0, %v2752
    %v2754 = vrot.slane %v2745, %v2753
    %v2755 = vlaneseq
    %v2756 = vshrl.u32 %v2755, 7
    %v2757 = vsub.s32 0, %v2756
    %v2758 = vrot.slane %v2746, %v2757
    %v2759 = vmul.f32 %v2569, %v2754
    %v2760 = vmul.f32 %v2572, %v2754
    %v2761 = vmul.f32 %v2577, %v2754
    %v2762 = vmul.f32 %v2580, %v2754
    %v2763 = vmul.f32 %v2585, %v2754
    %v2764 = vmul.f32 %v2588, %v2754
    %v2765 = vmul.f32 %v2593, %v2754
    %v2766 = vmul.f32 %v2596, %v2754
    %v2767 = vmul.f32 %v2601, %v2758
    %v2768 = vmul.f32 %v2604, %v2758
    %v2769 = vmul.f32 %v2609, %v2758
    %v2770 = vmul.f32 %v2612, %v2758
    %v2771 = vmul.f32 %v2617, %v2758
    %v2772 = vmul.f32 %v2620, %v2758
    %v2773 = vmul.f32 %v2625, %v2758
    %v2774 = vmul.f32 %v2628, %v2758
    %v2775 = vlaneseq
    %v2776 = vshrl.u32 %v2775, 7
    %v2777 = vsub.s32 0, %v2776
    %v2778 = vrot.slane %v2749, %v2777
    %v2779 = vlaneseq
    %v2780 = vshrl.u32 %v2779, 7
    %v2781 = vsub.s32 0, %v2780
    %v2782 = vrot.slane %v2750, %v2781
    %v2783 = vadd.f32 %v2759, %v2778
    %v2784 = vadd.f32 %v2760, %v2778
    %v2785 = vadd.f32 %v2761, %v2778
    %v2786 = vadd.f32 %v2762, %v2778
    %v2787 = vadd.f32 %v2763, %v2778
    %v2788 = vadd.f32 %v2764, %v2778
    %v2789 = vadd.f32 %v2765, %v2778
    %v2790 = vadd.f32 %v2766, %v2778
    %v2791 = vadd.f32 %v2767, %v2782
    %v2792 = vadd.f32 %v2768, %v2782
    %v2793 = vadd.f32 %v2769, %v2782
    %v2794 = vadd.f32 %v2770, %v2782
    %v2795 = vadd.f32 %v2771, %v2782
    %v2796 = vadd.f32 %v2772, %v2782
    %v2797 = vadd.f32 %v2773, %v2782
    %v2798 = vadd.f32 %v2774, %v2782
    %v2799 = vmax.f32 %v2783, 0.0
    %v2800 = vmax.f32 %v2784, 0.0
    %v2801 = vmax.f32 %v2785, 0.0
    %v2802 = vmax.f32 %v2786, 0.0
    %v2803 = vmax.f32 %v2787, 0.0
    %v2804 = vmax.f32 %v2788, 0.0
    %v2805 = vmax.f32 %v2789, 0.0
    %v2806 = vmax.f32 %v2790, 0.0
    %v2807 = vmax.f32 %v2791, 0.0
    %v2808 = vmax.f32 %v2792, 0.0
    %v2809 = vmax.f32 %v2793, 0.0
    %v2810 = vmax.f32 %v2794, 0.0
    %v2811 = vmax.f32 %v2795, 0.0
    %v2812 = vmax.f32 %v2796, 0.0
    %v2813 = vmax.f32 %v2797, 0.0
    %v2814 = vmax.f32 %v2798, 0.0
    %2815 = vst.msk [vmem:[%s1602 + $0x1] sm:$0xff] %vm82, %v2799
    %2816 = vst.msk [vmem:[%s1602 + $0x11] sm:$0xff] %vm82, %v2800
    %2817 = vst.msk [vmem:[%s1602 + $0x21] sm:$0xff] %vm82, %v2801
    %2818 = vst.msk [vmem:[%s1602 + $0x31] sm:$0xff] %vm82, %v2802
    %2819 = vst.msk [vmem:[%s1602 + $0x41] sm:$0xff] %vm82, %v2803
    %2820 = vst.msk [vmem:[%s1602 + $0x51] sm:$0xff] %vm82, %v2804
    %2821 = vst.msk [vmem:[%s1602 + $0x61] sm:$0xff] %vm82, %v2805
    %2822 = vst.msk [vmem:[%s1602 + $0x71] sm:$0xff] %vm82, %v2806
    %2823 = vst.msk [vmem:[%s1602 + $0xa1] sm:$0xff] %vm82, %v2807
    %2824 = vst.msk [vmem:[%s1602 + $0xb1] sm:$0xff] %vm82, %v2808
    %2825 = vst.msk [vmem:[%s1602 + $0xc1] sm:$0xff] %vm82, %v2809
    %2826 = vst.msk [vmem:[%s1602 + $0xd1] sm:$0xff] %vm82, %v2810
    %2827 = vst.msk [vmem:[%s1602 + $0xe1] sm:$0xff] %vm82, %v2811
    %2828 = vst.msk [vmem:[%s1602 + $0xf1] sm:$0xff] %vm82, %v2812
    %2829 = vst.msk [vmem:[%s1602 + $0x101] sm:$0xff] %vm82, %v2813
    %2830 = vst.msk [vmem:[%s1602 + $0x111] sm:$0xff] %vm82, %v2814
    %s2831 = scalar_lea.vmem %s3, 144
    %v2832 = vld [vmem:[%s2831] sm:$0xf]
    %v2833 = vld [vmem:[%s2831 + $0x4] sm:$0xf]
    %v2834 = vld [vmem:[%s2831 + $0x8] sm:$0xf]
    %v2835 = vld [vmem:[%s2831 + $0xc] sm:$0xf]
    %v2836 = vld [vmem:[%s2831 + $0x10] sm:$0xf]
    %v2837 = vld [vmem:[%s2831 + $0x14] sm:$0xf]
    %v2838 = vld [vmem:[%s2831 + $0x18] sm:$0xf]
    %v2839 = vld [vmem:[%s2831 + $0x1c] sm:$0xf]
    %v2840 = vld [vmem:[%s2831 + $0x20] sm:$0xf]
    %v2841 = vld [vmem:[%s2831 + $0x24] sm:$0xf]
    %v2842 = vld [vmem:[%s2831 + $0x28] sm:$0xf]
    %v2843 = vld [vmem:[%s2831 + $0x2c] sm:$0xf]
    %v2844 = vld [vmem:[%s2831 + $0x30] sm:$0xf]
    %v2845 = vld [vmem:[%s2831 + $0x34] sm:$0xf]
    %v2846 = vld [vmem:[%s2831 + $0x38] sm:$0xf]
    %v2847 = vld [vmem:[%s2831 + $0x3c] sm:$0xf]
    %v2848 = vld [vmem:[%s2831 + $0x40] sm:$0xf]
    %v2849 = vld [vmem:[%s2831 + $0x44] sm:$0xf]
    %v2850 = vld [vmem:[%s2831 + $0x48] sm:$0xf]
    %v2851 = vld [vmem:[%s2831 + $0x4c] sm:$0xf]
    %v2852 = vld [vmem:[%s2831 + $0x50] sm:$0xf]
    %v2853 = vld [vmem:[%s2831 + $0x54] sm:$0xf]
    %v2854 = vld [vmem:[%s2831 + $0x58] sm:$0xf]
    %v2855 = vld [vmem:[%s2831 + $0x5c] sm:$0xf]
    %v2856 = vld [vmem:[%s2831 + $0x60] sm:$0xf]
    %v2857 = vld [vmem:[%s2831 + $0x64] sm:$0xf]
    %v2858 = vld [vmem:[%s2831 + $0x68] sm:$0xf]
    %v2859 = vld [vmem:[%s2831 + $0x6c] sm:$0xf]
    %v2860 = vld [vmem:[%s2831 + $0x70] sm:$0xf]
    %v2861 = vld [vmem:[%s2831 + $0x74] sm:$0xf]
    %v2862 = vld [vmem:[%s2831 + $0x78] sm:$0xf]
    %v2863 = vld [vmem:[%s2831 + $0x7c] sm:$0xf]
    %v2864 = vld [vmem:[%s2831 + $0x80] sm:$0xf]
    %v2865 = vld [vmem:[%s2831 + $0x84] sm:$0xf]
    %v2866 = vld [vmem:[%s2831 + $0x88] sm:$0xf]
    %v2867 = vld [vmem:[%s2831 + $0x8c] sm:$0xf]
    %v2868 = vld [vmem:[#allocation3] sm:$0xff]
    %v2869 = vld [vmem:[#allocation3 + $0x10] sm:$0xff]
    %v2870 = vld [vmem:[#allocation3 + $0x20] sm:$0xff]
    %v2871 = vld [vmem:[#allocation3 + $0x30] sm:$0xff]
    %v2872 = vld [vmem:[#allocation3 + $0x40] sm:$0xff]
    %v2873 = vld [vmem:[#allocation3 + $0x50] sm:$0xff]
    %v2874 = vld [vmem:[#allocation3 + $0x60] sm:$0xff]
    %v2875 = vld [vmem:[#allocation3 + $0x70] sm:$0xff]
    %v2876 = vld [vmem:[#allocation3 + $0xa0] sm:$0xff]
    %v2877 = vld [vmem:[#allocation3 + $0xb0] sm:$0xff]
    %v2878 = vld [vmem:[#allocation3 + $0xc0] sm:$0xff]
    %v2879 = vld [vmem:[#allocation3 + $0xd0] sm:$0xff]
    %v2880 = vld [vmem:[#allocation3 + $0xe0] sm:$0xff]
    %v2881 = vld [vmem:[#allocation3 + $0xf0] sm:$0xff]
    %v2882 = vld [vmem:[#allocation3 + $0x100] sm:$0xff]
    %v2883 = vld [vmem:[#allocation3 + $0x110] sm:$0xff]
    %v2884 = vld [vmem:[#allocation3 + $0x1] sm:$0xff]
    %v2885 = vld [vmem:[#allocation3 + $0x11] sm:$0xff]
    %v2886 = vld [vmem:[#allocation3 + $0x21] sm:$0xff]
    %v2887 = vld [vmem:[#allocation3 + $0x31] sm:$0xff]
    %v2888 = vld [vmem:[#allocation3 + $0x41] sm:$0xff]
    %v2889 = vld [vmem:[#allocation3 + $0x51] sm:$0xff]
    %v2890 = vld [vmem:[#allocation3 + $0x61] sm:$0xff]
    %v2891 = vld [vmem:[#allocation3 + $0x71] sm:$0xff]
    %v2892 = vld [vmem:[#allocation3 + $0xa1] sm:$0xff]
    %v2893 = vld [vmem:[#allocation3 + $0xb1] sm:$0xff]
    %v2894 = vld [vmem:[#allocation3 + $0xc1] sm:$0xff]
    %v2895 = vld [vmem:[#allocation3 + $0xd1] sm:$0xff]
    %v2896 = vld [vmem:[#allocation3 + $0xe1] sm:$0xff]
    %v2897 = vld [vmem:[#allocation3 + $0xf1] sm:$0xff]
    %v2898 = vld [vmem:[#allocation3 + $0x101] sm:$0xff]
    %v2899 = vld [vmem:[#allocation3 + $0x111] sm:$0xff]
    %v2900 = vld [vmem:[#allocation3 + $0x2] sm:$0xff]
    %v2901 = vld [vmem:[#allocation3 + $0x12] sm:$0xff]
    %v2902 = vld [vmem:[#allocation3 + $0x22] sm:$0xff]
    %v2903 = vld [vmem:[#allocation3 + $0x32] sm:$0xff]
    %v2904 = vld [vmem:[#allocation3 + $0x42] sm:$0xff]
    %v2905 = vld [vmem:[#allocation3 + $0x52] sm:$0xff]
    %v2906 = vld [vmem:[#allocation3 + $0x62] sm:$0xff]
    %v2907 = vld [vmem:[#allocation3 + $0x72] sm:$0xff]
    %v2908 = vld [vmem:[#allocation3 + $0xa2] sm:$0xff]
    %v2909 = vld [vmem:[#allocation3 + $0xb2] sm:$0xff]
    %v2910 = vld [vmem:[#allocation3 + $0xc2] sm:$0xff]
    %v2911 = vld [vmem:[#allocation3 + $0xd2] sm:$0xff]
    %v2912 = vld [vmem:[#allocation3 + $0xe2] sm:$0xff]
    %v2913 = vld [vmem:[#allocation3 + $0xf2] sm:$0xff]
    %v2914 = vld [vmem:[#allocation3 + $0x102] sm:$0xff]
    %v2915 = vld [vmem:[#allocation3 + $0x112] sm:$0xff]
    %v2916 = vld [vmem:[%s1602] sm:$0xff]
    %v2917 = vld [vmem:[%s1602 + $0x10] sm:$0xff]
    %v2918 = vld [vmem:[%s1602 + $0x20] sm:$0xff]
    %v2919 = vld [vmem:[%s1602 + $0x30] sm:$0xff]
    %v2920 = vld [vmem:[%s1602 + $0x40] sm:$0xff]
    %v2921 = vld [vmem:[%s1602 + $0x50] sm:$0xff]
    %v2922 = vld [vmem:[%s1602 + $0x60] sm:$0xff]
    %v2923 = vld [vmem:[%s1602 + $0x70] sm:$0xff]
    %v2924 = vld [vmem:[%s1602 + $0xa0] sm:$0xff]
    %v2925 = vld [vmem:[%s1602 + $0xb0] sm:$0xff]
    %v2926 = vld [vmem:[%s1602 + $0xc0] sm:$0xff]
    %v2927 = vld [vmem:[%s1602 + $0xd0] sm:$0xff]
    %v2928 = vld [vmem:[%s1602 + $0xe0] sm:$0xff]
    %v2929 = vld [vmem:[%s1602 + $0xf0] sm:$0xff]
    %v2930 = vld [vmem:[%s1602 + $0x100] sm:$0xff]
    %v2931 = vld [vmem:[%s1602 + $0x110] sm:$0xff]
    %v2932 = vld [vmem:[%s1602 + $0x1] sm:$0xff]
    %v2933 = vld [vmem:[%s1602 + $0x11] sm:$0xff]
    %v2934 = vld [vmem:[%s1602 + $0x21] sm:$0xff]
    %v2935 = vld [vmem:[%s1602 + $0x31] sm:$0xff]
    %v2936 = vld [vmem:[%s1602 + $0x41] sm:$0xff]
    %v2937 = vld [vmem:[%s1602 + $0x51] sm:$0xff]
    %v2938 = vld [vmem:[%s1602 + $0x61] sm:$0xff]
    %v2939 = vld [vmem:[%s1602 + $0x71] sm:$0xff]
    %v2940 = vld [vmem:[%s1602 + $0xa1] sm:$0xff]
    %v2941 = vld [vmem:[%s1602 + $0xb1] sm:$0xff]
    %v2942 = vld [vmem:[%s1602 + $0xc1] sm:$0xff]
    %v2943 = vld [vmem:[%s1602 + $0xd1] sm:$0xff]
    %v2944 = vld [vmem:[%s1602 + $0xe1] sm:$0xff]
    %v2945 = vld [vmem:[%s1602 + $0xf1] sm:$0xff]
    %v2946 = vld [vmem:[%s1602 + $0x101] sm:$0xff]
    %v2947 = vld [vmem:[%s1602 + $0x111] sm:$0xff]
    %v2948 = vld [vmem:[%s1602 + $0x2] sm:$0xff]
    %v2949 = vld [vmem:[%s1602 + $0x12] sm:$0xff]
    %v2950 = vld [vmem:[%s1602 + $0x22] sm:$0xff]
    %v2951 = vld [vmem:[%s1602 + $0x32] sm:$0xff]
    %v2952 = vld [vmem:[%s1602 + $0x42] sm:$0xff]
    %v2953 = vld [vmem:[%s1602 + $0x52] sm:$0xff]
    %v2954 = vld [vmem:[%s1602 + $0x62] sm:$0xff]
    %v2955 = vld [vmem:[%s1602 + $0x72] sm:$0xff]
    %v2956 = vld [vmem:[%s1602 + $0xa2] sm:$0xff]
    %v2957 = vld [vmem:[%s1602 + $0xb2] sm:$0xff]
    %v2958 = vld [vmem:[%s1602 + $0xc2] sm:$0xff]
    %v2959 = vld [vmem:[%s1602 + $0xd2] sm:$0xff]
    %v2960 = vld [vmem:[%s1602 + $0xe2] sm:$0xff]
    %v2961 = vld [vmem:[%s1602 + $0xf2] sm:$0xff]
    %v2962 = vld [vmem:[%s1602 + $0x102] sm:$0xff]
    %v2963 = vld [vmem:[%s1602 + $0x112] sm:$0xff]
    %v2964 = vld [vmem:[%s1751] sm:$0xff]
    %v2965 = vld [vmem:[%s1751 + $0x10] sm:$0xff]
    %v2966 = vld [vmem:[%s1751 + $0x20] sm:$0xff]
    %v2967 = vld [vmem:[%s1751 + $0x30] sm:$0xff]
    %v2968 = vld [vmem:[%s1751 + $0x40] sm:$0xff]
    %v2969 = vld [vmem:[%s1751 + $0x50] sm:$0xff]
    %v2970 = vld [vmem:[%s1751 + $0x60] sm:$0xff]
    %v2971 = vld [vmem:[%s1751 + $0x70] sm:$0xff]
    %v2972 = vld [vmem:[%s1751 + $0xa0] sm:$0xff]
    %v2973 = vld [vmem:[%s1751 + $0xb0] sm:$0xff]
    %v2974 = vld [vmem:[%s1751 + $0xc0] sm:$0xff]
    %v2975 = vld [vmem:[%s1751 + $0xd0] sm:$0xff]
    %v2976 = vld [vmem:[%s1751 + $0xe0] sm:$0xff]
    %v2977 = vld [vmem:[%s1751 + $0xf0] sm:$0xff]
    %v2978 = vld [vmem:[%s1751 + $0x100] sm:$0xff]
    %v2979 = vld [vmem:[%s1751 + $0x110] sm:$0xff]
    %v2980 = vld [vmem:[%s1751 + $0x1] sm:$0xff]
    %v2981 = vld [vmem:[%s1751 + $0x11] sm:$0xff]
    %v2982 = vld [vmem:[%s1751 + $0x21] sm:$0xff]
    %v2983 = vld [vmem:[%s1751 + $0x31] sm:$0xff]
    %v2984 = vld [vmem:[%s1751 + $0x41] sm:$0xff]
    %v2985 = vld [vmem:[%s1751 + $0x51] sm:$0xff]
    %v2986 = vld [vmem:[%s1751 + $0x61] sm:$0xff]
    %v2987 = vld [vmem:[%s1751 + $0x71] sm:$0xff]
    %v2988 = vld [vmem:[%s1751 + $0xa1] sm:$0xff]
    %v2989 = vld [vmem:[%s1751 + $0xb1] sm:$0xff]
    %v2990 = vld [vmem:[%s1751 + $0xc1] sm:$0xff]
    %v2991 = vld [vmem:[%s1751 + $0xd1] sm:$0xff]
    %v2992 = vld [vmem:[%s1751 + $0xe1] sm:$0xff]
    %v2993 = vld [vmem:[%s1751 + $0xf1] sm:$0xff]
    %v2994 = vld [vmem:[%s1751 + $0x101] sm:$0xff]
    %v2995 = vld [vmem:[%s1751 + $0x111] sm:$0xff]
    %v2996 = vld [vmem:[%s1751 + $0x2] sm:$0xff]
    %v2997 = vld [vmem:[%s1751 + $0x12] sm:$0xff]
    %v2998 = vld [vmem:[%s1751 + $0x22] sm:$0xff]
    %v2999 = vld [vmem:[%s1751 + $0x32] sm:$0xff]
    %v3000 = vld [vmem:[%s1751 + $0x42] sm:$0xff]
    %v3001 = vld [vmem:[%s1751 + $0x52] sm:$0xff]
    %v3002 = vld [vmem:[%s1751 + $0x62] sm:$0xff]
    %v3003 = vld [vmem:[%s1751 + $0x72] sm:$0xff]
    %v3004 = vld [vmem:[%s1751 + $0xa2] sm:$0xff]
    %v3005 = vld [vmem:[%s1751 + $0xb2] sm:$0xff]
    %v3006 = vld [vmem:[%s1751 + $0xc2] sm:$0xff]
    %v3007 = vld [vmem:[%s1751 + $0xd2] sm:$0xff]
    %v3008 = vld [vmem:[%s1751 + $0xe2] sm:$0xff]
    %v3009 = vld [vmem:[%s1751 + $0xf2] sm:$0xff]
    %v3010 = vld [vmem:[%s1751 + $0x102] sm:$0xff]
    %v3011 = vld [vmem:[%s1751 + $0x112] sm:$0xff]
    %3028 = vrot.lane.b32.xlu0 %v2884, 32
    %v3029 = vpop.permute.xlu0 %3028
    %3030 = vrot.lane.b32.xlu0 %v2885, 32
    %v3031 = vpop.permute.xlu0 %3030
    %3032 = vrot.lane.b32.xlu0 %v2886, 32
    %v3033 = vpop.permute.xlu0 %3032
    %3034 = vrot.lane.b32.xlu0 %v2887, 32
    %v3035 = vpop.permute.xlu0 %3034
    %3036 = vrot.lane.b32.xlu0 %v2888, 32
    %v3037 = vpop.permute.xlu0 %3036
    %3038 = vrot.lane.b32.xlu0 %v2889, 32
    %v3039 = vpop.permute.xlu0 %3038
    %3040 = vrot.lane.b32.xlu0 %v2890, 32
    %v3041 = vpop.permute.xlu0 %3040
    %3042 = vrot.lane.b32.xlu0 %v2891, 32
    %v3043 = vpop.permute.xlu0 %3042
    %3044 = vrot.lane.b32.xlu0 %v2892, 32
    %v3045 = vpop.permute.xlu0 %3044
    %3046 = vrot.lane.b32.xlu0 %v2893, 32
    %v3047 = vpop.permute.xlu0 %3046
    %3048 = vrot.lane.b32.xlu0 %v2894, 32
    %v3049 = vpop.permute.xlu0 %3048
    %3050 = vrot.lane.b32.xlu0 %v2895, 32
    %v3051 = vpop.permute.xlu0 %3050
    %3052 = vrot.lane.b32.xlu0 %v2896, 32
    %v3053 = vpop.permute.xlu0 %3052
    %3054 = vrot.lane.b32.xlu0 %v2897, 32
    %v3055 = vpop.permute.xlu0 %3054
    %3056 = vrot.lane.b32.xlu0 %v2898, 32
    %v3057 = vpop.permute.xlu0 %3056
    %3058 = vrot.lane.b32.xlu0 %v2899, 32
    %v3059 = vpop.permute.xlu0 %3058
    %3092 = vrot.lane.b32.xlu0 %v2900, 64
    %v3093 = vpop.permute.xlu0 %3092
    %3094 = vrot.lane.b32.xlu0 %v2901, 64
    %v3095 = vpop.permute.xlu0 %3094
    %3096 = vrot.lane.b32.xlu0 %v2902, 64
    %v3097 = vpop.permute.xlu0 %3096
    %3098 = vrot.lane.b32.xlu0 %v2903, 64
    %v3099 = vpop.permute.xlu0 %3098
    %3100 = vrot.lane.b32.xlu0 %v2904, 64
    %v3101 = vpop.permute.xlu0 %3100
    %3102 = vrot.lane.b32.xlu0 %v2905, 64
    %v3103 = vpop.permute.xlu0 %3102
    %3104 = vrot.lane.b32.xlu0 %v2906, 64
    %v3105 = vpop.permute.xlu0 %3104
    %3106 = vrot.lane.b32.xlu0 %v2907, 64
    %v3107 = vpop.permute.xlu0 %3106
    %3108 = vrot.lane.b32.xlu0 %v2908, 64
    %v3109 = vpop.permute.xlu0 %3108
    %3110 = vrot.lane.b32.xlu0 %v2909, 64
    %v3111 = vpop.permute.xlu0 %3110
    %3112 = vrot.lane.b32.xlu0 %v2910, 64
    %v3113 = vpop.permute.xlu0 %3112
    %3114 = vrot.lane.b32.xlu0 %v2911, 64
    %v3115 = vpop.permute.xlu0 %3114
    %3116 = vrot.lane.b32.xlu0 %v2912, 64
    %v3117 = vpop.permute.xlu0 %3116
    %3118 = vrot.lane.b32.xlu0 %v2913, 64
    %v3119 = vpop.permute.xlu0 %3118
    %3120 = vrot.lane.b32.xlu0 %v2914, 64
    %v3121 = vpop.permute.xlu0 %3120
    %3122 = vrot.lane.b32.xlu0 %v2915, 64
    %v3123 = vpop.permute.xlu0 %3122
    %3156 = vrot.lane.b32.xlu0 %v2916, 96
    %v3157 = vpop.permute.xlu0 %3156
    %3158 = vrot.lane.b32.xlu0 %v2917, 96
    %v3159 = vpop.permute.xlu0 %3158
    %3160 = vrot.lane.b32.xlu0 %v2918, 96
    %v3161 = vpop.permute.xlu0 %3160
    %3162 = vrot.lane.b32.xlu0 %v2919, 96
    %v3163 = vpop.permute.xlu0 %3162
    %3164 = vrot.lane.b32.xlu0 %v2920, 96
    %v3165 = vpop.permute.xlu0 %3164
    %3166 = vrot.lane.b32.xlu0 %v2921, 96
    %v3167 = vpop.permute.xlu0 %3166
    %3168 = vrot.lane.b32.xlu0 %v2922, 96
    %v3169 = vpop.permute.xlu0 %3168
    %3170 = vrot.lane.b32.xlu0 %v2923, 96
    %v3171 = vpop.permute.xlu0 %3170
    %3172 = vrot.lane.b32.xlu0 %v2924, 96
    %v3173 = vpop.permute.xlu0 %3172
    %3174 = vrot.lane.b32.xlu0 %v2925, 96
    %v3175 = vpop.permute.xlu0 %3174
    %3176 = vrot.lane.b32.xlu0 %v2926, 96
    %v3177 = vpop.permute.xlu0 %3176
    %3178 = vrot.lane.b32.xlu0 %v2927, 96
    %v3179 = vpop.permute.xlu0 %3178
    %3180 = vrot.lane.b32.xlu0 %v2928, 96
    %v3181 = vpop.permute.xlu0 %3180
    %3182 = vrot.lane.b32.xlu0 %v2929, 96
    %v3183 = vpop.permute.xlu0 %3182
    %3184 = vrot.lane.b32.xlu0 %v2930, 96
    %v3185 = vpop.permute.xlu0 %3184
    %3186 = vrot.lane.b32.xlu0 %v2931, 96
    %v3187 = vpop.permute.xlu0 %3186
    %3220 = vrot.lane.b32.xlu0 %v2948, 32
    %v3221 = vpop.permute.xlu0 %3220
    %3222 = vrot.lane.b32.xlu0 %v2949, 32
    %v3223 = vpop.permute.xlu0 %3222
    %3224 = vrot.lane.b32.xlu0 %v2950, 32
    %v3225 = vpop.permute.xlu0 %3224
    %3226 = vrot.lane.b32.xlu0 %v2951, 32
    %v3227 = vpop.permute.xlu0 %3226
    %3228 = vrot.lane.b32.xlu0 %v2952, 32
    %v3229 = vpop.permute.xlu0 %3228
    %3230 = vrot.lane.b32.xlu0 %v2953, 32
    %v3231 = vpop.permute.xlu0 %3230
    %3232 = vrot.lane.b32.xlu0 %v2954, 32
    %v3233 = vpop.permute.xlu0 %3232
    %3234 = vrot.lane.b32.xlu0 %v2955, 32
    %v3235 = vpop.permute.xlu0 %3234
    %3236 = vrot.lane.b32.xlu0 %v2956, 32
    %v3237 = vpop.permute.xlu0 %3236
    %3238 = vrot.lane.b32.xlu0 %v2957, 32
    %v3239 = vpop.permute.xlu0 %3238
    %3240 = vrot.lane.b32.xlu0 %v2958, 32
    %v3241 = vpop.permute.xlu0 %3240
    %3242 = vrot.lane.b32.xlu0 %v2959, 32
    %v3243 = vpop.permute.xlu0 %3242
    %3244 = vrot.lane.b32.xlu0 %v2960, 32
    %v3245 = vpop.permute.xlu0 %3244
    %3246 = vrot.lane.b32.xlu0 %v2961, 32
    %v3247 = vpop.permute.xlu0 %3246
    %3248 = vrot.lane.b32.xlu0 %v2962, 32
    %v3249 = vpop.permute.xlu0 %3248
    %3250 = vrot.lane.b32.xlu0 %v2963, 32
    %v3251 = vpop.permute.xlu0 %3250
    %3284 = vrot.lane.b32.xlu0 %v2964, 64
    %v3285 = vpop.permute.xlu0 %3284
    %3286 = vrot.lane.b32.xlu0 %v2965, 64
    %v3287 = vpop.permute.xlu0 %3286
    %3288 = vrot.lane.b32.xlu0 %v2966, 64
    %v3289 = vpop.permute.xlu0 %3288
    %3290 = vrot.lane.b32.xlu0 %v2967, 64
    %v3291 = vpop.permute.xlu0 %3290
    %3292 = vrot.lane.b32.xlu0 %v2968, 64
    %v3293 = vpop.permute.xlu0 %3292
    %3294 = vrot.lane.b32.xlu0 %v2969, 64
    %v3295 = vpop.permute.xlu0 %3294
    %3296 = vrot.lane.b32.xlu0 %v2970, 64
    %v3297 = vpop.permute.xlu0 %3296
    %3298 = vrot.lane.b32.xlu0 %v2971, 64
    %v3299 = vpop.permute.xlu0 %3298
    %3300 = vrot.lane.b32.xlu0 %v2972, 64
    %v3301 = vpop.permute.xlu0 %3300
    %3302 = vrot.lane.b32.xlu0 %v2973, 64
    %v3303 = vpop.permute.xlu0 %3302
    %3304 = vrot.lane.b32.xlu0 %v2974, 64
    %v3305 = vpop.permute.xlu0 %3304
    %3306 = vrot.lane.b32.xlu0 %v2975, 64
    %v3307 = vpop.permute.xlu0 %3306
    %3308 = vrot.lane.b32.xlu0 %v2976, 64
    %v3309 = vpop.permute.xlu0 %3308
    %3310 = vrot.lane.b32.xlu0 %v2977, 64
    %v3311 = vpop.permute.xlu0 %3310
    %3312 = vrot.lane.b32.xlu0 %v2978, 64
    %v3313 = vpop.permute.xlu0 %3312
    %3314 = vrot.lane.b32.xlu0 %v2979, 64
    %v3315 = vpop.permute.xlu0 %3314
    %3348 = vrot.lane.b32.xlu0 %v2980, 96
    %v3349 = vpop.permute.xlu0 %3348
    %3350 = vrot.lane.b32.xlu0 %v2981, 96
    %v3351 = vpop.permute.xlu0 %3350
    %3352 = vrot.lane.b32.xlu0 %v2982, 96
    %v3353 = vpop.permute.xlu0 %3352
    %3354 = vrot.lane.b32.xlu0 %v2983, 96
    %v3355 = vpop.permute.xlu0 %3354
    %3356 = vrot.lane.b32.xlu0 %v2984, 96
    %v3357 = vpop.permute.xlu0 %3356
    %3358 = vrot.lane.b32.xlu0 %v2985, 96
    %v3359 = vpop.permute.xlu0 %3358
    %3360 = vrot.lane.b32.xlu0 %v2986, 96
    %v3361 = vpop.permute.xlu0 %3360
    %3362 = vrot.lane.b32.xlu0 %v2987, 96
    %v3363 = vpop.permute.xlu0 %3362
    %3364 = vrot.lane.b32.xlu0 %v2988, 96
    %v3365 = vpop.permute.xlu0 %3364
    %3366 = vrot.lane.b32.xlu0 %v2989, 96
    %v3367 = vpop.permute.xlu0 %3366
    %3368 = vrot.lane.b32.xlu0 %v2990, 96
    %v3369 = vpop.permute.xlu0 %3368
    %3370 = vrot.lane.b32.xlu0 %v2991, 96
    %v3371 = vpop.permute.xlu0 %3370
    %3372 = vrot.lane.b32.xlu0 %v2992, 96
    %v3373 = vpop.permute.xlu0 %3372
    %3374 = vrot.lane.b32.xlu0 %v2993, 96
    %v3375 = vpop.permute.xlu0 %3374
    %3376 = vrot.lane.b32.xlu0 %v2994, 96
    %v3377 = vpop.permute.xlu0 %3376
    %3378 = vrot.lane.b32.xlu0 %v2995, 96
    %v3379 = vpop.permute.xlu0 %3378
    %v3396 = vsel %vm82, %v2868, %v3029
    %v3397 = vsel %vm82, %v2869, %v3031
    %v3398 = vsel %vm82, %v2870, %v3033
    %v3399 = vsel %vm82, %v2871, %v3035
    %v3400 = vsel %vm82, %v2872, %v3037
    %v3401 = vsel %vm82, %v2873, %v3039
    %v3402 = vsel %vm82, %v2874, %v3041
    %v3403 = vsel %vm82, %v2875, %v3043
    %v3404 = vsel %vm82, %v2876, %v3045
    %v3405 = vsel %vm82, %v2877, %v3047
    %v3406 = vsel %vm82, %v2878, %v3049
    %v3407 = vsel %vm82, %v2879, %v3051
    %v3408 = vsel %vm82, %v2880, %v3053
    %v3409 = vsel %vm82, %v2881, %v3055
    %v3410 = vsel %vm82, %v2882, %v3057
    %v3411 = vsel %vm82, %v2883, %v3059
    %v3412 = vsel %vm978, %v3396, %v3093
    %v3413 = vsel %vm978, %v3397, %v3095
    %v3414 = vsel %vm978, %v3398, %v3097
    %v3415 = vsel %vm978, %v3399, %v3099
    %v3416 = vsel %vm978, %v3400, %v3101
    %v3417 = vsel %vm978, %v3401, %v3103
    %v3418 = vsel %vm978, %v3402, %v3105
    %v3419 = vsel %vm978, %v3403, %v3107
    %v3420 = vsel %vm978, %v3404, %v3109
    %v3421 = vsel %vm978, %v3405, %v3111
    %v3422 = vsel %vm978, %v3406, %v3113
    %v3423 = vsel %vm978, %v3407, %v3115
    %v3424 = vsel %vm978, %v3408, %v3117
    %v3425 = vsel %vm978, %v3409, %v3119
    %v3426 = vsel %vm978, %v3410, %v3121
    %v3427 = vsel %vm978, %v3411, %v3123
    %v3428 = vsel %vm2216, %v3412, %v3157
    %v3429 = vsel %vm2216, %v3413, %v3159
    %v3430 = vsel %vm2216, %v3414, %v3161
    %v3431 = vsel %vm2216, %v3415, %v3163
    %v3432 = vsel %vm2216, %v3416, %v3165
    %v3433 = vsel %vm2216, %v3417, %v3167
    %v3434 = vsel %vm2216, %v3418, %v3169
    %v3435 = vsel %vm2216, %v3419, %v3171
    %v3436 = vsel %vm2216, %v3420, %v3173
    %v3437 = vsel %vm2216, %v3421, %v3175
    %v3438 = vsel %vm2216, %v3422, %v3177
    %v3439 = vsel %vm2216, %v3423, %v3179
    %v3440 = vsel %vm2216, %v3424, %v3181
    %v3441 = vsel %vm2216, %v3425, %v3183
    %v3442 = vsel %vm2216, %v3426, %v3185
    %v3443 = vsel %vm2216, %v3427, %v3187
    %v3444 = vsel %vm82, %v2932, %v3221
    %v3445 = vsel %vm82, %v2933, %v3223
    %v3446 = vsel %vm82, %v2934, %v3225
    %v3447 = vsel %vm82, %v2935, %v3227
    %v3448 = vsel %vm82, %v2936, %v3229
    %v3449 = vsel %vm82, %v2937, %v3231
    %v3450 = vsel %vm82, %v2938, %v3233
    %v3451 = vsel %vm82, %v2939, %v3235
    %v3452 = vsel %vm82, %v2940, %v3237
    %v3453 = vsel %vm82, %v2941, %v3239
    %v3454 = vsel %vm82, %v2942, %v3241
    %v3455 = vsel %vm82, %v2943, %v3243
    %v3456 = vsel %vm82, %v2944, %v3245
    %v3457 = vsel %vm82, %v2945, %v3247
    %v3458 = vsel %vm82, %v2946, %v3249
    %v3459 = vsel %vm82, %v2947, %v3251
    %v3460 = vsel %vm978, %v3444, %v3285
    %v3461 = vsel %vm978, %v3445, %v3287
    %v3462 = vsel %vm978, %v3446, %v3289
    %v3463 = vsel %vm978, %v3447, %v3291
    %v3464 = vsel %vm978, %v3448, %v3293
    %v3465 = vsel %vm978, %v3449, %v3295
    %v3466 = vsel %vm978, %v3450, %v3297
    %v3467 = vsel %vm978, %v3451, %v3299
    %v3468 = vsel %vm978, %v3452, %v3301
    %v3469 = vsel %vm978, %v3453, %v3303
    %v3470 = vsel %vm978, %v3454, %v3305
    %v3471 = vsel %vm978, %v3455, %v3307
    %v3472 = vsel %vm978, %v3456, %v3309
    %v3473 = vsel %vm978, %v3457, %v3311
    %v3474 = vsel %vm978, %v3458, %v3313
    %v3475 = vsel %vm978, %v3459, %v3315
    %v3476 = vsel %vm2216, %v3460, %v3349
    %v3477 = vsel %vm2216, %v3461, %v3351
    %v3478 = vsel %vm2216, %v3462, %v3353
    %v3479 = vsel %vm2216, %v3463, %v3355
    %v3480 = vsel %vm2216, %v3464, %v3357
    %v3481 = vsel %vm2216, %v3465, %v3359
    %v3482 = vsel %vm2216, %v3466, %v3361
    %v3483 = vsel %vm2216, %v3467, %v3363
    %v3484 = vsel %vm2216, %v3468, %v3365
    %v3485 = vsel %vm2216, %v3469, %v3367
    %v3486 = vsel %vm2216, %v3470, %v3369
    %v3487 = vsel %vm2216, %v3471, %v3371
    %v3488 = vsel %vm2216, %v3472, %v3373
    %v3489 = vsel %vm2216, %v3473, %v3375
    %v3490 = vsel %vm2216, %v3474, %v3377
    %v3491 = vsel %vm2216, %v3475, %v3379
    %v3492 = vpack.c.bf16 %v3429, %v3428
    %v3493 = vpack.c.bf16 %v3477, %v3476
    %v3494 = vpack.c.bf16 %v2997, %v2996
    %v3495 = vpack.c.bf16 %v3431, %v3430
    %v3496 = vpack.c.bf16 %v3479, %v3478
    %v3497 = vpack.c.bf16 %v2999, %v2998
    %v3498 = vpack.c.bf16 %v3433, %v3432
    %v3499 = vpack.c.bf16 %v3481, %v3480
    %v3500 = vpack.c.bf16 %v3001, %v3000
    %v3501 = vpack.c.bf16 %v3435, %v3434
    %v3502 = vpack.c.bf16 %v3483, %v3482
    %v3503 = vpack.c.bf16 %v3003, %v3002
    %v3504 = vpack.c.bf16 %v3437, %v3436
    %v3505 = vpack.c.bf16 %v3485, %v3484
    %v3506 = vpack.c.bf16 %v3005, %v3004
    %v3507 = vpack.c.bf16 %v3439, %v3438
    %v3508 = vpack.c.bf16 %v3487, %v3486
    %v3509 = vpack.c.bf16 %v3007, %v3006
    %v3510 = vpack.c.bf16 %v3441, %v3440
    %v3511 = vpack.c.bf16 %v3489, %v3488
    %v3512 = vpack.c.bf16 %v3009, %v3008
    %v3513 = vpack.c.bf16 %v3443, %v3442
    %v3514 = vpack.c.bf16 %v3491, %v3490
    %v3515 = vpack.c.bf16 %v3011, %v3010
    %v3552 = vunpack.c.l.b16 %v2832
    %v3553 = vunpack.c.l.b16 %v2833
    %v3554 = vunpack.c.l.b16 %v2834
    %v3555 = vunpack.c.l.b16 %v2835
    %v3556 = vunpack.c.l.b16 %v2836
    %v3557 = vunpack.c.l.b16 %v2837
    %v3558 = vunpack.c.l.b16 %v2838
    %v3559 = vunpack.c.l.b16 %v2839
    %v3560 = vunpack.c.l.b16 %v2840
    %v3561 = vunpack.c.l.b16 %v2841
    %v3562 = vunpack.c.l.b16 %v2842
    %v3563 = vunpack.c.l.b16 %v2843
    %v3564 = vunpack.c.l.b16 %v2844
    %v3565 = vunpack.c.l.b16 %v2845
    %v3566 = vunpack.c.l.b16 %v2846
    %v3567 = vunpack.c.l.b16 %v2847
    %v3568 = vunpack.c.l.b16 %v2848
    %v3569 = vunpack.c.l.b16 %v2849
    %v3570 = vunpack.c.l.b16 %v2850
    %v3571 = vunpack.c.l.b16 %v2851
    %v3572 = vunpack.c.l.b16 %v2852
    %v3573 = vunpack.c.l.b16 %v2853
    %v3574 = vunpack.c.l.b16 %v2854
    %v3575 = vunpack.c.l.b16 %v2855
    %v3576 = vunpack.c.l.b16 %v2856
    %v3577 = vunpack.c.l.b16 %v2857
    %v3578 = vunpack.c.l.b16 %v2858
    %v3579 = vunpack.c.l.b16 %v2859
    %v3580 = vunpack.c.l.b16 %v2860
    %v3581 = vunpack.c.l.b16 %v2861
    %v3582 = vunpack.c.l.b16 %v2862
    %v3583 = vunpack.c.l.b16 %v2863
    %v3584 = vunpack.c.l.b16 %v2864
    %v3585 = vunpack.c.l.b16 %v2865
    %v3586 = vunpack.c.l.b16 %v2866
    %v3587 = vunpack.c.l.b16 %v2867
    %v3588 = vpack.c.b16 %v3553, %v3552
    %v3589 = vpack.c.b16 %v3555, %v3554
    %v3590 = vpack.c.b16 %v3557, %v3556
    %v3591 = vpack.c.b16 %v3559, %v3558
    %v3592 = vpack.c.b16 %v3561, %v3560
    %v3593 = vpack.c.b16 %v3563, %v3562
    %v3594 = vpack.c.b16 %v3565, %v3564
    %v3595 = vpack.c.b16 %v3567, %v3566
    %v3596 = vpack.c.b16 %v3569, %v3568
    %v3597 = vpack.c.b16 %v3571, %v3570
    %v3598 = vpack.c.b16 %v3573, %v3572
    %v3599 = vpack.c.b16 %v3575, %v3574
    %v3600 = vpack.c.b16 %v3577, %v3576
    %v3601 = vpack.c.b16 %v3579, %v3578
    %v3602 = vpack.c.b16 %v3581, %v3580
    %v3603 = vpack.c.b16 %v3583, %v3582
    %v3604 = vpack.c.b16 %v3585, %v3584
    %v3605 = vpack.c.b16 %v3587, %v3586
    %v3625 = vsel %vm82, %v3494, 0
    %v3628 = vsel %vm82, %v3497, 0
    %v3631 = vsel %vm82, %v3500, 0
    %v3634 = vsel %vm82, %v3503, 0
    %v3637 = vsel %vm82, %v3506, 0
    %v3640 = vsel %vm82, %v3509, 0
    %v3643 = vsel %vm82, %v3512, 0
    %v3646 = vsel %vm82, %v3515, 0
    %3648 = vmatprep.subr.bf16.mxu0 0
    %3649 = vmatpush1.bf16.msra.mxu0 %v3588
    %3650 = vmatprep.subr.bf16.mxu0 0
    %3651 = vmatpush1.bf16.msra.mxu0 %v3589
    %3652 = vmatprep.subr.bf16.mxu0 0
    %3653 = vmatpush1.bf16.msra.mxu0 %v3590
    %3654 = vmatprep.subr.bf16.mxu0 0
    %3655 = vmatpush1.bf16.msra.mxu0 %v3591
    %3656 = vmatprep.subr.bf16.mxu0 0
    %3657 = vmatpush1.bf16.msra.mxu0 %v3592
    %3658 = vmatprep.subr.bf16.mxu0 0
    %3659 = vmatpush1.bf16.msra.mxu0 %v3593
    %3660 = vmatprep.subr.bf16.mxu0 0
    %3661 = vmatpush1.bf16.msra.mxu0 %v3594
    %3662 = vmatprep.subr.bf16.mxu0 0
    %3663 = vmatpush1.bf16.msra.mxu0 %v3595
    %3664 = vmatprep.subr.bf16.mxu0 0
    %3665 = vmatpush1.bf16.msra.mxu0 %v3596
    %3666 = vmatprep.subr.bf16.mxu0 0
    %3667 = vmatpush1.bf16.msra.mxu0 %v3597
    %3668 = vmatprep.subr.bf16.mxu0 0
    %3669 = vmatpush1.bf16.msra.mxu0 %v3598
    %3670 = vmatprep.subr.bf16.mxu0 0
    %3671 = vmatpush1.bf16.msra.mxu0 %v3599
    %3672 = vmatprep.subr.bf16.mxu0 0
    %3673 = vmatpush1.bf16.msra.mxu0 %v3600
    %3674 = vmatprep.subr.bf16.mxu0 0
    %3675 = vmatpush1.bf16.msra.mxu0 %v3601
    %3676 = vmatprep.subr.bf16.mxu0 0
    %3677 = vmatpush1.bf16.msra.mxu0 %v3602
    %3678 = vmatprep.subr.bf16.mxu0 0
    %3679 = vmatpush1.bf16.msra.mxu0 %v3603
    %3680 = vmatprep.mubr.bf16.mxu0 %v3493
    %3681 = vmatmul.mubr.bf16.gmra.mrb[0].mxu0 %v3492
    %v3682 = vpop.f32.mrb[0].mxu0
    %v3683 = vadd.f32 0.0, %v3682
    %v3684 = vpop.f32.mrb[0].mxu0
    %v3685 = vpop.f32.mrb[0].mxu0
    %v3686 = vadd.f32 0.0, %v3685
    %v3687 = vpop.f32.mrb[0].mxu0
    %3688 = vmatprep.mubr.bf16.mxu0 %v3496
    %3689 = vmatmul.mubr.bf16.gmra.mrb[0].mxu0 %v3495
    %v3690 = vpop.f32.mrb[0].mxu0
    %v3691 = vadd.f32 0.0, %v3690
    %v3692 = vpop.f32.mrb[0].mxu0
    %v3693 = vpop.f32.mrb[0].mxu0
    %v3694 = vadd.f32 0.0, %v3693
    %v3695 = vpop.f32.mrb[0].mxu0
    %3696 = vmatprep.mubr.bf16.mxu0 %v3499
    %3697 = vmatmul.mubr.bf16.gmra.mrb[0].mxu0 %v3498
    %v3698 = vpop.f32.mrb[0].mxu0
    %v3699 = vadd.f32 0.0, %v3698
    %v3700 = vpop.f32.mrb[0].mxu0
    %v3701 = vpop.f32.mrb[0].mxu0
    %v3702 = vadd.f32 0.0, %v3701
    %v3703 = vpop.f32.mrb[0].mxu0
    %3704 = vmatprep.mubr.bf16.mxu0 %v3502
    %3705 = vmatmul.mubr.bf16.gmra.mrb[0].mxu0 %v3501
    %v3706 = vpop.f32.mrb[0].mxu0
    %v3707 = vadd.f32 0.0, %v3706
    %v3708 = vpop.f32.mrb[0].mxu0
    %v3709 = vpop.f32.mrb[0].mxu0
    %v3710 = vadd.f32 0.0, %v3709
    %v3711 = vpop.f32.mrb[0].mxu0
    %3712 = vmatprep.mubr.bf16.mxu0 %v3505
    %3713 = vmatmul.mubr.bf16.gmra.mrb[0].mxu0 %v3504
    %v3714 = vpop.f32.mrb[0].mxu0
    %v3715 = vadd.f32 0.0, %v3714
    %v3716 = vpop.f32.mrb[0].mxu0
    %v3717 = vpop.f32.mrb[0].mxu0
    %v3718 = vadd.f32 0.0, %v3717
    %v3719 = vpop.f32.mrb[0].mxu0
    %3720 = vmatprep.mubr.bf16.mxu0 %v3508
    %3721 = vmatmul.mubr.bf16.gmra.mrb[0].mxu0 %v3507
    %v3722 = vpop.f32.mrb[0].mxu0
    %v3723 = vadd.f32 0.0, %v3722
    %v3724 = vpop.f32.mrb[0].mxu0
    %v3725 = vpop.f32.mrb[0].mxu0
    %v3726 = vadd.f32 0.0, %v3725
    %v3727 = vpop.f32.mrb[0].mxu0
    %3728 = vmatprep.mubr.bf16.mxu0 %v3511
    %3729 = vmatmul.mubr.bf16.gmra.mrb[0].mxu0 %v3510
    %v3730 = vpop.f32.mrb[0].mxu0
    %v3731 = vadd.f32 0.0, %v3730
    %v3732 = vpop.f32.mrb[0].mxu0
    %v3733 = vpop.f32.mrb[0].mxu0
    %v3734 = vadd.f32 0.0, %v3733
    %v3735 = vpop.f32.mrb[0].mxu0
    %3736 = vmatprep.mubr.bf16.mxu0 %v3514
    %3737 = vmatmul.mubr.bf16.gmra.mrb[0].mxu0 %v3513
    %v3738 = vpop.f32.mrb[0].mxu0
    %v3739 = vadd.f32 0.0, %v3738
    %v3740 = vpop.f32.mrb[0].mxu0
    %v3741 = vpop.f32.mrb[0].mxu0
    %v3742 = vadd.f32 0.0, %v3741
    %v3743 = vpop.f32.mrb[0].mxu0
    %3744 = vdwg.mxu0
    %3745 = vmatprep.subr.bf16.mxu0 0
    %3746 = vmatpush1.bf16.msra.mxu0 %v3604
    %3747 = vmatprep.subr.bf16.mxu0 0
    %3748 = vmatpush1.bf16.msra.mxu0 %v3605
    %3749 = vmatprep.subr.bf16.mxu0 0
    %3750 = vmatpush1.bf16.msra.mxu0 0
    %3751 = vmatprep.subr.bf16.mxu0 0
    %3752 = vmatpush1.bf16.msra.mxu0 0
    %3753 = vmatprep.subr.bf16.mxu0 0
    %3754 = vmatpush1.bf16.msra.mxu0 0
    %3755 = vmatprep.subr.bf16.mxu0 0
    %3756 = vmatpush1.bf16.msra.mxu0 0
    %3757 = vmatprep.subr.bf16.mxu0 0
    %3758 = vmatpush1.bf16.msra.mxu0 0
    %3759 = vmatprep.subr.bf16.mxu0 0
    %3760 = vmatpush1.bf16.msra.mxu0 0
    %3761 = vmatprep.subr.bf16.mxu0 0
    %3762 = vmatpush1.bf16.msra.mxu0 0
    %3763 = vmatprep.subr.bf16.mxu0 0
    %3764 = vmatpush1.bf16.msra.mxu0 0
    %3765 = vmatprep.subr.bf16.mxu0 0
    %3766 = vmatpush1.bf16.msra.mxu0 0
    %3767 = vmatprep.subr.bf16.mxu0 0
    %3768 = vmatpush1.bf16.msra.mxu0 0
    %3769 = vmatprep.subr.bf16.mxu0 0
    %3770 = vmatpush1.bf16.msra.mxu0 0
    %3771 = vmatprep.subr.bf16.mxu0 0
    %3772 = vmatpush1.bf16.msra.mxu0 0
    %3773 = vmatprep.subr.bf16.mxu0 0
    %3774 = vmatpush1.bf16.msra.mxu0 0
    %3775 = vmatprep.subr.bf16.mxu0 0
    %3776 = vmatpush1.bf16.msra.mxu0 0
    %3777 = vmatprep.mubr.bf16.mxu0 0
    %3778 = vmatmul.mubr.bf16.gmra.mrb[0].mxu0 %v3625
    %v3779 = vpop.f32.mrb[0].mxu0
    %v3780 = vadd.f32 %v3683, %v3779
    %v3781 = vpop.f32.mrb[0].mxu0
    %v3782 = vpop.f32.mrb[0].mxu0
    %v3783 = vadd.f32 %v3686, %v3782
    %v3784 = vpop.f32.mrb[0].mxu0
    %3785 = vmatprep.mubr.bf16.mxu0 0
    %3786 = vmatmul.mubr.bf16.gmra.mrb[0].mxu0 %v3628
    %v3787 = vpop.f32.mrb[0].mxu0
    %v3788 = vadd.f32 %v3691, %v3787
    %v3789 = vpop.f32.mrb[0].mxu0
    %v3790 = vpop.f32.mrb[0].mxu0
    %v3791 = vadd.f32 %v3694, %v3790
    %v3792 = vpop.f32.mrb[0].mxu0
    %3793 = vmatprep.mubr.bf16.mxu0 0
    %3794 = vmatmul.mubr.bf16.gmra.mrb[0].mxu0 %v3631
    %v3795 = vpop.f32.mrb[0].mxu0
    %v3796 = vadd.f32 %v3699, %v3795
    %v3797 = vpop.f32.mrb[0].mxu0
    %v3798 = vpop.f32.mrb[0].mxu0
    %v3799 = vadd.f32 %v3702, %v3798
    %v3800 = vpop.f32.mrb[0].mxu0
    %3801 = vmatprep.mubr.bf16.mxu0 0
    %3802 = vmatmul.mubr.bf16.gmra.mrb[0].mxu0 %v3634
    %v3803 = vpop.f32.mrb[0].mxu0
    %v3804 = vadd.f32 %v3707, %v3803
    %v3805 = vpop.f32.mrb[0].mxu0
    %v3806 = vpop.f32.mrb[0].mxu0
    %v3807 = vadd.f32 %v3710, %v3806
    %v3808 = vpop.f32.mrb[0].mxu0
    %3809 = vmatprep.mubr.bf16.mxu0 0
    %3810 = vmatmul.mubr.bf16.gmra.mrb[0].mxu0 %v3637
    %v3811 = vpop.f32.mrb[0].mxu0
    %v3812 = vadd.f32 %v3715, %v3811
    %v3813 = vpop.f32.mrb[0].mxu0
    %v3814 = vpop.f32.mrb[0].mxu0
    %v3815 = vadd.f32 %v3718, %v3814
    %v3816 = vpop.f32.mrb[0].mxu0
    %3817 = vmatprep.mubr.bf16.mxu0 0
    %3818 = vmatmul.mubr.bf16.gmra.mrb[0].mxu0 %v3640
    %v3819 = vpop.f32.mrb[0].mxu0
    %v3820 = vadd.f32 %v3723, %v3819
    %v3821 = vpop.f32.mrb[0].mxu0
    %v3822 = vpop.f32.mrb[0].mxu0
    %v3823 = vadd.f32 %v3726, %v3822
    %v3824 = vpop.f32.mrb[0].mxu0
    %3825 = vmatprep.mubr.bf16.mxu0 0
    %3826 = vmatmul.mubr.bf16.gmra.mrb[0].mxu0 %v3643
    %v3827 = vpop.f32.mrb[0].mxu0
    %v3828 = vadd.f32 %v3731, %v3827
    %v3829 = vpop.f32.mrb[0].mxu0
    %v3830 = vpop.f32.mrb[0].mxu0
    %v3831 = vadd.f32 %v3734, %v3830
    %v3832 = vpop.f32.mrb[0].mxu0
    %3833 = vmatprep.mubr.bf16.mxu0 0
    %3834 = vmatmul.mubr.bf16.gmra.mrb[0].mxu0 %v3646
    %v3835 = vpop.f32.mrb[0].mxu0
    %v3836 = vadd.f32 %v3739, %v3835
    %v3837 = vpop.f32.mrb[0].mxu0
    %v3838 = vpop.f32.mrb[0].mxu0
    %v3839 = vadd.f32 %v3742, %v3838
    %v3840 = vpop.f32.mrb[0].mxu0
    %3841 = vdwg.mxu0
    %v3842 = vld [vmem:[%s4 + $0x2] sm:$0x1]
    %v3843 = vld [vmem:[%s5 + $0x2] sm:$0x1]
    %v3844 = vsel %vm82, %v3780, 0.0
    %v3845 = vsel %vm82, %v3783, 0.0
    %v3846 = vadd.f32 %v3844, %v3845
    %v3847 = vsel %vm82, %v3788, 0.0
    %v3848 = vadd.f32 %v3846, %v3847
    %v3849 = vsel %vm82, %v3791, 0.0
    %v3850 = vadd.f32 %v3848, %v3849
    %v3851 = vsel %vm82, %v3796, 0.0
    %v3852 = vadd.f32 %v3850, %v3851
    %v3853 = vsel %vm82, %v3799, 0.0
    %v3854 = vadd.f32 %v3852, %v3853
    %v3855 = vsel %vm82, %v3804, 0.0
    %v3856 = vadd.f32 %v3854, %v3855
    %v3857 = vsel %vm82, %v3807, 0.0
    %v3858 = vadd.f32 %v3856, %v3857
    %v3859 = vrot.slane %v3858, 4
    %v3860 = vadd.f32 %v3858, %v3859
    %v3861 = vrot.slane %v3860, 2
    %v3862 = vadd.f32 %v3860, %v3861
    %v3863 = vrot.slane %v3862, 1
    %v3864 = vadd.f32 %v3862, %v3863
    %v3865 = vsel %vm82, %v3812, 0.0
    %v3866 = vsel %vm82, %v3815, 0.0
    %v3867 = vadd.f32 %v3865, %v3866
    %v3868 = vsel %vm82, %v3820, 0.0
    %v3869 = vadd.f32 %v3867, %v3868
    %v3870 = vsel %vm82, %v3823, 0.0
    %v3871 = vadd.f32 %v3869, %v3870
    %v3872 = vsel %vm82, %v3828, 0.0
    %v3873 = vadd.f32 %v3871, %v3872
    %v3874 = vsel %vm82, %v3831, 0.0
    %v3875 = vadd.f32 %v3873, %v3874
    %v3876 = vsel %vm82, %v3836, 0.0
    %v3877 = vadd.f32 %v3875, %v3876
    %v3878 = vsel %vm82, %v3839, 0.0
    %v3879 = vadd.f32 %v3877, %v3878
    %v3880 = vrot.slane %v3879, 4
    %v3881 = vadd.f32 %v3879, %v3880
    %v3882 = vrot.slane %v3881, 2
    %v3883 = vadd.f32 %v3881, %v3882
    %v3884 = vrot.slane %v3883, 1
    %v3885 = vadd.f32 %v3883, %v3884
    %v3886 = vmul.f32 %v3780, %v3780
    %v3887 = vmul.f32 %v3783, %v3783
    %v3888 = vmul.f32 %v3788, %v3788
    %v3889 = vmul.f32 %v3791, %v3791
    %v3890 = vmul.f32 %v3796, %v3796
    %v3891 = vmul.f32 %v3799, %v3799
    %v3892 = vmul.f32 %v3804, %v3804
    %v3893 = vmul.f32 %v3807, %v3807
    %v3894 = vmul.f32 %v3812, %v3812
    %v3895 = vmul.f32 %v3815, %v3815
    %v3896 = vmul.f32 %v3820, %v3820
    %v3897 = vmul.f32 %v3823, %v3823
    %v3898 = vmul.f32 %v3828, %v3828
    %v3899 = vmul.f32 %v3831, %v3831
    %v3900 = vmul.f32 %v3836, %v3836
    %v3901 = vmul.f32 %v3839, %v3839
    %v3902 = vsel %vm82, %v3886, 0.0
    %v3903 = vsel %vm82, %v3887, 0.0
    %v3904 = vadd.f32 %v3902, %v3903
    %v3905 = vsel %vm82, %v3888, 0.0
    %v3906 = vadd.f32 %v3904, %v3905
    %v3907 = vsel %vm82, %v3889, 0.0
    %v3908 = vadd.f32 %v3906, %v3907
    %v3909 = vsel %vm82, %v3890, 0.0
    %v3910 = vadd.f32 %v3908, %v3909
    %v3911 = vsel %vm82, %v3891, 0.0
    %v3912 = vadd.f32 %v3910, %v3911
    %v3913 = vsel %vm82, %v3892, 0.0
    %v3914 = vadd.f32 %v3912, %v3913
    %v3915 = vsel %vm82, %v3893, 0.0
    %v3916 = vadd.f32 %v3914, %v3915
    %v3917 = vrot.slane %v3916, 4
    %v3918 = vadd.f32 %v3916, %v3917
    %v3919 = vrot.slane %v3918, 2
    %v3920 = vadd.f32 %v3918, %v3919
    %v3921 = vrot.slane %v3920, 1
    %v3922 = vadd.f32 %v3920, %v3921
    %v3923 = vsel %vm82, %v3894, 0.0
    %v3924 = vsel %vm82, %v3895, 0.0
    %v3925 = vadd.f32 %v3923, %v3924
    %v3926 = vsel %vm82, %v3896, 0.0
    %v3927 = vadd.f32 %v3925, %v3926
    %v3928 = vsel %vm82, %v3897, 0.0
    %v3929 = vadd.f32 %v3927, %v3928
    %v3930 = vsel %vm82, %v3898, 0.0
    %v3931 = vadd.f32 %v3929, %v3930
    %v3932 = vsel %vm82, %v3899, 0.0
    %v3933 = vadd.f32 %v3931, %v3932
    %v3934 = vsel %vm82, %v3900, 0.0
    %v3935 = vadd.f32 %v3933, %v3934
    %v3936 = vsel %vm82, %v3901, 0.0
    %v3937 = vadd.f32 %v3935, %v3936
    %v3938 = vrot.slane %v3937, 4
    %v3939 = vadd.f32 %v3937, %v3938
    %v3940 = vrot.slane %v3939, 2
    %v3941 = vadd.f32 %v3939, %v3940
    %v3942 = vrot.slane %v3941, 1
    %v3943 = vadd.f32 %v3941, %v3942
    %v3944 = vmul.f32 %v3864, 0.015625
    %v3945 = vmul.f32 %v3885, 0.015625
    %v3946 = vmul.f32 %v3922, 0.015625
    %v3947 = vmul.f32 %v3943, 0.015625
    %v3948 = vmul.f32 %v3944, %v3944
    %v3949 = vmul.f32 %v3945, %v3945
    %v3950 = vsub.f32 %v3946, %v3948
    %v3951 = vsub.f32 %v3947, %v3949
    %v3952 = vadd.f32 %v3950, 1e-05
    %v3953 = vadd.f32 %v3951, 1e-05
    %v3954 = vrsqrt.pop %v3952
    %v3955 = vrsqrt.pop %v3953
    %v3956 = vmul.f32 %v3842, %v3954
    %v3957 = vmul.f32 %v3842, %v3955
    %v3958 = vmul.f32 %v3944, %v3956
    %v3959 = vmul.f32 %v3945, %v3957
    %v3960 = vsub.f32 %v3843, %v3958
    %v3961 = vsub.f32 %v3843, %v3959
    %v3962 = vlaneseq
    %v3963 = vshrl.u32 %v3962, 7
    %v3964 = vsub.s32 0, %v3963
    %v3965 = vrot.slane %v3956, %v3964
    %v3966 = vlaneseq
    %v3967 = vshrl.u32 %v3966, 7
    %v3968 = vsub.s32 0, %v3967
    %v3969 = vrot.slane %v3957, %v3968
    %v3970 = vmul.f32 %v3780, %v3965
    %v3971 = vmul.f32 %v3783, %v3965
    %v3972 = vmul.f32 %v3788, %v3965
    %v3973 = vmul.f32 %v3791, %v3965
    %v3974 = vmul.f32 %v3796, %v3965
    %v3975 = vmul.f32 %v3799, %v3965
    %v3976 = vmul.f32 %v3804, %v3965
    %v3977 = vmul.f32 %v3807, %v3965
    %v3978 = vmul.f32 %v3812, %v3969
    %v3979 = vmul.f32 %v3815, %v3969
    %v3980 = vmul.f32 %v3820, %v3969
    %v3981 = vmul.f32 %v3823, %v3969
    %v3982 = vmul.f32 %v3828, %v3969
    %v3983 = vmul.f32 %v3831, %v3969
    %v3984 = vmul.f32 %v3836, %v3969
    %v3985 = vmul.f32 %v3839, %v3969
    %v3986 = vlaneseq
    %v3987 = vshrl.u32 %v3986, 7
    %v3988 = vsub.s32 0, %v3987
    %v3989 = vrot.slane %v3960, %v3988
    %v3990 = vlaneseq
    %v3991 = vshrl.u32 %v3990, 7
    %v3992 = vsub.s32 0, %v3991
    %v3993 = vrot.slane %v3961, %v3992
    %v3994 = vadd.f32 %v3970, %v3989
    %v3995 = vadd.f32 %v3971, %v3989
    %v3996 = vadd.f32 %v3972, %v3989
    %v3997 = vadd.f32 %v3973, %v3989
    %v3998 = vadd.f32 %v3974, %v3989
    %v3999 = vadd.f32 %v3975, %v3989
    %v4000 = vadd.f32 %v3976, %v3989
    %v4001 = vadd.f32 %v3977, %v3989
    %v4002 = vadd.f32 %v3978, %v3993
    %v4003 = vadd.f32 %v3979, %v3993
    %v4004 = vadd.f32 %v3980, %v3993
    %v4005 = vadd.f32 %v3981, %v3993
    %v4006 = vadd.f32 %v3982, %v3993
    %v4007 = vadd.f32 %v3983, %v3993
    %v4008 = vadd.f32 %v3984, %v3993
    %v4009 = vadd.f32 %v3985, %v3993
    %v4010 = vadd.f32 %v1545, %v3994
    %v4011 = vadd.f32 %v1546, %v3995
    %v4012 = vadd.f32 %v1547, %v3996
    %v4013 = vadd.f32 %v1548, %v3997
    %v4014 = vadd.f32 %v1549, %v3998
    %v4015 = vadd.f32 %v1550, %v3999
    %v4016 = vadd.f32 %v1551, %v4000
    %v4017 = vadd.f32 %v1552, %v4001
    %v4018 = vadd.f32 %v1553, %v4002
    %v4019 = vadd.f32 %v1554, %v4003
    %v4020 = vadd.f32 %v1555, %v4004
    %v4021 = vadd.f32 %v1556, %v4005
    %v4022 = vadd.f32 %v1557, %v4006
    %v4023 = vadd.f32 %v1558, %v4007
    %v4024 = vadd.f32 %v1559, %v4008
    %v4025 = vadd.f32 %v1560, %v4009
    %4026 = vst.msk [vmem:[%s1602 + $0x1] sm:$0xff] %vm82, %v4010
    %4027 = vst.msk [vmem:[%s1602 + $0x11] sm:$0xff] %vm82, %v4011
    %4028 = vst.msk [vmem:[%s1602 + $0x21] sm:$0xff] %vm82, %v4012
    %4029 = vst.msk [vmem:[%s1602 + $0x31] sm:$0xff] %vm82, %v4013
    %4030 = vst.msk [vmem:[%s1602 + $0x41] sm:$0xff] %vm82, %v4014
    %4031 = vst.msk [vmem:[%s1602 + $0x51] sm:$0xff] %vm82, %v4015
    %4032 = vst.msk [vmem:[%s1602 + $0x61] sm:$0xff] %vm82, %v4016
    %4033 = vst.msk [vmem:[%s1602 + $0x71] sm:$0xff] %vm82, %v4017
    %4034 = vst.msk [vmem:[%s1602 + $0xa1] sm:$0xff] %vm82, %v4018
    %4035 = vst.msk [vmem:[%s1602 + $0xb1] sm:$0xff] %vm82, %v4019
    %4036 = vst.msk [vmem:[%s1602 + $0xc1] sm:$0xff] %vm82, %v4020
    %4037 = vst.msk [vmem:[%s1602 + $0xd1] sm:$0xff] %vm82, %v4021
    %4038 = vst.msk [vmem:[%s1602 + $0xe1] sm:$0xff] %vm82, %v4022
    %4039 = vst.msk [vmem:[%s1602 + $0xf1] sm:$0xff] %vm82, %v4023
    %4040 = vst.msk [vmem:[%s1602 + $0x101] sm:$0xff] %vm82, %v4024
    %4041 = vst.msk [vmem:[%s1602 + $0x111] sm:$0xff] %vm82, %v4025
    %s4042 = scalar_lea.vmem %s3, 288
    %v4043 = vld [vmem:[%s4042] sm:$0xf]
    %v4044 = vld [vmem:[%s4042 + $0x4] sm:$0xf]
    %v4045 = vld [vmem:[%s4042 + $0x8] sm:$0xf]
    %v4046 = vld [vmem:[%s4042 + $0xc] sm:$0xf]
    %v4047 = vld [vmem:[%s4042 + $0x10] sm:$0xf]
    %v4048 = vld [vmem:[%s4042 + $0x14] sm:$0xf]
    %v4049 = vld [vmem:[%s4042 + $0x18] sm:$0xf]
    %v4050 = vld [vmem:[%s4042 + $0x1c] sm:$0xf]
    %v4051 = vld [vmem:[%s4042 + $0x20] sm:$0xf]
    %v4052 = vld [vmem:[%s4042 + $0x24] sm:$0xf]
    %v4053 = vld [vmem:[%s4042 + $0x28] sm:$0xf]
    %v4054 = vld [vmem:[%s4042 + $0x2c] sm:$0xf]
    %v4055 = vld [vmem:[%s4042 + $0x30] sm:$0xf]
    %v4056 = vld [vmem:[%s4042 + $0x34] sm:$0xf]
    %v4057 = vld [vmem:[%s4042 + $0x38] sm:$0xf]
    %v4058 = vld [vmem:[%s4042 + $0x3c] sm:$0xf]
    %v4059 = vld [vmem:[%s4042 + $0x40] sm:$0xf]
    %v4060 = vld [vmem:[%s4042 + $0x44] sm:$0xf]
    %v4061 = vld [vmem:[%s4042 + $0x48] sm:$0xf]
    %v4062 = vld [vmem:[%s4042 + $0x4c] sm:$0xf]
    %v4063 = vld [vmem:[%s4042 + $0x50] sm:$0xf]
    %v4064 = vld [vmem:[%s4042 + $0x54] sm:$0xf]
    %v4065 = vld [vmem:[%s4042 + $0x58] sm:$0xf]
    %v4066 = vld [vmem:[%s4042 + $0x5c] sm:$0xf]
    %v4067 = vld [vmem:[%s4042 + $0x60] sm:$0xf]
    %v4068 = vld [vmem:[%s4042 + $0x64] sm:$0xf]
    %v4069 = vld [vmem:[%s4042 + $0x68] sm:$0xf]
    %v4070 = vld [vmem:[%s4042 + $0x6c] sm:$0xf]
    %v4071 = vld [vmem:[%s4042 + $0x70] sm:$0xf]
    %v4072 = vld [vmem:[%s4042 + $0x74] sm:$0xf]
    %v4073 = vld [vmem:[%s4042 + $0x78] sm:$0xf]
    %v4074 = vld [vmem:[%s4042 + $0x7c] sm:$0xf]
    %v4075 = vld [vmem:[%s4042 + $0x80] sm:$0xf]
    %v4076 = vld [vmem:[%s4042 + $0x84] sm:$0xf]
    %v4077 = vld [vmem:[%s4042 + $0x88] sm:$0xf]
    %v4078 = vld [vmem:[%s4042 + $0x8c] sm:$0xf]
    %v4079 = vld [vmem:[#allocation3] sm:$0xff]
    %v4080 = vld [vmem:[#allocation3 + $0x10] sm:$0xff]
    %v4081 = vld [vmem:[#allocation3 + $0x20] sm:$0xff]
    %v4082 = vld [vmem:[#allocation3 + $0x30] sm:$0xff]
    %v4083 = vld [vmem:[#allocation3 + $0x40] sm:$0xff]
    %v4084 = vld [vmem:[#allocation3 + $0x50] sm:$0xff]
    %v4085 = vld [vmem:[#allocation3 + $0x60] sm:$0xff]
    %v4086 = vld [vmem:[#allocation3 + $0x70] sm:$0xff]
    %v4087 = vld [vmem:[#allocation3 + $0xa0] sm:$0xff]
    %v4088 = vld [vmem:[#allocation3 + $0xb0] sm:$0xff]
    %v4089 = vld [vmem:[#allocation3 + $0xc0] sm:$0xff]
    %v4090 = vld [vmem:[#allocation3 + $0xd0] sm:$0xff]
    %v4091 = vld [vmem:[#allocation3 + $0xe0] sm:$0xff]
    %v4092 = vld [vmem:[#allocation3 + $0xf0] sm:$0xff]
    %v4093 = vld [vmem:[#allocation3 + $0x100] sm:$0xff]
    %v4094 = vld [vmem:[#allocation3 + $0x110] sm:$0xff]
    %v4095 = vld [vmem:[#allocation3 + $0x1] sm:$0xff]
    %v4096 = vld [vmem:[#allocation3 + $0x11] sm:$0xff]
    %v4097 = vld [vmem:[#allocation3 + $0x21] sm:$0xff]
    %v4098 = vld [vmem:[#allocation3 + $0x31] sm:$0xff]
    %v4099 = vld [vmem:[#allocation3 + $0x41] sm:$0xff]
    %v4100 = vld [vmem:[#allocation3 + $0x51] sm:$0xff]
    %v4101 = vld [vmem:[#allocation3 + $0x61] sm:$0xff]
    %v4102 = vld [vmem:[#allocation3 + $0x71] sm:$0xff]
    %v4103 = vld [vmem:[#allocation3 + $0xa1] sm:$0xff]
    %v4104 = vld [vmem:[#allocation3 + $0xb1] sm:$0xff]
    %v4105 = vld [vmem:[#allocation3 + $0xc1] sm:$0xff]
    %v4106 = vld [vmem:[#allocation3 + $0xd1] sm:$0xff]
    %v4107 = vld [vmem:[#allocation3 + $0xe1] sm:$0xff]
    %v4108 = vld [vmem:[#allocation3 + $0xf1] sm:$0xff]
    %v4109 = vld [vmem:[#allocation3 + $0x101] sm:$0xff]
    %v4110 = vld [vmem:[#allocation3 + $0x111] sm:$0xff]
    %v4111 = vld [vmem:[#allocation3 + $0x2] sm:$0xff]
    %v4112 = vld [vmem:[#allocation3 + $0x12] sm:$0xff]
    %v4113 = vld [vmem:[#allocation3 + $0x22] sm:$0xff]
    %v4114 = vld [vmem:[#allocation3 + $0x32] sm:$0xff]
    %v4115 = vld [vmem:[#allocation3 + $0x42] sm:$0xff]
    %v4116 = vld [vmem:[#allocation3 + $0x52] sm:$0xff]
    %v4117 = vld [vmem:[#allocation3 + $0x62] sm:$0xff]
    %v4118 = vld [vmem:[#allocation3 + $0x72] sm:$0xff]
    %v4119 = vld [vmem:[#allocation3 + $0xa2] sm:$0xff]
    %v4120 = vld [vmem:[#allocation3 + $0xb2] sm:$0xff]
    %v4121 = vld [vmem:[#allocation3 + $0xc2] sm:$0xff]
    %v4122 = vld [vmem:[#allocation3 + $0xd2] sm:$0xff]
    %v4123 = vld [vmem:[#allocation3 + $0xe2] sm:$0xff]
    %v4124 = vld [vmem:[#allocation3 + $0xf2] sm:$0xff]
    %v4125 = vld [vmem:[#allocation3 + $0x102] sm:$0xff]
    %v4126 = vld [vmem:[#allocation3 + $0x112] sm:$0xff]
    %v4127 = vld [vmem:[%s1602] sm:$0xff]
    %v4128 = vld [vmem:[%s1602 + $0x10] sm:$0xff]
    %v4129 = vld [vmem:[%s1602 + $0x20] sm:$0xff]
    %v4130 = vld [vmem:[%s1602 + $0x30] sm:$0xff]
    %v4131 = vld [vmem:[%s1602 + $0x40] sm:$0xff]
    %v4132 = vld [vmem:[%s1602 + $0x50] sm:$0xff]
    %v4133 = vld [vmem:[%s1602 + $0x60] sm:$0xff]
    %v4134 = vld [vmem:[%s1602 + $0x70] sm:$0xff]
    %v4135 = vld [vmem:[%s1602 + $0xa0] sm:$0xff]
    %v4136 = vld [vmem:[%s1602 + $0xb0] sm:$0xff]
    %v4137 = vld [vmem:[%s1602 + $0xc0] sm:$0xff]
    %v4138 = vld [vmem:[%s1602 + $0xd0] sm:$0xff]
    %v4139 = vld [vmem:[%s1602 + $0xe0] sm:$0xff]
    %v4140 = vld [vmem:[%s1602 + $0xf0] sm:$0xff]
    %v4141 = vld [vmem:[%s1602 + $0x100] sm:$0xff]
    %v4142 = vld [vmem:[%s1602 + $0x110] sm:$0xff]
    %v4143 = vld [vmem:[%s1602 + $0x1] sm:$0xff]
    %v4144 = vld [vmem:[%s1602 + $0x11] sm:$0xff]
    %v4145 = vld [vmem:[%s1602 + $0x21] sm:$0xff]
    %v4146 = vld [vmem:[%s1602 + $0x31] sm:$0xff]
    %v4147 = vld [vmem:[%s1602 + $0x41] sm:$0xff]
    %v4148 = vld [vmem:[%s1602 + $0x51] sm:$0xff]
    %v4149 = vld [vmem:[%s1602 + $0x61] sm:$0xff]
    %v4150 = vld [vmem:[%s1602 + $0x71] sm:$0xff]
    %v4151 = vld [vmem:[%s1602 + $0xa1] sm:$0xff]
    %v4152 = vld [vmem:[%s1602 + $0xb1] sm:$0xff]
    %v4153 = vld [vmem:[%s1602 + $0xc1] sm:$0xff]
    %v4154 = vld [vmem:[%s1602 + $0xd1] sm:$0xff]
    %v4155 = vld [vmem:[%s1602 + $0xe1] sm:$0xff]
    %v4156 = vld [vmem:[%s1602 + $0xf1] sm:$0xff]
    %v4157 = vld [vmem:[%s1602 + $0x101] sm:$0xff]
    %v4158 = vld [vmem:[%s1602 + $0x111] sm:$0xff]
    %v4159 = vld [vmem:[%s1602 + $0x2] sm:$0xff]
    %v4160 = vld [vmem:[%s1602 + $0x12] sm:$0xff]
    %v4161 = vld [vmem:[%s1602 + $0x22] sm:$0xff]
    %v4162 = vld [vmem:[%s1602 + $0x32] sm:$0xff]
    %v4163 = vld [vmem:[%s1602 + $0x42] sm:$0xff]
    %v4164 = vld [vmem:[%s1602 + $0x52] sm:$0xff]
    %v4165 = vld [vmem:[%s1602 + $0x62] sm:$0xff]
    %v4166 = vld [vmem:[%s1602 + $0x72] sm:$0xff]
    %v4167 = vld [vmem:[%s1602 + $0xa2] sm:$0xff]
    %v4168 = vld [vmem:[%s1602 + $0xb2] sm:$0xff]
    %v4169 = vld [vmem:[%s1602 + $0xc2] sm:$0xff]
    %v4170 = vld [vmem:[%s1602 + $0xd2] sm:$0xff]
    %v4171 = vld [vmem:[%s1602 + $0xe2] sm:$0xff]
    %v4172 = vld [vmem:[%s1602 + $0xf2] sm:$0xff]
    %v4173 = vld [vmem:[%s1602 + $0x102] sm:$0xff]
    %v4174 = vld [vmem:[%s1602 + $0x112] sm:$0xff]
    %v4175 = vld [vmem:[%s1751] sm:$0xff]
    %v4176 = vld [vmem:[%s1751 + $0x10] sm:$0xff]
    %v4177 = vld [vmem:[%s1751 + $0x20] sm:$0xff]
    %v4178 = vld [vmem:[%s1751 + $0x30] sm:$0xff]
    %v4179 = vld [vmem:[%s1751 + $0x40] sm:$0xff]
    %v4180 = vld [vmem:[%s1751 + $0x50] sm:$0xff]
    %v4181 = vld [vmem:[%s1751 + $0x60] sm:$0xff]
    %v4182 = vld [vmem:[%s1751 + $0x70] sm:$0xff]
    %v4183 = vld [vmem:[%s1751 + $0xa0] sm:$0xff]
    %v4184 = vld [vmem:[%s1751 + $0xb0] sm:$0xff]
    %v4185 = vld [vmem:[%s1751 + $0xc0] sm:$0xff]
    %v4186 = vld [vmem:[%s1751 + $0xd0] sm:$0xff]
    %v4187 = vld [vmem:[%s1751 + $0xe0] sm:$0xff]
    %v4188 = vld [vmem:[%s1751 + $0xf0] sm:$0xff]
    %v4189 = vld [vmem:[%s1751 + $0x100] sm:$0xff]
    %v4190 = vld [vmem:[%s1751 + $0x110] sm:$0xff]
    %v4191 = vld [vmem:[%s1751 + $0x1] sm:$0xff]
    %v4192 = vld [vmem:[%s1751 + $0x11] sm:$0xff]
    %v4193 = vld [vmem:[%s1751 + $0x21] sm:$0xff]
    %v4194 = vld [vmem:[%s1751 + $0x31] sm:$0xff]
    %v4195 = vld [vmem:[%s1751 + $0x41] sm:$0xff]
    %v4196 = vld [vmem:[%s1751 + $0x51] sm:$0xff]
    %v4197 = vld [vmem:[%s1751 + $0x61] sm:$0xff]
    %v4198 = vld [vmem:[%s1751 + $0x71] sm:$0xff]
    %v4199 = vld [vmem:[%s1751 + $0xa1] sm:$0xff]
    %v4200 = vld [vmem:[%s1751 + $0xb1] sm:$0xff]
    %v4201 = vld [vmem:[%s1751 + $0xc1] sm:$0xff]
    %v4202 = vld [vmem:[%s1751 + $0xd1] sm:$0xff]
    %v4203 = vld [vmem:[%s1751 + $0xe1] sm:$0xff]
    %v4204 = vld [vmem:[%s1751 + $0xf1] sm:$0xff]
    %v4205 = vld [vmem:[%s1751 + $0x101] sm:$0xff]
    %v4206 = vld [vmem:[%s1751 + $0x111] sm:$0xff]
    %v4207 = vld [vmem:[%s1751 + $0x2] sm:$0xff]
    %v4208 = vld [vmem:[%s1751 + $0x12] sm:$0xff]
    %v4209 = vld [vmem:[%s1751 + $0x22] sm:$0xff]
    %v4210 = vld [vmem:[%s1751 + $0x32] sm:$0xff]
    %v4211 = vld [vmem:[%s1751 + $0x42] sm:$0xff]
    %v4212 = vld [vmem:[%s1751 + $0x52] sm:$0xff]
    %v4213 = vld [vmem:[%s1751 + $0x62] sm:$0xff]
    %v4214 = vld [vmem:[%s1751 + $0x72] sm:$0xff]
    %v4215 = vld [vmem:[%s1751 + $0xa2] sm:$0xff]
    %v4216 = vld [vmem:[%s1751 + $0xb2] sm:$0xff]
    %v4217 = vld [vmem:[%s1751 + $0xc2] sm:$0xff]
    %v4218 = vld [vmem:[%s1751 + $0xd2] sm:$0xff]
    %v4219 = vld [vmem:[%s1751 + $0xe2] sm:$0xff]
    %v4220 = vld [vmem:[%s1751 + $0xf2] sm:$0xff]
    %v4221 = vld [vmem:[%s1751 + $0x102] sm:$0xff]
    %v4222 = vld [vmem:[%s1751 + $0x112] sm:$0xff]
    %4239 = vrot.lane.b32.xlu0 %v4095, 32
    %v4240 = vpop.permute.xlu0 %4239
    %4241 = vrot.lane.b32.xlu0 %v4096, 32
    %v4242 = vpop.permute.xlu0 %4241
    %4243 = vrot.lane.b32.xlu0 %v4097, 32
    %v4244 = vpop.permute.xlu0 %4243
    %4245 = vrot.lane.b32.xlu0 %v4098, 32
    %v4246 = vpop.permute.xlu0 %4245
    %4247 = vrot.lane.b32.xlu0 %v4099, 32
    %v4248 = vpop.permute.xlu0 %4247
    %4249 = vrot.lane.b32.xlu0 %v4100, 32
    %v4250 = vpop.permute.xlu0 %4249
    %4251 = vrot.lane.b32.xlu0 %v4101, 32
    %v4252 = vpop.permute.xlu0 %4251
    %4253 = vrot.lane.b32.xlu0 %v4102, 32
    %v4254 = vpop.permute.xlu0 %4253
    %4255 = vrot.lane.b32.xlu0 %v4103, 32
    %v4256 = vpop.permute.xlu0 %4255
    %4257 = vrot.lane.b32.xlu0 %v4104, 32
    %v4258 = vpop.permute.xlu0 %4257
    %4259 = vrot.lane.b32.xlu0 %v4105, 32
    %v4260 = vpop.permute.xlu0 %4259
    %4261 = vrot.lane.b32.xlu0 %v4106, 32
    %v4262 = vpop.permute.xlu0 %4261
    %4263 = vrot.lane.b32.xlu0 %v4107, 32
    %v4264 = vpop.permute.xlu0 %4263
    %4265 = vrot.lane.b32.xlu0 %v4108, 32
    %v4266 = vpop.permute.xlu0 %4265
    %4267 = vrot.lane.b32.xlu0 %v4109, 32
    %v4268 = vpop.permute.xlu0 %4267
    %4269 = vrot.lane.b32.xlu0 %v4110, 32
    %v4270 = vpop.permute.xlu0 %4269
    %4303 = vrot.lane.b32.xlu0 %v4111, 64
    %v4304 = vpop.permute.xlu0 %4303
    %4305 = vrot.lane.b32.xlu0 %v4112, 64
    %v4306 = vpop.permute.xlu0 %4305
    %4307 = vrot.lane.b32.xlu0 %v4113, 64
    %v4308 = vpop.permute.xlu0 %4307
    %4309 = vrot.lane.b32.xlu0 %v4114, 64
    %v4310 = vpop.permute.xlu0 %4309
    %4311 = vrot.lane.b32.xlu0 %v4115, 64
    %v4312 = vpop.permute.xlu0 %4311
    %4313 = vrot.lane.b32.xlu0 %v4116, 64
    %v4314 = vpop.permute.xlu0 %4313
    %4315 = vrot.lane.b32.xlu0 %v4117, 64
    %v4316 = vpop.permute.xlu0 %4315
    %4317 = vrot.lane.b32.xlu0 %v4118, 64
    %v4318 = vpop.permute.xlu0 %4317
    %4319 = vrot.lane.b32.xlu0 %v4119, 64
    %v4320 = vpop.permute.xlu0 %4319
    %4321 = vrot.lane.b32.xlu0 %v4120, 64
    %v4322 = vpop.permute.xlu0 %4321
    %4323 = vrot.lane.b32.xlu0 %v4121, 64
    %v4324 = vpop.permute.xlu0 %4323
    %4325 = vrot.lane.b32.xlu0 %v4122, 64
    %v4326 = vpop.permute.xlu0 %4325
    %4327 = vrot.lane.b32.xlu0 %v4123, 64
    %v4328 = vpop.permute.xlu0 %4327
    %4329 = vrot.lane.b32.xlu0 %v4124, 64
    %v4330 = vpop.permute.xlu0 %4329
    %4331 = vrot.lane.b32.xlu0 %v4125, 64
    %v4332 = vpop.permute.xlu0 %4331
    %4333 = vrot.lane.b32.xlu0 %v4126, 64
    %v4334 = vpop.permute.xlu0 %4333
    %4367 = vrot.lane.b32.xlu0 %v4127, 96
    %v4368 = vpop.permute.xlu0 %4367
    %4369 = vrot.lane.b32.xlu0 %v4128, 96
    %v4370 = vpop.permute.xlu0 %4369
    %4371 = vrot.lane.b32.xlu0 %v4129, 96
    %v4372 = vpop.permute.xlu0 %4371
    %4373 = vrot.lane.b32.xlu0 %v4130, 96
    %v4374 = vpop.permute.xlu0 %4373
    %4375 = vrot.lane.b32.xlu0 %v4131, 96
    %v4376 = vpop.permute.xlu0 %4375
    %4377 = vrot.lane.b32.xlu0 %v4132, 96
    %v4378 = vpop.permute.xlu0 %4377
    %4379 = vrot.lane.b32.xlu0 %v4133, 96
    %v4380 = vpop.permute.xlu0 %4379
    %4381 = vrot.lane.b32.xlu0 %v4134, 96
    %v4382 = vpop.permute.xlu0 %4381
    %4383 = vrot.lane.b32.xlu0 %v4135, 96
    %v4384 = vpop.permute.xlu0 %4383
    %4385 = vrot.lane.b32.xlu0 %v4136, 96
    %v4386 = vpop.permute.xlu0 %4385
    %4387 = vrot.lane.b32.xlu0 %v4137, 96
    %v4388 = vpop.permute.xlu0 %4387
    %4389 = vrot.lane.b32.xlu0 %v4138, 96
    %v4390 = vpop.permute.xlu0 %4389
    %4391 = vrot.lane.b32.xlu0 %v4139, 96
    %v4392 = vpop.permute.xlu0 %4391
    %4393 = vrot.lane.b32.xlu0 %v4140, 96
    %v4394 = vpop.permute.xlu0 %4393
    %4395 = vrot.lane.b32.xlu0 %v4141, 96
    %v4396 = vpop.permute.xlu0 %4395
    %4397 = vrot.lane.b32.xlu0 %v4142, 96
    %v4398 = vpop.permute.xlu0 %4397
    %4431 = vrot.lane.b32.xlu0 %v4159, 32
    %v4432 = vpop.permute.xlu0 %4431
    %4433 = vrot.lane.b32.xlu0 %v4160, 32
    %v4434 = vpop.permute.xlu0 %4433
    %4435 = vrot.lane.b32.xlu0 %v4161, 32
    %v4436 = vpop.permute.xlu0 %4435
    %4437 = vrot.lane.b32.xlu0 %v4162, 32
    %v4438 = vpop.permute.xlu0 %4437
    %4439 = vrot.lane.b32.xlu0 %v4163, 32
    %v4440 = vpop.permute.xlu0 %4439
    %4441 = vrot.lane.b32.xlu0 %v4164, 32
    %v4442 = vpop.permute.xlu0 %4441
    %4443 = vrot.lane.b32.xlu0 %v4165, 32
    %v4444 = vpop.permute.xlu0 %4443
    %4445 = vrot.lane.b32.xlu0 %v4166, 32
    %v4446 = vpop.permute.xlu0 %4445
    %4447 = vrot.lane.b32.xlu0 %v4167, 32
    %v4448 = vpop.permute.xlu0 %4447
    %4449 = vrot.lane.b32.xlu0 %v4168, 32
    %v4450 = vpop.permute.xlu0 %4449
    %4451 = vrot.lane.b32.xlu0 %v4169, 32
    %v4452 = vpop.permute.xlu0 %4451
    %4453 = vrot.lane.b32.xlu0 %v4170, 32
    %v4454 = vpop.permute.xlu0 %4453
    %4455 = vrot.lane.b32.xlu0 %v4171, 32
    %v4456 = vpop.permute.xlu0 %4455
    %4457 = vrot.lane.b32.xlu0 %v4172, 32
    %v4458 = vpop.permute.xlu0 %4457
    %4459 = vrot.lane.b32.xlu0 %v4173, 32
    %v4460 = vpop.permute.xlu0 %4459
    %4461 = vrot.lane.b32.xlu0 %v4174, 32
    %v4462 = vpop.permute.xlu0 %4461
    %4495 = vrot.lane.b32.xlu0 %v4175, 64
    %v4496 = vpop.permute.xlu0 %4495
    %4497 = vrot.lane.b32.xlu0 %v4176, 64
    %v4498 = vpop.permute.xlu0 %4497
    %4499 = vrot.lane.b32.xlu0 %v4177, 64
    %v4500 = vpop.permute.xlu0 %4499
    %4501 = vrot.lane.b32.xlu0 %v4178, 64
    %v4502 = vpop.permute.xlu0 %4501
    %4503 = vrot.lane.b32.xlu0 %v4179, 64
    %v4504 = vpop.permute.xlu0 %4503
    %4505 = vrot.lane.b32.xlu0 %v4180, 64
    %v4506 = vpop.permute.xlu0 %4505
    %4507 = vrot.lane.b32.xlu0 %v4181, 64
    %v4508 = vpop.permute.xlu0 %4507
    %4509 = vrot.lane.b32.xlu0 %v4182, 64
    %v4510 = vpop.permute.xlu0 %4509
    %4511 = vrot.lane.b32.xlu0 %v4183, 64
    %v4512 = vpop.permute.xlu0 %4511
    %4513 = vrot.lane.b32.xlu0 %v4184, 64
    %v4514 = vpop.permute.xlu0 %4513
    %4515 = vrot.lane.b32.xlu0 %v4185, 64
    %v4516 = vpop.permute.xlu0 %4515
    %4517 = vrot.lane.b32.xlu0 %v4186, 64
    %v4518 = vpop.permute.xlu0 %4517
    %4519 = vrot.lane.b32.xlu0 %v4187, 64
    %v4520 = vpop.permute.xlu0 %4519
    %4521 = vrot.lane.b32.xlu0 %v4188, 64
    %v4522 = vpop.permute.xlu0 %4521
    %4523 = vrot.lane.b32.xlu0 %v4189, 64
    %v4524 = vpop.permute.xlu0 %4523
    %4525 = vrot.lane.b32.xlu0 %v4190, 64
    %v4526 = vpop.permute.xlu0 %4525
    %4559 = vrot.lane.b32.xlu0 %v4191, 96
    %v4560 = vpop.permute.xlu0 %4559
    %4561 = vrot.lane.b32.xlu0 %v4192, 96
    %v4562 = vpop.permute.xlu0 %4561
    %4563 = vrot.lane.b32.xlu0 %v4193, 96
    %v4564 = vpop.permute.xlu0 %4563
    %4565 = vrot.lane.b32.xlu0 %v4194, 96
    %v4566 = vpop.permute.xlu0 %4565
    %4567 = vrot.lane.b32.xlu0 %v4195, 96
    %v4568 = vpop.permute.xlu0 %4567
    %4569 = vrot.lane.b32.xlu0 %v4196, 96
    %v4570 = vpop.permute.xlu0 %4569
    %4571 = vrot.lane.b32.xlu0 %v4197, 96
    %v4572 = vpop.permute.xlu0 %4571
    %4573 = vrot.lane.b32.xlu0 %v4198, 96
    %v4574 = vpop.permute.xlu0 %4573
    %4575 = vrot.lane.b32.xlu0 %v4199, 96
    %v4576 = vpop.permute.xlu0 %4575
    %4577 = vrot.lane.b32.xlu0 %v4200, 96
    %v4578 = vpop.permute.xlu0 %4577
    %4579 = vrot.lane.b32.xlu0 %v4201, 96
    %v4580 = vpop.permute.xlu0 %4579
    %4581 = vrot.lane.b32.xlu0 %v4202, 96
    %v4582 = vpop.permute.xlu0 %4581
    %4583 = vrot.lane.b32.xlu0 %v4203, 96
    %v4584 = vpop.permute.xlu0 %4583
    %4585 = vrot.lane.b32.xlu0 %v4204, 96
    %v4586 = vpop.permute.xlu0 %4585
    %4587 = vrot.lane.b32.xlu0 %v4205, 96
    %v4588 = vpop.permute.xlu0 %4587
    %4589 = vrot.lane.b32.xlu0 %v4206, 96
    %v4590 = vpop.permute.xlu0 %4589
    %v4607 = vsel %vm82, %v4079, %v4240
    %v4608 = vsel %vm82, %v4080, %v4242
    %v4609 = vsel %vm82, %v4081, %v4244
    %v4610 = vsel %vm82, %v4082, %v4246
    %v4611 = vsel %vm82, %v4083, %v4248
    %v4612 = vsel %vm82, %v4084, %v4250
    %v4613 = vsel %vm82, %v4085, %v4252
    %v4614 = vsel %vm82, %v4086, %v4254
    %v4615 = vsel %vm82, %v4087, %v4256
    %v4616 = vsel %vm82, %v4088, %v4258
    %v4617 = vsel %vm82, %v4089, %v4260
    %v4618 = vsel %vm82, %v4090, %v4262
    %v4619 = vsel %vm82, %v4091, %v4264
    %v4620 = vsel %vm82, %v4092, %v4266
    %v4621 = vsel %vm82, %v4093, %v4268
    %v4622 = vsel %vm82, %v4094, %v4270
    %v4623 = vsel %vm978, %v4607, %v4304
    %v4624 = vsel %vm978, %v4608, %v4306
    %v4625 = vsel %vm978, %v4609, %v4308
    %v4626 = vsel %vm978, %v4610, %v4310
    %v4627 = vsel %vm978, %v4611, %v4312
    %v4628 = vsel %vm978, %v4612, %v4314
    %v4629 = vsel %vm978, %v4613, %v4316
    %v4630 = vsel %vm978, %v4614, %v4318
    %v4631 = vsel %vm978, %v4615, %v4320
    %v4632 = vsel %vm978, %v4616, %v4322
    %v4633 = vsel %vm978, %v4617, %v4324
    %v4634 = vsel %vm978, %v4618, %v4326
    %v4635 = vsel %vm978, %v4619, %v4328
    %v4636 = vsel %vm978, %v4620, %v4330
    %v4637 = vsel %vm978, %v4621, %v4332
    %v4638 = vsel %vm978, %v4622, %v4334
    %v4639 = vsel %vm2216, %v4623, %v4368
    %v4640 = vsel %vm2216, %v4624, %v4370
    %v4641 = vsel %vm2216, %v4625, %v4372
    %v4642 = vsel %vm2216, %v4626, %v4374
    %v4643 = vsel %vm2216, %v4627, %v4376
    %v4644 = vsel %vm2216, %v4628, %v4378
    %v4645 = vsel %vm2216, %v4629, %v4380
    %v4646 = vsel %vm2216, %v4630, %v4382
    %v4647 = vsel %vm2216, %v4631, %v4384
    %v4648 = vsel %vm2216, %v4632, %v4386
    %v4649 = vsel %vm2216, %v4633, %v4388
    %v4650 = vsel %vm2216, %v4634, %v4390
    %v4651 = vsel %vm2216, %v4635, %v4392
    %v4652 = vsel %vm2216, %v4636, %v4394
    %v4653 = vsel %vm2216, %v4637, %v4396
    %v4654 = vsel %vm2216, %v4638, %v4398
    %v4655 = vsel %vm82, %v4143, %v4432
    %v4656 = vsel %vm82, %v4144, %v4434
    %v4657 = vsel %vm82, %v4145, %v4436
    %v4658 = vsel %vm82, %v4146, %v4438
    %v4659 = vsel %vm82, %v4147, %v4440
    %v4660 = vsel %vm82, %v4148, %v4442
    %v4661 = vsel %vm82, %v4149, %v4444
    %v4662 = vsel %vm82, %v4150, %v4446
    %v4663 = vsel %vm82, %v4151, %v4448
    %v4664 = vsel %vm82, %v4152, %v4450
    %v4665 = vsel %vm82, %v4153, %v4452
    %v4666 = vsel %vm82, %v4154, %v4454
    %v4667 = vsel %vm82, %v4155, %v4456
    %v4668 = vsel %vm82, %v4156, %v4458
    %v4669 = vsel %vm82, %v4157, %v4460
    %v4670 = vsel %vm82, %v4158, %v4462
    %v4671 = vsel %vm978, %v4655, %v4496
    %v4672 = vsel %vm978, %v4656, %v4498
    %v4673 = vsel %vm978, %v4657, %v4500
    %v4674 = vsel %vm978, %v4658, %v4502
    %v4675 = vsel %vm978, %v4659, %v4504
    %v4676 = vsel %vm978, %v4660, %v4506
    %v4677 = vsel %vm978, %v4661, %v4508
    %v4678 = vsel %vm978, %v4662, %v4510
    %v4679 = vsel %vm978, %v4663, %v4512
    %v4680 = vsel %vm978, %v4664, %v4514
    %v4681 = vsel %vm978, %v4665, %v4516
    %v4682 = vsel %vm978, %v4666, %v4518
    %v4683 = vsel %vm978, %v4667, %v4520
    %v4684 = vsel %vm978, %v4668, %v4522
    %v4685 = vsel %vm978, %v4669, %v4524
    %v4686 = vsel %vm978, %v4670, %v4526
    %v4687 = vsel %vm2216, %v4671, %v4560
    %v4688 = vsel %vm2216, %v4672, %v4562
    %v4689 = vsel %vm2216, %v4673, %v4564
    %v4690 = vsel %vm2216, %v4674, %v4566
    %v4691 = vsel %vm2216, %v4675, %v4568
    %v4692 = vsel %vm2216, %v4676, %v4570
    %v4693 = vsel %vm2216, %v4677, %v4572
    %v4694 = vsel %vm2216, %v4678, %v4574
    %v4695 = vsel %vm2216, %v4679, %v4576
    %v4696 = vsel %vm2216, %v4680, %v4578
    %v4697 = vsel %vm2216, %v4681, %v4580
    %v4698 = vsel %vm2216, %v4682, %v4582
    %v4699 = vsel %vm2216, %v4683, %v4584
    %v4700 = vsel %vm2216, %v4684, %v4586
    %v4701 = vsel %vm2216, %v4685, %v4588
    %v4702 = vsel %vm2216, %v4686, %v4590
    %v4703 = vpack.c.bf16 %v4640, %v4639
    %v4704 = vpack.c.bf16 %v4688, %v4687
    %v4705 = vpack.c.bf16 %v4208, %v4207
    %v4706 = vpack.c.bf16 %v4642, %v4641
    %v4707 = vpack.c.bf16 %v4690, %v4689
    %v4708 = vpack.c.bf16 %v4210, %v4209
    %v4709 = vpack.c.bf16 %v4644, %v4643
    %v4710 = vpack.c.bf16 %v4692, %v4691
    %v4711 = vpack.c.bf16 %v4212, %v4211
    %v4712 = vpack.c.bf16 %v4646, %v4645
    %v4713 = vpack.c.bf16 %v4694, %v4693
    %v4714 = vpack.c.bf16 %v4214, %v4213
    %v4715 = vpack.c.bf16 %v4648, %v4647
    %v4716 = vpack.c.bf16 %v4696, %v4695
    %v4717 = vpack.c.bf16 %v4216, %v4215
    %v4718 = vpack.c.bf16 %v4650, %v4649
    %v4719 = vpack.c.bf16 %v4698, %v4697
    %v4720 = vpack.c.bf16 %v4218, %v4217
    %v4721 = vpack.c.bf16 %v4652, %v4651
    %v4722 = vpack.c.bf16 %v4700, %v4699
    %v4723 = vpack.c.bf16 %v4220, %v4219
    %v4724 = vpack.c.bf16 %v4654, %v4653
    %v4725 = vpack.c.bf16 %v4702, %v4701
    %v4726 = vpack.c.bf16 %v4222, %v4221
    %v4763 = vunpack.c.l.b16 %v4043
    %v4764 = vunpack.c.l.b16 %v4044
    %v4765 = vunpack.c.l.b16 %v4045
    %v4766 = vunpack.c.l.b16 %v4046
    %v4767 = vunpack.c.l.b16 %v4047
    %v4768 = vunpack.c.l.b16 %v4048
    %v4769 = vunpack.c.l.b16 %v4049
    %v4770 = vunpack.c.l.b16 %v4050
    %v4771 = vunpack.c.l.b16 %v4051
    %v4772 = vunpack.c.l.b16 %v4052
    %v4773 = vunpack.c.l.b16 %v4053
    %v4774 = vunpack.c.l.b16 %v4054
    %v4775 = vunpack.c.l.b16 %v4055
    %v4776 = vunpack.c.l.b16 %v4056
    %v4777 = vunpack.c.l.b16 %v4057
    %v4778 = vunpack.c.l.b16 %v4058
    %v4779 = vunpack.c.l.b16 %v4059
    %v4780 = vunpack.c.l.b16 %v4060
    %v4781 = vunpack.c.l.b16 %v4061
    %v4782 = vunpack.c.l.b16 %v4062
    %v4783 = vunpack.c.l.b16 %v4063
    %v4784 = vunpack.c.l.b16 %v4064
    %v4785 = vunpack.c.l.b16 %v4065
    %v4786 = vunpack.c.l.b16 %v4066
    %v4787 = vunpack.c.l.b16 %v4067
    %v4788 = vunpack.c.l.b16 %v4068
    %v4789 = vunpack.c.l.b16 %v4069
    %v4790 = vunpack.c.l.b16 %v4070
    %v4791 = vunpack.c.l.b16 %v4071
    %v4792 = vunpack.c.l.b16 %v4072
    %v4793 = vunpack.c.l.b16 %v4073
    %v4794 = vunpack.c.l.b16 %v4074
    %v4795 = vunpack.c.l.b16 %v4075
    %v4796 = vunpack.c.l.b16 %v4076
    %v4797 = vunpack.c.l.b16 %v4077
    %v4798 = vunpack.c.l.b16 %v4078
    %v4799 = vpack.c.b16 %v4764, %v4763
    %v4800 = vpack.c.b16 %v4766, %v4765
    %v4801 = vpack.c.b16 %v4768, %v4767
    %v4802 = vpack.c.b16 %v4770, %v4769
    %v4803 = vpack.c.b16 %v4772, %v4771
    %v4804 = vpack.c.b16 %v4774, %v4773
    %v4805 = vpack.c.b16 %v4776, %v4775
    %v4806 = vpack.c.b16 %v4778, %v4777
    %v4807 = vpack.c.b16 %v4780, %v4779
    %v4808 = vpack.c.b16 %v4782, %v4781
    %v4809 = vpack.c.b16 %v4784, %v4783
    %v4810 = vpack.c.b16 %v4786, %v4785
    %v4811 = vpack.c.b16 %v4788, %v4787
    %v4812 = vpack.c.b16 %v4790, %v4789
    %v4813 = vpack.c.b16 %v4792, %v4791
    %v4814 = vpack.c.b16 %v4794, %v4793
    %v4815 = vpack.c.b16 %v4796, %v4795
    %v4816 = vpack.c.b16 %v4798, %v4797
    %v4836 = vsel %vm82, %v4705, 0
    %v4839 = vsel %vm82, %v4708, 0
    %v4842 = vsel %vm82, %v4711, 0
    %v4845 = vsel %vm82, %v4714, 0
    %v4848 = vsel %vm82, %v4717, 0
    %v4851 = vsel %vm82, %v4720, 0
    %v4854 = vsel %vm82, %v4723, 0
    %v4857 = vsel %vm82, %v4726, 0
    %4859 = vmatprep.subr.bf16.mxu0 0
    %4860 = vmatpush1.bf16.msra.mxu0 %v4799
    %4861 = vmatprep.subr.bf16.mxu0 0
    %4862 = vmatpush1.bf16.msra.mxu0 %v4800
    %4863 = vmatprep.subr.bf16.mxu0 0
    %4864 = vmatpush1.bf16.msra.mxu0 %v4801
    %4865 = vmatprep.subr.bf16.mxu0 0
    %4866 = vmatpush1.bf16.msra.mxu0 %v4802
    %4867 = vmatprep.subr.bf16.mxu0 0
    %4868 = vmatpush1.bf16.msra.mxu0 %v4803
    %4869 = vmatprep.subr.bf16.mxu0 0
    %4870 = vmatpush1.bf16.msra.mxu0 %v4804
    %4871 = vmatprep.subr.bf16.mxu0 0
    %4872 = vmatpush1.bf16.msra.mxu0 %v4805
    %4873 = vmatprep.subr.bf16.mxu0 0
    %4874 = vmatpush1.bf16.msra.mxu0 %v4806
    %4875 = vmatprep.subr.bf16.mxu0 0
    %4876 = vmatpush1.bf16.msra.mxu0 %v4807
    %4877 = vmatprep.subr.bf16.mxu0 0
    %4878 = vmatpush1.bf16.msra.mxu0 %v4808
    %4879 = vmatprep.subr.bf16.mxu0 0
    %4880 = vmatpush1.bf16.msra.mxu0 %v4809
    %4881 = vmatprep.subr.bf16.mxu0 0
    %4882 = vmatpush1.bf16.msra.mxu0 %v4810
    %4883 = vmatprep.subr.bf16.mxu0 0
    %4884 = vmatpush1.bf16.msra.mxu0 %v4811
    %4885 = vmatprep.subr.bf16.mxu0 0
    %4886 = vmatpush1.bf16.msra.mxu0 %v4812
    %4887 = vmatprep.subr.bf16.mxu0 0
    %4888 = vmatpush1.bf16.msra.mxu0 %v4813
    %4889 = vmatprep.subr.bf16.mxu0 0
    %4890 = vmatpush1.bf16.msra.mxu0 %v4814
    %4891 = vmatprep.mubr.bf16.mxu0 %v4704
    %4892 = vmatmul.mubr.bf16.gmra.mrb[0].mxu0 %v4703
    %v4893 = vpop.f32.mrb[0].mxu0
    %v4894 = vadd.f32 0.0, %v4893
    %v4895 = vpop.f32.mrb[0].mxu0
    %v4896 = vpop.f32.mrb[0].mxu0
    %v4897 = vadd.f32 0.0, %v4896
    %v4898 = vpop.f32.mrb[0].mxu0
    %4899 = vmatprep.mubr.bf16.mxu0 %v4707
    %4900 = vmatmul.mubr.bf16.gmra.mrb[0].mxu0 %v4706
    %v4901 = vpop.f32.mrb[0].mxu0
    %v4902 = vadd.f32 0.0, %v4901
    %v4903 = vpop.f32.mrb[0].mxu0
    %v4904 = vpop.f32.mrb[0].mxu0
    %v4905 = vadd.f32 0.0, %v4904
    %v4906 = vpop.f32.mrb[0].mxu0
    %4907 = vmatprep.mubr.bf16.mxu0 %v4710
    %4908 = vmatmul.mubr.bf16.gmra.mrb[0].mxu0 %v4709
    %v4909 = vpop.f32.mrb[0].mxu0
    %v4910 = vadd.f32 0.0, %v4909
    %v4911 = vpop.f32.mrb[0].mxu0
    %v4912 = vpop.f32.mrb[0].mxu0
    %v4913 = vadd.f32 0.0, %v4912
    %v4914 = vpop.f32.mrb[0].mxu0
    %4915 = vmatprep.mubr.bf16.mxu0 %v4713
    %4916 = vmatmul.mubr.bf16.gmra.mrb[0].mxu0 %v4712
    %v4917 = vpop.f32.mrb[0].mxu0
    %v4918 = vadd.f32 0.0, %v4917
    %v4919 = vpop.f32.mrb[0].mxu0
    %v4920 = vpop.f32.mrb[0].mxu0
    %v4921 = vadd.f32 0.0, %v4920
    %v4922 = vpop.f32.mrb[0].mxu0
    %4923 = vmatprep.mubr.bf16.mxu0 %v4716
    %4924 = vmatmul.mubr.bf16.gmra.mrb[0].mxu0 %v4715
    %v4925 = vpop.f32.mrb[0].mxu0
    %v4926 = vadd.f32 0.0, %v4925
    %v4927 = vpop.f32.mrb[0].mxu0
    %v4928 = vpop.f32.mrb[0].mxu0
    %v4929 = vadd.f32 0.0, %v4928
    %v4930 = vpop.f32.mrb[0].mxu0
    %4931 = vmatprep.mubr.bf16.mxu0 %v4719
    %4932 = vmatmul.mubr.bf16.gmra.mrb[0].mxu0 %v4718
    %v4933 = vpop.f32.mrb[0].mxu0
    %v4934 = vadd.f32 0.0, %v4933
    %v4935 = vpop.f32.mrb[0].mxu0
    %v4936 = vpop.f32.mrb[0].mxu0
    %v4937 = vadd.f32 0.0, %v4936
    %v4938 = vpop.f32.mrb[0].mxu0
    %4939 = vmatprep.mubr.bf16.mxu0 %v4722
    %4940 = vmatmul.mubr.bf16.gmra.mrb[0].mxu0 %v4721
    %v4941 = vpop.f32.mrb[0].mxu0
    %v4942 = vadd.f32 0.0, %v4941
    %v4943 = vpop.f32.mrb[0].mxu0
    %v4944 = vpop.f32.mrb[0].mxu0
    %v4945 = vadd.f32 0.0, %v4944
    %v4946 = vpop.f32.mrb[0].mxu0
    %4947 = vmatprep.mubr.bf16.mxu0 %v4725
    %4948 = vmatmul.mubr.bf16.gmra.mrb[0].mxu0 %v4724
    %v4949 = vpop.f32.mrb[0].mxu0
    %v4950 = vadd.f32 0.0, %v4949
    %v4951 = vpop.f32.mrb[0].mxu0
    %v4952 = vpop.f32.mrb[0].mxu0
    %v4953 = vadd.f32 0.0, %v4952
    %v4954 = vpop.f32.mrb[0].mxu0
    %4955 = vdwg.mxu0
    %4956 = vmatprep.subr.bf16.mxu0 0
    %4957 = vmatpush1.bf16.msra.mxu0 %v4815
    %4958 = vmatprep.subr.bf16.mxu0 0
    %4959 = vmatpush1.bf16.msra.mxu0 %v4816
    %4960 = vmatprep.subr.bf16.mxu0 0
    %4961 = vmatpush1.bf16.msra.mxu0 0
    %4962 = vmatprep.subr.bf16.mxu0 0
    %4963 = vmatpush1.bf16.msra.mxu0 0
    %4964 = vmatprep.subr.bf16.mxu0 0
    %4965 = vmatpush1.bf16.msra.mxu0 0
    %4966 = vmatprep.subr.bf16.mxu0 0
    %4967 = vmatpush1.bf16.msra.mxu0 0
    %4968 = vmatprep.subr.bf16.mxu0 0
    %4969 = vmatpush1.bf16.msra.mxu0 0
    %4970 = vmatprep.subr.bf16.mxu0 0
    %4971 = vmatpush1.bf16.msra.mxu0 0
    %4972 = vmatprep.subr.bf16.mxu0 0
    %4973 = vmatpush1.bf16.msra.mxu0 0
    %4974 = vmatprep.subr.bf16.mxu0 0
    %4975 = vmatpush1.bf16.msra.mxu0 0
    %4976 = vmatprep.subr.bf16.mxu0 0
    %4977 = vmatpush1.bf16.msra.mxu0 0
    %4978 = vmatprep.subr.bf16.mxu0 0
    %4979 = vmatpush1.bf16.msra.mxu0 0
    %4980 = vmatprep.subr.bf16.mxu0 0
    %4981 = vmatpush1.bf16.msra.mxu0 0
    %4982 = vmatprep.subr.bf16.mxu0 0
    %4983 = vmatpush1.bf16.msra.mxu0 0
    %4984 = vmatprep.subr.bf16.mxu0 0
    %4985 = vmatpush1.bf16.msra.mxu0 0
    %4986 = vmatprep.subr.bf16.mxu0 0
    %4987 = vmatpush1.bf16.msra.mxu0 0
    %4988 = vmatprep.mubr.bf16.mxu0 0
    %4989 = vmatmul.mubr.bf16.gmra.mrb[0].mxu0 %v4836
    %v4990 = vpop.f32.mrb[0].mxu0
    %v4991 = vadd.f32 %v4894, %v4990
    %v4992 = vpop.f32.mrb[0].mxu0
    %v4993 = vpop.f32.mrb[0].mxu0
    %v4994 = vadd.f32 %v4897, %v4993
    %v4995 = vpop.f32.mrb[0].mxu0
    %4996 = vmatprep.mubr.bf16.mxu0 0
    %4997 = vmatmul.mubr.bf16.gmra.mrb[0].mxu0 %v4839
    %v4998 = vpop.f32.mrb[0].mxu0
    %v4999 = vadd.f32 %v4902, %v4998
    %v5000 = vpop.f32.mrb[0].mxu0
    %v5001 = vpop.f32.mrb[0].mxu0
    %v5002 = vadd.f32 %v4905, %v5001
    %v5003 = vpop.f32.mrb[0].mxu0
    %5004 = vmatprep.mubr.bf16.mxu0 0
    %5005 = vmatmul.mubr.bf16.gmra.mrb[0].mxu0 %v4842
    %v5006 = vpop.f32.mrb[0].mxu0
    %v5007 = vadd.f32 %v4910, %v5006
    %v5008 = vpop.f32.mrb[0].mxu0
    %v5009 = vpop.f32.mrb[0].mxu0
    %v5010 = vadd.f32 %v4913, %v5009
    %v5011 = vpop.f32.mrb[0].mxu0
    %5012 = vmatprep.mubr.bf16.mxu0 0
    %5013 = vmatmul.mubr.bf16.gmra.mrb[0].mxu0 %v4845
    %v5014 = vpop.f32.mrb[0].mxu0
    %v5015 = vadd.f32 %v4918, %v5014
    %v5016 = vpop.f32.mrb[0].mxu0
    %v5017 = vpop.f32.mrb[0].mxu0
    %v5018 = vadd.f32 %v4921, %v5017
    %v5019 = vpop.f32.mrb[0].mxu0
    %5020 = vmatprep.mubr.bf16.mxu0 0
    %5021 = vmatmul.mubr.bf16.gmra.mrb[0].mxu0 %v4848
    %v5022 = vpop.f32.mrb[0].mxu0
    %v5023 = vadd.f32 %v4926, %v5022
    %v5024 = vpop.f32.mrb[0].mxu0
    %v5025 = vpop.f32.mrb[0].mxu0
    %v5026 = vadd.f32 %v4929, %v5025
    %v5027 = vpop.f32.mrb[0].mxu0
    %5028 = vmatprep.mubr.bf16.mxu0 0
    %5029 = vmatmul.mubr.bf16.gmra.mrb[0].mxu0 %v4851
    %v5030 = vpop.f32.mrb[0].mxu0
    %v5031 = vadd.f32 %v4934, %v5030
    %v5032 = vpop.f32.mrb[0].mxu0
    %v5033 = vpop.f32.mrb[0].mxu0
    %v5034 = vadd.f32 %v4937, %v5033
    %v5035 = vpop.f32.mrb[0].mxu0
    %5036 = vmatprep.mubr.bf16.mxu0 0
    %5037 = vmatmul.mubr.bf16.gmra.mrb[0].mxu0 %v4854
    %v5038 = vpop.f32.mrb[0].mxu0
    %v5039 = vadd.f32 %v4942, %v5038
    %v5040 = vpop.f32.mrb[0].mxu0
    %v5041 = vpop.f32.mrb[0].mxu0
    %v5042 = vadd.f32 %v4945, %v5041
    %v5043 = vpop.f32.mrb[0].mxu0
    %5044 = vmatprep.mubr.bf16.mxu0 0
    %5045 = vmatmul.mubr.bf16.gmra.mrb[0].mxu0 %v4857
    %v5046 = vpop.f32.mrb[0].mxu0
    %v5047 = vadd.f32 %v4950, %v5046
    %v5048 = vpop.f32.mrb[0].mxu0
    %v5049 = vpop.f32.mrb[0].mxu0
    %v5050 = vadd.f32 %v4953, %v5049
    %v5051 = vpop.f32.mrb[0].mxu0
    %5052 = vdwg.mxu0
    %v5053 = vld [vmem:[%s4 + $0x3] sm:$0x1]
    %v5054 = vld [vmem:[%s5 + $0x3] sm:$0x1]
    %v5055 = vsel %vm82, %v4991, 0.0
    %v5056 = vsel %vm82, %v4994, 0.0
    %v5057 = vadd.f32 %v5055, %v5056
    %v5058 = vsel %vm82, %v4999, 0.0
    %v5059 = vadd.f32 %v5057, %v5058
    %v5060 = vsel %vm82, %v5002, 0.0
    %v5061 = vadd.f32 %v5059, %v5060
    %v5062 = vsel %vm82, %v5007, 0.0
    %v5063 = vadd.f32 %v5061, %v5062
    %v5064 = vsel %vm82, %v5010, 0.0
    %v5065 = vadd.f32 %v5063, %v5064
    %v5066 = vsel %vm82, %v5015, 0.0
    %v5067 = vadd.f32 %v5065, %v5066
    %v5068 = vsel %vm82, %v5018, 0.0
    %v5069 = vadd.f32 %v5067, %v5068
    %v5070 = vrot.slane %v5069, 4
    %v5071 = vadd.f32 %v5069, %v5070
    %v5072 = vrot.slane %v5071, 2
    %v5073 = vadd.f32 %v5071, %v5072
    %v5074 = vrot.slane %v5073, 1
    %v5075 = vadd.f32 %v5073, %v5074
    %v5076 = vsel %vm82, %v5023, 0.0
    %v5077 = vsel %vm82, %v5026, 0.0
    %v5078 = vadd.f32 %v5076, %v5077
    %v5079 = vsel %vm82, %v5031, 0.0
    %v5080 = vadd.f32 %v5078, %v5079
    %v5081 = vsel %vm82, %v5034, 0.0
    %v5082 = vadd.f32 %v5080, %v5081
    %v5083 = vsel %vm82, %v5039, 0.0
    %v5084 = vadd.f32 %v5082, %v5083
    %v5085 = vsel %vm82, %v5042, 0.0
    %v5086 = vadd.f32 %v5084, %v5085
    %v5087 = vsel %vm82, %v5047, 0.0
    %v5088 = vadd.f32 %v5086, %v5087
    %v5089 = vsel %vm82, %v5050, 0.0
    %v5090 = vadd.f32 %v5088, %v5089
    %v5091 = vrot.slane %v5090, 4
    %v5092 = vadd.f32 %v5090, %v5091
    %v5093 = vrot.slane %v5092, 2
    %v5094 = vadd.f32 %v5092, %v5093
    %v5095 = vrot.slane %v5094, 1
    %v5096 = vadd.f32 %v5094, %v5095
    %v5097 = vmul.f32 %v4991, %v4991
    %v5098 = vmul.f32 %v4994, %v4994
    %v5099 = vmul.f32 %v4999, %v4999
    %v5100 = vmul.f32 %v5002, %v5002
    %v5101 = vmul.f32 %v5007, %v5007
    %v5102 = vmul.f32 %v5010, %v5010
    %v5103 = vmul.f32 %v5015, %v5015
    %v5104 = vmul.f32 %v5018, %v5018
    %v5105 = vmul.f32 %v5023, %v5023
    %v5106 = vmul.f32 %v5026, %v5026
    %v5107 = vmul.f32 %v5031, %v5031
    %v5108 = vmul.f32 %v5034, %v5034
    %v5109 = vmul.f32 %v5039, %v5039
    %v5110 = vmul.f32 %v5042, %v5042
    %v5111 = vmul.f32 %v5047, %v5047
    %v5112 = vmul.f32 %v5050, %v5050
    %v5113 = vsel %vm82, %v5097, 0.0
    %v5114 = vsel %vm82, %v5098, 0.0
    %v5115 = vadd.f32 %v5113, %v5114
    %v5116 = vsel %vm82, %v5099, 0.0
    %v5117 = vadd.f32 %v5115, %v5116
    %v5118 = vsel %vm82, %v5100, 0.0
    %v5119 = vadd.f32 %v5117, %v5118
    %v5120 = vsel %vm82, %v5101, 0.0
    %v5121 = vadd.f32 %v5119, %v5120
    %v5122 = vsel %vm82, %v5102, 0.0
    %v5123 = vadd.f32 %v5121, %v5122
    %v5124 = vsel %vm82, %v5103, 0.0
    %v5125 = vadd.f32 %v5123, %v5124
    %v5126 = vsel %vm82, %v5104, 0.0
    %v5127 = vadd.f32 %v5125, %v5126
    %v5128 = vrot.slane %v5127, 4
    %v5129 = vadd.f32 %v5127, %v5128
    %v5130 = vrot.slane %v5129, 2
    %v5131 = vadd.f32 %v5129, %v5130
    %v5132 = vrot.slane %v5131, 1
    %v5133 = vadd.f32 %v5131, %v5132
    %v5134 = vsel %vm82, %v5105, 0.0
    %v5135 = vsel %vm82, %v5106, 0.0
    %v5136 = vadd.f32 %v5134, %v5135
    %v5137 = vsel %vm82, %v5107, 0.0
    %v5138 = vadd.f32 %v5136, %v5137
    %v5139 = vsel %vm82, %v5108, 0.0
    %v5140 = vadd.f32 %v5138, %v5139
    %v5141 = vsel %vm82, %v5109, 0.0
    %v5142 = vadd.f32 %v5140, %v5141
    %v5143 = vsel %vm82, %v5110, 0.0
    %v5144 = vadd.f32 %v5142, %v5143
    %v5145 = vsel %vm82, %v5111, 0.0
    %v5146 = vadd.f32 %v5144, %v5145
    %v5147 = vsel %vm82, %v5112, 0.0
    %v5148 = vadd.f32 %v5146, %v5147
    %v5149 = vrot.slane %v5148, 4
    %v5150 = vadd.f32 %v5148, %v5149
    %v5151 = vrot.slane %v5150, 2
    %v5152 = vadd.f32 %v5150, %v5151
    %v5153 = vrot.slane %v5152, 1
    %v5154 = vadd.f32 %v5152, %v5153
    %v5155 = vmul.f32 %v5075, 0.015625
    %v5156 = vmul.f32 %v5096, 0.015625
    %v5157 = vmul.f32 %v5133, 0.015625
    %v5158 = vmul.f32 %v5154, 0.015625
    %v5159 = vmul.f32 %v5155, %v5155
    %v5160 = vmul.f32 %v5156, %v5156
    %v5161 = vsub.f32 %v5157, %v5159
    %v5162 = vsub.f32 %v5158, %v5160
    %v5163 = vadd.f32 %v5161, 1e-05
    %v5164 = vadd.f32 %v5162, 1e-05
    %v5165 = vrsqrt.pop %v5163
    %v5166 = vrsqrt.pop %v5164
    %v5167 = vmul.f32 %v5053, %v5165
    %v5168 = vmul.f32 %v5053, %v5166
    %v5169 = vmul.f32 %v5155, %v5167
    %v5170 = vmul.f32 %v5156, %v5168
    %v5171 = vsub.f32 %v5054, %v5169
    %v5172 = vsub.f32 %v5054, %v5170
    %v5173 = vlaneseq
    %v5174 = vshrl.u32 %v5173, 7
    %v5175 = vsub.s32 0, %v5174
    %v5176 = vrot.slane %v5167, %v5175
    %v5177 = vlaneseq
    %v5178 = vshrl.u32 %v5177, 7
    %v5179 = vsub.s32 0, %v5178
    %v5180 = vrot.slane %v5168, %v5179
    %v5181 = vmul.f32 %v4991, %v5176
    %v5182 = vmul.f32 %v4994, %v5176
    %v5183 = vmul.f32 %v4999, %v5176
    %v5184 = vmul.f32 %v5002, %v5176
    %v5185 = vmul.f32 %v5007, %v5176
    %v5186 = vmul.f32 %v5010, %v5176
    %v5187 = vmul.f32 %v5015, %v5176
    %v5188 = vmul.f32 %v5018, %v5176
    %v5189 = vmul.f32 %v5023, %v5180
    %v5190 = vmul.f32 %v5026, %v5180
    %v5191 = vmul.f32 %v5031, %v5180
    %v5192 = vmul.f32 %v5034, %v5180
    %v5193 = vmul.f32 %v5039, %v5180
    %v5194 = vmul.f32 %v5042, %v5180
    %v5195 = vmul.f32 %v5047, %v5180
    %v5196 = vmul.f32 %v5050, %v5180
    %v5197 = vlaneseq
    %v5198 = vshrl.u32 %v5197, 7
    %v5199 = vsub.s32 0, %v5198
    %v5200 = vrot.slane %v5171, %v5199
    %v5201 = vlaneseq
    %v5202 = vshrl.u32 %v5201, 7
    %v5203 = vsub.s32 0, %v5202
    %v5204 = vrot.slane %v5172, %v5203
    %v5205 = vadd.f32 %v5181, %v5200
    %v5206 = vadd.f32 %v5182, %v5200
    %v5207 = vadd.f32 %v5183, %v5200
    %v5208 = vadd.f32 %v5184, %v5200
    %v5209 = vadd.f32 %v5185, %v5200
    %v5210 = vadd.f32 %v5186, %v5200
    %v5211 = vadd.f32 %v5187, %v5200
    %v5212 = vadd.f32 %v5188, %v5200
    %v5213 = vadd.f32 %v5189, %v5204
    %v5214 = vadd.f32 %v5190, %v5204
    %v5215 = vadd.f32 %v5191, %v5204
    %v5216 = vadd.f32 %v5192, %v5204
    %v5217 = vadd.f32 %v5193, %v5204
    %v5218 = vadd.f32 %v5194, %v5204
    %v5219 = vadd.f32 %v5195, %v5204
    %v5220 = vadd.f32 %v5196, %v5204
    %v5221 = vmax.f32 %v5205, 0.0
    %v5222 = vmax.f32 %v5206, 0.0
    %v5223 = vmax.f32 %v5207, 0.0
    %v5224 = vmax.f32 %v5208, 0.0
    %v5225 = vmax.f32 %v5209, 0.0
    %v5226 = vmax.f32 %v5210, 0.0
    %v5227 = vmax.f32 %v5211, 0.0
    %v5228 = vmax.f32 %v5212, 0.0
    %v5229 = vmax.f32 %v5213, 0.0
    %v5230 = vmax.f32 %v5214, 0.0
    %v5231 = vmax.f32 %v5215, 0.0
    %v5232 = vmax.f32 %v5216, 0.0
    %v5233 = vmax.f32 %v5217, 0.0
    %v5234 = vmax.f32 %v5218, 0.0
    %v5235 = vmax.f32 %v5219, 0.0
    %v5236 = vmax.f32 %v5220, 0.0
    %5237 = vst.msk [vmem:[%s1602 + $0x1] sm:$0xff] %vm82, %v5221
    %5238 = vst.msk [vmem:[%s1602 + $0x11] sm:$0xff] %vm82, %v5222
    %5239 = vst.msk [vmem:[%s1602 + $0x21] sm:$0xff] %vm82, %v5223
    %5240 = vst.msk [vmem:[%s1602 + $0x31] sm:$0xff] %vm82, %v5224
    %5241 = vst.msk [vmem:[%s1602 + $0x41] sm:$0xff] %vm82, %v5225
    %5242 = vst.msk [vmem:[%s1602 + $0x51] sm:$0xff] %vm82, %v5226
    %5243 = vst.msk [vmem:[%s1602 + $0x61] sm:$0xff] %vm82, %v5227
    %5244 = vst.msk [vmem:[%s1602 + $0x71] sm:$0xff] %vm82, %v5228
    %5245 = vst.msk [vmem:[%s1602 + $0xa1] sm:$0xff] %vm82, %v5229
    %5246 = vst.msk [vmem:[%s1602 + $0xb1] sm:$0xff] %vm82, %v5230
    %5247 = vst.msk [vmem:[%s1602 + $0xc1] sm:$0xff] %vm82, %v5231
    %5248 = vst.msk [vmem:[%s1602 + $0xd1] sm:$0xff] %vm82, %v5232
    %5249 = vst.msk [vmem:[%s1602 + $0xe1] sm:$0xff] %vm82, %v5233
    %5250 = vst.msk [vmem:[%s1602 + $0xf1] sm:$0xff] %vm82, %v5234
    %5251 = vst.msk [vmem:[%s1602 + $0x101] sm:$0xff] %vm82, %v5235
    %5252 = vst.msk [vmem:[%s1602 + $0x111] sm:$0xff] %vm82, %v5236
    %s5253 = scalar_lea.vmem %s3, 432
    %v5254 = vld [vmem:[%s5253] sm:$0xf]
    %v5255 = vld [vmem:[%s5253 + $0x4] sm:$0xf]
    %v5256 = vld [vmem:[%s5253 + $0x8] sm:$0xf]
    %v5257 = vld [vmem:[%s5253 + $0xc] sm:$0xf]
    %v5258 = vld [vmem:[%s5253 + $0x10] sm:$0xf]
    %v5259 = vld [vmem:[%s5253 + $0x14] sm:$0xf]
    %v5260 = vld [vmem:[%s5253 + $0x18] sm:$0xf]
    %v5261 = vld [vmem:[%s5253 + $0x1c] sm:$0xf]
    %v5262 = vld [vmem:[%s5253 + $0x20] sm:$0xf]
    %v5263 = vld [vmem:[%s5253 + $0x24] sm:$0xf]
    %v5264 = vld [vmem:[%s5253 + $0x28] sm:$0xf]
    %v5265 = vld [vmem:[%s5253 + $0x2c] sm:$0xf]
    %v5266 = vld [vmem:[%s5253 + $0x30] sm:$0xf]
    %v5267 = vld [vmem:[%s5253 + $0x34] sm:$0xf]
    %v5268 = vld [vmem:[%s5253 + $0x38] sm:$0xf]
    %v5269 = vld [vmem:[%s5253 + $0x3c] sm:$0xf]
    %v5270 = vld [vmem:[%s5253 + $0x40] sm:$0xf]
    %v5271 = vld [vmem:[%s5253 + $0x44] sm:$0xf]
    %v5272 = vld [vmem:[%s5253 + $0x48] sm:$0xf]
    %v5273 = vld [vmem:[%s5253 + $0x4c] sm:$0xf]
    %v5274 = vld [vmem:[%s5253 + $0x50] sm:$0xf]
    %v5275 = vld [vmem:[%s5253 + $0x54] sm:$0xf]
    %v5276 = vld [vmem:[%s5253 + $0x58] sm:$0xf]
    %v5277 = vld [vmem:[%s5253 + $0x5c] sm:$0xf]
    %v5278 = vld [vmem:[%s5253 + $0x60] sm:$0xf]
    %v5279 = vld [vmem:[%s5253 + $0x64] sm:$0xf]
    %v5280 = vld [vmem:[%s5253 + $0x68] sm:$0xf]
    %v5281 = vld [vmem:[%s5253 + $0x6c] sm:$0xf]
    %v5282 = vld [vmem:[%s5253 + $0x70] sm:$0xf]
    %v5283 = vld [vmem:[%s5253 + $0x74] sm:$0xf]
    %v5284 = vld [vmem:[%s5253 + $0x78] sm:$0xf]
    %v5285 = vld [vmem:[%s5253 + $0x7c] sm:$0xf]
    %v5286 = vld [vmem:[%s5253 + $0x80] sm:$0xf]
    %v5287 = vld [vmem:[%s5253 + $0x84] sm:$0xf]
    %v5288 = vld [vmem:[%s5253 + $0x88] sm:$0xf]
    %v5289 = vld [vmem:[%s5253 + $0x8c] sm:$0xf]
    %v5290 = vld [vmem:[#allocation3] sm:$0xff]
    %v5291 = vld [vmem:[#allocation3 + $0x10] sm:$0xff]
    %v5292 = vld [vmem:[#allocation3 + $0x20] sm:$0xff]
    %v5293 = vld [vmem:[#allocation3 + $0x30] sm:$0xff]
    %v5294 = vld [vmem:[#allocation3 + $0x40] sm:$0xff]
    %v5295 = vld [vmem:[#allocation3 + $0x50] sm:$0xff]
    %v5296 = vld [vmem:[#allocation3 + $0x60] sm:$0xff]
    %v5297 = vld [vmem:[#allocation3 + $0x70] sm:$0xff]
    %v5298 = vld [vmem:[#allocation3 + $0xa0] sm:$0xff]
    %v5299 = vld [vmem:[#allocation3 + $0xb0] sm:$0xff]
    %v5300 = vld [vmem:[#allocation3 + $0xc0] sm:$0xff]
    %v5301 = vld [vmem:[#allocation3 + $0xd0] sm:$0xff]
    %v5302 = vld [vmem:[#allocation3 + $0xe0] sm:$0xff]
    %v5303 = vld [vmem:[#allocation3 + $0xf0] sm:$0xff]
    %v5304 = vld [vmem:[#allocation3 + $0x100] sm:$0xff]
    %v5305 = vld [vmem:[#allocation3 + $0x110] sm:$0xff]
    %v5306 = vld [vmem:[#allocation3 + $0x1] sm:$0xff]
    %v5307 = vld [vmem:[#allocation3 + $0x11] sm:$0xff]
    %v5308 = vld [vmem:[#allocation3 + $0x21] sm:$0xff]
    %v5309 = vld [vmem:[#allocation3 + $0x31] sm:$0xff]
    %v5310 = vld [vmem:[#allocation3 + $0x41] sm:$0xff]
    %v5311 = vld [vmem:[#allocation3 + $0x51] sm:$0xff]
    %v5312 = vld [vmem:[#allocation3 + $0x61] sm:$0xff]
    %v5313 = vld [vmem:[#allocation3 + $0x71] sm:$0xff]
    %v5314 = vld [vmem:[#allocation3 + $0xa1] sm:$0xff]
    %v5315 = vld [vmem:[#allocation3 + $0xb1] sm:$0xff]
    %v5316 = vld [vmem:[#allocation3 + $0xc1] sm:$0xff]
    %v5317 = vld [vmem:[#allocation3 + $0xd1] sm:$0xff]
    %v5318 = vld [vmem:[#allocation3 + $0xe1] sm:$0xff]
    %v5319 = vld [vmem:[#allocation3 + $0xf1] sm:$0xff]
    %v5320 = vld [vmem:[#allocation3 + $0x101] sm:$0xff]
    %v5321 = vld [vmem:[#allocation3 + $0x111] sm:$0xff]
    %v5322 = vld [vmem:[#allocation3 + $0x2] sm:$0xff]
    %v5323 = vld [vmem:[#allocation3 + $0x12] sm:$0xff]
    %v5324 = vld [vmem:[#allocation3 + $0x22] sm:$0xff]
    %v5325 = vld [vmem:[#allocation3 + $0x32] sm:$0xff]
    %v5326 = vld [vmem:[#allocation3 + $0x42] sm:$0xff]
    %v5327 = vld [vmem:[#allocation3 + $0x52] sm:$0xff]
    %v5328 = vld [vmem:[#allocation3 + $0x62] sm:$0xff]
    %v5329 = vld [vmem:[#allocation3 + $0x72] sm:$0xff]
    %v5330 = vld [vmem:[#allocation3 + $0xa2] sm:$0xff]
    %v5331 = vld [vmem:[#allocation3 + $0xb2] sm:$0xff]
    %v5332 = vld [vmem:[#allocation3 + $0xc2] sm:$0xff]
    %v5333 = vld [vmem:[#allocation3 + $0xd2] sm:$0xff]
    %v5334 = vld [vmem:[#allocation3 + $0xe2] sm:$0xff]
    %v5335 = vld [vmem:[#allocation3 + $0xf2] sm:$0xff]
    %v5336 = vld [vmem:[#allocation3 + $0x102] sm:$0xff]
    %v5337 = vld [vmem:[#allocation3 + $0x112] sm:$0xff]
    %v5338 = vld [vmem:[%s1602] sm:$0xff]
    %v5339 = vld [vmem:[%s1602 + $0x10] sm:$0xff]
    %v5340 = vld [vmem:[%s1602 + $0x20] sm:$0xff]
    %v5341 = vld [vmem:[%s1602 + $0x30] sm:$0xff]
    %v5342 = vld [vmem:[%s1602 + $0x40] sm:$0xff]
    %v5343 = vld [vmem:[%s1602 + $0x50] sm:$0xff]
    %v5344 = vld [vmem:[%s1602 + $0x60] sm:$0xff]
    %v5345 = vld [vmem:[%s1602 + $0x70] sm:$0xff]
    %v5346 = vld [vmem:[%s1602 + $0xa0] sm:$0xff]
    %v5347 = vld [vmem:[%s1602 + $0xb0] sm:$0xff]
    %v5348 = vld [vmem:[%s1602 + $0xc0] sm:$0xff]
    %v5349 = vld [vmem:[%s1602 + $0xd0] sm:$0xff]
    %v5350 = vld [vmem:[%s1602 + $0xe0] sm:$0xff]
    %v5351 = vld [vmem:[%s1602 + $0xf0] sm:$0xff]
    %v5352 = vld [vmem:[%s1602 + $0x100] sm:$0xff]
    %v5353 = vld [vmem:[%s1602 + $0x110] sm:$0xff]
    %v5354 = vld [vmem:[%s1602 + $0x1] sm:$0xff]
    %v5355 = vld [vmem:[%s1602 + $0x11] sm:$0xff]
    %v5356 = vld [vmem:[%s1602 + $0x21] sm:$0xff]
    %v5357 = vld [vmem:[%s1602 + $0x31] sm:$0xff]
    %v5358 = vld [vmem:[%s1602 + $0x41] sm:$0xff]
    %v5359 = vld [vmem:[%s1602 + $0x51] sm:$0xff]
    %v5360 = vld [vmem:[%s1602 + $0x61] sm:$0xff]
    %v5361 = vld [vmem:[%s1602 + $0x71] sm:$0xff]
    %v5362 = vld [vmem:[%s1602 + $0xa1] sm:$0xff]
    %v5363 = vld [vmem:[%s1602 + $0xb1] sm:$0xff]
    %v5364 = vld [vmem:[%s1602 + $0xc1] sm:$0xff]
    %v5365 = vld [vmem:[%s1602 + $0xd1] sm:$0xff]
    %v5366 = vld [vmem:[%s1602 + $0xe1] sm:$0xff]
    %v5367 = vld [vmem:[%s1602 + $0xf1] sm:$0xff]
    %v5368 = vld [vmem:[%s1602 + $0x101] sm:$0xff]
    %v5369 = vld [vmem:[%s1602 + $0x111] sm:$0xff]
    %v5370 = vld [vmem:[%s1602 + $0x2] sm:$0xff]
    %v5371 = vld [vmem:[%s1602 + $0x12] sm:$0xff]
    %v5372 = vld [vmem:[%s1602 + $0x22] sm:$0xff]
    %v5373 = vld [vmem:[%s1602 + $0x32] sm:$0xff]
    %v5374 = vld [vmem:[%s1602 + $0x42] sm:$0xff]
    %v5375 = vld [vmem:[%s1602 + $0x52] sm:$0xff]
    %v5376 = vld [vmem:[%s1602 + $0x62] sm:$0xff]
    %v5377 = vld [vmem:[%s1602 + $0x72] sm:$0xff]
    %v5378 = vld [vmem:[%s1602 + $0xa2] sm:$0xff]
    %v5379 = vld [vmem:[%s1602 + $0xb2] sm:$0xff]
    %v5380 = vld [vmem:[%s1602 + $0xc2] sm:$0xff]
    %v5381 = vld [vmem:[%s1602 + $0xd2] sm:$0xff]
    %v5382 = vld [vmem:[%s1602 + $0xe2] sm:$0xff]
    %v5383 = vld [vmem:[%s1602 + $0xf2] sm:$0xff]
    %v5384 = vld [vmem:[%s1602 + $0x102] sm:$0xff]
    %v5385 = vld [vmem:[%s1602 + $0x112] sm:$0xff]
    %v5386 = vld [vmem:[%s1751] sm:$0xff]
    %v5387 = vld [vmem:[%s1751 + $0x10] sm:$0xff]
    %v5388 = vld [vmem:[%s1751 + $0x20] sm:$0xff]
    %v5389 = vld [vmem:[%s1751 + $0x30] sm:$0xff]
    %v5390 = vld [vmem:[%s1751 + $0x40] sm:$0xff]
    %v5391 = vld [vmem:[%s1751 + $0x50] sm:$0xff]
    %v5392 = vld [vmem:[%s1751 + $0x60] sm:$0xff]
    %v5393 = vld [vmem:[%s1751 + $0x70] sm:$0xff]
    %v5394 = vld [vmem:[%s1751 + $0xa0] sm:$0xff]
    %v5395 = vld [vmem:[%s1751 + $0xb0] sm:$0xff]
    %v5396 = vld [vmem:[%s1751 + $0xc0] sm:$0xff]
    %v5397 = vld [vmem:[%s1751 + $0xd0] sm:$0xff]
    %v5398 = vld [vmem:[%s1751 + $0xe0] sm:$0xff]
    %v5399 = vld [vmem:[%s1751 + $0xf0] sm:$0xff]
    %v5400 = vld [vmem:[%s1751 + $0x100] sm:$0xff]
    %v5401 = vld [vmem:[%s1751 + $0x110] sm:$0xff]
    %v5402 = vld [vmem:[%s1751 + $0x1] sm:$0xff]
    %v5403 = vld [vmem:[%s1751 + $0x11] sm:$0xff]
    %v5404 = vld [vmem:[%s1751 + $0x21] sm:$0xff]
    %v5405 = vld [vmem:[%s1751 + $0x31] sm:$0xff]
    %v5406 = vld [vmem:[%s1751 + $0x41] sm:$0xff]
    %v5407 = vld [vmem:[%s1751 + $0x51] sm:$0xff]
    %v5408 = vld [vmem:[%s1751 + $0x61] sm:$0xff]
    %v5409 = vld [vmem:[%s1751 + $0x71] sm:$0xff]
    %v5410 = vld [vmem:[%s1751 + $0xa1] sm:$0xff]
    %v5411 = vld [vmem:[%s1751 + $0xb1] sm:$0xff]
    %v5412 = vld [vmem:[%s1751 + $0xc1] sm:$0xff]
    %v5413 = vld [vmem:[%s1751 + $0xd1] sm:$0xff]
    %v5414 = vld [vmem:[%s1751 + $0xe1] sm:$0xff]
    %v5415 = vld [vmem:[%s1751 + $0xf1] sm:$0xff]
    %v5416 = vld [vmem:[%s1751 + $0x101] sm:$0xff]
    %v5417 = vld [vmem:[%s1751 + $0x111] sm:$0xff]
    %v5418 = vld [vmem:[%s1751 + $0x2] sm:$0xff]
    %v5419 = vld [vmem:[%s1751 + $0x12] sm:$0xff]
    %v5420 = vld [vmem:[%s1751 + $0x22] sm:$0xff]
    %v5421 = vld [vmem:[%s1751 + $0x32] sm:$0xff]
    %v5422 = vld [vmem:[%s1751 + $0x42] sm:$0xff]
    %v5423 = vld [vmem:[%s1751 + $0x52] sm:$0xff]
    %v5424 = vld [vmem:[%s1751 + $0x62] sm:$0xff]
    %v5425 = vld [vmem:[%s1751 + $0x72] sm:$0xff]
    %v5426 = vld [vmem:[%s1751 + $0xa2] sm:$0xff]
    %v5427 = vld [vmem:[%s1751 + $0xb2] sm:$0xff]
    %v5428 = vld [vmem:[%s1751 + $0xc2] sm:$0xff]
    %v5429 = vld [vmem:[%s1751 + $0xd2] sm:$0xff]
    %v5430 = vld [vmem:[%s1751 + $0xe2] sm:$0xff]
    %v5431 = vld [vmem:[%s1751 + $0xf2] sm:$0xff]
    %v5432 = vld [vmem:[%s1751 + $0x102] sm:$0xff]
    %v5433 = vld [vmem:[%s1751 + $0x112] sm:$0xff]
    %5450 = vrot.lane.b32.xlu0 %v5306, 32
    %v5451 = vpop.permute.xlu0 %5450
    %5452 = vrot.lane.b32.xlu0 %v5307, 32
    %v5453 = vpop.permute.xlu0 %5452
    %5454 = vrot.lane.b32.xlu0 %v5308, 32
    %v5455 = vpop.permute.xlu0 %5454
    %5456 = vrot.lane.b32.xlu0 %v5309, 32
    %v5457 = vpop.permute.xlu0 %5456
    %5458 = vrot.lane.b32.xlu0 %v5310, 32
    %v5459 = vpop.permute.xlu0 %5458
    %5460 = vrot.lane.b32.xlu0 %v5311, 32
    %v5461 = vpop.permute.xlu0 %5460
    %5462 = vrot.lane.b32.xlu0 %v5312, 32
    %v5463 = vpop.permute.xlu0 %5462
    %5464 = vrot.lane.b32.xlu0 %v5313, 32
    %v5465 = vpop.permute.xlu0 %5464
    %5466 = vrot.lane.b32.xlu0 %v5314, 32
    %v5467 = vpop.permute.xlu0 %5466
    %5468 = vrot.lane.b32.xlu0 %v5315, 32
    %v5469 = vpop.permute.xlu0 %5468
    %5470 = vrot.lane.b32.xlu0 %v5316, 32
    %v5471 = vpop.permute.xlu0 %5470
    %5472 = vrot.lane.b32.xlu0 %v5317, 32
    %v5473 = vpop.permute.xlu0 %5472
    %5474 = vrot.lane.b32.xlu0 %v5318, 32
    %v5475 = vpop.permute.xlu0 %5474
    %5476 = vrot.lane.b32.xlu0 %v5319, 32
    %v5477 = vpop.permute.xlu0 %5476
    %5478 = vrot.lane.b32.xlu0 %v5320, 32
    %v5479 = vpop.permute.xlu0 %5478
    %5480 = vrot.lane.b32.xlu0 %v5321, 32
    %v5481 = vpop.permute.xlu0 %5480
    %5514 = vrot.lane.b32.xlu0 %v5322, 64
    %v5515 = vpop.permute.xlu0 %5514
    %5516 = vrot.lane.b32.xlu0 %v5323, 64
    %v5517 = vpop.permute.xlu0 %5516
    %5518 = vrot.lane.b32.xlu0 %v5324, 64
    %v5519 = vpop.permute.xlu0 %5518
    %5520 = vrot.lane.b32.xlu0 %v5325, 64
    %v5521 = vpop.permute.xlu0 %5520
    %5522 = vrot.lane.b32.xlu0 %v5326, 64
    %v5523 = vpop.permute.xlu0 %5522
    %5524 = vrot.lane.b32.xlu0 %v5327, 64
    %v5525 = vpop.permute.xlu0 %5524
    %5526 = vrot.lane.b32.xlu0 %v5328, 64
    %v5527 = vpop.permute.xlu0 %5526
    %5528 = vrot.lane.b32.xlu0 %v5329, 64
    %v5529 = vpop.permute.xlu0 %5528
    %5530 = vrot.lane.b32.xlu0 %v5330, 64
    %v5531 = vpop.permute.xlu0 %5530
    %5532 = vrot.lane.b32.xlu0 %v5331, 64
    %v5533 = vpop.permute.xlu0 %5532
    %5534 = vrot.lane.b32.xlu0 %v5332, 64
    %v5535 = vpop.permute.xlu0 %5534
    %5536 = vrot.lane.b32.xlu0 %v5333, 64
    %v5537 = vpop.permute.xlu0 %5536
    %5538 = vrot.lane.b32.xlu0 %v5334, 64
    %v5539 = vpop.permute.xlu0 %5538
    %5540 = vrot.lane.b32.xlu0 %v5335, 64
    %v5541 = vpop.permute.xlu0 %5540
    %5542 = vrot.lane.b32.xlu0 %v5336, 64
    %v5543 = vpop.permute.xlu0 %5542
    %5544 = vrot.lane.b32.xlu0 %v5337, 64
    %v5545 = vpop.permute.xlu0 %5544
    %5578 = vrot.lane.b32.xlu0 %v5338, 96
    %v5579 = vpop.permute.xlu0 %5578
    %5580 = vrot.lane.b32.xlu0 %v5339, 96
    %v5581 = vpop.permute.xlu0 %5580
    %5582 = vrot.lane.b32.xlu0 %v5340, 96
    %v5583 = vpop.permute.xlu0 %5582
    %5584 = vrot.lane.b32.xlu0 %v5341, 96
    %v5585 = vpop.permute.xlu0 %5584
    %5586 = vrot.lane.b32.xlu0 %v5342, 96
    %v5587 = vpop.permute.xlu0 %5586
    %5588 = vrot.lane.b32.xlu0 %v5343, 96
    %v5589 = vpop.permute.xlu0 %5588
    %5590 = vrot.lane.b32.xlu0 %v5344, 96
    %v5591 = vpop.permute.xlu0 %5590
    %5592 = vrot.lane.b32.xlu0 %v5345, 96
    %v5593 = vpop.permute.xlu0 %5592
    %5594 = vrot.lane.b32.xlu0 %v5346, 96
    %v5595 = vpop.permute.xlu0 %5594
    %5596 = vrot.lane.b32.xlu0 %v5347, 96
    %v5597 = vpop.permute.xlu0 %5596
    %5598 = vrot.lane.b32.xlu0 %v5348, 96
    %v5599 = vpop.permute.xlu0 %5598
    %5600 = vrot.lane.b32.xlu0 %v5349, 96
    %v5601 = vpop.permute.xlu0 %5600
    %5602 = vrot.lane.b32.xlu0 %v5350, 96
    %v5603 = vpop.permute.xlu0 %5602
    %5604 = vrot.lane.b32.xlu0 %v5351, 96
    %v5605 = vpop.permute.xlu0 %5604
    %5606 = vrot.lane.b32.xlu0 %v5352, 96
    %v5607 = vpop.permute.xlu0 %5606
    %5608 = vrot.lane.b32.xlu0 %v5353, 96
    %v5609 = vpop.permute.xlu0 %5608
    %5642 = vrot.lane.b32.xlu0 %v5370, 32
    %v5643 = vpop.permute.xlu0 %5642
    %5644 = vrot.lane.b32.xlu0 %v5371, 32
    %v5645 = vpop.permute.xlu0 %5644
    %5646 = vrot.lane.b32.xlu0 %v5372, 32
    %v5647 = vpop.permute.xlu0 %5646
    %5648 = vrot.lane.b32.xlu0 %v5373, 32
    %v5649 = vpop.permute.xlu0 %5648
    %5650 = vrot.lane.b32.xlu0 %v5374, 32
    %v5651 = vpop.permute.xlu0 %5650
    %5652 = vrot.lane.b32.xlu0 %v5375, 32
    %v5653 = vpop.permute.xlu0 %5652
    %5654 = vrot.lane.b32.xlu0 %v5376, 32
    %v5655 = vpop.permute.xlu0 %5654
    %5656 = vrot.lane.b32.xlu0 %v5377, 32
    %v5657 = vpop.permute.xlu0 %5656
    %5658 = vrot.lane.b32.xlu0 %v5378, 32
    %v5659 = vpop.permute.xlu0 %5658
    %5660 = vrot.lane.b32.xlu0 %v5379, 32
    %v5661 = vpop.permute.xlu0 %5660
    %5662 = vrot.lane.b32.xlu0 %v5380, 32
    %v5663 = vpop.permute.xlu0 %5662
    %5664 = vrot.lane.b32.xlu0 %v5381, 32
    %v5665 = vpop.permute.xlu0 %5664
    %5666 = vrot.lane.b32.xlu0 %v5382, 32
    %v5667 = vpop.permute.xlu0 %5666
    %5668 = vrot.lane.b32.xlu0 %v5383, 32
    %v5669 = vpop.permute.xlu0 %5668
    %5670 = vrot.lane.b32.xlu0 %v5384, 32
    %v5671 = vpop.permute.xlu0 %5670
    %5672 = vrot.lane.b32.xlu0 %v5385, 32
    %v5673 = vpop.permute.xlu0 %5672
    %5706 = vrot.lane.b32.xlu0 %v5386, 64
    %v5707 = vpop.permute.xlu0 %5706
    %5708 = vrot.lane.b32.xlu0 %v5387, 64
    %v5709 = vpop.permute.xlu0 %5708
    %5710 = vrot.lane.b32.xlu0 %v5388, 64
    %v5711 = vpop.permute.xlu0 %5710
    %5712 = vrot.lane.b32.xlu0 %v5389, 64
    %v5713 = vpop.permute.xlu0 %5712
    %5714 = vrot.lane.b32.xlu0 %v5390, 64
    %v5715 = vpop.permute.xlu0 %5714
    %5716 = vrot.lane.b32.xlu0 %v5391, 64
    %v5717 = vpop.permute.xlu0 %5716
    %5718 = vrot.lane.b32.xlu0 %v5392, 64
    %v5719 = vpop.permute.xlu0 %5718
    %5720 = vrot.lane.b32.xlu0 %v5393, 64
    %v5721 = vpop.permute.xlu0 %5720
    %5722 = vrot.lane.b32.xlu0 %v5394, 64
    %v5723 = vpop.permute.xlu0 %5722
    %5724 = vrot.lane.b32.xlu0 %v5395, 64
    %v5725 = vpop.permute.xlu0 %5724
    %5726 = vrot.lane.b32.xlu0 %v5396, 64
    %v5727 = vpop.permute.xlu0 %5726
    %5728 = vrot.lane.b32.xlu0 %v5397, 64
    %v5729 = vpop.permute.xlu0 %5728
    %5730 = vrot.lane.b32.xlu0 %v5398, 64
    %v5731 = vpop.permute.xlu0 %5730
    %5732 = vrot.lane.b32.xlu0 %v5399, 64
    %v5733 = vpop.permute.xlu0 %5732
    %5734 = vrot.lane.b32.xlu0 %v5400, 64
    %v5735 = vpop.permute.xlu0 %5734
    %5736 = vrot.lane.b32.xlu0 %v5401, 64
    %v5737 = vpop.permute.xlu0 %5736
    %5770 = vrot.lane.b32.xlu0 %v5402, 96
    %v5771 = vpop.permute.xlu0 %5770
    %5772 = vrot.lane.b32.xlu0 %v5403, 96
    %v5773 = vpop.permute.xlu0 %5772
    %5774 = vrot.lane.b32.xlu0 %v5404, 96
    %v5775 = vpop.permute.xlu0 %5774
    %5776 = vrot.lane.b32.xlu0 %v5405, 96
    %v5777 = vpop.permute.xlu0 %5776
    %5778 = vrot.lane.b32.xlu0 %v5406, 96
    %v5779 = vpop.permute.xlu0 %5778
    %5780 = vrot.lane.b32.xlu0 %v5407, 96
    %v5781 = vpop.permute.xlu0 %5780
    %5782 = vrot.lane.b32.xlu0 %v5408, 96
    %v5783 = vpop.permute.xlu0 %5782
    %5784 = vrot.lane.b32.xlu0 %v5409, 96
    %v5785 = vpop.permute.xlu0 %5784
    %5786 = vrot.lane.b32.xlu0 %v5410, 96
    %v5787 = vpop.permute.xlu0 %5786
    %5788 = vrot.lane.b32.xlu0 %v5411, 96
    %v5789 = vpop.permute.xlu0 %5788
    %5790 = vrot.lane.b32.xlu0 %v5412, 96
    %v5791 = vpop.permute.xlu0 %5790
    %5792 = vrot.lane.b32.xlu0 %v5413, 96
    %v5793 = vpop.permute.xlu0 %5792
    %5794 = vrot.lane.b32.xlu0 %v5414, 96
    %v5795 = vpop.permute.xlu0 %5794
    %5796 = vrot.lane.b32.xlu0 %v5415, 96
    %v5797 = vpop.permute.xlu0 %5796
    %5798 = vrot.lane.b32.xlu0 %v5416, 96
    %v5799 = vpop.permute.xlu0 %5798
    %5800 = vrot.lane.b32.xlu0 %v5417, 96
    %v5801 = vpop.permute.xlu0 %5800
    %v5818 = vsel %vm82, %v5290, %v5451
    %v5819 = vsel %vm82, %v5291, %v5453
    %v5820 = vsel %vm82, %v5292, %v5455
    %v5821 = vsel %vm82, %v5293, %v5457
    %v5822 = vsel %vm82, %v5294, %v5459
    %v5823 = vsel %vm82, %v5295, %v5461
    %v5824 = vsel %vm82, %v5296, %v5463
    %v5825 = vsel %vm82, %v5297, %v5465
    %v5826 = vsel %vm82, %v5298, %v5467
    %v5827 = vsel %vm82, %v5299, %v5469
    %v5828 = vsel %vm82, %v5300, %v5471
    %v5829 = vsel %vm82, %v5301, %v5473
    %v5830 = vsel %vm82, %v5302, %v5475
    %v5831 = vsel %vm82, %v5303, %v5477
    %v5832 = vsel %vm82, %v5304, %v5479
    %v5833 = vsel %vm82, %v5305, %v5481
    %v5834 = vsel %vm978, %v5818, %v5515
    %v5835 = vsel %vm978, %v5819, %v5517
    %v5836 = vsel %vm978, %v5820, %v5519
    %v5837 = vsel %vm978, %v5821, %v5521
    %v5838 = vsel %vm978, %v5822, %v5523
    %v5839 = vsel %vm978, %v5823, %v5525
    %v5840 = vsel %vm978, %v5824, %v5527
    %v5841 = vsel %vm978, %v5825, %v5529
    %v5842 = vsel %vm978, %v5826, %v5531
    %v5843 = vsel %vm978, %v5827, %v5533
    %v5844 = vsel %vm978, %v5828, %v5535
    %v5845 = vsel %vm978, %v5829, %v5537
    %v5846 = vsel %vm978, %v5830, %v5539
    %v5847 = vsel %vm978, %v5831, %v5541
    %v5848 = vsel %vm978, %v5832, %v5543
    %v5849 = vsel %vm978, %v5833, %v5545
    %v5850 = vsel %vm2216, %v5834, %v5579
    %v5851 = vsel %vm2216, %v5835, %v5581
    %v5852 = vsel %vm2216, %v5836, %v5583
    %v5853 = vsel %vm2216, %v5837, %v5585
    %v5854 = vsel %vm2216, %v5838, %v5587
    %v5855 = vsel %vm2216, %v5839, %v5589
    %v5856 = vsel %vm2216, %v5840, %v5591
    %v5857 = vsel %vm2216, %v5841, %v5593
    %v5858 = vsel %vm2216, %v5842, %v5595
    %v5859 = vsel %vm2216, %v5843, %v5597
    %v5860 = vsel %vm2216, %v5844, %v5599
    %v5861 = vsel %vm2216, %v5845, %v5601
    %v5862 = vsel %vm2216, %v5846, %v5603
    %v5863 = vsel %vm2216, %v5847, %v5605
    %v5864 = vsel %vm2216, %v5848, %v5607
    %v5865 = vsel %vm2216, %v5849, %v5609
    %v5866 = vsel %vm82, %v5354, %v5643
    %v5867 = vsel %vm82, %v5355, %v5645
    %v5868 = vsel %vm82, %v5356, %v5647
    %v5869 = vsel %vm82, %v5357, %v5649
    %v5870 = vsel %vm82, %v5358, %v5651
    %v5871 = vsel %vm82, %v5359, %v5653
    %v5872 = vsel %vm82, %v5360, %v5655
    %v5873 = vsel %vm82, %v5361, %v5657
    %v5874 = vsel %vm82, %v5362, %v5659
    %v5875 = vsel %vm82, %v5363, %v5661
    %v5876 = vsel %vm82, %v5364, %v5663
    %v5877 = vsel %vm82, %v5365, %v5665
    %v5878 = vsel %vm82, %v5366, %v5667
    %v5879 = vsel %vm82, %v5367, %v5669
    %v5880 = vsel %vm82, %v5368, %v5671
    %v5881 = vsel %vm82, %v5369, %v5673
    %v5882 = vsel %vm978, %v5866, %v5707
    %v5883 = vsel %vm978, %v5867, %v5709
    %v5884 = vsel %vm978, %v5868, %v5711
    %v5885 = vsel %vm978, %v5869, %v5713
    %v5886 = vsel %vm978, %v5870, %v5715
    %v5887 = vsel %vm978, %v5871, %v5717
    %v5888 = vsel %vm978, %v5872, %v5719
    %v5889 = vsel %vm978, %v5873, %v5721
    %v5890 = vsel %vm978, %v5874, %v5723
    %v5891 = vsel %vm978, %v5875, %v5725
    %v5892 = vsel %vm978, %v5876, %v5727
    %v5893 = vsel %vm978, %v5877, %v5729
    %v5894 = vsel %vm978, %v5878, %v5731
    %v5895 = vsel %vm978, %v5879, %v5733
    %v5896 = vsel %vm978, %v5880, %v5735
    %v5897 = vsel %vm978, %v5881, %v5737
    %v5898 = vsel %vm2216, %v5882, %v5771
    %v5899 = vsel %vm2216, %v5883, %v5773
    %v5900 = vsel %vm2216, %v5884, %v5775
    %v5901 = vsel %vm2216, %v5885, %v5777
    %v5902 = vsel %vm2216, %v5886, %v5779
    %v5903 = vsel %vm2216, %v5887, %v5781
    %v5904 = vsel %vm2216, %v5888, %v5783
    %v5905 = vsel %vm2216, %v5889, %v5785
    %v5906 = vsel %vm2216, %v5890, %v5787
    %v5907 = vsel %vm2216, %v5891, %v5789
    %v5908 = vsel %vm2216, %v5892, %v5791
    %v5909 = vsel %vm2216, %v5893, %v5793
    %v5910 = vsel %vm2216, %v5894, %v5795
    %v5911 = vsel %vm2216, %v5895, %v5797
    %v5912 = vsel %vm2216, %v5896, %v5799
    %v5913 = vsel %vm2216, %v5897, %v5801
    %v5914 = vpack.c.bf16 %v5851, %v5850
    %v5915 = vpack.c.bf16 %v5899, %v5898
    %v5916 = vpack.c.bf16 %v5419, %v5418
    %v5917 = vpack.c.bf16 %v5853, %v5852
    %v5918 = vpack.c.bf16 %v5901, %v5900
    %v5919 = vpack.c.bf16 %v5421, %v5420
    %v5920 = vpack.c.bf16 %v5855, %v5854
    %v5921 = vpack.c.bf16 %v5903, %v5902
    %v5922 = vpack.c.bf16 %v5423, %v5422
    %v5923 = vpack.c.bf16 %v5857, %v5856
    %v5924 = vpack.c.bf16 %v5905, %v5904
    %v5925 = vpack.c.bf16 %v5425, %v5424
    %v5926 = vpack.c.bf16 %v5859, %v5858
    %v5927 = vpack.c.bf16 %v5907, %v5906
    %v5928 = vpack.c.bf16 %v5427, %v5426
    %v5929 = vpack.c.bf16 %v5861, %v5860
    %v5930 = vpack.c.bf16 %v5909, %v5908
    %v5931 = vpack.c.bf16 %v5429, %v5428
    %v5932 = vpack.c.bf16 %v5863, %v5862
    %v5933 = vpack.c.bf16 %v5911, %v5910
    %v5934 = vpack.c.bf16 %v5431, %v5430
    %v5935 = vpack.c.bf16 %v5865, %v5864
    %v5936 = vpack.c.bf16 %v5913, %v5912
    %v5937 = vpack.c.bf16 %v5433, %v5432
    %v5974 = vunpack.c.l.b16 %v5254
    %v5975 = vunpack.c.l.b16 %v5255
    %v5976 = vunpack.c.l.b16 %v5256
    %v5977 = vunpack.c.l.b16 %v5257
    %v5978 = vunpack.c.l.b16 %v5258
    %v5979 = vunpack.c.l.b16 %v5259
    %v5980 = vunpack.c.l.b16 %v5260
    %v5981 = vunpack.c.l.b16 %v5261
    %v5982 = vunpack.c.l.b16 %v5262
    %v5983 = vunpack.c.l.b16 %v5263
    %v5984 = vunpack.c.l.b16 %v5264
    %v5985 = vunpack.c.l.b16 %v5265
    %v5986 = vunpack.c.l.b16 %v5266
    %v5987 = vunpack.c.l.b16 %v5267
    %v5988 = vunpack.c.l.b16 %v5268
    %v5989 = vunpack.c.l.b16 %v5269
    %v5990 = vunpack.c.l.b16 %v5270
    %v5991 = vunpack.c.l.b16 %v5271
    %v5992 = vunpack.c.l.b16 %v5272
    %v5993 = vunpack.c.l.b16 %v5273
    %v5994 = vunpack.c.l.b16 %v5274
    %v5995 = vunpack.c.l.b16 %v5275
    %v5996 = vunpack.c.l.b16 %v5276
    %v5997 = vunpack.c.l.b16 %v5277
    %v5998 = vunpack.c.l.b16 %v5278
    %v5999 = vunpack.c.l.b16 %v5279
    %v6000 = vunpack.c.l.b16 %v5280
    %v6001 = vunpack.c.l.b16 %v5281
    %v6002 = vunpack.c.l.b16 %v5282
    %v6003 = vunpack.c.l.b16 %v5283
    %v6004 = vunpack.c.l.b16 %v5284
    %v6005 = vunpack.c.l.b16 %v5285
    %v6006 = vunpack.c.l.b16 %v5286
    %v6007 = vunpack.c.l.b16 %v5287
    %v6008 = vunpack.c.l.b16 %v5288
    %v6009 = vunpack.c.l.b16 %v5289
    %v6010 = vpack.c.b16 %v5975, %v5974
    %v6011 = vpack.c.b16 %v5977, %v5976
    %v6012 = vpack.c.b16 %v5979, %v5978
    %v6013 = vpack.c.b16 %v5981, %v5980
    %v6014 = vpack.c.b16 %v5983, %v5982
    %v6015 = vpack.c.b16 %v5985, %v5984
    %v6016 = vpack.c.b16 %v5987, %v5986
    %v6017 = vpack.c.b16 %v5989, %v5988
    %v6018 = vpack.c.b16 %v5991, %v5990
    %v6019 = vpack.c.b16 %v5993, %v5992
    %v6020 = vpack.c.b16 %v5995, %v5994
    %v6021 = vpack.c.b16 %v5997, %v5996
    %v6022 = vpack.c.b16 %v5999, %v5998
    %v6023 = vpack.c.b16 %v6001, %v6000
    %v6024 = vpack.c.b16 %v6003, %v6002
    %v6025 = vpack.c.b16 %v6005, %v6004
    %v6026 = vpack.c.b16 %v6007, %v6006
    %v6027 = vpack.c.b16 %v6009, %v6008
    %v6047 = vsel %vm82, %v5916, 0
    %v6050 = vsel %vm82, %v5919, 0
    %v6053 = vsel %vm82, %v5922, 0
    %v6056 = vsel %vm82, %v5925, 0
    %v6059 = vsel %vm82, %v5928, 0
    %v6062 = vsel %vm82, %v5931, 0
    %v6065 = vsel %vm82, %v5934, 0
    %v6068 = vsel %vm82, %v5937, 0
    %6070 = vmatprep.subr.bf16.mxu0 0
    %6071 = vmatpush1.bf16.msra.mxu0 %v6010
    %6072 = vmatprep.subr.bf16.mxu0 0
    %6073 = vmatpush1.bf16.msra.mxu0 %v6011
    %6074 = vmatprep.subr.bf16.mxu0 0
    %6075 = vmatpush1.bf16.msra.mxu0 %v6012
    %6076 = vmatprep.subr.bf16.mxu0 0
    %6077 = vmatpush1.bf16.msra.mxu0 %v6013
    %6078 = vmatprep.subr.bf16.mxu0 0
    %6079 = vmatpush1.bf16.msra.mxu0 %v6014
    %6080 = vmatprep.subr.bf16.mxu0 0
    %6081 = vmatpush1.bf16.msra.mxu0 %v6015
    %6082 = vmatprep.subr.bf16.mxu0 0
    %6083 = vmatpush1.bf16.msra.mxu0 %v6016
    %6084 = vmatprep.subr.bf16.mxu0 0
    %6085 = vmatpush1.bf16.msra.mxu0 %v6017
    %6086 = vmatprep.subr.bf16.mxu0 0
    %6087 = vmatpush1.bf16.msra.mxu0 %v6018
    %6088 = vmatprep.subr.bf16.mxu0 0
    %6089 = vmatpush1.bf16.msra.mxu0 %v6019
    %6090 = vmatprep.subr.bf16.mxu0 0
    %6091 = vmatpush1.bf16.msra.mxu0 %v6020
    %6092 = vmatprep.subr.bf16.mxu0 0
    %6093 = vmatpush1.bf16.msra.mxu0 %v6021
    %6094 = vmatprep.subr.bf16.mxu0 0
    %6095 = vmatpush1.bf16.msra.mxu0 %v6022
    %6096 = vmatprep.subr.bf16.mxu0 0
    %6097 = vmatpush1.bf16.msra.mxu0 %v6023
    %6098 = vmatprep.subr.bf16.mxu0 0
    %6099 = vmatpush1.bf16.msra.mxu0 %v6024
    %6100 = vmatprep.subr.bf16.mxu0 0
    %6101 = vmatpush1.bf16.msra.mxu0 %v6025
    %6102 = vmatprep.mubr.bf16.mxu0 %v5915
    %6103 = vmatmul.mubr.bf16.gmra.mrb[0].mxu0 %v5914
    %v6104 = vpop.f32.mrb[0].mxu0
    %v6105 = vadd.f32 0.0, %v6104
    %v6106 = vpop.f32.mrb[0].mxu0
    %v6107 = vpop.f32.mrb[0].mxu0
    %v6108 = vadd.f32 0.0, %v6107
    %v6109 = vpop.f32.mrb[0].mxu0
    %6110 = vmatprep.mubr.bf16.mxu0 %v5918
    %6111 = vmatmul.mubr.bf16.gmra.mrb[0].mxu0 %v5917
    %v6112 = vpop.f32.mrb[0].mxu0
    %v6113 = vadd.f32 0.0, %v6112
    %v6114 = vpop.f32.mrb[0].mxu0
    %v6115 = vpop.f32.mrb[0].mxu0
    %v6116 = vadd.f32 0.0, %v6115
    %v6117 = vpop.f32.mrb[0].mxu0
    %6118 = vmatprep.mubr.bf16.mxu0 %v5921
    %6119 = vmatmul.mubr.bf16.gmra.mrb[0].mxu0 %v5920
    %v6120 = vpop.f32.mrb[0].mxu0
    %v6121 = vadd.f32 0.0, %v6120
    %v6122 = vpop.f32.mrb[0].mxu0
    %v6123 = vpop.f32.mrb[0].mxu0
    %v6124 = vadd.f32 0.0, %v6123
    %v6125 = vpop.f32.mrb[0].mxu0
    %6126 = vmatprep.mubr.bf16.mxu0 %v5924
    %6127 = vmatmul.mubr.bf16.gmra.mrb[0].mxu0 %v5923
    %v6128 = vpop.f32.mrb[0].mxu0
    %v6129 = vadd.f32 0.0, %v6128
    %v6130 = vpop.f32.mrb[0].mxu0
    %v6131 = vpop.f32.mrb[0].mxu0
    %v6132 = vadd.f32 0.0, %v6131
    %v6133 = vpop.f32.mrb[0].mxu0
    %6134 = vmatprep.mubr.bf16.mxu0 %v5927
    %6135 = vmatmul.mubr.bf16.gmra.mrb[0].mxu0 %v5926
    %v6136 = vpop.f32.mrb[0].mxu0
    %v6137 = vadd.f32 0.0, %v6136
    %v6138 = vpop.f32.mrb[0].mxu0
    %v6139 = vpop.f32.mrb[0].mxu0
    %v6140 = vadd.f32 0.0, %v6139
    %v6141 = vpop.f32.mrb[0].mxu0
    %6142 = vmatprep.mubr.bf16.mxu0 %v5930
    %6143 = vmatmul.mubr.bf16.gmra.mrb[0].mxu0 %v5929
    %v6144 = vpop.f32.mrb[0].mxu0
    %v6145 = vadd.f32 0.0, %v6144
    %v6146 = vpop.f32.mrb[0].mxu0
    %v6147 = vpop.f32.mrb[0].mxu0
    %v6148 = vadd.f32 0.0, %v6147
    %v6149 = vpop.f32.mrb[0].mxu0
    %6150 = vmatprep.mubr.bf16.mxu0 %v5933
    %6151 = vmatmul.mubr.bf16.gmra.mrb[0].mxu0 %v5932
    %v6152 = vpop.f32.mrb[0].mxu0
    %v6153 = vadd.f32 0.0, %v6152
    %v6154 = vpop.f32.mrb[0].mxu0
    %v6155 = vpop.f32.mrb[0].mxu0
    %v6156 = vadd.f32 0.0, %v6155
    %v6157 = vpop.f32.mrb[0].mxu0
    %6158 = vmatprep.mubr.bf16.mxu0 %v5936
    %6159 = vmatmul.mubr.bf16.gmra.mrb[0].mxu0 %v5935
    %v6160 = vpop.f32.mrb[0].mxu0
    %v6161 = vadd.f32 0.0, %v6160
    %v6162 = vpop.f32.mrb[0].mxu0
    %v6163 = vpop.f32.mrb[0].mxu0
    %v6164 = vadd.f32 0.0, %v6163
    %v6165 = vpop.f32.mrb[0].mxu0
    %6166 = vdwg.mxu0
    %6167 = vmatprep.subr.bf16.mxu0 0
    %6168 = vmatpush1.bf16.msra.mxu0 %v6026
    %6169 = vmatprep.subr.bf16.mxu0 0
    %6170 = vmatpush1.bf16.msra.mxu0 %v6027
    %6171 = vmatprep.subr.bf16.mxu0 0
    %6172 = vmatpush1.bf16.msra.mxu0 0
    %6173 = vmatprep.subr.bf16.mxu0 0
    %6174 = vmatpush1.bf16.msra.mxu0 0
    %6175 = vmatprep.subr.bf16.mxu0 0
    %6176 = vmatpush1.bf16.msra.mxu0 0
    %6177 = vmatprep.subr.bf16.mxu0 0
    %6178 = vmatpush1.bf16.msra.mxu0 0
    %6179 = vmatprep.subr.bf16.mxu0 0
    %6180 = vmatpush1.bf16.msra.mxu0 0
    %6181 = vmatprep.subr.bf16.mxu0 0
    %6182 = vmatpush1.bf16.msra.mxu0 0
    %6183 = vmatprep.subr.bf16.mxu0 0
    %6184 = vmatpush1.bf16.msra.mxu0 0
    %6185 = vmatprep.subr.bf16.mxu0 0
    %6186 = vmatpush1.bf16.msra.mxu0 0
    %6187 = vmatprep.subr.bf16.mxu0 0
    %6188 = vmatpush1.bf16.msra.mxu0 0
    %6189 = vmatprep.subr.bf16.mxu0 0
    %6190 = vmatpush1.bf16.msra.mxu0 0
    %6191 = vmatprep.subr.bf16.mxu0 0
    %6192 = vmatpush1.bf16.msra.mxu0 0
    %6193 = vmatprep.subr.bf16.mxu0 0
    %6194 = vmatpush1.bf16.msra.mxu0 0
    %6195 = vmatprep.subr.bf16.mxu0 0
    %6196 = vmatpush1.bf16.msra.mxu0 0
    %6197 = vmatprep.subr.bf16.mxu0 0
    %6198 = vmatpush1.bf16.msra.mxu0 0
    %6199 = vmatprep.mubr.bf16.mxu0 0
    %6200 = vmatmul.mubr.bf16.gmra.mrb[0].mxu0 %v6047
    %v6201 = vpop.f32.mrb[0].mxu0
    %v6202 = vadd.f32 %v6105, %v6201
    %v6203 = vpop.f32.mrb[0].mxu0
    %v6204 = vpop.f32.mrb[0].mxu0
    %v6205 = vadd.f32 %v6108, %v6204
    %v6206 = vpop.f32.mrb[0].mxu0
    %6207 = vmatprep.mubr.bf16.mxu0 0
    %6208 = vmatmul.mubr.bf16.gmra.mrb[0].mxu0 %v6050
    %v6209 = vpop.f32.mrb[0].mxu0
    %v6210 = vadd.f32 %v6113, %v6209
    %v6211 = vpop.f32.mrb[0].mxu0
    %v6212 = vpop.f32.mrb[0].mxu0
    %v6213 = vadd.f32 %v6116, %v6212
    %v6214 = vpop.f32.mrb[0].mxu0
    %6215 = vmatprep.mubr.bf16.mxu0 0
    %6216 = vmatmul.mubr.bf16.gmra.mrb[0].mxu0 %v6053
    %v6217 = vpop.f32.mrb[0].mxu0
    %v6218 = vadd.f32 %v6121, %v6217
    %v6219 = vpop.f32.mrb[0].mxu0
    %v6220 = vpop.f32.mrb[0].mxu0
    %v6221 = vadd.f32 %v6124, %v6220
    %v6222 = vpop.f32.mrb[0].mxu0
    %6223 = vmatprep.mubr.bf16.mxu0 0
    %6224 = vmatmul.mubr.bf16.gmra.mrb[0].mxu0 %v6056
    %v6225 = vpop.f32.mrb[0].mxu0
    %v6226 = vadd.f32 %v6129, %v6225
    %v6227 = vpop.f32.mrb[0].mxu0
    %v6228 = vpop.f32.mrb[0].mxu0
    %v6229 = vadd.f32 %v6132, %v6228
    %v6230 = vpop.f32.mrb[0].mxu0
    %6231 = vmatprep.mubr.bf16.mxu0 0
    %6232 = vmatmul.mubr.bf16.gmra.mrb[0].mxu0 %v6059
    %v6233 = vpop.f32.mrb[0].mxu0
    %v6234 = vadd.f32 %v6137, %v6233
    %v6235 = vpop.f32.mrb[0].mxu0
    %v6236 = vpop.f32.mrb[0].mxu0
    %v6237 = vadd.f32 %v6140, %v6236
    %v6238 = vpop.f32.mrb[0].mxu0
    %6239 = vmatprep.mubr.bf16.mxu0 0
    %6240 = vmatmul.mubr.bf16.gmra.mrb[0].mxu0 %v6062
    %v6241 = vpop.f32.mrb[0].mxu0
    %v6242 = vadd.f32 %v6145, %v6241
    %v6243 = vpop.f32.mrb[0].mxu0
    %v6244 = vpop.f32.mrb[0].mxu0
    %v6245 = vadd.f32 %v6148, %v6244
    %v6246 = vpop.f32.mrb[0].mxu0
    %6247 = vmatprep.mubr.bf16.mxu0 0
    %6248 = vmatmul.mubr.bf16.gmra.mrb[0].mxu0 %v6065
    %v6249 = vpop.f32.mrb[0].mxu0
    %v6250 = vadd.f32 %v6153, %v6249
    %v6251 = vpop.f32.mrb[0].mxu0
    %v6252 = vpop.f32.mrb[0].mxu0
    %v6253 = vadd.f32 %v6156, %v6252
    %v6254 = vpop.f32.mrb[0].mxu0
    %6255 = vmatprep.mubr.bf16.mxu0 0
    %6256 = vmatmul.mubr.bf16.gmra.mrb[0].mxu0 %v6068
    %v6257 = vpop.f32.mrb[0].mxu0
    %v6258 = vadd.f32 %v6161, %v6257
    %v6259 = vpop.f32.mrb[0].mxu0
    %v6260 = vpop.f32.mrb[0].mxu0
    %v6261 = vadd.f32 %v6164, %v6260
    %v6262 = vpop.f32.mrb[0].mxu0
    %6263 = vdwg.mxu0
    %v6264 = vld [vmem:[%s4 + $0x4] sm:$0x1]
    %v6265 = vld [vmem:[%s5 + $0x4] sm:$0x1]
    %v6266 = vsel %vm82, %v6202, 0.0
    %v6267 = vsel %vm82, %v6205, 0.0
    %v6268 = vadd.f32 %v6266, %v6267
    %v6269 = vsel %vm82, %v6210, 0.0
    %v6270 = vadd.f32 %v6268, %v6269
    %v6271 = vsel %vm82, %v6213, 0.0
    %v6272 = vadd.f32 %v6270, %v6271
    %v6273 = vsel %vm82, %v6218, 0.0
    %v6274 = vadd.f32 %v6272, %v6273
    %v6275 = vsel %vm82, %v6221, 0.0
    %v6276 = vadd.f32 %v6274, %v6275
    %v6277 = vsel %vm82, %v6226, 0.0
    %v6278 = vadd.f32 %v6276, %v6277
    %v6279 = vsel %vm82, %v6229, 0.0
    %v6280 = vadd.f32 %v6278, %v6279
    %v6281 = vrot.slane %v6280, 4
    %v6282 = vadd.f32 %v6280, %v6281
    %v6283 = vrot.slane %v6282, 2
    %v6284 = vadd.f32 %v6282, %v6283
    %v6285 = vrot.slane %v6284, 1
    %v6286 = vadd.f32 %v6284, %v6285
    %v6287 = vsel %vm82, %v6234, 0.0
    %v6288 = vsel %vm82, %v6237, 0.0
    %v6289 = vadd.f32 %v6287, %v6288
    %v6290 = vsel %vm82, %v6242, 0.0
    %v6291 = vadd.f32 %v6289, %v6290
    %v6292 = vsel %vm82, %v6245, 0.0
    %v6293 = vadd.f32 %v6291, %v6292
    %v6294 = vsel %vm82, %v6250, 0.0
    %v6295 = vadd.f32 %v6293, %v6294
    %v6296 = vsel %vm82, %v6253, 0.0
    %v6297 = vadd.f32 %v6295, %v6296
    %v6298 = vsel %vm82, %v6258, 0.0
    %v6299 = vadd.f32 %v6297, %v6298
    %v6300 = vsel %vm82, %v6261, 0.0
    %v6301 = vadd.f32 %v6299, %v6300
    %v6302 = vrot.slane %v6301, 4
    %v6303 = vadd.f32 %v6301, %v6302
    %v6304 = vrot.slane %v6303, 2
    %v6305 = vadd.f32 %v6303, %v6304
    %v6306 = vrot.slane %v6305, 1
    %v6307 = vadd.f32 %v6305, %v6306
    %v6308 = vmul.f32 %v6202, %v6202
    %v6309 = vmul.f32 %v6205, %v6205
    %v6310 = vmul.f32 %v6210, %v6210
    %v6311 = vmul.f32 %v6213, %v6213
    %v6312 = vmul.f32 %v6218, %v6218
    %v6313 = vmul.f32 %v6221, %v6221
    %v6314 = vmul.f32 %v6226, %v6226
    %v6315 = vmul.f32 %v6229, %v6229
    %v6316 = vmul.f32 %v6234, %v6234
    %v6317 = vmul.f32 %v6237, %v6237
    %v6318 = vmul.f32 %v6242, %v6242
    %v6319 = vmul.f32 %v6245, %v6245
    %v6320 = vmul.f32 %v6250, %v6250
    %v6321 = vmul.f32 %v6253, %v6253
    %v6322 = vmul.f32 %v6258, %v6258
    %v6323 = vmul.f32 %v6261, %v6261
    %v6324 = vsel %vm82, %v6308, 0.0
    %v6325 = vsel %vm82, %v6309, 0.0
    %v6326 = vadd.f32 %v6324, %v6325
    %v6327 = vsel %vm82, %v6310, 0.0
    %v6328 = vadd.f32 %v6326, %v6327
    %v6329 = vsel %vm82, %v6311, 0.0
    %v6330 = vadd.f32 %v6328, %v6329
    %v6331 = vsel %vm82, %v6312, 0.0
    %v6332 = vadd.f32 %v6330, %v6331
    %v6333 = vsel %vm82, %v6313, 0.0
    %v6334 = vadd.f32 %v6332, %v6333
    %v6335 = vsel %vm82, %v6314, 0.0
    %v6336 = vadd.f32 %v6334, %v6335
    %v6337 = vsel %vm82, %v6315, 0.0
    %v6338 = vadd.f32 %v6336, %v6337
    %v6339 = vrot.slane %v6338, 4
    %v6340 = vadd.f32 %v6338, %v6339
    %v6341 = vrot.slane %v6340, 2
    %v6342 = vadd.f32 %v6340, %v6341
    %v6343 = vrot.slane %v6342, 1
    %v6344 = vadd.f32 %v6342, %v6343
    %v6345 = vsel %vm82, %v6316, 0.0
    %v6346 = vsel %vm82, %v6317, 0.0
    %v6347 = vadd.f32 %v6345, %v6346
    %v6348 = vsel %vm82, %v6318, 0.0
    %v6349 = vadd.f32 %v6347, %v6348
    %v6350 = vsel %vm82, %v6319, 0.0
    %v6351 = vadd.f32 %v6349, %v6350
    %v6352 = vsel %vm82, %v6320, 0.0
    %v6353 = vadd.f32 %v6351, %v6352
    %v6354 = vsel %vm82, %v6321, 0.0
    %v6355 = vadd.f32 %v6353, %v6354
    %v6356 = vsel %vm82, %v6322, 0.0
    %v6357 = vadd.f32 %v6355, %v6356
    %v6358 = vsel %vm82, %v6323, 0.0
    %v6359 = vadd.f32 %v6357, %v6358
    %v6360 = vrot.slane %v6359, 4
    %v6361 = vadd.f32 %v6359, %v6360
    %v6362 = vrot.slane %v6361, 2
    %v6363 = vadd.f32 %v6361, %v6362
    %v6364 = vrot.slane %v6363, 1
    %v6365 = vadd.f32 %v6363, %v6364
    %v6366 = vmul.f32 %v6286, 0.015625
    %v6367 = vmul.f32 %v6307, 0.015625
    %v6368 = vmul.f32 %v6344, 0.015625
    %v6369 = vmul.f32 %v6365, 0.015625
    %v6370 = vmul.f32 %v6366, %v6366
    %v6371 = vmul.f32 %v6367, %v6367
    %v6372 = vsub.f32 %v6368, %v6370
    %v6373 = vsub.f32 %v6369, %v6371
    %v6374 = vadd.f32 %v6372, 1e-05
    %v6375 = vadd.f32 %v6373, 1e-05
    %v6376 = vrsqrt.pop %v6374
    %v6377 = vrsqrt.pop %v6375
    %v6378 = vmul.f32 %v6264, %v6376
    %v6379 = vmul.f32 %v6264, %v6377
    %v6380 = vmul.f32 %v6366, %v6378
    %v6381 = vmul.f32 %v6367, %v6379
    %v6382 = vsub.f32 %v6265, %v6380
    %v6383 = vsub.f32 %v6265, %v6381
    %v6384 = vlaneseq
    %v6385 = vshrl.u32 %v6384, 7
    %v6386 = vsub.s32 0, %v6385
    %v6387 = vrot.slane %v6378, %v6386
    %v6388 = vlaneseq
    %v6389 = vshrl.u32 %v6388, 7
    %v6390 = vsub.s32 0, %v6389
    %v6391 = vrot.slane %v6379, %v6390
    %v6392 = vmul.f32 %v6202, %v6387
    %v6393 = vmul.f32 %v6205, %v6387
    %v6394 = vmul.f32 %v6210, %v6387
    %v6395 = vmul.f32 %v6213, %v6387
    %v6396 = vmul.f32 %v6218, %v6387
    %v6397 = vmul.f32 %v6221, %v6387
    %v6398 = vmul.f32 %v6226, %v6387
    %v6399 = vmul.f32 %v6229, %v6387
    %v6400 = vmul.f32 %v6234, %v6391
    %v6401 = vmul.f32 %v6237, %v6391
    %v6402 = vmul.f32 %v6242, %v6391
    %v6403 = vmul.f32 %v6245, %v6391
    %v6404 = vmul.f32 %v6250, %v6391
    %v6405 = vmul.f32 %v6253, %v6391
    %v6406 = vmul.f32 %v6258, %v6391
    %v6407 = vmul.f32 %v6261, %v6391
    %v6408 = vlaneseq
    %v6409 = vshrl.u32 %v6408, 7
    %v6410 = vsub.s32 0, %v6409
    %v6411 = vrot.slane %v6382, %v6410
    %v6412 = vlaneseq
    %v6413 = vshrl.u32 %v6412, 7
    %v6414 = vsub.s32 0, %v6413
    %v6415 = vrot.slane %v6383, %v6414
    %v6416 = vadd.f32 %v6392, %v6411
    %v6417 = vadd.f32 %v6393, %v6411
    %v6418 = vadd.f32 %v6394, %v6411
    %v6419 = vadd.f32 %v6395, %v6411
    %v6420 = vadd.f32 %v6396, %v6411
    %v6421 = vadd.f32 %v6397, %v6411
    %v6422 = vadd.f32 %v6398, %v6411
    %v6423 = vadd.f32 %v6399, %v6411
    %v6424 = vadd.f32 %v6400, %v6415
    %v6425 = vadd.f32 %v6401, %v6415
    %v6426 = vadd.f32 %v6402, %v6415
    %v6427 = vadd.f32 %v6403, %v6415
    %v6428 = vadd.f32 %v6404, %v6415
    %v6429 = vadd.f32 %v6405, %v6415
    %v6430 = vadd.f32 %v6406, %v6415
    %v6431 = vadd.f32 %v6407, %v6415
    %v6432 = vadd.f32 %v4010, %v6416
    %v6433 = vadd.f32 %v4011, %v6417
    %v6434 = vadd.f32 %v4012, %v6418
    %v6435 = vadd.f32 %v4013, %v6419
    %v6436 = vadd.f32 %v4014, %v6420
    %v6437 = vadd.f32 %v4015, %v6421
    %v6438 = vadd.f32 %v4016, %v6422
    %v6439 = vadd.f32 %v4017, %v6423
    %v6440 = vadd.f32 %v4018, %v6424
    %v6441 = vadd.f32 %v4019, %v6425
    %v6442 = vadd.f32 %v4020, %v6426
    %v6443 = vadd.f32 %v4021, %v6427
    %v6444 = vadd.f32 %v4022, %v6428
    %v6445 = vadd.f32 %v4023, %v6429
    %v6446 = vadd.f32 %v4024, %v6430
    %v6447 = vadd.f32 %v4025, %v6431
    %6448 = vst.msk [vmem:[#allocation4] sm:$0xff] %vm82, 0.0
    %vm6449 = vcmask 259072
    %6450 = vst.msk [vmem:[#allocation4 + $0x8] sm:$0x3f] %vm6449, 0.0
    %6451 = vst.msk [vmem:[#allocation4 + $0x10] sm:$0xff] %vm82, 0.0
    %6452 = vst.msk [vmem:[#allocation4 + $0x18] sm:$0x3f] %vm6449, 0.0
    %6453 = vst.msk [vmem:[#allocation4 + $0x20] sm:$0xff] %vm82, 0.0
    %6454 = vst.msk [vmem:[#allocation4 + $0x28] sm:$0x3f] %vm6449, 0.0
    %6455 = vst.msk [vmem:[#allocation4 + $0x30] sm:$0xff] %vm82, 0.0
    %6456 = vst.msk [vmem:[#allocation4 + $0x38] sm:$0x3f] %vm6449, 0.0
    %6457 = vst.msk [vmem:[#allocation4 + $0x40] sm:$0xff] %vm82, 0.0
    %6458 = vst.msk [vmem:[#allocation4 + $0x48] sm:$0x3f] %vm6449, 0.0
    %6459 = vst.msk [vmem:[#allocation4 + $0x50] sm:$0xff] %vm82, 0.0
    %6460 = vst.msk [vmem:[#allocation4 + $0x58] sm:$0x3f] %vm6449, 0.0
    %6461 = vst.msk [vmem:[#allocation4 + $0x60] sm:$0xff] %vm82, 0.0
    %6462 = vst.msk [vmem:[#allocation4 + $0x68] sm:$0x3f] %vm6449, 0.0
    %6463 = vst.msk [vmem:[#allocation4 + $0x70] sm:$0xff] %vm82, 0.0
    %6464 = vst.msk [vmem:[#allocation4 + $0x78] sm:$0x3f] %vm6449, 0.0
    %6465 = vst.msk [vmem:[#allocation4 + $0x80] sm:$0xff] %vm82, 0.0
    %6466 = vst.msk [vmem:[#allocation4 + $0x88] sm:$0x3f] %vm6449, 0.0
    %6467 = vst.msk [vmem:[#allocation4 + $0x90] sm:$0xff] %vm82, 0.0
    %6468 = vst.msk [vmem:[#allocation4 + $0x98] sm:$0x3f] %vm6449, 0.0
    %6469 = vst.msk [vmem:[#allocation4 + $0xa0] sm:$0xff] %vm82, 0.0
    %6470 = vst.msk [vmem:[#allocation4 + $0xa8] sm:$0x3f] %vm6449, 0.0
    %6471 = vst.msk [vmem:[#allocation4 + $0xb0] sm:$0xff] %vm82, 0.0
    %6472 = vst.msk [vmem:[#allocation4 + $0xb8] sm:$0x3f] %vm6449, 0.0
    %6473 = vst.msk [vmem:[#allocation4 + $0xc0] sm:$0xff] %vm82, 0.0
    %6474 = vst.msk [vmem:[#allocation4 + $0xc8] sm:$0x3f] %vm6449, 0.0
    %6475 = vst.msk [vmem:[#allocation4 + $0xd0] sm:$0xff] %vm82, 0.0
    %6476 = vst.msk [vmem:[#allocation4 + $0xd8] sm:$0x3f] %vm6449, 0.0
    %6477 = vst.msk [vmem:[#allocation4 + $0xe0] sm:$0xff] %vm82, 0.0
    %6478 = vst.msk [vmem:[#allocation4 + $0xe8] sm:$0x3f] %vm6449, 0.0
    %6479 = vst.msk [vmem:[#allocation4 + $0xf0] sm:$0xff] %vm82, 0.0
    %6480 = vst.msk [vmem:[#allocation4 + $0xf8] sm:$0x3f] %vm6449, 0.0
    %6481 = vst.msk [vmem:[#allocation4 + $0x100] sm:$0xff] %vm82, 0.0
    %6482 = vst.msk [vmem:[#allocation4 + $0x108] sm:$0x3f] %vm6449, 0.0
    %6483 = vst.msk [vmem:[#allocation4 + $0x110] sm:$0xff] %vm82, 0.0
    %6484 = vst.msk [vmem:[#allocation4 + $0x118] sm:$0x3f] %vm6449, 0.0
    %6485 = vst.msk [vmem:[#allocation4 + $0x120] sm:$0xff] %vm82, 0.0
    %6486 = vst.msk [vmem:[#allocation4 + $0x128] sm:$0x3f] %vm6449, 0.0
    %6487 = vst.msk [vmem:[#allocation4 + $0x130] sm:$0xff] %vm82, 0.0
    %6488 = vst.msk [vmem:[#allocation4 + $0x138] sm:$0x3f] %vm6449, 0.0
    %6489 = vst.msk [vmem:[#allocation4 + $0x140] sm:$0xff] %vm82, 0.0
    %6490 = vst.msk [vmem:[#allocation4 + $0x148] sm:$0x3f] %vm6449, 0.0
    %6491 = vst.msk [vmem:[#allocation4 + $0x150] sm:$0xff] %vm82, 0.0
    %6492 = vst.msk [vmem:[#allocation4 + $0x158] sm:$0x3f] %vm6449, 0.0
    %6493 = vst.msk [vmem:[#allocation4 + $0x160] sm:$0xff] %vm82, 0.0
    %6494 = vst.msk [vmem:[#allocation4 + $0x168] sm:$0x3f] %vm6449, 0.0
    %6495 = vst.msk [vmem:[#allocation4 + $0x170] sm:$0xff] %vm82, 0.0
    %6496 = vst.msk [vmem:[#allocation4 + $0x178] sm:$0x3f] %vm6449, 0.0
    %6497 = vst.msk [vmem:[#allocation4 + $0x180] sm:$0xff] %vm82, 0.0
    %6498 = vst.msk [vmem:[#allocation4 + $0x188] sm:$0x3f] %vm6449, 0.0
    %6499 = vst.msk [vmem:[#allocation4 + $0x190] sm:$0xff] %vm82, 0.0
    %6500 = vst.msk [vmem:[#allocation4 + $0x198] sm:$0x3f] %vm6449, 0.0
    %6501 = vst.msk [vmem:[#allocation4 + $0x1a0] sm:$0xff] %vm82, 0.0
    %6502 = vst.msk [vmem:[#allocation4 + $0x1a8] sm:$0x3f] %vm6449, 0.0
    %6503 = vst.msk [vmem:[#allocation4 + $0x1b0] sm:$0xff] %vm82, 0.0
    %6504 = vst.msk [vmem:[#allocation4 + $0x1b8] sm:$0x3f] %vm6449, 0.0
    %s6505 = scalar_lea.vmem [#allocation4], 48
    %6506 = vst.msk [vmem:[%s6505 + $0x3] sm:$0xff] %vm82, %v6432
    %6507 = vst.msk [vmem:[%s6505 + $0x13] sm:$0xff] %vm82, %v6433
    %6508 = vst.msk [vmem:[%s6505 + $0x23] sm:$0xff] %vm82, %v6434
    %6509 = vst.msk [vmem:[%s6505 + $0x33] sm:$0xff] %vm82, %v6435
    %6510 = vst.msk [vmem:[%s6505 + $0x43] sm:$0xff] %vm82, %v6436
    %6511 = vst.msk [vmem:[%s6505 + $0x53] sm:$0xff] %vm82, %v6437
    %6512 = vst.msk [vmem:[%s6505 + $0x63] sm:$0xff] %vm82, %v6438
    %6513 = vst.msk [vmem:[%s6505 + $0x73] sm:$0xff] %vm82, %v6439
    %6514 = vst.msk [vmem:[%s6505 + $0xe3] sm:$0xff] %vm82, %v6440
    %6515 = vst.msk [vmem:[%s6505 + $0xf3] sm:$0xff] %vm82, %v6441
    %6516 = vst.msk [vmem:[%s6505 + $0x103] sm:$0xff] %vm82, %v6442
    %6517 = vst.msk [vmem:[%s6505 + $0x113] sm:$0xff] %vm82, %v6443
    %6518 = vst.msk [vmem:[%s6505 + $0x123] sm:$0xff] %vm82, %v6444
    %6519 = vst.msk [vmem:[%s6505 + $0x133] sm:$0xff] %vm82, %v6445
    %6520 = vst.msk [vmem:[%s6505 + $0x143] sm:$0xff] %vm82, %v6446
    %6521 = vst.msk [vmem:[%s6505 + $0x153] sm:$0xff] %vm82, %v6447
    %v6522 = vld [vmem:[#allocation4] sm:$0xff]
    %v6523 = vld [vmem:[#allocation4 + $0x10] sm:$0xff]
    %v6524 = vld [vmem:[#allocation4 + $0x20] sm:$0xff]
    %v6525 = vld [vmem:[#allocation4 + $0x30] sm:$0xff]
    %v6526 = vld [vmem:[#allocation4 + $0x40] sm:$0xff]
    %v6527 = vld [vmem:[#allocation4 + $0x50] sm:$0xff]
    %v6528 = vld [vmem:[#allocation4 + $0x60] sm:$0xff]
    %v6529 = vld [vmem:[#allocation4 + $0x70] sm:$0xff]
    %v6530 = vld [vmem:[#allocation4 + $0xe0] sm:$0xff]
    %v6531 = vld [vmem:[#allocation4 + $0xf0] sm:$0xff]
    %v6532 = vld [vmem:[#allocation4 + $0x100] sm:$0xff]
    %v6533 = vld [vmem:[#allocation4 + $0x110] sm:$0xff]
    %v6534 = vld [vmem:[#allocation4 + $0x120] sm:$0xff]
    %v6535 = vld [vmem:[#allocation4 + $0x130] sm:$0xff]
    %v6536 = vld [vmem:[#allocation4 + $0x140] sm:$0xff]
    %v6537 = vld [vmem:[#allocation4 + $0x150] sm:$0xff]
    %v6538 = vld [vmem:[%s6] sm:$0x1]
    %v6539 = vlaneseq
    %v6540 = vshrl.u32 %v6539, 7
    %v6541 = vsub.s32 0, %v6540
    %v6542 = vrot.slane %v6538, %v6541
    %v6543 = vmul.f32 %v6522, %v6542
    %v6544 = vmul.f32 %v6523, %v6542
    %v6545 = vmul.f32 %v6524, %v6542
    %v6546 = vmul.f32 %v6525, %v6542
    %v6547 = vmul.f32 %v6526, %v6542
    %v6548 = vmul.f32 %v6527, %v6542
    %v6549 = vmul.f32 %v6528, %v6542
    %v6550 = vmul.f32 %v6529, %v6542
    %v6551 = vmul.f32 %v6530, %v6542
    %v6552 = vmul.f32 %v6531, %v6542
    %v6553 = vmul.f32 %v6532, %v6542
    %v6554 = vmul.f32 %v6533, %v6542
    %v6555 = vmul.f32 %v6534, %v6542
    %v6556 = vmul.f32 %v6535, %v6542
    %v6557 = vmul.f32 %v6536, %v6542
    %v6558 = vmul.f32 %v6537, %v6542
    %v6559 = vadd.f32 %v6543, 0.0
    %v6560 = vadd.f32 %v6544, 0.0
    %v6561 = vadd.f32 %v6545, 0.0
    %v6562 = vadd.f32 %v6546, 0.0
    %v6563 = vadd.f32 %v6547, 0.0
    %v6564 = vadd.f32 %v6548, 0.0
    %v6565 = vadd.f32 %v6549, 0.0
    %v6566 = vadd.f32 %v6550, 0.0
    %v6567 = vadd.f32 %v6551, 0.0
    %v6568 = vadd.f32 %v6552, 0.0
    %v6569 = vadd.f32 %v6553, 0.0
    %v6570 = vadd.f32 %v6554, 0.0
    %v6571 = vadd.f32 %v6555, 0.0
    %v6572 = vadd.f32 %v6556, 0.0
    %v6573 = vadd.f32 %v6557, 0.0
    %v6574 = vadd.f32 %v6558, 0.0
    %v6575 = vld [vmem:[#allocation4 + $0x1] sm:$0xff]
    %v6576 = vld [vmem:[#allocation4 + $0x11] sm:$0xff]
    %v6577 = vld [vmem:[#allocation4 + $0x21] sm:$0xff]
    %v6578 = vld [vmem:[#allocation4 + $0x31] sm:$0xff]
    %v6579 = vld [vmem:[#allocation4 + $0x41] sm:$0xff]
    %v6580 = vld [vmem:[#allocation4 + $0x51] sm:$0xff]
    %v6581 = vld [vmem:[#allocation4 + $0x61] sm:$0xff]
    %v6582 = vld [vmem:[#allocation4 + $0x71] sm:$0xff]
    %v6583 = vld [vmem:[#allocation4 + $0xe1] sm:$0xff]
    %v6584 = vld [vmem:[#allocation4 + $0xf1] sm:$0xff]
    %v6585 = vld [vmem:[#allocation4 + $0x101] sm:$0xff]
    %v6586 = vld [vmem:[#allocation4 + $0x111] sm:$0xff]
    %v6587 = vld [vmem:[#allocation4 + $0x121] sm:$0xff]
    %v6588 = vld [vmem:[#allocation4 + $0x131] sm:$0xff]
    %v6589 = vld [vmem:[#allocation4 + $0x141] sm:$0xff]
    %v6590 = vld [vmem:[#allocation4 + $0x151] sm:$0xff]
    %v6591 = vld [vmem:[%s6 + $0x1] sm:$0x1]
    %v6592 = vlaneseq
    %v6593 = vshrl.u32 %v6592, 7
    %v6594 = vsub.s32 0, %v6593
    %v6595 = vrot.slane %v6591, %v6594
    %v6596 = vmul.f32 %v6575, %v6595
    %v6597 = vmul.f32 %v6576, %v6595
    %v6598 = vmul.f32 %v6577, %v6595
    %v6599 = vmul.f32 %v6578, %v6595
    %v6600 = vmul.f32 %v6579, %v6595
    %v6601 = vmul.f32 %v6580, %v6595
    %v6602 = vmul.f32 %v6581, %v6595
    %v6603 = vmul.f32 %v6582, %v6595
    %v6604 = vmul.f32 %v6583, %v6595
    %v6605 = vmul.f32 %v6584, %v6595
    %v6606 = vmul.f32 %v6585, %v6595
    %v6607 = vmul.f32 %v6586, %v6595
    %v6608 = vmul.f32 %v6587, %v6595
    %v6609 = vmul.f32 %v6588, %v6595
    %v6610 = vmul.f32 %v6589, %v6595
    %v6611 = vmul.f32 %v6590, %v6595
    %v6612 = vadd.f32 %v6559, %v6596
    %v6613 = vadd.f32 %v6560, %v6597
    %v6614 = vadd.f32 %v6561, %v6598
    %v6615 = vadd.f32 %v6562, %v6599
    %v6616 = vadd.f32 %v6563, %v6600
    %v6617 = vadd.f32 %v6564, %v6601
    %v6618 = vadd.f32 %v6565, %v6602
    %v6619 = vadd.f32 %v6566, %v6603
    %v6620 = vadd.f32 %v6567, %v6604
    %v6621 = vadd.f32 %v6568, %v6605
    %v6622 = vadd.f32 %v6569, %v6606
    %v6623 = vadd.f32 %v6570, %v6607
    %v6624 = vadd.f32 %v6571, %v6608
    %v6625 = vadd.f32 %v6572, %v6609
    %v6626 = vadd.f32 %v6573, %v6610
    %v6627 = vadd.f32 %v6574, %v6611
    %v6628 = vld [vmem:[#allocation4 + $0x2] sm:$0xff]
    %v6629 = vld [vmem:[#allocation4 + $0x12] sm:$0xff]
    %v6630 = vld [vmem:[#allocation4 + $0x22] sm:$0xff]
    %v6631 = vld [vmem:[#allocation4 + $0x32] sm:$0xff]
    %v6632 = vld [vmem:[#allocation4 + $0x42] sm:$0xff]
    %v6633 = vld [vmem:[#allocation4 + $0x52] sm:$0xff]
    %v6634 = vld [vmem:[#allocation4 + $0x62] sm:$0xff]
    %v6635 = vld [vmem:[#allocation4 + $0x72] sm:$0xff]
    %v6636 = vld [vmem:[#allocation4 + $0xe2] sm:$0xff]
    %v6637 = vld [vmem:[#allocation4 + $0xf2] sm:$0xff]
    %v6638 = vld [vmem:[#allocation4 + $0x102] sm:$0xff]
    %v6639 = vld [vmem:[#allocation4 + $0x112] sm:$0xff]
    %v6640 = vld [vmem:[#allocation4 + $0x122] sm:$0xff]
    %v6641 = vld [vmem:[#allocation4 + $0x132] sm:$0xff]
    %v6642 = vld [vmem:[#allocation4 + $0x142] sm:$0xff]
    %v6643 = vld [vmem:[#allocation4 + $0x152] sm:$0xff]
    %v6644 = vld [vmem:[%s6 + $0x2] sm:$0x1]
    %v6645 = vlaneseq
    %v6646 = vshrl.u32 %v6645, 7
    %v6647 = vsub.s32 0, %v6646
    %v6648 = vrot.slane %v6644, %v6647
    %v6649 = vmul.f32 %v6628, %v6648
    %v6650 = vmul.f32 %v6629, %v6648
    %v6651 = vmul.f32 %v6630, %v6648
    %v6652 = vmul.f32 %v6631, %v6648
    %v6653 = vmul.f32 %v6632, %v6648
    %v6654 = vmul.f32 %v6633, %v6648
    %v6655 = vmul.f32 %v6634, %v6648
    %v6656 = vmul.f32 %v6635, %v6648
    %v6657 = vmul.f32 %v6636, %v6648
    %v6658 = vmul.f32 %v6637, %v6648
    %v6659 = vmul.f32 %v6638, %v6648
    %v6660 = vmul.f32 %v6639, %v6648
    %v6661 = vmul.f32 %v6640, %v6648
    %v6662 = vmul.f32 %v6641, %v6648
    %v6663 = vmul.f32 %v6642, %v6648
    %v6664 = vmul.f32 %v6643, %v6648
    %v6665 = vadd.f32 %v6612, %v6649
    %v6666 = vadd.f32 %v6613, %v6650
    %v6667 = vadd.f32 %v6614, %v6651
    %v6668 = vadd.f32 %v6615, %v6652
    %v6669 = vadd.f32 %v6616, %v6653
    %v6670 = vadd.f32 %v6617, %v6654
    %v6671 = vadd.f32 %v6618, %v6655
    %v6672 = vadd.f32 %v6619, %v6656
    %v6673 = vadd.f32 %v6620, %v6657
    %v6674 = vadd.f32 %v6621, %v6658
    %v6675 = vadd.f32 %v6622, %v6659
    %v6676 = vadd.f32 %v6623, %v6660
    %v6677 = vadd.f32 %v6624, %v6661
    %v6678 = vadd.f32 %v6625, %v6662
    %v6679 = vadd.f32 %v6626, %v6663
    %v6680 = vadd.f32 %v6627, %v6664
    %v6681 = vld [vmem:[#allocation4 + $0x3] sm:$0xff]
    %v6682 = vld [vmem:[#allocation4 + $0x13] sm:$0xff]
    %v6683 = vld [vmem:[#allocation4 + $0x23] sm:$0xff]
    %v6684 = vld [vmem:[#allocation4 + $0x33] sm:$0xff]
    %v6685 = vld [vmem:[#allocation4 + $0x43] sm:$0xff]
    %v6686 = vld [vmem:[#allocation4 + $0x53] sm:$0xff]
    %v6687 = vld [vmem:[#allocation4 + $0x63] sm:$0xff]
    %v6688 = vld [vmem:[#allocation4 + $0x73] sm:$0xff]
    %v6689 = vld [vmem:[#allocation4 + $0xe3] sm:$0xff]
    %v6690 = vld [vmem:[#allocation4 + $0xf3] sm:$0xff]
    %v6691 = vld [vmem:[#allocation4 + $0x103] sm:$0xff]
    %v6692 = vld [vmem:[#allocation4 + $0x113] sm:$0xff]
    %v6693 = vld [vmem:[#allocation4 + $0x123] sm:$0xff]
    %v6694 = vld [vmem:[#allocation4 + $0x133] sm:$0xff]
    %v6695 = vld [vmem:[#allocation4 + $0x143] sm:$0xff]
    %v6696 = vld [vmem:[#allocation4 + $0x153] sm:$0xff]
    %v6697 = vld [vmem:[%s6 + $0x3] sm:$0x1]
    %v6698 = vlaneseq
    %v6699 = vshrl.u32 %v6698, 7
    %v6700 = vsub.s32 0, %v6699
    %v6701 = vrot.slane %v6697, %v6700
    %v6702 = vmul.f32 %v6681, %v6701
    %v6703 = vmul.f32 %v6682, %v6701
    %v6704 = vmul.f32 %v6683, %v6701
    %v6705 = vmul.f32 %v6684, %v6701
    %v6706 = vmul.f32 %v6685, %v6701
    %v6707 = vmul.f32 %v6686, %v6701
    %v6708 = vmul.f32 %v6687, %v6701
    %v6709 = vmul.f32 %v6688, %v6701
    %v6710 = vmul.f32 %v6689, %v6701
    %v6711 = vmul.f32 %v6690, %v6701
    %v6712 = vmul.f32 %v6691, %v6701
    %v6713 = vmul.f32 %v6692, %v6701
    %v6714 = vmul.f32 %v6693, %v6701
    %v6715 = vmul.f32 %v6694, %v6701
    %v6716 = vmul.f32 %v6695, %v6701
    %v6717 = vmul.f32 %v6696, %v6701
    %v6718 = vadd.f32 %v6665, %v6702
    %v6719 = vadd.f32 %v6666, %v6703
    %v6720 = vadd.f32 %v6667, %v6704
    %v6721 = vadd.f32 %v6668, %v6705
    %v6722 = vadd.f32 %v6669, %v6706
    %v6723 = vadd.f32 %v6670, %v6707
    %v6724 = vadd.f32 %v6671, %v6708
    %v6725 = vadd.f32 %v6672, %v6709
    %v6726 = vadd.f32 %v6673, %v6710
    %v6727 = vadd.f32 %v6674, %v6711
    %v6728 = vadd.f32 %v6675, %v6712
    %v6729 = vadd.f32 %v6676, %v6713
    %v6730 = vadd.f32 %v6677, %v6714
    %v6731 = vadd.f32 %v6678, %v6715
    %v6732 = vadd.f32 %v6679, %v6716
    %v6733 = vadd.f32 %v6680, %v6717
    %v6734 = vld [vmem:[#allocation4 + $0x4] sm:$0xff]
    %v6735 = vld [vmem:[#allocation4 + $0x14] sm:$0xff]
    %v6736 = vld [vmem:[#allocation4 + $0x24] sm:$0xff]
    %v6737 = vld [vmem:[#allocation4 + $0x34] sm:$0xff]
    %v6738 = vld [vmem:[#allocation4 + $0x44] sm:$0xff]
    %v6739 = vld [vmem:[#allocation4 + $0x54] sm:$0xff]
    %v6740 = vld [vmem:[#allocation4 + $0x64] sm:$0xff]
    %v6741 = vld [vmem:[#allocation4 + $0x74] sm:$0xff]
    %v6742 = vld [vmem:[#allocation4 + $0xe4] sm:$0xff]
    %v6743 = vld [vmem:[#allocation4 + $0xf4] sm:$0xff]
    %v6744 = vld [vmem:[#allocation4 + $0x104] sm:$0xff]
    %v6745 = vld [vmem:[#allocation4 + $0x114] sm:$0xff]
    %v6746 = vld [vmem:[#allocation4 + $0x124] sm:$0xff]
    %v6747 = vld [vmem:[#allocation4 + $0x134] sm:$0xff]
    %v6748 = vld [vmem:[#allocation4 + $0x144] sm:$0xff]
    %v6749 = vld [vmem:[#allocation4 + $0x154] sm:$0xff]
    %v6750 = vld [vmem:[%s6 + $0x4] sm:$0x1]
    %v6751 = vlaneseq
    %v6752 = vshrl.u32 %v6751, 7
    %v6753 = vsub.s32 0, %v6752
    %v6754 = vrot.slane %v6750, %v6753
    %v6755 = vmul.f32 %v6734, %v6754
    %v6756 = vmul.f32 %v6735, %v6754
    %v6757 = vmul.f32 %v6736, %v6754
    %v6758 = vmul.f32 %v6737, %v6754
    %v6759 = vmul.f32 %v6738, %v6754
    %v6760 = vmul.f32 %v6739, %v6754
    %v6761 = vmul.f32 %v6740, %v6754
    %v6762 = vmul.f32 %v6741, %v6754
    %v6763 = vmul.f32 %v6742, %v6754
    %v6764 = vmul.f32 %v6743, %v6754
    %v6765 = vmul.f32 %v6744, %v6754
    %v6766 = vmul.f32 %v6745, %v6754
    %v6767 = vmul.f32 %v6746, %v6754
    %v6768 = vmul.f32 %v6747, %v6754
    %v6769 = vmul.f32 %v6748, %v6754
    %v6770 = vmul.f32 %v6749, %v6754
    %v6771 = vadd.f32 %v6718, %v6755
    %v6772 = vadd.f32 %v6719, %v6756
    %v6773 = vadd.f32 %v6720, %v6757
    %v6774 = vadd.f32 %v6721, %v6758
    %v6775 = vadd.f32 %v6722, %v6759
    %v6776 = vadd.f32 %v6723, %v6760
    %v6777 = vadd.f32 %v6724, %v6761
    %v6778 = vadd.f32 %v6725, %v6762
    %v6779 = vadd.f32 %v6726, %v6763
    %v6780 = vadd.f32 %v6727, %v6764
    %v6781 = vadd.f32 %v6728, %v6765
    %v6782 = vadd.f32 %v6729, %v6766
    %v6783 = vadd.f32 %v6730, %v6767
    %v6784 = vadd.f32 %v6731, %v6768
    %v6785 = vadd.f32 %v6732, %v6769
    %v6786 = vadd.f32 %v6733, %v6770
    %v6787 = vld [vmem:[#allocation4 + $0x5] sm:$0xff]
    %v6788 = vld [vmem:[#allocation4 + $0x15] sm:$0xff]
    %v6789 = vld [vmem:[#allocation4 + $0x25] sm:$0xff]
    %v6790 = vld [vmem:[#allocation4 + $0x35] sm:$0xff]
    %v6791 = vld [vmem:[#allocation4 + $0x45] sm:$0xff]
    %v6792 = vld [vmem:[#allocation4 + $0x55] sm:$0xff]
    %v6793 = vld [vmem:[#allocation4 + $0x65] sm:$0xff]
    %v6794 = vld [vmem:[#allocation4 + $0x75] sm:$0xff]
    %v6795 = vld [vmem:[#allocation4 + $0xe5] sm:$0xff]
    %v6796 = vld [vmem:[#allocation4 + $0xf5] sm:$0xff]
    %v6797 = vld [vmem:[#allocation4 + $0x105] sm:$0xff]
    %v6798 = vld [vmem:[#allocation4 + $0x115] sm:$0xff]
    %v6799 = vld [vmem:[#allocation4 + $0x125] sm:$0xff]
    %v6800 = vld [vmem:[#allocation4 + $0x135] sm:$0xff]
    %v6801 = vld [vmem:[#allocation4 + $0x145] sm:$0xff]
    %v6802 = vld [vmem:[#allocation4 + $0x155] sm:$0xff]
    %v6803 = vld [vmem:[%s6 + $0x5] sm:$0x1]
    %v6804 = vlaneseq
    %v6805 = vshrl.u32 %v6804, 7
    %v6806 = vsub.s32 0, %v6805
    %v6807 = vrot.slane %v6803, %v6806
    %v6808 = vmul.f32 %v6787, %v6807
    %v6809 = vmul.f32 %v6788, %v6807
    %v6810 = vmul.f32 %v6789, %v6807
    %v6811 = vmul.f32 %v6790, %v6807
    %v6812 = vmul.f32 %v6791, %v6807
    %v6813 = vmul.f32 %v6792, %v6807
    %v6814 = vmul.f32 %v6793, %v6807
    %v6815 = vmul.f32 %v6794, %v6807
    %v6816 = vmul.f32 %v6795, %v6807
    %v6817 = vmul.f32 %v6796, %v6807
    %v6818 = vmul.f32 %v6797, %v6807
    %v6819 = vmul.f32 %v6798, %v6807
    %v6820 = vmul.f32 %v6799, %v6807
    %v6821 = vmul.f32 %v6800, %v6807
    %v6822 = vmul.f32 %v6801, %v6807
    %v6823 = vmul.f32 %v6802, %v6807
    %v6824 = vadd.f32 %v6771, %v6808
    %v6825 = vadd.f32 %v6772, %v6809
    %v6826 = vadd.f32 %v6773, %v6810
    %v6827 = vadd.f32 %v6774, %v6811
    %v6828 = vadd.f32 %v6775, %v6812
    %v6829 = vadd.f32 %v6776, %v6813
    %v6830 = vadd.f32 %v6777, %v6814
    %v6831 = vadd.f32 %v6778, %v6815
    %v6832 = vadd.f32 %v6779, %v6816
    %v6833 = vadd.f32 %v6780, %v6817
    %v6834 = vadd.f32 %v6781, %v6818
    %v6835 = vadd.f32 %v6782, %v6819
    %v6836 = vadd.f32 %v6783, %v6820
    %v6837 = vadd.f32 %v6784, %v6821
    %v6838 = vadd.f32 %v6785, %v6822
    %v6839 = vadd.f32 %v6786, %v6823
    %v6840 = vld [vmem:[#allocation4 + $0x6] sm:$0xff]
    %v6841 = vld [vmem:[#allocation4 + $0x16] sm:$0xff]
    %v6842 = vld [vmem:[#allocation4 + $0x26] sm:$0xff]
    %v6843 = vld [vmem:[#allocation4 + $0x36] sm:$0xff]
    %v6844 = vld [vmem:[#allocation4 + $0x46] sm:$0xff]
    %v6845 = vld [vmem:[#allocation4 + $0x56] sm:$0xff]
    %v6846 = vld [vmem:[#allocation4 + $0x66] sm:$0xff]
    %v6847 = vld [vmem:[#allocation4 + $0x76] sm:$0xff]
    %v6848 = vld [vmem:[#allocation4 + $0xe6] sm:$0xff]
    %v6849 = vld [vmem:[#allocation4 + $0xf6] sm:$0xff]
    %v6850 = vld [vmem:[#allocation4 + $0x106] sm:$0xff]
    %v6851 = vld [vmem:[#allocation4 + $0x116] sm:$0xff]
    %v6852 = vld [vmem:[#allocation4 + $0x126] sm:$0xff]
    %v6853 = vld [vmem:[#allocation4 + $0x136] sm:$0xff]
    %v6854 = vld [vmem:[#allocation4 + $0x146] sm:$0xff]
    %v6855 = vld [vmem:[#allocation4 + $0x156] sm:$0xff]
    %v6856 = vld [vmem:[%s6 + $0x6] sm:$0x1]
    %v6857 = vlaneseq
    %v6858 = vshrl.u32 %v6857, 7
    %v6859 = vsub.s32 0, %v6858
    %v6860 = vrot.slane %v6856, %v6859
    %v6861 = vmul.f32 %v6840, %v6860
    %v6862 = vmul.f32 %v6841, %v6860
    %v6863 = vmul.f32 %v6842, %v6860
    %v6864 = vmul.f32 %v6843, %v6860
    %v6865 = vmul.f32 %v6844, %v6860
    %v6866 = vmul.f32 %v6845, %v6860
    %v6867 = vmul.f32 %v6846, %v6860
    %v6868 = vmul.f32 %v6847, %v6860
    %v6869 = vmul.f32 %v6848, %v6860
    %v6870 = vmul.f32 %v6849, %v6860
    %v6871 = vmul.f32 %v6850, %v6860
    %v6872 = vmul.f32 %v6851, %v6860
    %v6873 = vmul.f32 %v6852, %v6860
    %v6874 = vmul.f32 %v6853, %v6860
    %v6875 = vmul.f32 %v6854, %v6860
    %v6876 = vmul.f32 %v6855, %v6860
    %v6877 = vadd.f32 %v6824, %v6861
    %v6878 = vadd.f32 %v6825, %v6862
    %v6879 = vadd.f32 %v6826, %v6863
    %v6880 = vadd.f32 %v6827, %v6864
    %v6881 = vadd.f32 %v6828, %v6865
    %v6882 = vadd.f32 %v6829, %v6866
    %v6883 = vadd.f32 %v6830, %v6867
    %v6884 = vadd.f32 %v6831, %v6868
    %v6885 = vadd.f32 %v6832, %v6869
    %v6886 = vadd.f32 %v6833, %v6870
    %v6887 = vadd.f32 %v6834, %v6871
    %v6888 = vadd.f32 %v6835, %v6872
    %v6889 = vadd.f32 %v6836, %v6873
    %v6890 = vadd.f32 %v6837, %v6874
    %v6891 = vadd.f32 %v6838, %v6875
    %v6892 = vadd.f32 %v6839, %v6876
    %s6893 = scalar_lea.vmem [#allocation4], 16
    %v6894 = vld [vmem:[%s6893] sm:$0xff]
    %v6895 = vld [vmem:[%s6893 + $0x10] sm:$0xff]
    %v6896 = vld [vmem:[%s6893 + $0x20] sm:$0xff]
    %v6897 = vld [vmem:[%s6893 + $0x30] sm:$0xff]
    %v6898 = vld [vmem:[%s6893 + $0x40] sm:$0xff]
    %v6899 = vld [vmem:[%s6893 + $0x50] sm:$0xff]
    %v6900 = vld [vmem:[%s6893 + $0x60] sm:$0xff]
    %v6901 = vld [vmem:[%s6893 + $0x70] sm:$0xff]
    %v6902 = vld [vmem:[%s6893 + $0xe0] sm:$0xff]
    %v6903 = vld [vmem:[%s6893 + $0xf0] sm:$0xff]
    %v6904 = vld [vmem:[%s6893 + $0x100] sm:$0xff]
    %v6905 = vld [vmem:[%s6893 + $0x110] sm:$0xff]
    %v6906 = vld [vmem:[%s6893 + $0x120] sm:$0xff]
    %v6907 = vld [vmem:[%s6893 + $0x130] sm:$0xff]
    %v6908 = vld [vmem:[%s6893 + $0x140] sm:$0xff]
    %v6909 = vld [vmem:[%s6893 + $0x150] sm:$0xff]
    %v6910 = vld [vmem:[%s6 + $0x7] sm:$0x1]
    %v6911 = vlaneseq
    %v6912 = vshrl.u32 %v6911, 7
    %v6913 = vsub.s32 0, %v6912
    %v6914 = vrot.slane %v6910, %v6913
    %v6915 = vmul.f32 %v6894, %v6914
    %v6916 = vmul.f32 %v6895, %v6914
    %v6917 = vmul.f32 %v6896, %v6914
    %v6918 = vmul.f32 %v6897, %v6914
    %v6919 = vmul.f32 %v6898, %v6914
    %v6920 = vmul.f32 %v6899, %v6914
    %v6921 = vmul.f32 %v6900, %v6914
    %v6922 = vmul.f32 %v6901, %v6914
    %v6923 = vmul.f32 %v6902, %v6914
    %v6924 = vmul.f32 %v6903, %v6914
    %v6925 = vmul.f32 %v6904, %v6914
    %v6926 = vmul.f32 %v6905, %v6914
    %v6927 = vmul.f32 %v6906, %v6914
    %v6928 = vmul.f32 %v6907, %v6914
    %v6929 = vmul.f32 %v6908, %v6914
    %v6930 = vmul.f32 %v6909, %v6914
    %v6931 = vadd.f32 %v6877, %v6915
    %v6932 = vadd.f32 %v6878, %v6916
    %v6933 = vadd.f32 %v6879, %v6917
    %v6934 = vadd.f32 %v6880, %v6918
    %v6935 = vadd.f32 %v6881, %v6919
    %v6936 = vadd.f32 %v6882, %v6920
    %v6937 = vadd.f32 %v6883, %v6921
    %v6938 = vadd.f32 %v6884, %v6922
    %v6939 = vadd.f32 %v6885, %v6923
    %v6940 = vadd.f32 %v6886, %v6924
    %v6941 = vadd.f32 %v6887, %v6925
    %v6942 = vadd.f32 %v6888, %v6926
    %v6943 = vadd.f32 %v6889, %v6927
    %v6944 = vadd.f32 %v6890, %v6928
    %v6945 = vadd.f32 %v6891, %v6929
    %v6946 = vadd.f32 %v6892, %v6930
    %v6947 = vld [vmem:[%s6893 + $0x1] sm:$0xff]
    %v6948 = vld [vmem:[%s6893 + $0x11] sm:$0xff]
    %v6949 = vld [vmem:[%s6893 + $0x21] sm:$0xff]
    %v6950 = vld [vmem:[%s6893 + $0x31] sm:$0xff]
    %v6951 = vld [vmem:[%s6893 + $0x41] sm:$0xff]
    %v6952 = vld [vmem:[%s6893 + $0x51] sm:$0xff]
    %v6953 = vld [vmem:[%s6893 + $0x61] sm:$0xff]
    %v6954 = vld [vmem:[%s6893 + $0x71] sm:$0xff]
    %v6955 = vld [vmem:[%s6893 + $0xe1] sm:$0xff]
    %v6956 = vld [vmem:[%s6893 + $0xf1] sm:$0xff]
    %v6957 = vld [vmem:[%s6893 + $0x101] sm:$0xff]
    %v6958 = vld [vmem:[%s6893 + $0x111] sm:$0xff]
    %v6959 = vld [vmem:[%s6893 + $0x121] sm:$0xff]
    %v6960 = vld [vmem:[%s6893 + $0x131] sm:$0xff]
    %v6961 = vld [vmem:[%s6893 + $0x141] sm:$0xff]
    %v6962 = vld [vmem:[%s6893 + $0x151] sm:$0xff]
    %v6963 = vld [vmem:[%s6 + $0x8] sm:$0x1]
    %v6964 = vlaneseq
    %v6965 = vshrl.u32 %v6964, 7
    %v6966 = vsub.s32 0, %v6965
    %v6967 = vrot.slane %v6963, %v6966
    %v6968 = vmul.f32 %v6947, %v6967
    %v6969 = vmul.f32 %v6948, %v6967
    %v6970 = vmul.f32 %v6949, %v6967
    %v6971 = vmul.f32 %v6950, %v6967
    %v6972 = vmul.f32 %v6951, %v6967
    %v6973 = vmul.f32 %v6952, %v6967
    %v6974 = vmul.f32 %v6953, %v6967
    %v6975 = vmul.f32 %v6954, %v6967
    %v6976 = vmul.f32 %v6955, %v6967
    %v6977 = vmul.f32 %v6956, %v6967
    %v6978 = vmul.f32 %v6957, %v6967
    %v6979 = vmul.f32 %v6958, %v6967
    %v6980 = vmul.f32 %v6959, %v6967
    %v6981 = vmul.f32 %v6960, %v6967
    %v6982 = vmul.f32 %v6961, %v6967
    %v6983 = vmul.f32 %v6962, %v6967
    %v6984 = vadd.f32 %v6931, %v6968
    %v6985 = vadd.f32 %v6932, %v6969
    %v6986 = vadd.f32 %v6933, %v6970
    %v6987 = vadd.f32 %v6934, %v6971
    %v6988 = vadd.f32 %v6935, %v6972
    %v6989 = vadd.f32 %v6936, %v6973
    %v6990 = vadd.f32 %v6937, %v6974
    %v6991 = vadd.f32 %v6938, %v6975
    %v6992 = vadd.f32 %v6939, %v6976
    %v6993 = vadd.f32 %v6940, %v6977
    %v6994 = vadd.f32 %v6941, %v6978
    %v6995 = vadd.f32 %v6942, %v6979
    %v6996 = vadd.f32 %v6943, %v6980
    %v6997 = vadd.f32 %v6944, %v6981
    %v6998 = vadd.f32 %v6945, %v6982
    %v6999 = vadd.f32 %v6946, %v6983
    %v7000 = vld [vmem:[%s6893 + $0x2] sm:$0xff]
    %v7001 = vld [vmem:[%s6893 + $0x12] sm:$0xff]
    %v7002 = vld [vmem:[%s6893 + $0x22] sm:$0xff]
    %v7003 = vld [vmem:[%s6893 + $0x32] sm:$0xff]
    %v7004 = vld [vmem:[%s6893 + $0x42] sm:$0xff]
    %v7005 = vld [vmem:[%s6893 + $0x52] sm:$0xff]
    %v7006 = vld [vmem:[%s6893 + $0x62] sm:$0xff]
    %v7007 = vld [vmem:[%s6893 + $0x72] sm:$0xff]
    %v7008 = vld [vmem:[%s6893 + $0xe2] sm:$0xff]
    %v7009 = vld [vmem:[%s6893 + $0xf2] sm:$0xff]
    %v7010 = vld [vmem:[%s6893 + $0x102] sm:$0xff]
    %v7011 = vld [vmem:[%s6893 + $0x112] sm:$0xff]
    %v7012 = vld [vmem:[%s6893 + $0x122] sm:$0xff]
    %v7013 = vld [vmem:[%s6893 + $0x132] sm:$0xff]
    %v7014 = vld [vmem:[%s6893 + $0x142] sm:$0xff]
    %v7015 = vld [vmem:[%s6893 + $0x152] sm:$0xff]
    %v7016 = vld [vmem:[%s6 + $0x9] sm:$0x1]
    %v7017 = vlaneseq
    %v7018 = vshrl.u32 %v7017, 7
    %v7019 = vsub.s32 0, %v7018
    %v7020 = vrot.slane %v7016, %v7019
    %v7021 = vmul.f32 %v7000, %v7020
    %v7022 = vmul.f32 %v7001, %v7020
    %v7023 = vmul.f32 %v7002, %v7020
    %v7024 = vmul.f32 %v7003, %v7020
    %v7025 = vmul.f32 %v7004, %v7020
    %v7026 = vmul.f32 %v7005, %v7020
    %v7027 = vmul.f32 %v7006, %v7020
    %v7028 = vmul.f32 %v7007, %v7020
    %v7029 = vmul.f32 %v7008, %v7020
    %v7030 = vmul.f32 %v7009, %v7020
    %v7031 = vmul.f32 %v7010, %v7020
    %v7032 = vmul.f32 %v7011, %v7020
    %v7033 = vmul.f32 %v7012, %v7020
    %v7034 = vmul.f32 %v7013, %v7020
    %v7035 = vmul.f32 %v7014, %v7020
    %v7036 = vmul.f32 %v7015, %v7020
    %v7037 = vadd.f32 %v6984, %v7021
    %v7038 = vadd.f32 %v6985, %v7022
    %v7039 = vadd.f32 %v6986, %v7023
    %v7040 = vadd.f32 %v6987, %v7024
    %v7041 = vadd.f32 %v6988, %v7025
    %v7042 = vadd.f32 %v6989, %v7026
    %v7043 = vadd.f32 %v6990, %v7027
    %v7044 = vadd.f32 %v6991, %v7028
    %v7045 = vadd.f32 %v6992, %v7029
    %v7046 = vadd.f32 %v6993, %v7030
    %v7047 = vadd.f32 %v6994, %v7031
    %v7048 = vadd.f32 %v6995, %v7032
    %v7049 = vadd.f32 %v6996, %v7033
    %v7050 = vadd.f32 %v6997, %v7034
    %v7051 = vadd.f32 %v6998, %v7035
    %v7052 = vadd.f32 %v6999, %v7036
    %v7053 = vld [vmem:[%s6893 + $0x3] sm:$0xff]
    %v7054 = vld [vmem:[%s6893 + $0x13] sm:$0xff]
    %v7055 = vld [vmem:[%s6893 + $0x23] sm:$0xff]
    %v7056 = vld [vmem:[%s6893 + $0x33] sm:$0xff]
    %v7057 = vld [vmem:[%s6893 + $0x43] sm:$0xff]
    %v7058 = vld [vmem:[%s6893 + $0x53] sm:$0xff]
    %v7059 = vld [vmem:[%s6893 + $0x63] sm:$0xff]
    %v7060 = vld [vmem:[%s6893 + $0x73] sm:$0xff]
    %v7061 = vld [vmem:[%s6893 + $0xe3] sm:$0xff]
    %v7062 = vld [vmem:[%s6893 + $0xf3] sm:$0xff]
    %v7063 = vld [vmem:[%s6893 + $0x103] sm:$0xff]
    %v7064 = vld [vmem:[%s6893 + $0x113] sm:$0xff]
    %v7065 = vld [vmem:[%s6893 + $0x123] sm:$0xff]
    %v7066 = vld [vmem:[%s6893 + $0x133] sm:$0xff]
    %v7067 = vld [vmem:[%s6893 + $0x143] sm:$0xff]
    %v7068 = vld [vmem:[%s6893 + $0x153] sm:$0xff]
    %v7069 = vld [vmem:[%s6 + $0xa] sm:$0x1]
    %v7070 = vlaneseq
    %v7071 = vshrl.u32 %v7070, 7
    %v7072 = vsub.s32 0, %v7071
    %v7073 = vrot.slane %v7069, %v7072
    %v7074 = vmul.f32 %v7053, %v7073
    %v7075 = vmul.f32 %v7054, %v7073
    %v7076 = vmul.f32 %v7055, %v7073
    %v7077 = vmul.f32 %v7056, %v7073
    %v7078 = vmul.f32 %v7057, %v7073
    %v7079 = vmul.f32 %v7058, %v7073
    %v7080 = vmul.f32 %v7059, %v7073
    %v7081 = vmul.f32 %v7060, %v7073
    %v7082 = vmul.f32 %v7061, %v7073
    %v7083 = vmul.f32 %v7062, %v7073
    %v7084 = vmul.f32 %v7063, %v7073
    %v7085 = vmul.f32 %v7064, %v7073
    %v7086 = vmul.f32 %v7065, %v7073
    %v7087 = vmul.f32 %v7066, %v7073
    %v7088 = vmul.f32 %v7067, %v7073
    %v7089 = vmul.f32 %v7068, %v7073
    %v7090 = vadd.f32 %v7037, %v7074
    %v7091 = vadd.f32 %v7038, %v7075
    %v7092 = vadd.f32 %v7039, %v7076
    %v7093 = vadd.f32 %v7040, %v7077
    %v7094 = vadd.f32 %v7041, %v7078
    %v7095 = vadd.f32 %v7042, %v7079
    %v7096 = vadd.f32 %v7043, %v7080
    %v7097 = vadd.f32 %v7044, %v7081
    %v7098 = vadd.f32 %v7045, %v7082
    %v7099 = vadd.f32 %v7046, %v7083
    %v7100 = vadd.f32 %v7047, %v7084
    %v7101 = vadd.f32 %v7048, %v7085
    %v7102 = vadd.f32 %v7049, %v7086
    %v7103 = vadd.f32 %v7050, %v7087
    %v7104 = vadd.f32 %v7051, %v7088
    %v7105 = vadd.f32 %v7052, %v7089
    %v7106 = vld [vmem:[%s6893 + $0x4] sm:$0xff]
    %v7107 = vld [vmem:[%s6893 + $0x14] sm:$0xff]
    %v7108 = vld [vmem:[%s6893 + $0x24] sm:$0xff]
    %v7109 = vld [vmem:[%s6893 + $0x34] sm:$0xff]
    %v7110 = vld [vmem:[%s6893 + $0x44] sm:$0xff]
    %v7111 = vld [vmem:[%s6893 + $0x54] sm:$0xff]
    %v7112 = vld [vmem:[%s6893 + $0x64] sm:$0xff]
    %v7113 = vld [vmem:[%s6893 + $0x74] sm:$0xff]
    %v7114 = vld [vmem:[%s6893 + $0xe4] sm:$0xff]
    %v7115 = vld [vmem:[%s6893 + $0xf4] sm:$0xff]
    %v7116 = vld [vmem:[%s6893 + $0x104] sm:$0xff]
    %v7117 = vld [vmem:[%s6893 + $0x114] sm:$0xff]
    %v7118 = vld [vmem:[%s6893 + $0x124] sm:$0xff]
    %v7119 = vld [vmem:[%s6893 + $0x134] sm:$0xff]
    %v7120 = vld [vmem:[%s6893 + $0x144] sm:$0xff]
    %v7121 = vld [vmem:[%s6893 + $0x154] sm:$0xff]
    %v7122 = vld [vmem:[%s6 + $0xb] sm:$0x1]
    %v7123 = vlaneseq
    %v7124 = vshrl.u32 %v7123, 7
    %v7125 = vsub.s32 0, %v7124
    %v7126 = vrot.slane %v7122, %v7125
    %v7127 = vmul.f32 %v7106, %v7126
    %v7128 = vmul.f32 %v7107, %v7126
    %v7129 = vmul.f32 %v7108, %v7126
    %v7130 = vmul.f32 %v7109, %v7126
    %v7131 = vmul.f32 %v7110, %v7126
    %v7132 = vmul.f32 %v7111, %v7126
    %v7133 = vmul.f32 %v7112, %v7126
    %v7134 = vmul.f32 %v7113, %v7126
    %v7135 = vmul.f32 %v7114, %v7126
    %v7136 = vmul.f32 %v7115, %v7126
    %v7137 = vmul.f32 %v7116, %v7126
    %v7138 = vmul.f32 %v7117, %v7126
    %v7139 = vmul.f32 %v7118, %v7126
    %v7140 = vmul.f32 %v7119, %v7126
    %v7141 = vmul.f32 %v7120, %v7126
    %v7142 = vmul.f32 %v7121, %v7126
    %v7143 = vadd.f32 %v7090, %v7127
    %v7144 = vadd.f32 %v7091, %v7128
    %v7145 = vadd.f32 %v7092, %v7129
    %v7146 = vadd.f32 %v7093, %v7130
    %v7147 = vadd.f32 %v7094, %v7131
    %v7148 = vadd.f32 %v7095, %v7132
    %v7149 = vadd.f32 %v7096, %v7133
    %v7150 = vadd.f32 %v7097, %v7134
    %v7151 = vadd.f32 %v7098, %v7135
    %v7152 = vadd.f32 %v7099, %v7136
    %v7153 = vadd.f32 %v7100, %v7137
    %v7154 = vadd.f32 %v7101, %v7138
    %v7155 = vadd.f32 %v7102, %v7139
    %v7156 = vadd.f32 %v7103, %v7140
    %v7157 = vadd.f32 %v7104, %v7141
    %v7158 = vadd.f32 %v7105, %v7142
    %v7159 = vld [vmem:[%s6893 + $0x5] sm:$0xff]
    %v7160 = vld [vmem:[%s6893 + $0x15] sm:$0xff]
    %v7161 = vld [vmem:[%s6893 + $0x25] sm:$0xff]
    %v7162 = vld [vmem:[%s6893 + $0x35] sm:$0xff]
    %v7163 = vld [vmem:[%s6893 + $0x45] sm:$0xff]
    %v7164 = vld [vmem:[%s6893 + $0x55] sm:$0xff]
    %v7165 = vld [vmem:[%s6893 + $0x65] sm:$0xff]
    %v7166 = vld [vmem:[%s6893 + $0x75] sm:$0xff]
    %v7167 = vld [vmem:[%s6893 + $0xe5] sm:$0xff]
    %v7168 = vld [vmem:[%s6893 + $0xf5] sm:$0xff]
    %v7169 = vld [vmem:[%s6893 + $0x105] sm:$0xff]
    %v7170 = vld [vmem:[%s6893 + $0x115] sm:$0xff]
    %v7171 = vld [vmem:[%s6893 + $0x125] sm:$0xff]
    %v7172 = vld [vmem:[%s6893 + $0x135] sm:$0xff]
    %v7173 = vld [vmem:[%s6893 + $0x145] sm:$0xff]
    %v7174 = vld [vmem:[%s6893 + $0x155] sm:$0xff]
    %v7175 = vld [vmem:[%s6 + $0xc] sm:$0x1]
    %v7176 = vlaneseq
    %v7177 = vshrl.u32 %v7176, 7
    %v7178 = vsub.s32 0, %v7177
    %v7179 = vrot.slane %v7175, %v7178
    %v7180 = vmul.f32 %v7159, %v7179
    %v7181 = vmul.f32 %v7160, %v7179
    %v7182 = vmul.f32 %v7161, %v7179
    %v7183 = vmul.f32 %v7162, %v7179
    %v7184 = vmul.f32 %v7163, %v7179
    %v7185 = vmul.f32 %v7164, %v7179
    %v7186 = vmul.f32 %v7165, %v7179
    %v7187 = vmul.f32 %v7166, %v7179
    %v7188 = vmul.f32 %v7167, %v7179
    %v7189 = vmul.f32 %v7168, %v7179
    %v7190 = vmul.f32 %v7169, %v7179
    %v7191 = vmul.f32 %v7170, %v7179
    %v7192 = vmul.f32 %v7171, %v7179
    %v7193 = vmul.f32 %v7172, %v7179
    %v7194 = vmul.f32 %v7173, %v7179
    %v7195 = vmul.f32 %v7174, %v7179
    %v7196 = vadd.f32 %v7143, %v7180
    %v7197 = vadd.f32 %v7144, %v7181
    %v7198 = vadd.f32 %v7145, %v7182
    %v7199 = vadd.f32 %v7146, %v7183
    %v7200 = vadd.f32 %v7147, %v7184
    %v7201 = vadd.f32 %v7148, %v7185
    %v7202 = vadd.f32 %v7149, %v7186
    %v7203 = vadd.f32 %v7150, %v7187
    %v7204 = vadd.f32 %v7151, %v7188
    %v7205 = vadd.f32 %v7152, %v7189
    %v7206 = vadd.f32 %v7153, %v7190
    %v7207 = vadd.f32 %v7154, %v7191
    %v7208 = vadd.f32 %v7155, %v7192
    %v7209 = vadd.f32 %v7156, %v7193
    %v7210 = vadd.f32 %v7157, %v7194
    %v7211 = vadd.f32 %v7158, %v7195
    %v7212 = vld [vmem:[%s6893 + $0x6] sm:$0xff]
    %v7213 = vld [vmem:[%s6893 + $0x16] sm:$0xff]
    %v7214 = vld [vmem:[%s6893 + $0x26] sm:$0xff]
    %v7215 = vld [vmem:[%s6893 + $0x36] sm:$0xff]
    %v7216 = vld [vmem:[%s6893 + $0x46] sm:$0xff]
    %v7217 = vld [vmem:[%s6893 + $0x56] sm:$0xff]
    %v7218 = vld [vmem:[%s6893 + $0x66] sm:$0xff]
    %v7219 = vld [vmem:[%s6893 + $0x76] sm:$0xff]
    %v7220 = vld [vmem:[%s6893 + $0xe6] sm:$0xff]
    %v7221 = vld [vmem:[%s6893 + $0xf6] sm:$0xff]
    %v7222 = vld [vmem:[%s6893 + $0x106] sm:$0xff]
    %v7223 = vld [vmem:[%s6893 + $0x116] sm:$0xff]
    %v7224 = vld [vmem:[%s6893 + $0x126] sm:$0xff]
    %v7225 = vld [vmem:[%s6893 + $0x136] sm:$0xff]
    %v7226 = vld [vmem:[%s6893 + $0x146] sm:$0xff]
    %v7227 = vld [vmem:[%s6893 + $0x156] sm:$0xff]
    %v7228 = vld [vmem:[%s6 + $0xd] sm:$0x1]
    %v7229 = vlaneseq
    %v7230 = vshrl.u32 %v7229, 7
    %v7231 = vsub.s32 0, %v7230
    %v7232 = vrot.slane %v7228, %v7231
    %v7233 = vmul.f32 %v7212, %v7232
    %v7234 = vmul.f32 %v7213, %v7232
    %v7235 = vmul.f32 %v7214, %v7232
    %v7236 = vmul.f32 %v7215, %v7232
    %v7237 = vmul.f32 %v7216, %v7232
    %v7238 = vmul.f32 %v7217, %v7232
    %v7239 = vmul.f32 %v7218, %v7232
    %v7240 = vmul.f32 %v7219, %v7232
    %v7241 = vmul.f32 %v7220, %v7232
    %v7242 = vmul.f32 %v7221, %v7232
    %v7243 = vmul.f32 %v7222, %v7232
    %v7244 = vmul.f32 %v7223, %v7232
    %v7245 = vmul.f32 %v7224, %v7232
    %v7246 = vmul.f32 %v7225, %v7232
    %v7247 = vmul.f32 %v7226, %v7232
    %v7248 = vmul.f32 %v7227, %v7232
    %v7249 = vadd.f32 %v7196, %v7233
    %v7250 = vadd.f32 %v7197, %v7234
    %v7251 = vadd.f32 %v7198, %v7235
    %v7252 = vadd.f32 %v7199, %v7236
    %v7253 = vadd.f32 %v7200, %v7237
    %v7254 = vadd.f32 %v7201, %v7238
    %v7255 = vadd.f32 %v7202, %v7239
    %v7256 = vadd.f32 %v7203, %v7240
    %v7257 = vadd.f32 %v7204, %v7241
    %v7258 = vadd.f32 %v7205, %v7242
    %v7259 = vadd.f32 %v7206, %v7243
    %v7260 = vadd.f32 %v7207, %v7244
    %v7261 = vadd.f32 %v7208, %v7245
    %v7262 = vadd.f32 %v7209, %v7246
    %v7263 = vadd.f32 %v7210, %v7247
    %v7264 = vadd.f32 %v7211, %v7248
    %s7265 = scalar_lea.vmem [#allocation4], 32
    %v7266 = vld [vmem:[%s7265] sm:$0xff]
    %v7267 = vld [vmem:[%s7265 + $0x10] sm:$0xff]
    %v7268 = vld [vmem:[%s7265 + $0x20] sm:$0xff]
    %v7269 = vld [vmem:[%s7265 + $0x30] sm:$0xff]
    %v7270 = vld [vmem:[%s7265 + $0x40] sm:$0xff]
    %v7271 = vld [vmem:[%s7265 + $0x50] sm:$0xff]
    %v7272 = vld [vmem:[%s7265 + $0x60] sm:$0xff]
    %v7273 = vld [vmem:[%s7265 + $0x70] sm:$0xff]
    %v7274 = vld [vmem:[%s7265 + $0xe0] sm:$0xff]
    %v7275 = vld [vmem:[%s7265 + $0xf0] sm:$0xff]
    %v7276 = vld [vmem:[%s7265 + $0x100] sm:$0xff]
    %v7277 = vld [vmem:[%s7265 + $0x110] sm:$0xff]
    %v7278 = vld [vmem:[%s7265 + $0x120] sm:$0xff]
    %v7279 = vld [vmem:[%s7265 + $0x130] sm:$0xff]
    %v7280 = vld [vmem:[%s7265 + $0x140] sm:$0xff]
    %v7281 = vld [vmem:[%s7265 + $0x150] sm:$0xff]
    %v7282 = vld [vmem:[%s6 + $0xe] sm:$0x1]
    %v7283 = vlaneseq
    %v7284 = vshrl.u32 %v7283, 7
    %v7285 = vsub.s32 0, %v7284
    %v7286 = vrot.slane %v7282, %v7285
    %v7287 = vmul.f32 %v7266, %v7286
    %v7288 = vmul.f32 %v7267, %v7286
    %v7289 = vmul.f32 %v7268, %v7286
    %v7290 = vmul.f32 %v7269, %v7286
    %v7291 = vmul.f32 %v7270, %v7286
    %v7292 = vmul.f32 %v7271, %v7286
    %v7293 = vmul.f32 %v7272, %v7286
    %v7294 = vmul.f32 %v7273, %v7286
    %v7295 = vmul.f32 %v7274, %v7286
    %v7296 = vmul.f32 %v7275, %v7286
    %v7297 = vmul.f32 %v7276, %v7286
    %v7298 = vmul.f32 %v7277, %v7286
    %v7299 = vmul.f32 %v7278, %v7286
    %v7300 = vmul.f32 %v7279, %v7286
    %v7301 = vmul.f32 %v7280, %v7286
    %v7302 = vmul.f32 %v7281, %v7286
    %v7303 = vadd.f32 %v7249, %v7287
    %v7304 = vadd.f32 %v7250, %v7288
    %v7305 = vadd.f32 %v7251, %v7289
    %v7306 = vadd.f32 %v7252, %v7290
    %v7307 = vadd.f32 %v7253, %v7291
    %v7308 = vadd.f32 %v7254, %v7292
    %v7309 = vadd.f32 %v7255, %v7293
    %v7310 = vadd.f32 %v7256, %v7294
    %v7311 = vadd.f32 %v7257, %v7295
    %v7312 = vadd.f32 %v7258, %v7296
    %v7313 = vadd.f32 %v7259, %v7297
    %v7314 = vadd.f32 %v7260, %v7298
    %v7315 = vadd.f32 %v7261, %v7299
    %v7316 = vadd.f32 %v7262, %v7300
    %v7317 = vadd.f32 %v7263, %v7301
    %v7318 = vadd.f32 %v7264, %v7302
    %v7319 = vld [vmem:[%s7265 + $0x1] sm:$0xff]
    %v7320 = vld [vmem:[%s7265 + $0x11] sm:$0xff]
    %v7321 = vld [vmem:[%s7265 + $0x21] sm:$0xff]
    %v7322 = vld [vmem:[%s7265 + $0x31] sm:$0xff]
    %v7323 = vld [vmem:[%s7265 + $0x41] sm:$0xff]
    %v7324 = vld [vmem:[%s7265 + $0x51] sm:$0xff]
    %v7325 = vld [vmem:[%s7265 + $0x61] sm:$0xff]
    %v7326 = vld [vmem:[%s7265 + $0x71] sm:$0xff]
    %v7327 = vld [vmem:[%s7265 + $0xe1] sm:$0xff]
    %v7328 = vld [vmem:[%s7265 + $0xf1] sm:$0xff]
    %v7329 = vld [vmem:[%s7265 + $0x101] sm:$0xff]
    %v7330 = vld [vmem:[%s7265 + $0x111] sm:$0xff]
    %v7331 = vld [vmem:[%s7265 + $0x121] sm:$0xff]
    %v7332 = vld [vmem:[%s7265 + $0x131] sm:$0xff]
    %v7333 = vld [vmem:[%s7265 + $0x141] sm:$0xff]
    %v7334 = vld [vmem:[%s7265 + $0x151] sm:$0xff]
    %v7335 = vld [vmem:[%s6 + $0xf] sm:$0x1]
    %v7336 = vlaneseq
    %v7337 = vshrl.u32 %v7336, 7
    %v7338 = vsub.s32 0, %v7337
    %v7339 = vrot.slane %v7335, %v7338
    %v7340 = vmul.f32 %v7319, %v7339
    %v7341 = vmul.f32 %v7320, %v7339
    %v7342 = vmul.f32 %v7321, %v7339
    %v7343 = vmul.f32 %v7322, %v7339
    %v7344 = vmul.f32 %v7323, %v7339
    %v7345 = vmul.f32 %v7324, %v7339
    %v7346 = vmul.f32 %v7325, %v7339
    %v7347 = vmul.f32 %v7326, %v7339
    %v7348 = vmul.f32 %v7327, %v7339
    %v7349 = vmul.f32 %v7328, %v7339
    %v7350 = vmul.f32 %v7329, %v7339
    %v7351 = vmul.f32 %v7330, %v7339
    %v7352 = vmul.f32 %v7331, %v7339
    %v7353 = vmul.f32 %v7332, %v7339
    %v7354 = vmul.f32 %v7333, %v7339
    %v7355 = vmul.f32 %v7334, %v7339
    %v7356 = vadd.f32 %v7303, %v7340
    %v7357 = vadd.f32 %v7304, %v7341
    %v7358 = vadd.f32 %v7305, %v7342
    %v7359 = vadd.f32 %v7306, %v7343
    %v7360 = vadd.f32 %v7307, %v7344
    %v7361 = vadd.f32 %v7308, %v7345
    %v7362 = vadd.f32 %v7309, %v7346
    %v7363 = vadd.f32 %v7310, %v7347
    %v7364 = vadd.f32 %v7311, %v7348
    %v7365 = vadd.f32 %v7312, %v7349
    %v7366 = vadd.f32 %v7313, %v7350
    %v7367 = vadd.f32 %v7314, %v7351
    %v7368 = vadd.f32 %v7315, %v7352
    %v7369 = vadd.f32 %v7316, %v7353
    %v7370 = vadd.f32 %v7317, %v7354
    %v7371 = vadd.f32 %v7318, %v7355
    %v7372 = vld [vmem:[%s7265 + $0x2] sm:$0xff]
    %v7373 = vld [vmem:[%s7265 + $0x12] sm:$0xff]
    %v7374 = vld [vmem:[%s7265 + $0x22] sm:$0xff]
    %v7375 = vld [vmem:[%s7265 + $0x32] sm:$0xff]
    %v7376 = vld [vmem:[%s7265 + $0x42] sm:$0xff]
    %v7377 = vld [vmem:[%s7265 + $0x52] sm:$0xff]
    %v7378 = vld [vmem:[%s7265 + $0x62] sm:$0xff]
    %v7379 = vld [vmem:[%s7265 + $0x72] sm:$0xff]
    %v7380 = vld [vmem:[%s7265 + $0xe2] sm:$0xff]
    %v7381 = vld [vmem:[%s7265 + $0xf2] sm:$0xff]
    %v7382 = vld [vmem:[%s7265 + $0x102] sm:$0xff]
    %v7383 = vld [vmem:[%s7265 + $0x112] sm:$0xff]
    %v7384 = vld [vmem:[%s7265 + $0x122] sm:$0xff]
    %v7385 = vld [vmem:[%s7265 + $0x132] sm:$0xff]
    %v7386 = vld [vmem:[%s7265 + $0x142] sm:$0xff]
    %v7387 = vld [vmem:[%s7265 + $0x152] sm:$0xff]
    %v7388 = vld [vmem:[%s6 + $0x10] sm:$0x1]
    %v7389 = vlaneseq
    %v7390 = vshrl.u32 %v7389, 7
    %v7391 = vsub.s32 0, %v7390
    %v7392 = vrot.slane %v7388, %v7391
    %v7393 = vmul.f32 %v7372, %v7392
    %v7394 = vmul.f32 %v7373, %v7392
    %v7395 = vmul.f32 %v7374, %v7392
    %v7396 = vmul.f32 %v7375, %v7392
    %v7397 = vmul.f32 %v7376, %v7392
    %v7398 = vmul.f32 %v7377, %v7392
    %v7399 = vmul.f32 %v7378, %v7392
    %v7400 = vmul.f32 %v7379, %v7392
    %v7401 = vmul.f32 %v7380, %v7392
    %v7402 = vmul.f32 %v7381, %v7392
    %v7403 = vmul.f32 %v7382, %v7392
    %v7404 = vmul.f32 %v7383, %v7392
    %v7405 = vmul.f32 %v7384, %v7392
    %v7406 = vmul.f32 %v7385, %v7392
    %v7407 = vmul.f32 %v7386, %v7392
    %v7408 = vmul.f32 %v7387, %v7392
    %v7409 = vadd.f32 %v7356, %v7393
    %v7410 = vadd.f32 %v7357, %v7394
    %v7411 = vadd.f32 %v7358, %v7395
    %v7412 = vadd.f32 %v7359, %v7396
    %v7413 = vadd.f32 %v7360, %v7397
    %v7414 = vadd.f32 %v7361, %v7398
    %v7415 = vadd.f32 %v7362, %v7399
    %v7416 = vadd.f32 %v7363, %v7400
    %v7417 = vadd.f32 %v7364, %v7401
    %v7418 = vadd.f32 %v7365, %v7402
    %v7419 = vadd.f32 %v7366, %v7403
    %v7420 = vadd.f32 %v7367, %v7404
    %v7421 = vadd.f32 %v7368, %v7405
    %v7422 = vadd.f32 %v7369, %v7406
    %v7423 = vadd.f32 %v7370, %v7407
    %v7424 = vadd.f32 %v7371, %v7408
    %v7425 = vld [vmem:[%s7265 + $0x3] sm:$0xff]
    %v7426 = vld [vmem:[%s7265 + $0x13] sm:$0xff]
    %v7427 = vld [vmem:[%s7265 + $0x23] sm:$0xff]
    %v7428 = vld [vmem:[%s7265 + $0x33] sm:$0xff]
    %v7429 = vld [vmem:[%s7265 + $0x43] sm:$0xff]
    %v7430 = vld [vmem:[%s7265 + $0x53] sm:$0xff]
    %v7431 = vld [vmem:[%s7265 + $0x63] sm:$0xff]
    %v7432 = vld [vmem:[%s7265 + $0x73] sm:$0xff]
    %v7433 = vld [vmem:[%s7265 + $0xe3] sm:$0xff]
    %v7434 = vld [vmem:[%s7265 + $0xf3] sm:$0xff]
    %v7435 = vld [vmem:[%s7265 + $0x103] sm:$0xff]
    %v7436 = vld [vmem:[%s7265 + $0x113] sm:$0xff]
    %v7437 = vld [vmem:[%s7265 + $0x123] sm:$0xff]
    %v7438 = vld [vmem:[%s7265 + $0x133] sm:$0xff]
    %v7439 = vld [vmem:[%s7265 + $0x143] sm:$0xff]
    %v7440 = vld [vmem:[%s7265 + $0x153] sm:$0xff]
    %v7441 = vld [vmem:[%s6 + $0x11] sm:$0x1]
    %v7442 = vlaneseq
    %v7443 = vshrl.u32 %v7442, 7
    %v7444 = vsub.s32 0, %v7443
    %v7445 = vrot.slane %v7441, %v7444
    %v7446 = vmul.f32 %v7425, %v7445
    %v7447 = vmul.f32 %v7426, %v7445
    %v7448 = vmul.f32 %v7427, %v7445
    %v7449 = vmul.f32 %v7428, %v7445
    %v7450 = vmul.f32 %v7429, %v7445
    %v7451 = vmul.f32 %v7430, %v7445
    %v7452 = vmul.f32 %v7431, %v7445
    %v7453 = vmul.f32 %v7432, %v7445
    %v7454 = vmul.f32 %v7433, %v7445
    %v7455 = vmul.f32 %v7434, %v7445
    %v7456 = vmul.f32 %v7435, %v7445
    %v7457 = vmul.f32 %v7436, %v7445
    %v7458 = vmul.f32 %v7437, %v7445
    %v7459 = vmul.f32 %v7438, %v7445
    %v7460 = vmul.f32 %v7439, %v7445
    %v7461 = vmul.f32 %v7440, %v7445
    %v7462 = vadd.f32 %v7409, %v7446
    %v7463 = vadd.f32 %v7410, %v7447
    %v7464 = vadd.f32 %v7411, %v7448
    %v7465 = vadd.f32 %v7412, %v7449
    %v7466 = vadd.f32 %v7413, %v7450
    %v7467 = vadd.f32 %v7414, %v7451
    %v7468 = vadd.f32 %v7415, %v7452
    %v7469 = vadd.f32 %v7416, %v7453
    %v7470 = vadd.f32 %v7417, %v7454
    %v7471 = vadd.f32 %v7418, %v7455
    %v7472 = vadd.f32 %v7419, %v7456
    %v7473 = vadd.f32 %v7420, %v7457
    %v7474 = vadd.f32 %v7421, %v7458
    %v7475 = vadd.f32 %v7422, %v7459
    %v7476 = vadd.f32 %v7423, %v7460
    %v7477 = vadd.f32 %v7424, %v7461
    %v7478 = vld [vmem:[%s7265 + $0x4] sm:$0xff]
    %v7479 = vld [vmem:[%s7265 + $0x14] sm:$0xff]
    %v7480 = vld [vmem:[%s7265 + $0x24] sm:$0xff]
    %v7481 = vld [vmem:[%s7265 + $0x34] sm:$0xff]
    %v7482 = vld [vmem:[%s7265 + $0x44] sm:$0xff]
    %v7483 = vld [vmem:[%s7265 + $0x54] sm:$0xff]
    %v7484 = vld [vmem:[%s7265 + $0x64] sm:$0xff]
    %v7485 = vld [vmem:[%s7265 + $0x74] sm:$0xff]
    %v7486 = vld [vmem:[%s7265 + $0xe4] sm:$0xff]
    %v7487 = vld [vmem:[%s7265 + $0xf4] sm:$0xff]
    %v7488 = vld [vmem:[%s7265 + $0x104] sm:$0xff]
    %v7489 = vld [vmem:[%s7265 + $0x114] sm:$0xff]
    %v7490 = vld [vmem:[%s7265 + $0x124] sm:$0xff]
    %v7491 = vld [vmem:[%s7265 + $0x134] sm:$0xff]
    %v7492 = vld [vmem:[%s7265 + $0x144] sm:$0xff]
    %v7493 = vld [vmem:[%s7265 + $0x154] sm:$0xff]
    %v7494 = vld [vmem:[%s6 + $0x12] sm:$0x1]
    %v7495 = vlaneseq
    %v7496 = vshrl.u32 %v7495, 7
    %v7497 = vsub.s32 0, %v7496
    %v7498 = vrot.slane %v7494, %v7497
    %v7499 = vmul.f32 %v7478, %v7498
    %v7500 = vmul.f32 %v7479, %v7498
    %v7501 = vmul.f32 %v7480, %v7498
    %v7502 = vmul.f32 %v7481, %v7498
    %v7503 = vmul.f32 %v7482, %v7498
    %v7504 = vmul.f32 %v7483, %v7498
    %v7505 = vmul.f32 %v7484, %v7498
    %v7506 = vmul.f32 %v7485, %v7498
    %v7507 = vmul.f32 %v7486, %v7498
    %v7508 = vmul.f32 %v7487, %v7498
    %v7509 = vmul.f32 %v7488, %v7498
    %v7510 = vmul.f32 %v7489, %v7498
    %v7511 = vmul.f32 %v7490, %v7498
    %v7512 = vmul.f32 %v7491, %v7498
    %v7513 = vmul.f32 %v7492, %v7498
    %v7514 = vmul.f32 %v7493, %v7498
    %v7515 = vadd.f32 %v7462, %v7499
    %v7516 = vadd.f32 %v7463, %v7500
    %v7517 = vadd.f32 %v7464, %v7501
    %v7518 = vadd.f32 %v7465, %v7502
    %v7519 = vadd.f32 %v7466, %v7503
    %v7520 = vadd.f32 %v7467, %v7504
    %v7521 = vadd.f32 %v7468, %v7505
    %v7522 = vadd.f32 %v7469, %v7506
    %v7523 = vadd.f32 %v7470, %v7507
    %v7524 = vadd.f32 %v7471, %v7508
    %v7525 = vadd.f32 %v7472, %v7509
    %v7526 = vadd.f32 %v7473, %v7510
    %v7527 = vadd.f32 %v7474, %v7511
    %v7528 = vadd.f32 %v7475, %v7512
    %v7529 = vadd.f32 %v7476, %v7513
    %v7530 = vadd.f32 %v7477, %v7514
    %v7531 = vld [vmem:[%s7265 + $0x5] sm:$0xff]
    %v7532 = vld [vmem:[%s7265 + $0x15] sm:$0xff]
    %v7533 = vld [vmem:[%s7265 + $0x25] sm:$0xff]
    %v7534 = vld [vmem:[%s7265 + $0x35] sm:$0xff]
    %v7535 = vld [vmem:[%s7265 + $0x45] sm:$0xff]
    %v7536 = vld [vmem:[%s7265 + $0x55] sm:$0xff]
    %v7537 = vld [vmem:[%s7265 + $0x65] sm:$0xff]
    %v7538 = vld [vmem:[%s7265 + $0x75] sm:$0xff]
    %v7539 = vld [vmem:[%s7265 + $0xe5] sm:$0xff]
    %v7540 = vld [vmem:[%s7265 + $0xf5] sm:$0xff]
    %v7541 = vld [vmem:[%s7265 + $0x105] sm:$0xff]
    %v7542 = vld [vmem:[%s7265 + $0x115] sm:$0xff]
    %v7543 = vld [vmem:[%s7265 + $0x125] sm:$0xff]
    %v7544 = vld [vmem:[%s7265 + $0x135] sm:$0xff]
    %v7545 = vld [vmem:[%s7265 + $0x145] sm:$0xff]
    %v7546 = vld [vmem:[%s7265 + $0x155] sm:$0xff]
    %v7547 = vld [vmem:[%s6 + $0x13] sm:$0x1]
    %v7548 = vlaneseq
    %v7549 = vshrl.u32 %v7548, 7
    %v7550 = vsub.s32 0, %v7549
    %v7551 = vrot.slane %v7547, %v7550
    %v7552 = vmul.f32 %v7531, %v7551
    %v7553 = vmul.f32 %v7532, %v7551
    %v7554 = vmul.f32 %v7533, %v7551
    %v7555 = vmul.f32 %v7534, %v7551
    %v7556 = vmul.f32 %v7535, %v7551
    %v7557 = vmul.f32 %v7536, %v7551
    %v7558 = vmul.f32 %v7537, %v7551
    %v7559 = vmul.f32 %v7538, %v7551
    %v7560 = vmul.f32 %v7539, %v7551
    %v7561 = vmul.f32 %v7540, %v7551
    %v7562 = vmul.f32 %v7541, %v7551
    %v7563 = vmul.f32 %v7542, %v7551
    %v7564 = vmul.f32 %v7543, %v7551
    %v7565 = vmul.f32 %v7544, %v7551
    %v7566 = vmul.f32 %v7545, %v7551
    %v7567 = vmul.f32 %v7546, %v7551
    %v7568 = vadd.f32 %v7515, %v7552
    %v7569 = vadd.f32 %v7516, %v7553
    %v7570 = vadd.f32 %v7517, %v7554
    %v7571 = vadd.f32 %v7518, %v7555
    %v7572 = vadd.f32 %v7519, %v7556
    %v7573 = vadd.f32 %v7520, %v7557
    %v7574 = vadd.f32 %v7521, %v7558
    %v7575 = vadd.f32 %v7522, %v7559
    %v7576 = vadd.f32 %v7523, %v7560
    %v7577 = vadd.f32 %v7524, %v7561
    %v7578 = vadd.f32 %v7525, %v7562
    %v7579 = vadd.f32 %v7526, %v7563
    %v7580 = vadd.f32 %v7527, %v7564
    %v7581 = vadd.f32 %v7528, %v7565
    %v7582 = vadd.f32 %v7529, %v7566
    %v7583 = vadd.f32 %v7530, %v7567
    %v7584 = vld [vmem:[%s7265 + $0x6] sm:$0xff]
    %v7585 = vld [vmem:[%s7265 + $0x16] sm:$0xff]
    %v7586 = vld [vmem:[%s7265 + $0x26] sm:$0xff]
    %v7587 = vld [vmem:[%s7265 + $0x36] sm:$0xff]
    %v7588 = vld [vmem:[%s7265 + $0x46] sm:$0xff]
    %v7589 = vld [vmem:[%s7265 + $0x56] sm:$0xff]
    %v7590 = vld [vmem:[%s7265 + $0x66] sm:$0xff]
    %v7591 = vld [vmem:[%s7265 + $0x76] sm:$0xff]
    %v7592 = vld [vmem:[%s7265 + $0xe6] sm:$0xff]
    %v7593 = vld [vmem:[%s7265 + $0xf6] sm:$0xff]
    %v7594 = vld [vmem:[%s7265 + $0x106] sm:$0xff]
    %v7595 = vld [vmem:[%s7265 + $0x116] sm:$0xff]
    %v7596 = vld [vmem:[%s7265 + $0x126] sm:$0xff]
    %v7597 = vld [vmem:[%s7265 + $0x136] sm:$0xff]
    %v7598 = vld [vmem:[%s7265 + $0x146] sm:$0xff]
    %v7599 = vld [vmem:[%s7265 + $0x156] sm:$0xff]
    %v7600 = vld [vmem:[%s6 + $0x14] sm:$0x1]
    %v7601 = vlaneseq
    %v7602 = vshrl.u32 %v7601, 7
    %v7603 = vsub.s32 0, %v7602
    %v7604 = vrot.slane %v7600, %v7603
    %v7605 = vmul.f32 %v7584, %v7604
    %v7606 = vmul.f32 %v7585, %v7604
    %v7607 = vmul.f32 %v7586, %v7604
    %v7608 = vmul.f32 %v7587, %v7604
    %v7609 = vmul.f32 %v7588, %v7604
    %v7610 = vmul.f32 %v7589, %v7604
    %v7611 = vmul.f32 %v7590, %v7604
    %v7612 = vmul.f32 %v7591, %v7604
    %v7613 = vmul.f32 %v7592, %v7604
    %v7614 = vmul.f32 %v7593, %v7604
    %v7615 = vmul.f32 %v7594, %v7604
    %v7616 = vmul.f32 %v7595, %v7604
    %v7617 = vmul.f32 %v7596, %v7604
    %v7618 = vmul.f32 %v7597, %v7604
    %v7619 = vmul.f32 %v7598, %v7604
    %v7620 = vmul.f32 %v7599, %v7604
    %v7621 = vadd.f32 %v7568, %v7605
    %v7622 = vadd.f32 %v7569, %v7606
    %v7623 = vadd.f32 %v7570, %v7607
    %v7624 = vadd.f32 %v7571, %v7608
    %v7625 = vadd.f32 %v7572, %v7609
    %v7626 = vadd.f32 %v7573, %v7610
    %v7627 = vadd.f32 %v7574, %v7611
    %v7628 = vadd.f32 %v7575, %v7612
    %v7629 = vadd.f32 %v7576, %v7613
    %v7630 = vadd.f32 %v7577, %v7614
    %v7631 = vadd.f32 %v7578, %v7615
    %v7632 = vadd.f32 %v7579, %v7616
    %v7633 = vadd.f32 %v7580, %v7617
    %v7634 = vadd.f32 %v7581, %v7618
    %v7635 = vadd.f32 %v7582, %v7619
    %v7636 = vadd.f32 %v7583, %v7620
    %v7637 = vld [vmem:[%s6505] sm:$0xff]
    %v7638 = vld [vmem:[%s6505 + $0x10] sm:$0xff]
    %v7639 = vld [vmem:[%s6505 + $0x20] sm:$0xff]
    %v7640 = vld [vmem:[%s6505 + $0x30] sm:$0xff]
    %v7641 = vld [vmem:[%s6505 + $0x40] sm:$0xff]
    %v7642 = vld [vmem:[%s6505 + $0x50] sm:$0xff]
    %v7643 = vld [vmem:[%s6505 + $0x60] sm:$0xff]
    %v7644 = vld [vmem:[%s6505 + $0x70] sm:$0xff]
    %v7645 = vld [vmem:[%s6505 + $0xe0] sm:$0xff]
    %v7646 = vld [vmem:[%s6505 + $0xf0] sm:$0xff]
    %v7647 = vld [vmem:[%s6505 + $0x100] sm:$0xff]
    %v7648 = vld [vmem:[%s6505 + $0x110] sm:$0xff]
    %v7649 = vld [vmem:[%s6505 + $0x120] sm:$0xff]
    %v7650 = vld [vmem:[%s6505 + $0x130] sm:$0xff]
    %v7651 = vld [vmem:[%s6505 + $0x140] sm:$0xff]
    %v7652 = vld [vmem:[%s6505 + $0x150] sm:$0xff]
    %v7653 = vld [vmem:[%s6 + $0x15] sm:$0x1]
    %v7654 = vlaneseq
    %v7655 = vshrl.u32 %v7654, 7
    %v7656 = vsub.s32 0, %v7655
    %v7657 = vrot.slane %v7653, %v7656
    %v7658 = vmul.f32 %v7637, %v7657
    %v7659 = vmul.f32 %v7638, %v7657
    %v7660 = vmul.f32 %v7639, %v7657
    %v7661 = vmul.f32 %v7640, %v7657
    %v7662 = vmul.f32 %v7641, %v7657
    %v7663 = vmul.f32 %v7642, %v7657
    %v7664 = vmul.f32 %v7643, %v7657
    %v7665 = vmul.f32 %v7644, %v7657
    %v7666 = vmul.f32 %v7645, %v7657
    %v7667 = vmul.f32 %v7646, %v7657
    %v7668 = vmul.f32 %v7647, %v7657
    %v7669 = vmul.f32 %v7648, %v7657
    %v7670 = vmul.f32 %v7649, %v7657
    %v7671 = vmul.f32 %v7650, %v7657
    %v7672 = vmul.f32 %v7651, %v7657
    %v7673 = vmul.f32 %v7652, %v7657
    %v7674 = vadd.f32 %v7621, %v7658
    %v7675 = vadd.f32 %v7622, %v7659
    %v7676 = vadd.f32 %v7623, %v7660
    %v7677 = vadd.f32 %v7624, %v7661
    %v7678 = vadd.f32 %v7625, %v7662
    %v7679 = vadd.f32 %v7626, %v7663
    %v7680 = vadd.f32 %v7627, %v7664
    %v7681 = vadd.f32 %v7628, %v7665
    %v7682 = vadd.f32 %v7629, %v7666
    %v7683 = vadd.f32 %v7630, %v7667
    %v7684 = vadd.f32 %v7631, %v7668
    %v7685 = vadd.f32 %v7632, %v7669
    %v7686 = vadd.f32 %v7633, %v7670
    %v7687 = vadd.f32 %v7634, %v7671
    %v7688 = vadd.f32 %v7635, %v7672
    %v7689 = vadd.f32 %v7636, %v7673
    %v7690 = vld [vmem:[%s6505 + $0x1] sm:$0xff]
    %v7691 = vld [vmem:[%s6505 + $0x11] sm:$0xff]
    %v7692 = vld [vmem:[%s6505 + $0x21] sm:$0xff]
    %v7693 = vld [vmem:[%s6505 + $0x31] sm:$0xff]
    %v7694 = vld [vmem:[%s6505 + $0x41] sm:$0xff]
    %v7695 = vld [vmem:[%s6505 + $0x51] sm:$0xff]
    %v7696 = vld [vmem:[%s6505 + $0x61] sm:$0xff]
    %v7697 = vld [vmem:[%s6505 + $0x71] sm:$0xff]
    %v7698 = vld [vmem:[%s6505 + $0xe1] sm:$0xff]
    %v7699 = vld [vmem:[%s6505 + $0xf1] sm:$0xff]
    %v7700 = vld [vmem:[%s6505 + $0x101] sm:$0xff]
    %v7701 = vld [vmem:[%s6505 + $0x111] sm:$0xff]
    %v7702 = vld [vmem:[%s6505 + $0x121] sm:$0xff]
    %v7703 = vld [vmem:[%s6505 + $0x131] sm:$0xff]
    %v7704 = vld [vmem:[%s6505 + $0x141] sm:$0xff]
    %v7705 = vld [vmem:[%s6505 + $0x151] sm:$0xff]
    %v7706 = vld [vmem:[%s6 + $0x16] sm:$0x1]
    %v7707 = vlaneseq
    %v7708 = vshrl.u32 %v7707, 7
    %v7709 = vsub.s32 0, %v7708
    %v7710 = vrot.slane %v7706, %v7709
    %v7711 = vmul.f32 %v7690, %v7710
    %v7712 = vmul.f32 %v7691, %v7710
    %v7713 = vmul.f32 %v7692, %v7710
    %v7714 = vmul.f32 %v7693, %v7710
    %v7715 = vmul.f32 %v7694, %v7710
    %v7716 = vmul.f32 %v7695, %v7710
    %v7717 = vmul.f32 %v7696, %v7710
    %v7718 = vmul.f32 %v7697, %v7710
    %v7719 = vmul.f32 %v7698, %v7710
    %v7720 = vmul.f32 %v7699, %v7710
    %v7721 = vmul.f32 %v7700, %v7710
    %v7722 = vmul.f32 %v7701, %v7710
    %v7723 = vmul.f32 %v7702, %v7710
    %v7724 = vmul.f32 %v7703, %v7710
    %v7725 = vmul.f32 %v7704, %v7710
    %v7726 = vmul.f32 %v7705, %v7710
    %v7727 = vadd.f32 %v7674, %v7711
    %v7728 = vadd.f32 %v7675, %v7712
    %v7729 = vadd.f32 %v7676, %v7713
    %v7730 = vadd.f32 %v7677, %v7714
    %v7731 = vadd.f32 %v7678, %v7715
    %v7732 = vadd.f32 %v7679, %v7716
    %v7733 = vadd.f32 %v7680, %v7717
    %v7734 = vadd.f32 %v7681, %v7718
    %v7735 = vadd.f32 %v7682, %v7719
    %v7736 = vadd.f32 %v7683, %v7720
    %v7737 = vadd.f32 %v7684, %v7721
    %v7738 = vadd.f32 %v7685, %v7722
    %v7739 = vadd.f32 %v7686, %v7723
    %v7740 = vadd.f32 %v7687, %v7724
    %v7741 = vadd.f32 %v7688, %v7725
    %v7742 = vadd.f32 %v7689, %v7726
    %v7743 = vld [vmem:[%s6505 + $0x2] sm:$0xff]
    %v7744 = vld [vmem:[%s6505 + $0x12] sm:$0xff]
    %v7745 = vld [vmem:[%s6505 + $0x22] sm:$0xff]
    %v7746 = vld [vmem:[%s6505 + $0x32] sm:$0xff]
    %v7747 = vld [vmem:[%s6505 + $0x42] sm:$0xff]
    %v7748 = vld [vmem:[%s6505 + $0x52] sm:$0xff]
    %v7749 = vld [vmem:[%s6505 + $0x62] sm:$0xff]
    %v7750 = vld [vmem:[%s6505 + $0x72] sm:$0xff]
    %v7751 = vld [vmem:[%s6505 + $0xe2] sm:$0xff]
    %v7752 = vld [vmem:[%s6505 + $0xf2] sm:$0xff]
    %v7753 = vld [vmem:[%s6505 + $0x102] sm:$0xff]
    %v7754 = vld [vmem:[%s6505 + $0x112] sm:$0xff]
    %v7755 = vld [vmem:[%s6505 + $0x122] sm:$0xff]
    %v7756 = vld [vmem:[%s6505 + $0x132] sm:$0xff]
    %v7757 = vld [vmem:[%s6505 + $0x142] sm:$0xff]
    %v7758 = vld [vmem:[%s6505 + $0x152] sm:$0xff]
    %v7759 = vld [vmem:[%s6 + $0x17] sm:$0x1]
    %v7760 = vlaneseq
    %v7761 = vshrl.u32 %v7760, 7
    %v7762 = vsub.s32 0, %v7761
    %v7763 = vrot.slane %v7759, %v7762
    %v7764 = vmul.f32 %v7743, %v7763
    %v7765 = vmul.f32 %v7744, %v7763
    %v7766 = vmul.f32 %v7745, %v7763
    %v7767 = vmul.f32 %v7746, %v7763
    %v7768 = vmul.f32 %v7747, %v7763
    %v7769 = vmul.f32 %v7748, %v7763
    %v7770 = vmul.f32 %v7749, %v7763
    %v7771 = vmul.f32 %v7750, %v7763
    %v7772 = vmul.f32 %v7751, %v7763
    %v7773 = vmul.f32 %v7752, %v7763
    %v7774 = vmul.f32 %v7753, %v7763
    %v7775 = vmul.f32 %v7754, %v7763
    %v7776 = vmul.f32 %v7755, %v7763
    %v7777 = vmul.f32 %v7756, %v7763
    %v7778 = vmul.f32 %v7757, %v7763
    %v7779 = vmul.f32 %v7758, %v7763
    %v7780 = vadd.f32 %v7727, %v7764
    %v7781 = vadd.f32 %v7728, %v7765
    %v7782 = vadd.f32 %v7729, %v7766
    %v7783 = vadd.f32 %v7730, %v7767
    %v7784 = vadd.f32 %v7731, %v7768
    %v7785 = vadd.f32 %v7732, %v7769
    %v7786 = vadd.f32 %v7733, %v7770
    %v7787 = vadd.f32 %v7734, %v7771
    %v7788 = vadd.f32 %v7735, %v7772
    %v7789 = vadd.f32 %v7736, %v7773
    %v7790 = vadd.f32 %v7737, %v7774
    %v7791 = vadd.f32 %v7738, %v7775
    %v7792 = vadd.f32 %v7739, %v7776
    %v7793 = vadd.f32 %v7740, %v7777
    %v7794 = vadd.f32 %v7741, %v7778
    %v7795 = vadd.f32 %v7742, %v7779
    %v7796 = vld [vmem:[%s6505 + $0x3] sm:$0xff]
    %v7797 = vld [vmem:[%s6505 + $0x13] sm:$0xff]
    %v7798 = vld [vmem:[%s6505 + $0x23] sm:$0xff]
    %v7799 = vld [vmem:[%s6505 + $0x33] sm:$0xff]
    %v7800 = vld [vmem:[%s6505 + $0x43] sm:$0xff]
    %v7801 = vld [vmem:[%s6505 + $0x53] sm:$0xff]
    %v7802 = vld [vmem:[%s6505 + $0x63] sm:$0xff]
    %v7803 = vld [vmem:[%s6505 + $0x73] sm:$0xff]
    %v7804 = vld [vmem:[%s6505 + $0xe3] sm:$0xff]
    %v7805 = vld [vmem:[%s6505 + $0xf3] sm:$0xff]
    %v7806 = vld [vmem:[%s6505 + $0x103] sm:$0xff]
    %v7807 = vld [vmem:[%s6505 + $0x113] sm:$0xff]
    %v7808 = vld [vmem:[%s6505 + $0x123] sm:$0xff]
    %v7809 = vld [vmem:[%s6505 + $0x133] sm:$0xff]
    %v7810 = vld [vmem:[%s6505 + $0x143] sm:$0xff]
    %v7811 = vld [vmem:[%s6505 + $0x153] sm:$0xff]
    %v7812 = vld [vmem:[%s6 + $0x18] sm:$0x1]
    %v7813 = vlaneseq
    %v7814 = vshrl.u32 %v7813, 7
    %v7815 = vsub.s32 0, %v7814
    %v7816 = vrot.slane %v7812, %v7815
    %v7817 = vmul.f32 %v7796, %v7816
    %v7818 = vmul.f32 %v7797, %v7816
    %v7819 = vmul.f32 %v7798, %v7816
    %v7820 = vmul.f32 %v7799, %v7816
    %v7821 = vmul.f32 %v7800, %v7816
    %v7822 = vmul.f32 %v7801, %v7816
    %v7823 = vmul.f32 %v7802, %v7816
    %v7824 = vmul.f32 %v7803, %v7816
    %v7825 = vmul.f32 %v7804, %v7816
    %v7826 = vmul.f32 %v7805, %v7816
    %v7827 = vmul.f32 %v7806, %v7816
    %v7828 = vmul.f32 %v7807, %v7816
    %v7829 = vmul.f32 %v7808, %v7816
    %v7830 = vmul.f32 %v7809, %v7816
    %v7831 = vmul.f32 %v7810, %v7816
    %v7832 = vmul.f32 %v7811, %v7816
    %v7833 = vadd.f32 %v7780, %v7817
    %v7834 = vadd.f32 %v7781, %v7818
    %v7835 = vadd.f32 %v7782, %v7819
    %v7836 = vadd.f32 %v7783, %v7820
    %v7837 = vadd.f32 %v7784, %v7821
    %v7838 = vadd.f32 %v7785, %v7822
    %v7839 = vadd.f32 %v7786, %v7823
    %v7840 = vadd.f32 %v7787, %v7824
    %v7841 = vadd.f32 %v7788, %v7825
    %v7842 = vadd.f32 %v7789, %v7826
    %v7843 = vadd.f32 %v7790, %v7827
    %v7844 = vadd.f32 %v7791, %v7828
    %v7845 = vadd.f32 %v7792, %v7829
    %v7846 = vadd.f32 %v7793, %v7830
    %v7847 = vadd.f32 %v7794, %v7831
    %v7848 = vadd.f32 %v7795, %v7832
    %v7849 = vld [vmem:[%s6505 + $0x4] sm:$0xff]
    %v7850 = vld [vmem:[%s6505 + $0x14] sm:$0xff]
    %v7851 = vld [vmem:[%s6505 + $0x24] sm:$0xff]
    %v7852 = vld [vmem:[%s6505 + $0x34] sm:$0xff]
    %v7853 = vld [vmem:[%s6505 + $0x44] sm:$0xff]
    %v7854 = vld [vmem:[%s6505 + $0x54] sm:$0xff]
    %v7855 = vld [vmem:[%s6505 + $0x64] sm:$0xff]
    %v7856 = vld [vmem:[%s6505 + $0x74] sm:$0xff]
    %v7857 = vld [vmem:[%s6505 + $0xe4] sm:$0xff]
    %v7858 = vld [vmem:[%s6505 + $0xf4] sm:$0xff]
    %v7859 = vld [vmem:[%s6505 + $0x104] sm:$0xff]
    %v7860 = vld [vmem:[%s6505 + $0x114] sm:$0xff]
    %v7861 = vld [vmem:[%s6505 + $0x124] sm:$0xff]
    %v7862 = vld [vmem:[%s6505 + $0x134] sm:$0xff]
    %v7863 = vld [vmem:[%s6505 + $0x144] sm:$0xff]
    %v7864 = vld [vmem:[%s6505 + $0x154] sm:$0xff]
    %v7865 = vld [vmem:[%s6 + $0x19] sm:$0x1]
    %v7866 = vlaneseq
    %v7867 = vshrl.u32 %v7866, 7
    %v7868 = vsub.s32 0, %v7867
    %v7869 = vrot.slane %v7865, %v7868
    %v7870 = vmul.f32 %v7849, %v7869
    %v7871 = vmul.f32 %v7850, %v7869
    %v7872 = vmul.f32 %v7851, %v7869
    %v7873 = vmul.f32 %v7852, %v7869
    %v7874 = vmul.f32 %v7853, %v7869
    %v7875 = vmul.f32 %v7854, %v7869
    %v7876 = vmul.f32 %v7855, %v7869
    %v7877 = vmul.f32 %v7856, %v7869
    %v7878 = vmul.f32 %v7857, %v7869
    %v7879 = vmul.f32 %v7858, %v7869
    %v7880 = vmul.f32 %v7859, %v7869
    %v7881 = vmul.f32 %v7860, %v7869
    %v7882 = vmul.f32 %v7861, %v7869
    %v7883 = vmul.f32 %v7862, %v7869
    %v7884 = vmul.f32 %v7863, %v7869
    %v7885 = vmul.f32 %v7864, %v7869
    %v7886 = vadd.f32 %v7833, %v7870
    %v7887 = vadd.f32 %v7834, %v7871
    %v7888 = vadd.f32 %v7835, %v7872
    %v7889 = vadd.f32 %v7836, %v7873
    %v7890 = vadd.f32 %v7837, %v7874
    %v7891 = vadd.f32 %v7838, %v7875
    %v7892 = vadd.f32 %v7839, %v7876
    %v7893 = vadd.f32 %v7840, %v7877
    %v7894 = vadd.f32 %v7841, %v7878
    %v7895 = vadd.f32 %v7842, %v7879
    %v7896 = vadd.f32 %v7843, %v7880
    %v7897 = vadd.f32 %v7844, %v7881
    %v7898 = vadd.f32 %v7845, %v7882
    %v7899 = vadd.f32 %v7846, %v7883
    %v7900 = vadd.f32 %v7847, %v7884
    %v7901 = vadd.f32 %v7848, %v7885
    %v7902 = vld [vmem:[%s6505 + $0x5] sm:$0xff]
    %v7903 = vld [vmem:[%s6505 + $0x15] sm:$0xff]
    %v7904 = vld [vmem:[%s6505 + $0x25] sm:$0xff]
    %v7905 = vld [vmem:[%s6505 + $0x35] sm:$0xff]
    %v7906 = vld [vmem:[%s6505 + $0x45] sm:$0xff]
    %v7907 = vld [vmem:[%s6505 + $0x55] sm:$0xff]
    %v7908 = vld [vmem:[%s6505 + $0x65] sm:$0xff]
    %v7909 = vld [vmem:[%s6505 + $0x75] sm:$0xff]
    %v7910 = vld [vmem:[%s6505 + $0xe5] sm:$0xff]
    %v7911 = vld [vmem:[%s6505 + $0xf5] sm:$0xff]
    %v7912 = vld [vmem:[%s6505 + $0x105] sm:$0xff]
    %v7913 = vld [vmem:[%s6505 + $0x115] sm:$0xff]
    %v7914 = vld [vmem:[%s6505 + $0x125] sm:$0xff]
    %v7915 = vld [vmem:[%s6505 + $0x135] sm:$0xff]
    %v7916 = vld [vmem:[%s6505 + $0x145] sm:$0xff]
    %v7917 = vld [vmem:[%s6505 + $0x155] sm:$0xff]
    %v7918 = vld [vmem:[%s6 + $0x1a] sm:$0x1]
    %v7919 = vlaneseq
    %v7920 = vshrl.u32 %v7919, 7
    %v7921 = vsub.s32 0, %v7920
    %v7922 = vrot.slane %v7918, %v7921
    %v7923 = vmul.f32 %v7902, %v7922
    %v7924 = vmul.f32 %v7903, %v7922
    %v7925 = vmul.f32 %v7904, %v7922
    %v7926 = vmul.f32 %v7905, %v7922
    %v7927 = vmul.f32 %v7906, %v7922
    %v7928 = vmul.f32 %v7907, %v7922
    %v7929 = vmul.f32 %v7908, %v7922
    %v7930 = vmul.f32 %v7909, %v7922
    %v7931 = vmul.f32 %v7910, %v7922
    %v7932 = vmul.f32 %v7911, %v7922
    %v7933 = vmul.f32 %v7912, %v7922
    %v7934 = vmul.f32 %v7913, %v7922
    %v7935 = vmul.f32 %v7914, %v7922
    %v7936 = vmul.f32 %v7915, %v7922
    %v7937 = vmul.f32 %v7916, %v7922
    %v7938 = vmul.f32 %v7917, %v7922
    %v7939 = vadd.f32 %v7886, %v7923
    %v7940 = vadd.f32 %v7887, %v7924
    %v7941 = vadd.f32 %v7888, %v7925
    %v7942 = vadd.f32 %v7889, %v7926
    %v7943 = vadd.f32 %v7890, %v7927
    %v7944 = vadd.f32 %v7891, %v7928
    %v7945 = vadd.f32 %v7892, %v7929
    %v7946 = vadd.f32 %v7893, %v7930
    %v7947 = vadd.f32 %v7894, %v7931
    %v7948 = vadd.f32 %v7895, %v7932
    %v7949 = vadd.f32 %v7896, %v7933
    %v7950 = vadd.f32 %v7897, %v7934
    %v7951 = vadd.f32 %v7898, %v7935
    %v7952 = vadd.f32 %v7899, %v7936
    %v7953 = vadd.f32 %v7900, %v7937
    %v7954 = vadd.f32 %v7901, %v7938
    %v7955 = vld [vmem:[%s6505 + $0x6] sm:$0xff]
    %v7956 = vld [vmem:[%s6505 + $0x16] sm:$0xff]
    %v7957 = vld [vmem:[%s6505 + $0x26] sm:$0xff]
    %v7958 = vld [vmem:[%s6505 + $0x36] sm:$0xff]
    %v7959 = vld [vmem:[%s6505 + $0x46] sm:$0xff]
    %v7960 = vld [vmem:[%s6505 + $0x56] sm:$0xff]
    %v7961 = vld [vmem:[%s6505 + $0x66] sm:$0xff]
    %v7962 = vld [vmem:[%s6505 + $0x76] sm:$0xff]
    %v7963 = vld [vmem:[%s6505 + $0xe6] sm:$0xff]
    %v7964 = vld [vmem:[%s6505 + $0xf6] sm:$0xff]
    %v7965 = vld [vmem:[%s6505 + $0x106] sm:$0xff]
    %v7966 = vld [vmem:[%s6505 + $0x116] sm:$0xff]
    %v7967 = vld [vmem:[%s6505 + $0x126] sm:$0xff]
    %v7968 = vld [vmem:[%s6505 + $0x136] sm:$0xff]
    %v7969 = vld [vmem:[%s6505 + $0x146] sm:$0xff]
    %v7970 = vld [vmem:[%s6505 + $0x156] sm:$0xff]
    %v7971 = vld [vmem:[%s6 + $0x1b] sm:$0x1]
    %v7972 = vlaneseq
    %v7973 = vshrl.u32 %v7972, 7
    %v7974 = vsub.s32 0, %v7973
    %v7975 = vrot.slane %v7971, %v7974
    %v7976 = vmul.f32 %v7955, %v7975
    %v7977 = vmul.f32 %v7956, %v7975
    %v7978 = vmul.f32 %v7957, %v7975
    %v7979 = vmul.f32 %v7958, %v7975
    %v7980 = vmul.f32 %v7959, %v7975
    %v7981 = vmul.f32 %v7960, %v7975
    %v7982 = vmul.f32 %v7961, %v7975
    %v7983 = vmul.f32 %v7962, %v7975
    %v7984 = vmul.f32 %v7963, %v7975
    %v7985 = vmul.f32 %v7964, %v7975
    %v7986 = vmul.f32 %v7965, %v7975
    %v7987 = vmul.f32 %v7966, %v7975
    %v7988 = vmul.f32 %v7967, %v7975
    %v7989 = vmul.f32 %v7968, %v7975
    %v7990 = vmul.f32 %v7969, %v7975
    %v7991 = vmul.f32 %v7970, %v7975
    %v7992 = vadd.f32 %v7939, %v7976
    %v7993 = vadd.f32 %v7940, %v7977
    %v7994 = vadd.f32 %v7941, %v7978
    %v7995 = vadd.f32 %v7942, %v7979
    %v7996 = vadd.f32 %v7943, %v7980
    %v7997 = vadd.f32 %v7944, %v7981
    %v7998 = vadd.f32 %v7945, %v7982
    %v7999 = vadd.f32 %v7946, %v7983
    %v8000 = vadd.f32 %v7947, %v7984
    %v8001 = vadd.f32 %v7948, %v7985
    %v8002 = vadd.f32 %v7949, %v7986
    %v8003 = vadd.f32 %v7950, %v7987
    %v8004 = vadd.f32 %v7951, %v7988
    %v8005 = vadd.f32 %v7952, %v7989
    %v8006 = vadd.f32 %v7953, %v7990
    %v8007 = vadd.f32 %v7954, %v7991
    %s8008 = scalar_lea.vmem [#allocation4], 64
    %v8009 = vld [vmem:[%s8008] sm:$0xff]
    %v8010 = vld [vmem:[%s8008 + $0x10] sm:$0xff]
    %v8011 = vld [vmem:[%s8008 + $0x20] sm:$0xff]
    %v8012 = vld [vmem:[%s8008 + $0x30] sm:$0xff]
    %v8013 = vld [vmem:[%s8008 + $0x40] sm:$0xff]
    %v8014 = vld [vmem:[%s8008 + $0x50] sm:$0xff]
    %v8015 = vld [vmem:[%s8008 + $0x60] sm:$0xff]
    %v8016 = vld [vmem:[%s8008 + $0x70] sm:$0xff]
    %v8017 = vld [vmem:[%s8008 + $0xe0] sm:$0xff]
    %v8018 = vld [vmem:[%s8008 + $0xf0] sm:$0xff]
    %v8019 = vld [vmem:[%s8008 + $0x100] sm:$0xff]
    %v8020 = vld [vmem:[%s8008 + $0x110] sm:$0xff]
    %v8021 = vld [vmem:[%s8008 + $0x120] sm:$0xff]
    %v8022 = vld [vmem:[%s8008 + $0x130] sm:$0xff]
    %v8023 = vld [vmem:[%s8008 + $0x140] sm:$0xff]
    %v8024 = vld [vmem:[%s8008 + $0x150] sm:$0xff]
    %v8025 = vld [vmem:[%s6 + $0x1c] sm:$0x1]
    %v8026 = vlaneseq
    %v8027 = vshrl.u32 %v8026, 7
    %v8028 = vsub.s32 0, %v8027
    %v8029 = vrot.slane %v8025, %v8028
    %v8030 = vmul.f32 %v8009, %v8029
    %v8031 = vmul.f32 %v8010, %v8029
    %v8032 = vmul.f32 %v8011, %v8029
    %v8033 = vmul.f32 %v8012, %v8029
    %v8034 = vmul.f32 %v8013, %v8029
    %v8035 = vmul.f32 %v8014, %v8029
    %v8036 = vmul.f32 %v8015, %v8029
    %v8037 = vmul.f32 %v8016, %v8029
    %v8038 = vmul.f32 %v8017, %v8029
    %v8039 = vmul.f32 %v8018, %v8029
    %v8040 = vmul.f32 %v8019, %v8029
    %v8041 = vmul.f32 %v8020, %v8029
    %v8042 = vmul.f32 %v8021, %v8029
    %v8043 = vmul.f32 %v8022, %v8029
    %v8044 = vmul.f32 %v8023, %v8029
    %v8045 = vmul.f32 %v8024, %v8029
    %v8046 = vadd.f32 %v7992, %v8030
    %v8047 = vadd.f32 %v7993, %v8031
    %v8048 = vadd.f32 %v7994, %v8032
    %v8049 = vadd.f32 %v7995, %v8033
    %v8050 = vadd.f32 %v7996, %v8034
    %v8051 = vadd.f32 %v7997, %v8035
    %v8052 = vadd.f32 %v7998, %v8036
    %v8053 = vadd.f32 %v7999, %v8037
    %v8054 = vadd.f32 %v8000, %v8038
    %v8055 = vadd.f32 %v8001, %v8039
    %v8056 = vadd.f32 %v8002, %v8040
    %v8057 = vadd.f32 %v8003, %v8041
    %v8058 = vadd.f32 %v8004, %v8042
    %v8059 = vadd.f32 %v8005, %v8043
    %v8060 = vadd.f32 %v8006, %v8044
    %v8061 = vadd.f32 %v8007, %v8045
    %v8062 = vld [vmem:[%s8008 + $0x1] sm:$0xff]
    %v8063 = vld [vmem:[%s8008 + $0x11] sm:$0xff]
    %v8064 = vld [vmem:[%s8008 + $0x21] sm:$0xff]
    %v8065 = vld [vmem:[%s8008 + $0x31] sm:$0xff]
    %v8066 = vld [vmem:[%s8008 + $0x41] sm:$0xff]
    %v8067 = vld [vmem:[%s8008 + $0x51] sm:$0xff]
    %v8068 = vld [vmem:[%s8008 + $0x61] sm:$0xff]
    %v8069 = vld [vmem:[%s8008 + $0x71] sm:$0xff]
    %v8070 = vld [vmem:[%s8008 + $0xe1] sm:$0xff]
    %v8071 = vld [vmem:[%s8008 + $0xf1] sm:$0xff]
    %v8072 = vld [vmem:[%s8008 + $0x101] sm:$0xff]
    %v8073 = vld [vmem:[%s8008 + $0x111] sm:$0xff]
    %v8074 = vld [vmem:[%s8008 + $0x121] sm:$0xff]
    %v8075 = vld [vmem:[%s8008 + $0x131] sm:$0xff]
    %v8076 = vld [vmem:[%s8008 + $0x141] sm:$0xff]
    %v8077 = vld [vmem:[%s8008 + $0x151] sm:$0xff]
    %v8078 = vld [vmem:[%s6 + $0x1d] sm:$0x1]
    %v8079 = vlaneseq
    %v8080 = vshrl.u32 %v8079, 7
    %v8081 = vsub.s32 0, %v8080
    %v8082 = vrot.slane %v8078, %v8081
    %v8083 = vmul.f32 %v8062, %v8082
    %v8084 = vmul.f32 %v8063, %v8082
    %v8085 = vmul.f32 %v8064, %v8082
    %v8086 = vmul.f32 %v8065, %v8082
    %v8087 = vmul.f32 %v8066, %v8082
    %v8088 = vmul.f32 %v8067, %v8082
    %v8089 = vmul.f32 %v8068, %v8082
    %v8090 = vmul.f32 %v8069, %v8082
    %v8091 = vmul.f32 %v8070, %v8082
    %v8092 = vmul.f32 %v8071, %v8082
    %v8093 = vmul.f32 %v8072, %v8082
    %v8094 = vmul.f32 %v8073, %v8082
    %v8095 = vmul.f32 %v8074, %v8082
    %v8096 = vmul.f32 %v8075, %v8082
    %v8097 = vmul.f32 %v8076, %v8082
    %v8098 = vmul.f32 %v8077, %v8082
    %v8099 = vadd.f32 %v8046, %v8083
    %v8100 = vadd.f32 %v8047, %v8084
    %v8101 = vadd.f32 %v8048, %v8085
    %v8102 = vadd.f32 %v8049, %v8086
    %v8103 = vadd.f32 %v8050, %v8087
    %v8104 = vadd.f32 %v8051, %v8088
    %v8105 = vadd.f32 %v8052, %v8089
    %v8106 = vadd.f32 %v8053, %v8090
    %v8107 = vadd.f32 %v8054, %v8091
    %v8108 = vadd.f32 %v8055, %v8092
    %v8109 = vadd.f32 %v8056, %v8093
    %v8110 = vadd.f32 %v8057, %v8094
    %v8111 = vadd.f32 %v8058, %v8095
    %v8112 = vadd.f32 %v8059, %v8096
    %v8113 = vadd.f32 %v8060, %v8097
    %v8114 = vadd.f32 %v8061, %v8098
    %v8115 = vld [vmem:[%s8008 + $0x2] sm:$0xff]
    %v8116 = vld [vmem:[%s8008 + $0x12] sm:$0xff]
    %v8117 = vld [vmem:[%s8008 + $0x22] sm:$0xff]
    %v8118 = vld [vmem:[%s8008 + $0x32] sm:$0xff]
    %v8119 = vld [vmem:[%s8008 + $0x42] sm:$0xff]
    %v8120 = vld [vmem:[%s8008 + $0x52] sm:$0xff]
    %v8121 = vld [vmem:[%s8008 + $0x62] sm:$0xff]
    %v8122 = vld [vmem:[%s8008 + $0x72] sm:$0xff]
    %v8123 = vld [vmem:[%s8008 + $0xe2] sm:$0xff]
    %v8124 = vld [vmem:[%s8008 + $0xf2] sm:$0xff]
    %v8125 = vld [vmem:[%s8008 + $0x102] sm:$0xff]
    %v8126 = vld [vmem:[%s8008 + $0x112] sm:$0xff]
    %v8127 = vld [vmem:[%s8008 + $0x122] sm:$0xff]
    %v8128 = vld [vmem:[%s8008 + $0x132] sm:$0xff]
    %v8129 = vld [vmem:[%s8008 + $0x142] sm:$0xff]
    %v8130 = vld [vmem:[%s8008 + $0x152] sm:$0xff]
    %v8131 = vld [vmem:[%s6 + $0x1e] sm:$0x1]
    %v8132 = vlaneseq
    %v8133 = vshrl.u32 %v8132, 7
    %v8134 = vsub.s32 0, %v8133
    %v8135 = vrot.slane %v8131, %v8134
    %v8136 = vmul.f32 %v8115, %v8135
    %v8137 = vmul.f32 %v8116, %v8135
    %v8138 = vmul.f32 %v8117, %v8135
    %v8139 = vmul.f32 %v8118, %v8135
    %v8140 = vmul.f32 %v8119, %v8135
    %v8141 = vmul.f32 %v8120, %v8135
    %v8142 = vmul.f32 %v8121, %v8135
    %v8143 = vmul.f32 %v8122, %v8135
    %v8144 = vmul.f32 %v8123, %v8135
    %v8145 = vmul.f32 %v8124, %v8135
    %v8146 = vmul.f32 %v8125, %v8135
    %v8147 = vmul.f32 %v8126, %v8135
    %v8148 = vmul.f32 %v8127, %v8135
    %v8149 = vmul.f32 %v8128, %v8135
    %v8150 = vmul.f32 %v8129, %v8135
    %v8151 = vmul.f32 %v8130, %v8135
    %v8152 = vadd.f32 %v8099, %v8136
    %v8153 = vadd.f32 %v8100, %v8137
    %v8154 = vadd.f32 %v8101, %v8138
    %v8155 = vadd.f32 %v8102, %v8139
    %v8156 = vadd.f32 %v8103, %v8140
    %v8157 = vadd.f32 %v8104, %v8141
    %v8158 = vadd.f32 %v8105, %v8142
    %v8159 = vadd.f32 %v8106, %v8143
    %v8160 = vadd.f32 %v8107, %v8144
    %v8161 = vadd.f32 %v8108, %v8145
    %v8162 = vadd.f32 %v8109, %v8146
    %v8163 = vadd.f32 %v8110, %v8147
    %v8164 = vadd.f32 %v8111, %v8148
    %v8165 = vadd.f32 %v8112, %v8149
    %v8166 = vadd.f32 %v8113, %v8150
    %v8167 = vadd.f32 %v8114, %v8151
    %v8168 = vld [vmem:[%s8008 + $0x3] sm:$0xff]
    %v8169 = vld [vmem:[%s8008 + $0x13] sm:$0xff]
    %v8170 = vld [vmem:[%s8008 + $0x23] sm:$0xff]
    %v8171 = vld [vmem:[%s8008 + $0x33] sm:$0xff]
    %v8172 = vld [vmem:[%s8008 + $0x43] sm:$0xff]
    %v8173 = vld [vmem:[%s8008 + $0x53] sm:$0xff]
    %v8174 = vld [vmem:[%s8008 + $0x63] sm:$0xff]
    %v8175 = vld [vmem:[%s8008 + $0x73] sm:$0xff]
    %v8176 = vld [vmem:[%s8008 + $0xe3] sm:$0xff]
    %v8177 = vld [vmem:[%s8008 + $0xf3] sm:$0xff]
    %v8178 = vld [vmem:[%s8008 + $0x103] sm:$0xff]
    %v8179 = vld [vmem:[%s8008 + $0x113] sm:$0xff]
    %v8180 = vld [vmem:[%s8008 + $0x123] sm:$0xff]
    %v8181 = vld [vmem:[%s8008 + $0x133] sm:$0xff]
    %v8182 = vld [vmem:[%s8008 + $0x143] sm:$0xff]
    %v8183 = vld [vmem:[%s8008 + $0x153] sm:$0xff]
    %v8184 = vld [vmem:[%s6 + $0x1f] sm:$0x1]
    %v8185 = vlaneseq
    %v8186 = vshrl.u32 %v8185, 7
    %v8187 = vsub.s32 0, %v8186
    %v8188 = vrot.slane %v8184, %v8187
    %v8189 = vmul.f32 %v8168, %v8188
    %v8190 = vmul.f32 %v8169, %v8188
    %v8191 = vmul.f32 %v8170, %v8188
    %v8192 = vmul.f32 %v8171, %v8188
    %v8193 = vmul.f32 %v8172, %v8188
    %v8194 = vmul.f32 %v8173, %v8188
    %v8195 = vmul.f32 %v8174, %v8188
    %v8196 = vmul.f32 %v8175, %v8188
    %v8197 = vmul.f32 %v8176, %v8188
    %v8198 = vmul.f32 %v8177, %v8188
    %v8199 = vmul.f32 %v8178, %v8188
    %v8200 = vmul.f32 %v8179, %v8188
    %v8201 = vmul.f32 %v8180, %v8188
    %v8202 = vmul.f32 %v8181, %v8188
    %v8203 = vmul.f32 %v8182, %v8188
    %v8204 = vmul.f32 %v8183, %v8188
    %v8205 = vadd.f32 %v8152, %v8189
    %v8206 = vadd.f32 %v8153, %v8190
    %v8207 = vadd.f32 %v8154, %v8191
    %v8208 = vadd.f32 %v8155, %v8192
    %v8209 = vadd.f32 %v8156, %v8193
    %v8210 = vadd.f32 %v8157, %v8194
    %v8211 = vadd.f32 %v8158, %v8195
    %v8212 = vadd.f32 %v8159, %v8196
    %v8213 = vadd.f32 %v8160, %v8197
    %v8214 = vadd.f32 %v8161, %v8198
    %v8215 = vadd.f32 %v8162, %v8199
    %v8216 = vadd.f32 %v8163, %v8200
    %v8217 = vadd.f32 %v8164, %v8201
    %v8218 = vadd.f32 %v8165, %v8202
    %v8219 = vadd.f32 %v8166, %v8203
    %v8220 = vadd.f32 %v8167, %v8204
    %v8221 = vld [vmem:[%s8008 + $0x4] sm:$0xff]
    %v8222 = vld [vmem:[%s8008 + $0x14] sm:$0xff]
    %v8223 = vld [vmem:[%s8008 + $0x24] sm:$0xff]
    %v8224 = vld [vmem:[%s8008 + $0x34] sm:$0xff]
    %v8225 = vld [vmem:[%s8008 + $0x44] sm:$0xff]
    %v8226 = vld [vmem:[%s8008 + $0x54] sm:$0xff]
    %v8227 = vld [vmem:[%s8008 + $0x64] sm:$0xff]
    %v8228 = vld [vmem:[%s8008 + $0x74] sm:$0xff]
    %v8229 = vld [vmem:[%s8008 + $0xe4] sm:$0xff]
    %v8230 = vld [vmem:[%s8008 + $0xf4] sm:$0xff]
    %v8231 = vld [vmem:[%s8008 + $0x104] sm:$0xff]
    %v8232 = vld [vmem:[%s8008 + $0x114] sm:$0xff]
    %v8233 = vld [vmem:[%s8008 + $0x124] sm:$0xff]
    %v8234 = vld [vmem:[%s8008 + $0x134] sm:$0xff]
    %v8235 = vld [vmem:[%s8008 + $0x144] sm:$0xff]
    %v8236 = vld [vmem:[%s8008 + $0x154] sm:$0xff]
    %v8237 = vld [vmem:[%s6 + $0x20] sm:$0x1]
    %v8238 = vlaneseq
    %v8239 = vshrl.u32 %v8238, 7
    %v8240 = vsub.s32 0, %v8239
    %v8241 = vrot.slane %v8237, %v8240
    %v8242 = vmul.f32 %v8221, %v8241
    %v8243 = vmul.f32 %v8222, %v8241
    %v8244 = vmul.f32 %v8223, %v8241
    %v8245 = vmul.f32 %v8224, %v8241
    %v8246 = vmul.f32 %v8225, %v8241
    %v8247 = vmul.f32 %v8226, %v8241
    %v8248 = vmul.f32 %v8227, %v8241
    %v8249 = vmul.f32 %v8228, %v8241
    %v8250 = vmul.f32 %v8229, %v8241
    %v8251 = vmul.f32 %v8230, %v8241
    %v8252 = vmul.f32 %v8231, %v8241
    %v8253 = vmul.f32 %v8232, %v8241
    %v8254 = vmul.f32 %v8233, %v8241
    %v8255 = vmul.f32 %v8234, %v8241
    %v8256 = vmul.f32 %v8235, %v8241
    %v8257 = vmul.f32 %v8236, %v8241
    %v8258 = vadd.f32 %v8205, %v8242
    %v8259 = vadd.f32 %v8206, %v8243
    %v8260 = vadd.f32 %v8207, %v8244
    %v8261 = vadd.f32 %v8208, %v8245
    %v8262 = vadd.f32 %v8209, %v8246
    %v8263 = vadd.f32 %v8210, %v8247
    %v8264 = vadd.f32 %v8211, %v8248
    %v8265 = vadd.f32 %v8212, %v8249
    %v8266 = vadd.f32 %v8213, %v8250
    %v8267 = vadd.f32 %v8214, %v8251
    %v8268 = vadd.f32 %v8215, %v8252
    %v8269 = vadd.f32 %v8216, %v8253
    %v8270 = vadd.f32 %v8217, %v8254
    %v8271 = vadd.f32 %v8218, %v8255
    %v8272 = vadd.f32 %v8219, %v8256
    %v8273 = vadd.f32 %v8220, %v8257
    %v8274 = vld [vmem:[%s8008 + $0x5] sm:$0xff]
    %v8275 = vld [vmem:[%s8008 + $0x15] sm:$0xff]
    %v8276 = vld [vmem:[%s8008 + $0x25] sm:$0xff]
    %v8277 = vld [vmem:[%s8008 + $0x35] sm:$0xff]
    %v8278 = vld [vmem:[%s8008 + $0x45] sm:$0xff]
    %v8279 = vld [vmem:[%s8008 + $0x55] sm:$0xff]
    %v8280 = vld [vmem:[%s8008 + $0x65] sm:$0xff]
    %v8281 = vld [vmem:[%s8008 + $0x75] sm:$0xff]
    %v8282 = vld [vmem:[%s8008 + $0xe5] sm:$0xff]
    %v8283 = vld [vmem:[%s8008 + $0xf5] sm:$0xff]
    %v8284 = vld [vmem:[%s8008 + $0x105] sm:$0xff]
    %v8285 = vld [vmem:[%s8008 + $0x115] sm:$0xff]
    %v8286 = vld [vmem:[%s8008 + $0x125] sm:$0xff]
    %v8287 = vld [vmem:[%s8008 + $0x135] sm:$0xff]
    %v8288 = vld [vmem:[%s8008 + $0x145] sm:$0xff]
    %v8289 = vld [vmem:[%s8008 + $0x155] sm:$0xff]
    %v8290 = vld [vmem:[%s6 + $0x21] sm:$0x1]
    %v8291 = vlaneseq
    %v8292 = vshrl.u32 %v8291, 7
    %v8293 = vsub.s32 0, %v8292
    %v8294 = vrot.slane %v8290, %v8293
    %v8295 = vmul.f32 %v8274, %v8294
    %v8296 = vmul.f32 %v8275, %v8294
    %v8297 = vmul.f32 %v8276, %v8294
    %v8298 = vmul.f32 %v8277, %v8294
    %v8299 = vmul.f32 %v8278, %v8294
    %v8300 = vmul.f32 %v8279, %v8294
    %v8301 = vmul.f32 %v8280, %v8294
    %v8302 = vmul.f32 %v8281, %v8294
    %v8303 = vmul.f32 %v8282, %v8294
    %v8304 = vmul.f32 %v8283, %v8294
    %v8305 = vmul.f32 %v8284, %v8294
    %v8306 = vmul.f32 %v8285, %v8294
    %v8307 = vmul.f32 %v8286, %v8294
    %v8308 = vmul.f32 %v8287, %v8294
    %v8309 = vmul.f32 %v8288, %v8294
    %v8310 = vmul.f32 %v8289, %v8294
    %v8311 = vadd.f32 %v8258, %v8295
    %v8312 = vadd.f32 %v8259, %v8296
    %v8313 = vadd.f32 %v8260, %v8297
    %v8314 = vadd.f32 %v8261, %v8298
    %v8315 = vadd.f32 %v8262, %v8299
    %v8316 = vadd.f32 %v8263, %v8300
    %v8317 = vadd.f32 %v8264, %v8301
    %v8318 = vadd.f32 %v8265, %v8302
    %v8319 = vadd.f32 %v8266, %v8303
    %v8320 = vadd.f32 %v8267, %v8304
    %v8321 = vadd.f32 %v8268, %v8305
    %v8322 = vadd.f32 %v8269, %v8306
    %v8323 = vadd.f32 %v8270, %v8307
    %v8324 = vadd.f32 %v8271, %v8308
    %v8325 = vadd.f32 %v8272, %v8309
    %v8326 = vadd.f32 %v8273, %v8310
    %v8327 = vld [vmem:[%s8008 + $0x6] sm:$0xff]
    %v8328 = vld [vmem:[%s8008 + $0x16] sm:$0xff]
    %v8329 = vld [vmem:[%s8008 + $0x26] sm:$0xff]
    %v8330 = vld [vmem:[%s8008 + $0x36] sm:$0xff]
    %v8331 = vld [vmem:[%s8008 + $0x46] sm:$0xff]
    %v8332 = vld [vmem:[%s8008 + $0x56] sm:$0xff]
    %v8333 = vld [vmem:[%s8008 + $0x66] sm:$0xff]
    %v8334 = vld [vmem:[%s8008 + $0x76] sm:$0xff]
    %v8335 = vld [vmem:[%s8008 + $0xe6] sm:$0xff]
    %v8336 = vld [vmem:[%s8008 + $0xf6] sm:$0xff]
    %v8337 = vld [vmem:[%s8008 + $0x106] sm:$0xff]
    %v8338 = vld [vmem:[%s8008 + $0x116] sm:$0xff]
    %v8339 = vld [vmem:[%s8008 + $0x126] sm:$0xff]
    %v8340 = vld [vmem:[%s8008 + $0x136] sm:$0xff]
    %v8341 = vld [vmem:[%s8008 + $0x146] sm:$0xff]
    %v8342 = vld [vmem:[%s8008 + $0x156] sm:$0xff]
    %v8343 = vld [vmem:[%s6 + $0x22] sm:$0x1]
    %v8344 = vlaneseq
    %v8345 = vshrl.u32 %v8344, 7
    %v8346 = vsub.s32 0, %v8345
    %v8347 = vrot.slane %v8343, %v8346
    %v8348 = vmul.f32 %v8327, %v8347
    %v8349 = vmul.f32 %v8328, %v8347
    %v8350 = vmul.f32 %v8329, %v8347
    %v8351 = vmul.f32 %v8330, %v8347
    %v8352 = vmul.f32 %v8331, %v8347
    %v8353 = vmul.f32 %v8332, %v8347
    %v8354 = vmul.f32 %v8333, %v8347
    %v8355 = vmul.f32 %v8334, %v8347
    %v8356 = vmul.f32 %v8335, %v8347
    %v8357 = vmul.f32 %v8336, %v8347
    %v8358 = vmul.f32 %v8337, %v8347
    %v8359 = vmul.f32 %v8338, %v8347
    %v8360 = vmul.f32 %v8339, %v8347
    %v8361 = vmul.f32 %v8340, %v8347
    %v8362 = vmul.f32 %v8341, %v8347
    %v8363 = vmul.f32 %v8342, %v8347
    %v8364 = vadd.f32 %v8311, %v8348
    %v8365 = vadd.f32 %v8312, %v8349
    %v8366 = vadd.f32 %v8313, %v8350
    %v8367 = vadd.f32 %v8314, %v8351
    %v8368 = vadd.f32 %v8315, %v8352
    %v8369 = vadd.f32 %v8316, %v8353
    %v8370 = vadd.f32 %v8317, %v8354
    %v8371 = vadd.f32 %v8318, %v8355
    %v8372 = vadd.f32 %v8319, %v8356
    %v8373 = vadd.f32 %v8320, %v8357
    %v8374 = vadd.f32 %v8321, %v8358
    %v8375 = vadd.f32 %v8322, %v8359
    %v8376 = vadd.f32 %v8323, %v8360
    %v8377 = vadd.f32 %v8324, %v8361
    %v8378 = vadd.f32 %v8325, %v8362
    %v8379 = vadd.f32 %v8326, %v8363
    %s8380 = scalar_lea.vmem [#allocation4], 80
    %v8381 = vld [vmem:[%s8380] sm:$0xff]
    %v8382 = vld [vmem:[%s8380 + $0x10] sm:$0xff]
    %v8383 = vld [vmem:[%s8380 + $0x20] sm:$0xff]
    %v8384 = vld [vmem:[%s8380 + $0x30] sm:$0xff]
    %v8385 = vld [vmem:[%s8380 + $0x40] sm:$0xff]
    %v8386 = vld [vmem:[%s8380 + $0x50] sm:$0xff]
    %v8387 = vld [vmem:[%s8380 + $0x60] sm:$0xff]
    %v8388 = vld [vmem:[%s8380 + $0x70] sm:$0xff]
    %v8389 = vld [vmem:[%s8380 + $0xe0] sm:$0xff]
    %v8390 = vld [vmem:[%s8380 + $0xf0] sm:$0xff]
    %v8391 = vld [vmem:[%s8380 + $0x100] sm:$0xff]
    %v8392 = vld [vmem:[%s8380 + $0x110] sm:$0xff]
    %v8393 = vld [vmem:[%s8380 + $0x120] sm:$0xff]
    %v8394 = vld [vmem:[%s8380 + $0x130] sm:$0xff]
    %v8395 = vld [vmem:[%s8380 + $0x140] sm:$0xff]
    %v8396 = vld [vmem:[%s8380 + $0x150] sm:$0xff]
    %v8397 = vld [vmem:[%s6 + $0x23] sm:$0x1]
    %v8398 = vlaneseq
    %v8399 = vshrl.u32 %v8398, 7
    %v8400 = vsub.s32 0, %v8399
    %v8401 = vrot.slane %v8397, %v8400
    %v8402 = vmul.f32 %v8381, %v8401
    %v8403 = vmul.f32 %v8382, %v8401
    %v8404 = vmul.f32 %v8383, %v8401
    %v8405 = vmul.f32 %v8384, %v8401
    %v8406 = vmul.f32 %v8385, %v8401
    %v8407 = vmul.f32 %v8386, %v8401
    %v8408 = vmul.f32 %v8387, %v8401
    %v8409 = vmul.f32 %v8388, %v8401
    %v8410 = vmul.f32 %v8389, %v8401
    %v8411 = vmul.f32 %v8390, %v8401
    %v8412 = vmul.f32 %v8391, %v8401
    %v8413 = vmul.f32 %v8392, %v8401
    %v8414 = vmul.f32 %v8393, %v8401
    %v8415 = vmul.f32 %v8394, %v8401
    %v8416 = vmul.f32 %v8395, %v8401
    %v8417 = vmul.f32 %v8396, %v8401
    %v8418 = vadd.f32 %v8364, %v8402
    %v8419 = vadd.f32 %v8365, %v8403
    %v8420 = vadd.f32 %v8366, %v8404
    %v8421 = vadd.f32 %v8367, %v8405
    %v8422 = vadd.f32 %v8368, %v8406
    %v8423 = vadd.f32 %v8369, %v8407
    %v8424 = vadd.f32 %v8370, %v8408
    %v8425 = vadd.f32 %v8371, %v8409
    %v8426 = vadd.f32 %v8372, %v8410
    %v8427 = vadd.f32 %v8373, %v8411
    %v8428 = vadd.f32 %v8374, %v8412
    %v8429 = vadd.f32 %v8375, %v8413
    %v8430 = vadd.f32 %v8376, %v8414
    %v8431 = vadd.f32 %v8377, %v8415
    %v8432 = vadd.f32 %v8378, %v8416
    %v8433 = vadd.f32 %v8379, %v8417
    %v8434 = vld [vmem:[%s8380 + $0x1] sm:$0xff]
    %v8435 = vld [vmem:[%s8380 + $0x11] sm:$0xff]
    %v8436 = vld [vmem:[%s8380 + $0x21] sm:$0xff]
    %v8437 = vld [vmem:[%s8380 + $0x31] sm:$0xff]
    %v8438 = vld [vmem:[%s8380 + $0x41] sm:$0xff]
    %v8439 = vld [vmem:[%s8380 + $0x51] sm:$0xff]
    %v8440 = vld [vmem:[%s8380 + $0x61] sm:$0xff]
    %v8441 = vld [vmem:[%s8380 + $0x71] sm:$0xff]
    %v8442 = vld [vmem:[%s8380 + $0xe1] sm:$0xff]
    %v8443 = vld [vmem:[%s8380 + $0xf1] sm:$0xff]
    %v8444 = vld [vmem:[%s8380 + $0x101] sm:$0xff]
    %v8445 = vld [vmem:[%s8380 + $0x111] sm:$0xff]
    %v8446 = vld [vmem:[%s8380 + $0x121] sm:$0xff]
    %v8447 = vld [vmem:[%s8380 + $0x131] sm:$0xff]
    %v8448 = vld [vmem:[%s8380 + $0x141] sm:$0xff]
    %v8449 = vld [vmem:[%s8380 + $0x151] sm:$0xff]
    %v8450 = vld [vmem:[%s6 + $0x24] sm:$0x1]
    %v8451 = vlaneseq
    %v8452 = vshrl.u32 %v8451, 7
    %v8453 = vsub.s32 0, %v8452
    %v8454 = vrot.slane %v8450, %v8453
    %v8455 = vmul.f32 %v8434, %v8454
    %v8456 = vmul.f32 %v8435, %v8454
    %v8457 = vmul.f32 %v8436, %v8454
    %v8458 = vmul.f32 %v8437, %v8454
    %v8459 = vmul.f32 %v8438, %v8454
    %v8460 = vmul.f32 %v8439, %v8454
    %v8461 = vmul.f32 %v8440, %v8454
    %v8462 = vmul.f32 %v8441, %v8454
    %v8463 = vmul.f32 %v8442, %v8454
    %v8464 = vmul.f32 %v8443, %v8454
    %v8465 = vmul.f32 %v8444, %v8454
    %v8466 = vmul.f32 %v8445, %v8454
    %v8467 = vmul.f32 %v8446, %v8454
    %v8468 = vmul.f32 %v8447, %v8454
    %v8469 = vmul.f32 %v8448, %v8454
    %v8470 = vmul.f32 %v8449, %v8454
    %v8471 = vadd.f32 %v8418, %v8455
    %v8472 = vadd.f32 %v8419, %v8456
    %v8473 = vadd.f32 %v8420, %v8457
    %v8474 = vadd.f32 %v8421, %v8458
    %v8475 = vadd.f32 %v8422, %v8459
    %v8476 = vadd.f32 %v8423, %v8460
    %v8477 = vadd.f32 %v8424, %v8461
    %v8478 = vadd.f32 %v8425, %v8462
    %v8479 = vadd.f32 %v8426, %v8463
    %v8480 = vadd.f32 %v8427, %v8464
    %v8481 = vadd.f32 %v8428, %v8465
    %v8482 = vadd.f32 %v8429, %v8466
    %v8483 = vadd.f32 %v8430, %v8467
    %v8484 = vadd.f32 %v8431, %v8468
    %v8485 = vadd.f32 %v8432, %v8469
    %v8486 = vadd.f32 %v8433, %v8470
    %v8487 = vld [vmem:[%s8380 + $0x2] sm:$0xff]
    %v8488 = vld [vmem:[%s8380 + $0x12] sm:$0xff]
    %v8489 = vld [vmem:[%s8380 + $0x22] sm:$0xff]
    %v8490 = vld [vmem:[%s8380 + $0x32] sm:$0xff]
    %v8491 = vld [vmem:[%s8380 + $0x42] sm:$0xff]
    %v8492 = vld [vmem:[%s8380 + $0x52] sm:$0xff]
    %v8493 = vld [vmem:[%s8380 + $0x62] sm:$0xff]
    %v8494 = vld [vmem:[%s8380 + $0x72] sm:$0xff]
    %v8495 = vld [vmem:[%s8380 + $0xe2] sm:$0xff]
    %v8496 = vld [vmem:[%s8380 + $0xf2] sm:$0xff]
    %v8497 = vld [vmem:[%s8380 + $0x102] sm:$0xff]
    %v8498 = vld [vmem:[%s8380 + $0x112] sm:$0xff]
    %v8499 = vld [vmem:[%s8380 + $0x122] sm:$0xff]
    %v8500 = vld [vmem:[%s8380 + $0x132] sm:$0xff]
    %v8501 = vld [vmem:[%s8380 + $0x142] sm:$0xff]
    %v8502 = vld [vmem:[%s8380 + $0x152] sm:$0xff]
    %v8503 = vld [vmem:[%s6 + $0x25] sm:$0x1]
    %v8504 = vlaneseq
    %v8505 = vshrl.u32 %v8504, 7
    %v8506 = vsub.s32 0, %v8505
    %v8507 = vrot.slane %v8503, %v8506
    %v8508 = vmul.f32 %v8487, %v8507
    %v8509 = vmul.f32 %v8488, %v8507
    %v8510 = vmul.f32 %v8489, %v8507
    %v8511 = vmul.f32 %v8490, %v8507
    %v8512 = vmul.f32 %v8491, %v8507
    %v8513 = vmul.f32 %v8492, %v8507
    %v8514 = vmul.f32 %v8493, %v8507
    %v8515 = vmul.f32 %v8494, %v8507
    %v8516 = vmul.f32 %v8495, %v8507
    %v8517 = vmul.f32 %v8496, %v8507
    %v8518 = vmul.f32 %v8497, %v8507
    %v8519 = vmul.f32 %v8498, %v8507
    %v8520 = vmul.f32 %v8499, %v8507
    %v8521 = vmul.f32 %v8500, %v8507
    %v8522 = vmul.f32 %v8501, %v8507
    %v8523 = vmul.f32 %v8502, %v8507
    %v8524 = vadd.f32 %v8471, %v8508
    %v8525 = vadd.f32 %v8472, %v8509
    %v8526 = vadd.f32 %v8473, %v8510
    %v8527 = vadd.f32 %v8474, %v8511
    %v8528 = vadd.f32 %v8475, %v8512
    %v8529 = vadd.f32 %v8476, %v8513
    %v8530 = vadd.f32 %v8477, %v8514
    %v8531 = vadd.f32 %v8478, %v8515
    %v8532 = vadd.f32 %v8479, %v8516
    %v8533 = vadd.f32 %v8480, %v8517
    %v8534 = vadd.f32 %v8481, %v8518
    %v8535 = vadd.f32 %v8482, %v8519
    %v8536 = vadd.f32 %v8483, %v8520
    %v8537 = vadd.f32 %v8484, %v8521
    %v8538 = vadd.f32 %v8485, %v8522
    %v8539 = vadd.f32 %v8486, %v8523
    %v8540 = vld [vmem:[%s8380 + $0x3] sm:$0xff]
    %v8541 = vld [vmem:[%s8380 + $0x13] sm:$0xff]
    %v8542 = vld [vmem:[%s8380 + $0x23] sm:$0xff]
    %v8543 = vld [vmem:[%s8380 + $0x33] sm:$0xff]
    %v8544 = vld [vmem:[%s8380 + $0x43] sm:$0xff]
    %v8545 = vld [vmem:[%s8380 + $0x53] sm:$0xff]
    %v8546 = vld [vmem:[%s8380 + $0x63] sm:$0xff]
    %v8547 = vld [vmem:[%s8380 + $0x73] sm:$0xff]
    %v8548 = vld [vmem:[%s8380 + $0xe3] sm:$0xff]
    %v8549 = vld [vmem:[%s8380 + $0xf3] sm:$0xff]
    %v8550 = vld [vmem:[%s8380 + $0x103] sm:$0xff]
    %v8551 = vld [vmem:[%s8380 + $0x113] sm:$0xff]
    %v8552 = vld [vmem:[%s8380 + $0x123] sm:$0xff]
    %v8553 = vld [vmem:[%s8380 + $0x133] sm:$0xff]
    %v8554 = vld [vmem:[%s8380 + $0x143] sm:$0xff]
    %v8555 = vld [vmem:[%s8380 + $0x153] sm:$0xff]
    %v8556 = vld [vmem:[%s6 + $0x26] sm:$0x1]
    %v8557 = vlaneseq
    %v8558 = vshrl.u32 %v8557, 7
    %v8559 = vsub.s32 0, %v8558
    %v8560 = vrot.slane %v8556, %v8559
    %v8561 = vmul.f32 %v8540, %v8560
    %v8562 = vmul.f32 %v8541, %v8560
    %v8563 = vmul.f32 %v8542, %v8560
    %v8564 = vmul.f32 %v8543, %v8560
    %v8565 = vmul.f32 %v8544, %v8560
    %v8566 = vmul.f32 %v8545, %v8560
    %v8567 = vmul.f32 %v8546, %v8560
    %v8568 = vmul.f32 %v8547, %v8560
    %v8569 = vmul.f32 %v8548, %v8560
    %v8570 = vmul.f32 %v8549, %v8560
    %v8571 = vmul.f32 %v8550, %v8560
    %v8572 = vmul.f32 %v8551, %v8560
    %v8573 = vmul.f32 %v8552, %v8560
    %v8574 = vmul.f32 %v8553, %v8560
    %v8575 = vmul.f32 %v8554, %v8560
    %v8576 = vmul.f32 %v8555, %v8560
    %v8577 = vadd.f32 %v8524, %v8561
    %v8578 = vadd.f32 %v8525, %v8562
    %v8579 = vadd.f32 %v8526, %v8563
    %v8580 = vadd.f32 %v8527, %v8564
    %v8581 = vadd.f32 %v8528, %v8565
    %v8582 = vadd.f32 %v8529, %v8566
    %v8583 = vadd.f32 %v8530, %v8567
    %v8584 = vadd.f32 %v8531, %v8568
    %v8585 = vadd.f32 %v8532, %v8569
    %v8586 = vadd.f32 %v8533, %v8570
    %v8587 = vadd.f32 %v8534, %v8571
    %v8588 = vadd.f32 %v8535, %v8572
    %v8589 = vadd.f32 %v8536, %v8573
    %v8590 = vadd.f32 %v8537, %v8574
    %v8591 = vadd.f32 %v8538, %v8575
    %v8592 = vadd.f32 %v8539, %v8576
    %v8593 = vld [vmem:[%s8380 + $0x4] sm:$0xff]
    %v8594 = vld [vmem:[%s8380 + $0x14] sm:$0xff]
    %v8595 = vld [vmem:[%s8380 + $0x24] sm:$0xff]
    %v8596 = vld [vmem:[%s8380 + $0x34] sm:$0xff]
    %v8597 = vld [vmem:[%s8380 + $0x44] sm:$0xff]
    %v8598 = vld [vmem:[%s8380 + $0x54] sm:$0xff]
    %v8599 = vld [vmem:[%s8380 + $0x64] sm:$0xff]
    %v8600 = vld [vmem:[%s8380 + $0x74] sm:$0xff]
    %v8601 = vld [vmem:[%s8380 + $0xe4] sm:$0xff]
    %v8602 = vld [vmem:[%s8380 + $0xf4] sm:$0xff]
    %v8603 = vld [vmem:[%s8380 + $0x104] sm:$0xff]
    %v8604 = vld [vmem:[%s8380 + $0x114] sm:$0xff]
    %v8605 = vld [vmem:[%s8380 + $0x124] sm:$0xff]
    %v8606 = vld [vmem:[%s8380 + $0x134] sm:$0xff]
    %v8607 = vld [vmem:[%s8380 + $0x144] sm:$0xff]
    %v8608 = vld [vmem:[%s8380 + $0x154] sm:$0xff]
    %v8609 = vld [vmem:[%s6 + $0x27] sm:$0x1]
    %v8610 = vlaneseq
    %v8611 = vshrl.u32 %v8610, 7
    %v8612 = vsub.s32 0, %v8611
    %v8613 = vrot.slane %v8609, %v8612
    %v8614 = vmul.f32 %v8593, %v8613
    %v8615 = vmul.f32 %v8594, %v8613
    %v8616 = vmul.f32 %v8595, %v8613
    %v8617 = vmul.f32 %v8596, %v8613
    %v8618 = vmul.f32 %v8597, %v8613
    %v8619 = vmul.f32 %v8598, %v8613
    %v8620 = vmul.f32 %v8599, %v8613
    %v8621 = vmul.f32 %v8600, %v8613
    %v8622 = vmul.f32 %v8601, %v8613
    %v8623 = vmul.f32 %v8602, %v8613
    %v8624 = vmul.f32 %v8603, %v8613
    %v8625 = vmul.f32 %v8604, %v8613
    %v8626 = vmul.f32 %v8605, %v8613
    %v8627 = vmul.f32 %v8606, %v8613
    %v8628 = vmul.f32 %v8607, %v8613
    %v8629 = vmul.f32 %v8608, %v8613
    %v8630 = vadd.f32 %v8577, %v8614
    %v8631 = vadd.f32 %v8578, %v8615
    %v8632 = vadd.f32 %v8579, %v8616
    %v8633 = vadd.f32 %v8580, %v8617
    %v8634 = vadd.f32 %v8581, %v8618
    %v8635 = vadd.f32 %v8582, %v8619
    %v8636 = vadd.f32 %v8583, %v8620
    %v8637 = vadd.f32 %v8584, %v8621
    %v8638 = vadd.f32 %v8585, %v8622
    %v8639 = vadd.f32 %v8586, %v8623
    %v8640 = vadd.f32 %v8587, %v8624
    %v8641 = vadd.f32 %v8588, %v8625
    %v8642 = vadd.f32 %v8589, %v8626
    %v8643 = vadd.f32 %v8590, %v8627
    %v8644 = vadd.f32 %v8591, %v8628
    %v8645 = vadd.f32 %v8592, %v8629
    %v8646 = vld [vmem:[%s8380 + $0x5] sm:$0xff]
    %v8647 = vld [vmem:[%s8380 + $0x15] sm:$0xff]
    %v8648 = vld [vmem:[%s8380 + $0x25] sm:$0xff]
    %v8649 = vld [vmem:[%s8380 + $0x35] sm:$0xff]
    %v8650 = vld [vmem:[%s8380 + $0x45] sm:$0xff]
    %v8651 = vld [vmem:[%s8380 + $0x55] sm:$0xff]
    %v8652 = vld [vmem:[%s8380 + $0x65] sm:$0xff]
    %v8653 = vld [vmem:[%s8380 + $0x75] sm:$0xff]
    %v8654 = vld [vmem:[%s8380 + $0xe5] sm:$0xff]
    %v8655 = vld [vmem:[%s8380 + $0xf5] sm:$0xff]
    %v8656 = vld [vmem:[%s8380 + $0x105] sm:$0xff]
    %v8657 = vld [vmem:[%s8380 + $0x115] sm:$0xff]
    %v8658 = vld [vmem:[%s8380 + $0x125] sm:$0xff]
    %v8659 = vld [vmem:[%s8380 + $0x135] sm:$0xff]
    %v8660 = vld [vmem:[%s8380 + $0x145] sm:$0xff]
    %v8661 = vld [vmem:[%s8380 + $0x155] sm:$0xff]
    %v8662 = vld [vmem:[%s6 + $0x28] sm:$0x1]
    %v8663 = vlaneseq
    %v8664 = vshrl.u32 %v8663, 7
    %v8665 = vsub.s32 0, %v8664
    %v8666 = vrot.slane %v8662, %v8665
    %v8667 = vmul.f32 %v8646, %v8666
    %v8668 = vmul.f32 %v8647, %v8666
    %v8669 = vmul.f32 %v8648, %v8666
    %v8670 = vmul.f32 %v8649, %v8666
    %v8671 = vmul.f32 %v8650, %v8666
    %v8672 = vmul.f32 %v8651, %v8666
    %v8673 = vmul.f32 %v8652, %v8666
    %v8674 = vmul.f32 %v8653, %v8666
    %v8675 = vmul.f32 %v8654, %v8666
    %v8676 = vmul.f32 %v8655, %v8666
    %v8677 = vmul.f32 %v8656, %v8666
    %v8678 = vmul.f32 %v8657, %v8666
    %v8679 = vmul.f32 %v8658, %v8666
    %v8680 = vmul.f32 %v8659, %v8666
    %v8681 = vmul.f32 %v8660, %v8666
    %v8682 = vmul.f32 %v8661, %v8666
    %v8683 = vadd.f32 %v8630, %v8667
    %v8684 = vadd.f32 %v8631, %v8668
    %v8685 = vadd.f32 %v8632, %v8669
    %v8686 = vadd.f32 %v8633, %v8670
    %v8687 = vadd.f32 %v8634, %v8671
    %v8688 = vadd.f32 %v8635, %v8672
    %v8689 = vadd.f32 %v8636, %v8673
    %v8690 = vadd.f32 %v8637, %v8674
    %v8691 = vadd.f32 %v8638, %v8675
    %v8692 = vadd.f32 %v8639, %v8676
    %v8693 = vadd.f32 %v8640, %v8677
    %v8694 = vadd.f32 %v8641, %v8678
    %v8695 = vadd.f32 %v8642, %v8679
    %v8696 = vadd.f32 %v8643, %v8680
    %v8697 = vadd.f32 %v8644, %v8681
    %v8698 = vadd.f32 %v8645, %v8682
    %v8699 = vld [vmem:[%s8380 + $0x6] sm:$0xff]
    %v8700 = vld [vmem:[%s8380 + $0x16] sm:$0xff]
    %v8701 = vld [vmem:[%s8380 + $0x26] sm:$0xff]
    %v8702 = vld [vmem:[%s8380 + $0x36] sm:$0xff]
    %v8703 = vld [vmem:[%s8380 + $0x46] sm:$0xff]
    %v8704 = vld [vmem:[%s8380 + $0x56] sm:$0xff]
    %v8705 = vld [vmem:[%s8380 + $0x66] sm:$0xff]
    %v8706 = vld [vmem:[%s8380 + $0x76] sm:$0xff]
    %v8707 = vld [vmem:[%s8380 + $0xe6] sm:$0xff]
    %v8708 = vld [vmem:[%s8380 + $0xf6] sm:$0xff]
    %v8709 = vld [vmem:[%s8380 + $0x106] sm:$0xff]
    %v8710 = vld [vmem:[%s8380 + $0x116] sm:$0xff]
    %v8711 = vld [vmem:[%s8380 + $0x126] sm:$0xff]
    %v8712 = vld [vmem:[%s8380 + $0x136] sm:$0xff]
    %v8713 = vld [vmem:[%s8380 + $0x146] sm:$0xff]
    %v8714 = vld [vmem:[%s8380 + $0x156] sm:$0xff]
    %v8715 = vld [vmem:[%s6 + $0x29] sm:$0x1]
    %v8716 = vlaneseq
    %v8717 = vshrl.u32 %v8716, 7
    %v8718 = vsub.s32 0, %v8717
    %v8719 = vrot.slane %v8715, %v8718
    %v8720 = vmul.f32 %v8699, %v8719
    %v8721 = vmul.f32 %v8700, %v8719
    %v8722 = vmul.f32 %v8701, %v8719
    %v8723 = vmul.f32 %v8702, %v8719
    %v8724 = vmul.f32 %v8703, %v8719
    %v8725 = vmul.f32 %v8704, %v8719
    %v8726 = vmul.f32 %v8705, %v8719
    %v8727 = vmul.f32 %v8706, %v8719
    %v8728 = vmul.f32 %v8707, %v8719
    %v8729 = vmul.f32 %v8708, %v8719
    %v8730 = vmul.f32 %v8709, %v8719
    %v8731 = vmul.f32 %v8710, %v8719
    %v8732 = vmul.f32 %v8711, %v8719
    %v8733 = vmul.f32 %v8712, %v8719
    %v8734 = vmul.f32 %v8713, %v8719
    %v8735 = vmul.f32 %v8714, %v8719
    %v8736 = vadd.f32 %v8683, %v8720
    %v8737 = vadd.f32 %v8684, %v8721
    %v8738 = vadd.f32 %v8685, %v8722
    %v8739 = vadd.f32 %v8686, %v8723
    %v8740 = vadd.f32 %v8687, %v8724
    %v8741 = vadd.f32 %v8688, %v8725
    %v8742 = vadd.f32 %v8689, %v8726
    %v8743 = vadd.f32 %v8690, %v8727
    %v8744 = vadd.f32 %v8691, %v8728
    %v8745 = vadd.f32 %v8692, %v8729
    %v8746 = vadd.f32 %v8693, %v8730
    %v8747 = vadd.f32 %v8694, %v8731
    %v8748 = vadd.f32 %v8695, %v8732
    %v8749 = vadd.f32 %v8696, %v8733
    %v8750 = vadd.f32 %v8697, %v8734
    %v8751 = vadd.f32 %v8698, %v8735
    %s8752 = scalar_lea.vmem [#allocation4], 96
    %v8753 = vld [vmem:[%s8752] sm:$0xff]
    %v8754 = vld [vmem:[%s8752 + $0x10] sm:$0xff]
    %v8755 = vld [vmem:[%s8752 + $0x20] sm:$0xff]
    %v8756 = vld [vmem:[%s8752 + $0x30] sm:$0xff]
    %v8757 = vld [vmem:[%s8752 + $0x40] sm:$0xff]
    %v8758 = vld [vmem:[%s8752 + $0x50] sm:$0xff]
    %v8759 = vld [vmem:[%s8752 + $0x60] sm:$0xff]
    %v8760 = vld [vmem:[%s8752 + $0x70] sm:$0xff]
    %v8761 = vld [vmem:[%s8752 + $0xe0] sm:$0xff]
    %v8762 = vld [vmem:[%s8752 + $0xf0] sm:$0xff]
    %v8763 = vld [vmem:[%s8752 + $0x100] sm:$0xff]
    %v8764 = vld [vmem:[%s8752 + $0x110] sm:$0xff]
    %v8765 = vld [vmem:[%s8752 + $0x120] sm:$0xff]
    %v8766 = vld [vmem:[%s8752 + $0x130] sm:$0xff]
    %v8767 = vld [vmem:[%s8752 + $0x140] sm:$0xff]
    %v8768 = vld [vmem:[%s8752 + $0x150] sm:$0xff]
    %v8769 = vld [vmem:[%s6 + $0x2a] sm:$0x1]
    %v8770 = vlaneseq
    %v8771 = vshrl.u32 %v8770, 7
    %v8772 = vsub.s32 0, %v8771
    %v8773 = vrot.slane %v8769, %v8772
    %v8774 = vmul.f32 %v8753, %v8773
    %v8775 = vmul.f32 %v8754, %v8773
    %v8776 = vmul.f32 %v8755, %v8773
    %v8777 = vmul.f32 %v8756, %v8773
    %v8778 = vmul.f32 %v8757, %v8773
    %v8779 = vmul.f32 %v8758, %v8773
    %v8780 = vmul.f32 %v8759, %v8773
    %v8781 = vmul.f32 %v8760, %v8773
    %v8782 = vmul.f32 %v8761, %v8773
    %v8783 = vmul.f32 %v8762, %v8773
    %v8784 = vmul.f32 %v8763, %v8773
    %v8785 = vmul.f32 %v8764, %v8773
    %v8786 = vmul.f32 %v8765, %v8773
    %v8787 = vmul.f32 %v8766, %v8773
    %v8788 = vmul.f32 %v8767, %v8773
    %v8789 = vmul.f32 %v8768, %v8773
    %v8790 = vadd.f32 %v8736, %v8774
    %v8791 = vadd.f32 %v8737, %v8775
    %v8792 = vadd.f32 %v8738, %v8776
    %v8793 = vadd.f32 %v8739, %v8777
    %v8794 = vadd.f32 %v8740, %v8778
    %v8795 = vadd.f32 %v8741, %v8779
    %v8796 = vadd.f32 %v8742, %v8780
    %v8797 = vadd.f32 %v8743, %v8781
    %v8798 = vadd.f32 %v8744, %v8782
    %v8799 = vadd.f32 %v8745, %v8783
    %v8800 = vadd.f32 %v8746, %v8784
    %v8801 = vadd.f32 %v8747, %v8785
    %v8802 = vadd.f32 %v8748, %v8786
    %v8803 = vadd.f32 %v8749, %v8787
    %v8804 = vadd.f32 %v8750, %v8788
    %v8805 = vadd.f32 %v8751, %v8789
    %v8806 = vld [vmem:[%s8752 + $0x1] sm:$0xff]
    %v8807 = vld [vmem:[%s8752 + $0x11] sm:$0xff]
    %v8808 = vld [vmem:[%s8752 + $0x21] sm:$0xff]
    %v8809 = vld [vmem:[%s8752 + $0x31] sm:$0xff]
    %v8810 = vld [vmem:[%s8752 + $0x41] sm:$0xff]
    %v8811 = vld [vmem:[%s8752 + $0x51] sm:$0xff]
    %v8812 = vld [vmem:[%s8752 + $0x61] sm:$0xff]
    %v8813 = vld [vmem:[%s8752 + $0x71] sm:$0xff]
    %v8814 = vld [vmem:[%s8752 + $0xe1] sm:$0xff]
    %v8815 = vld [vmem:[%s8752 + $0xf1] sm:$0xff]
    %v8816 = vld [vmem:[%s8752 + $0x101] sm:$0xff]
    %v8817 = vld [vmem:[%s8752 + $0x111] sm:$0xff]
    %v8818 = vld [vmem:[%s8752 + $0x121] sm:$0xff]
    %v8819 = vld [vmem:[%s8752 + $0x131] sm:$0xff]
    %v8820 = vld [vmem:[%s8752 + $0x141] sm:$0xff]
    %v8821 = vld [vmem:[%s8752 + $0x151] sm:$0xff]
    %v8822 = vld [vmem:[%s6 + $0x2b] sm:$0x1]
    %v8823 = vlaneseq
    %v8824 = vshrl.u32 %v8823, 7
    %v8825 = vsub.s32 0, %v8824
    %v8826 = vrot.slane %v8822, %v8825
    %v8827 = vmul.f32 %v8806, %v8826
    %v8828 = vmul.f32 %v8807, %v8826
    %v8829 = vmul.f32 %v8808, %v8826
    %v8830 = vmul.f32 %v8809, %v8826
    %v8831 = vmul.f32 %v8810, %v8826
    %v8832 = vmul.f32 %v8811, %v8826
    %v8833 = vmul.f32 %v8812, %v8826
    %v8834 = vmul.f32 %v8813, %v8826
    %v8835 = vmul.f32 %v8814, %v8826
    %v8836 = vmul.f32 %v8815, %v8826
    %v8837 = vmul.f32 %v8816, %v8826
    %v8838 = vmul.f32 %v8817, %v8826
    %v8839 = vmul.f32 %v8818, %v8826
    %v8840 = vmul.f32 %v8819, %v8826
    %v8841 = vmul.f32 %v8820, %v8826
    %v8842 = vmul.f32 %v8821, %v8826
    %v8843 = vadd.f32 %v8790, %v8827
    %v8844 = vadd.f32 %v8791, %v8828
    %v8845 = vadd.f32 %v8792, %v8829
    %v8846 = vadd.f32 %v8793, %v8830
    %v8847 = vadd.f32 %v8794, %v8831
    %v8848 = vadd.f32 %v8795, %v8832
    %v8849 = vadd.f32 %v8796, %v8833
    %v8850 = vadd.f32 %v8797, %v8834
    %v8851 = vadd.f32 %v8798, %v8835
    %v8852 = vadd.f32 %v8799, %v8836
    %v8853 = vadd.f32 %v8800, %v8837
    %v8854 = vadd.f32 %v8801, %v8838
    %v8855 = vadd.f32 %v8802, %v8839
    %v8856 = vadd.f32 %v8803, %v8840
    %v8857 = vadd.f32 %v8804, %v8841
    %v8858 = vadd.f32 %v8805, %v8842
    %v8859 = vld [vmem:[%s8752 + $0x2] sm:$0xff]
    %v8860 = vld [vmem:[%s8752 + $0x12] sm:$0xff]
    %v8861 = vld [vmem:[%s8752 + $0x22] sm:$0xff]
    %v8862 = vld [vmem:[%s8752 + $0x32] sm:$0xff]
    %v8863 = vld [vmem:[%s8752 + $0x42] sm:$0xff]
    %v8864 = vld [vmem:[%s8752 + $0x52] sm:$0xff]
    %v8865 = vld [vmem:[%s8752 + $0x62] sm:$0xff]
    %v8866 = vld [vmem:[%s8752 + $0x72] sm:$0xff]
    %v8867 = vld [vmem:[%s8752 + $0xe2] sm:$0xff]
    %v8868 = vld [vmem:[%s8752 + $0xf2] sm:$0xff]
    %v8869 = vld [vmem:[%s8752 + $0x102] sm:$0xff]
    %v8870 = vld [vmem:[%s8752 + $0x112] sm:$0xff]
    %v8871 = vld [vmem:[%s8752 + $0x122] sm:$0xff]
    %v8872 = vld [vmem:[%s8752 + $0x132] sm:$0xff]
    %v8873 = vld [vmem:[%s8752 + $0x142] sm:$0xff]
    %v8874 = vld [vmem:[%s8752 + $0x152] sm:$0xff]
    %v8875 = vld [vmem:[%s6 + $0x2c] sm:$0x1]
    %v8876 = vlaneseq
    %v8877 = vshrl.u32 %v8876, 7
    %v8878 = vsub.s32 0, %v8877
    %v8879 = vrot.slane %v8875, %v8878
    %v8880 = vmul.f32 %v8859, %v8879
    %v8881 = vmul.f32 %v8860, %v8879
    %v8882 = vmul.f32 %v8861, %v8879
    %v8883 = vmul.f32 %v8862, %v8879
    %v8884 = vmul.f32 %v8863, %v8879
    %v8885 = vmul.f32 %v8864, %v8879
    %v8886 = vmul.f32 %v8865, %v8879
    %v8887 = vmul.f32 %v8866, %v8879
    %v8888 = vmul.f32 %v8867, %v8879
    %v8889 = vmul.f32 %v8868, %v8879
    %v8890 = vmul.f32 %v8869, %v8879
    %v8891 = vmul.f32 %v8870, %v8879
    %v8892 = vmul.f32 %v8871, %v8879
    %v8893 = vmul.f32 %v8872, %v8879
    %v8894 = vmul.f32 %v8873, %v8879
    %v8895 = vmul.f32 %v8874, %v8879
    %v8896 = vadd.f32 %v8843, %v8880
    %v8897 = vadd.f32 %v8844, %v8881
    %v8898 = vadd.f32 %v8845, %v8882
    %v8899 = vadd.f32 %v8846, %v8883
    %v8900 = vadd.f32 %v8847, %v8884
    %v8901 = vadd.f32 %v8848, %v8885
    %v8902 = vadd.f32 %v8849, %v8886
    %v8903 = vadd.f32 %v8850, %v8887
    %v8904 = vadd.f32 %v8851, %v8888
    %v8905 = vadd.f32 %v8852, %v8889
    %v8906 = vadd.f32 %v8853, %v8890
    %v8907 = vadd.f32 %v8854, %v8891
    %v8908 = vadd.f32 %v8855, %v8892
    %v8909 = vadd.f32 %v8856, %v8893
    %v8910 = vadd.f32 %v8857, %v8894
    %v8911 = vadd.f32 %v8858, %v8895
    %v8912 = vld [vmem:[%s8752 + $0x3] sm:$0xff]
    %v8913 = vld [vmem:[%s8752 + $0x13] sm:$0xff]
    %v8914 = vld [vmem:[%s8752 + $0x23] sm:$0xff]
    %v8915 = vld [vmem:[%s8752 + $0x33] sm:$0xff]
    %v8916 = vld [vmem:[%s8752 + $0x43] sm:$0xff]
    %v8917 = vld [vmem:[%s8752 + $0x53] sm:$0xff]
    %v8918 = vld [vmem:[%s8752 + $0x63] sm:$0xff]
    %v8919 = vld [vmem:[%s8752 + $0x73] sm:$0xff]
    %v8920 = vld [vmem:[%s8752 + $0xe3] sm:$0xff]
    %v8921 = vld [vmem:[%s8752 + $0xf3] sm:$0xff]
    %v8922 = vld [vmem:[%s8752 + $0x103] sm:$0xff]
    %v8923 = vld [vmem:[%s8752 + $0x113] sm:$0xff]
    %v8924 = vld [vmem:[%s8752 + $0x123] sm:$0xff]
    %v8925 = vld [vmem:[%s8752 + $0x133] sm:$0xff]
    %v8926 = vld [vmem:[%s8752 + $0x143] sm:$0xff]
    %v8927 = vld [vmem:[%s8752 + $0x153] sm:$0xff]
    %v8928 = vld [vmem:[%s6 + $0x2d] sm:$0x1]
    %v8929 = vlaneseq
    %v8930 = vshrl.u32 %v8929, 7
    %v8931 = vsub.s32 0, %v8930
    %v8932 = vrot.slane %v8928, %v8931
    %v8933 = vmul.f32 %v8912, %v8932
    %v8934 = vmul.f32 %v8913, %v8932
    %v8935 = vmul.f32 %v8914, %v8932
    %v8936 = vmul.f32 %v8915, %v8932
    %v8937 = vmul.f32 %v8916, %v8932
    %v8938 = vmul.f32 %v8917, %v8932
    %v8939 = vmul.f32 %v8918, %v8932
    %v8940 = vmul.f32 %v8919, %v8932
    %v8941 = vmul.f32 %v8920, %v8932
    %v8942 = vmul.f32 %v8921, %v8932
    %v8943 = vmul.f32 %v8922, %v8932
    %v8944 = vmul.f32 %v8923, %v8932
    %v8945 = vmul.f32 %v8924, %v8932
    %v8946 = vmul.f32 %v8925, %v8932
    %v8947 = vmul.f32 %v8926, %v8932
    %v8948 = vmul.f32 %v8927, %v8932
    %v8949 = vadd.f32 %v8896, %v8933
    %v8950 = vadd.f32 %v8897, %v8934
    %v8951 = vadd.f32 %v8898, %v8935
    %v8952 = vadd.f32 %v8899, %v8936
    %v8953 = vadd.f32 %v8900, %v8937
    %v8954 = vadd.f32 %v8901, %v8938
    %v8955 = vadd.f32 %v8902, %v8939
    %v8956 = vadd.f32 %v8903, %v8940
    %v8957 = vadd.f32 %v8904, %v8941
    %v8958 = vadd.f32 %v8905, %v8942
    %v8959 = vadd.f32 %v8906, %v8943
    %v8960 = vadd.f32 %v8907, %v8944
    %v8961 = vadd.f32 %v8908, %v8945
    %v8962 = vadd.f32 %v8909, %v8946
    %v8963 = vadd.f32 %v8910, %v8947
    %v8964 = vadd.f32 %v8911, %v8948
    %v8965 = vld [vmem:[%s8752 + $0x4] sm:$0xff]
    %v8966 = vld [vmem:[%s8752 + $0x14] sm:$0xff]
    %v8967 = vld [vmem:[%s8752 + $0x24] sm:$0xff]
    %v8968 = vld [vmem:[%s8752 + $0x34] sm:$0xff]
    %v8969 = vld [vmem:[%s8752 + $0x44] sm:$0xff]
    %v8970 = vld [vmem:[%s8752 + $0x54] sm:$0xff]
    %v8971 = vld [vmem:[%s8752 + $0x64] sm:$0xff]
    %v8972 = vld [vmem:[%s8752 + $0x74] sm:$0xff]
    %v8973 = vld [vmem:[%s8752 + $0xe4] sm:$0xff]
    %v8974 = vld [vmem:[%s8752 + $0xf4] sm:$0xff]
    %v8975 = vld [vmem:[%s8752 + $0x104] sm:$0xff]
    %v8976 = vld [vmem:[%s8752 + $0x114] sm:$0xff]
    %v8977 = vld [vmem:[%s8752 + $0x124] sm:$0xff]
    %v8978 = vld [vmem:[%s8752 + $0x134] sm:$0xff]
    %v8979 = vld [vmem:[%s8752 + $0x144] sm:$0xff]
    %v8980 = vld [vmem:[%s8752 + $0x154] sm:$0xff]
    %v8981 = vld [vmem:[%s6 + $0x2e] sm:$0x1]
    %v8982 = vlaneseq
    %v8983 = vshrl.u32 %v8982, 7
    %v8984 = vsub.s32 0, %v8983
    %v8985 = vrot.slane %v8981, %v8984
    %v8986 = vmul.f32 %v8965, %v8985
    %v8987 = vmul.f32 %v8966, %v8985
    %v8988 = vmul.f32 %v8967, %v8985
    %v8989 = vmul.f32 %v8968, %v8985
    %v8990 = vmul.f32 %v8969, %v8985
    %v8991 = vmul.f32 %v8970, %v8985
    %v8992 = vmul.f32 %v8971, %v8985
    %v8993 = vmul.f32 %v8972, %v8985
    %v8994 = vmul.f32 %v8973, %v8985
    %v8995 = vmul.f32 %v8974, %v8985
    %v8996 = vmul.f32 %v8975, %v8985
    %v8997 = vmul.f32 %v8976, %v8985
    %v8998 = vmul.f32 %v8977, %v8985
    %v8999 = vmul.f32 %v8978, %v8985
    %v9000 = vmul.f32 %v8979, %v8985
    %v9001 = vmul.f32 %v8980, %v8985
    %v9002 = vadd.f32 %v8949, %v8986
    %v9003 = vadd.f32 %v8950, %v8987
    %v9004 = vadd.f32 %v8951, %v8988
    %v9005 = vadd.f32 %v8952, %v8989
    %v9006 = vadd.f32 %v8953, %v8990
    %v9007 = vadd.f32 %v8954, %v8991
    %v9008 = vadd.f32 %v8955, %v8992
    %v9009 = vadd.f32 %v8956, %v8993
    %v9010 = vadd.f32 %v8957, %v8994
    %v9011 = vadd.f32 %v8958, %v8995
    %v9012 = vadd.f32 %v8959, %v8996
    %v9013 = vadd.f32 %v8960, %v8997
    %v9014 = vadd.f32 %v8961, %v8998
    %v9015 = vadd.f32 %v8962, %v8999
    %v9016 = vadd.f32 %v8963, %v9000
    %v9017 = vadd.f32 %v8964, %v9001
    %v9018 = vld [vmem:[%s8752 + $0x5] sm:$0xff]
    %v9019 = vld [vmem:[%s8752 + $0x15] sm:$0xff]
    %v9020 = vld [vmem:[%s8752 + $0x25] sm:$0xff]
    %v9021 = vld [vmem:[%s8752 + $0x35] sm:$0xff]
    %v9022 = vld [vmem:[%s8752 + $0x45] sm:$0xff]
    %v9023 = vld [vmem:[%s8752 + $0x55] sm:$0xff]
    %v9024 = vld [vmem:[%s8752 + $0x65] sm:$0xff]
    %v9025 = vld [vmem:[%s8752 + $0x75] sm:$0xff]
    %v9026 = vld [vmem:[%s8752 + $0xe5] sm:$0xff]
    %v9027 = vld [vmem:[%s8752 + $0xf5] sm:$0xff]
    %v9028 = vld [vmem:[%s8752 + $0x105] sm:$0xff]
    %v9029 = vld [vmem:[%s8752 + $0x115] sm:$0xff]
    %v9030 = vld [vmem:[%s8752 + $0x125] sm:$0xff]
    %v9031 = vld [vmem:[%s8752 + $0x135] sm:$0xff]
    %v9032 = vld [vmem:[%s8752 + $0x145] sm:$0xff]
    %v9033 = vld [vmem:[%s8752 + $0x155] sm:$0xff]
    %v9034 = vld [vmem:[%s6 + $0x2f] sm:$0x1]
    %v9035 = vlaneseq
    %v9036 = vshrl.u32 %v9035, 7
    %v9037 = vsub.s32 0, %v9036
    %v9038 = vrot.slane %v9034, %v9037
    %v9039 = vmul.f32 %v9018, %v9038
    %v9040 = vmul.f32 %v9019, %v9038
    %v9041 = vmul.f32 %v9020, %v9038
    %v9042 = vmul.f32 %v9021, %v9038
    %v9043 = vmul.f32 %v9022, %v9038
    %v9044 = vmul.f32 %v9023, %v9038
    %v9045 = vmul.f32 %v9024, %v9038
    %v9046 = vmul.f32 %v9025, %v9038
    %v9047 = vmul.f32 %v9026, %v9038
    %v9048 = vmul.f32 %v9027, %v9038
    %v9049 = vmul.f32 %v9028, %v9038
    %v9050 = vmul.f32 %v9029, %v9038
    %v9051 = vmul.f32 %v9030, %v9038
    %v9052 = vmul.f32 %v9031, %v9038
    %v9053 = vmul.f32 %v9032, %v9038
    %v9054 = vmul.f32 %v9033, %v9038
    %v9055 = vadd.f32 %v9002, %v9039
    %v9056 = vadd.f32 %v9003, %v9040
    %v9057 = vadd.f32 %v9004, %v9041
    %v9058 = vadd.f32 %v9005, %v9042
    %v9059 = vadd.f32 %v9006, %v9043
    %v9060 = vadd.f32 %v9007, %v9044
    %v9061 = vadd.f32 %v9008, %v9045
    %v9062 = vadd.f32 %v9009, %v9046
    %v9063 = vadd.f32 %v9010, %v9047
    %v9064 = vadd.f32 %v9011, %v9048
    %v9065 = vadd.f32 %v9012, %v9049
    %v9066 = vadd.f32 %v9013, %v9050
    %v9067 = vadd.f32 %v9014, %v9051
    %v9068 = vadd.f32 %v9015, %v9052
    %v9069 = vadd.f32 %v9016, %v9053
    %v9070 = vadd.f32 %v9017, %v9054
    %v9071 = vld [vmem:[%s8752 + $0x6] sm:$0xff]
    %v9072 = vld [vmem:[%s8752 + $0x16] sm:$0xff]
    %v9073 = vld [vmem:[%s8752 + $0x26] sm:$0xff]
    %v9074 = vld [vmem:[%s8752 + $0x36] sm:$0xff]
    %v9075 = vld [vmem:[%s8752 + $0x46] sm:$0xff]
    %v9076 = vld [vmem:[%s8752 + $0x56] sm:$0xff]
    %v9077 = vld [vmem:[%s8752 + $0x66] sm:$0xff]
    %v9078 = vld [vmem:[%s8752 + $0x76] sm:$0xff]
    %v9079 = vld [vmem:[%s8752 + $0xe6] sm:$0xff]
    %v9080 = vld [vmem:[%s8752 + $0xf6] sm:$0xff]
    %v9081 = vld [vmem:[%s8752 + $0x106] sm:$0xff]
    %v9082 = vld [vmem:[%s8752 + $0x116] sm:$0xff]
    %v9083 = vld [vmem:[%s8752 + $0x126] sm:$0xff]
    %v9084 = vld [vmem:[%s8752 + $0x136] sm:$0xff]
    %v9085 = vld [vmem:[%s8752 + $0x146] sm:$0xff]
    %v9086 = vld [vmem:[%s8752 + $0x156] sm:$0xff]
    %v9087 = vld [vmem:[%s6 + $0x30] sm:$0x1]
    %v9088 = vlaneseq
    %v9089 = vshrl.u32 %v9088, 7
    %v9090 = vsub.s32 0, %v9089
    %v9091 = vrot.slane %v9087, %v9090
    %v9092 = vmul.f32 %v9071, %v9091
    %v9093 = vmul.f32 %v9072, %v9091
    %v9094 = vmul.f32 %v9073, %v9091
    %v9095 = vmul.f32 %v9074, %v9091
    %v9096 = vmul.f32 %v9075, %v9091
    %v9097 = vmul.f32 %v9076, %v9091
    %v9098 = vmul.f32 %v9077, %v9091
    %v9099 = vmul.f32 %v9078, %v9091
    %v9100 = vmul.f32 %v9079, %v9091
    %v9101 = vmul.f32 %v9080, %v9091
    %v9102 = vmul.f32 %v9081, %v9091
    %v9103 = vmul.f32 %v9082, %v9091
    %v9104 = vmul.f32 %v9083, %v9091
    %v9105 = vmul.f32 %v9084, %v9091
    %v9106 = vmul.f32 %v9085, %v9091
    %v9107 = vmul.f32 %v9086, %v9091
    %v9108 = vadd.f32 %v9055, %v9092
    %v9109 = vadd.f32 %v9056, %v9093
    %v9110 = vadd.f32 %v9057, %v9094
    %v9111 = vadd.f32 %v9058, %v9095
    %v9112 = vadd.f32 %v9059, %v9096
    %v9113 = vadd.f32 %v9060, %v9097
    %v9114 = vadd.f32 %v9061, %v9098
    %v9115 = vadd.f32 %v9062, %v9099
    %v9116 = vadd.f32 %v9063, %v9100
    %v9117 = vadd.f32 %v9064, %v9101
    %v9118 = vadd.f32 %v9065, %v9102
    %v9119 = vadd.f32 %v9066, %v9103
    %v9120 = vadd.f32 %v9067, %v9104
    %v9121 = vadd.f32 %v9068, %v9105
    %v9122 = vadd.f32 %v9069, %v9106
    %v9123 = vadd.f32 %v9070, %v9107
    %v9124 = vsel %vm82, %v9108, 0.0
    %9125 = vadd.xlane.f32.xlu0 %v9124
    %v9126 = vpop.xlane.xlu0 %9125
    %v9127 = vsel %vm82, %v9109, 0.0
    %9128 = vadd.xlane.f32.xlu0 %v9127
    %v9129 = vpop.xlane.xlu0 %9128
    %v9130 = vsel %vm82, %v9110, 0.0
    %9131 = vadd.xlane.f32.xlu0 %v9130
    %v9132 = vpop.xlane.xlu0 %9131
    %v9133 = vsel %vm82, %v9111, 0.0
    %9134 = vadd.xlane.f32.xlu0 %v9133
    %v9135 = vpop.xlane.xlu0 %9134
    %v9136 = vsel %vm82, %v9112, 0.0
    %9137 = vadd.xlane.f32.xlu0 %v9136
    %v9138 = vpop.xlane.xlu0 %9137
    %v9139 = vsel %vm82, %v9113, 0.0
    %9140 = vadd.xlane.f32.xlu0 %v9139
    %v9141 = vpop.xlane.xlu0 %9140
    %v9142 = vsel %vm82, %v9114, 0.0
    %9143 = vadd.xlane.f32.xlu0 %v9142
    %v9144 = vpop.xlane.xlu0 %9143
    %v9145 = vsel %vm82, %v9115, 0.0
    %9146 = vadd.xlane.f32.xlu0 %v9145
    %v9147 = vpop.xlane.xlu0 %9146
    %v9148 = vsel %vm82, %v9116, 0.0
    %9149 = vadd.xlane.f32.xlu0 %v9148
    %v9150 = vpop.xlane.xlu0 %9149
    %v9151 = vsel %vm82, %v9117, 0.0
    %9152 = vadd.xlane.f32.xlu0 %v9151
    %v9153 = vpop.xlane.xlu0 %9152
    %v9154 = vsel %vm82, %v9118, 0.0
    %9155 = vadd.xlane.f32.xlu0 %v9154
    %v9156 = vpop.xlane.xlu0 %9155
    %v9157 = vsel %vm82, %v9119, 0.0
    %9158 = vadd.xlane.f32.xlu0 %v9157
    %v9159 = vpop.xlane.xlu0 %9158
    %v9160 = vsel %vm82, %v9120, 0.0
    %9161 = vadd.xlane.f32.xlu0 %v9160
    %v9162 = vpop.xlane.xlu0 %9161
    %v9163 = vsel %vm82, %v9121, 0.0
    %9164 = vadd.xlane.f32.xlu0 %v9163
    %v9165 = vpop.xlane.xlu0 %9164
    %v9166 = vsel %vm82, %v9122, 0.0
    %9167 = vadd.xlane.f32.xlu0 %v9166
    %v9168 = vpop.xlane.xlu0 %9167
    %v9169 = vsel %vm82, %v9123, 0.0
    %9170 = vadd.xlane.f32.xlu0 %v9169
    %v9171 = vpop.xlane.xlu0 %9170
    %v9172 = vtanh.pop %v9126
    %v9173 = vtanh.pop %v9129
    %v9174 = vtanh.pop %v9132
    %v9175 = vtanh.pop %v9135
    %v9176 = vtanh.pop %v9138
    %v9177 = vtanh.pop %v9141
    %v9178 = vtanh.pop %v9144
    %v9179 = vtanh.pop %v9147
    %v9180 = vtanh.pop %v9150
    %v9181 = vtanh.pop %v9153
    %v9182 = vtanh.pop %v9156
    %v9183 = vtanh.pop %v9159
    %v9184 = vtanh.pop %v9162
    %v9185 = vtanh.pop %v9165
    %v9186 = vtanh.pop %v9168
    %v9187 = vtanh.pop %v9171
    %v9188 = vadd.f32 %v9172, 1.0
    %v9189 = vadd.f32 %v9173, 1.0
    %v9190 = vadd.f32 %v9174, 1.0
    %v9191 = vadd.f32 %v9175, 1.0
    %v9192 = vadd.f32 %v9176, 1.0
    %v9193 = vadd.f32 %v9177, 1.0
    %v9194 = vadd.f32 %v9178, 1.0
    %v9195 = vadd.f32 %v9179, 1.0
    %v9196 = vadd.f32 %v9180, 1.0
    %v9197 = vadd.f32 %v9181, 1.0
    %v9198 = vadd.f32 %v9182, 1.0
    %v9199 = vadd.f32 %v9183, 1.0
    %v9200 = vadd.f32 %v9184, 1.0
    %v9201 = vadd.f32 %v9185, 1.0
    %v9202 = vadd.f32 %v9186, 1.0
    %v9203 = vadd.f32 %v9187, 1.0
    %v9204 = vmul.f32 %v9188, 0.5
    %v9205 = vmul.f32 %v9189, 0.5
    %v9206 = vmul.f32 %v9190, 0.5
    %v9207 = vmul.f32 %v9191, 0.5
    %v9208 = vmul.f32 %v9192, 0.5
    %v9209 = vmul.f32 %v9193, 0.5
    %v9210 = vmul.f32 %v9194, 0.5
    %v9211 = vmul.f32 %v9195, 0.5
    %v9212 = vmul.f32 %v9196, 0.5
    %v9213 = vmul.f32 %v9197, 0.5
    %v9214 = vmul.f32 %v9198, 0.5
    %v9215 = vmul.f32 %v9199, 0.5
    %v9216 = vmul.f32 %v9200, 0.5
    %v9217 = vmul.f32 %v9201, 0.5
    %v9218 = vmul.f32 %v9202, 0.5
    %v9219 = vmul.f32 %v9203, 0.5
    %v9220 = vsub.f32 %v6432, %v28
    %v9221 = vsub.f32 %v6433, %v29
    %v9222 = vsub.f32 %v6434, %v30
    %v9223 = vsub.f32 %v6435, %v31
    %v9224 = vsub.f32 %v6436, %v32
    %v9225 = vsub.f32 %v6437, %v33
    %v9226 = vsub.f32 %v6438, %v34
    %v9227 = vsub.f32 %v6439, %v35
    %v9228 = vsub.f32 %v6440, %v36
    %v9229 = vsub.f32 %v6441, %v37
    %v9230 = vsub.f32 %v6442, %v38
    %v9231 = vsub.f32 %v6443, %v39
    %v9232 = vsub.f32 %v6444, %v40
    %v9233 = vsub.f32 %v6445, %v41
    %v9234 = vsub.f32 %v6446, %v42
    %v9235 = vsub.f32 %v6447, %v43
    %v9236 = vmul.f32 %v9204, %v9220
    %v9237 = vmul.f32 %v9205, %v9221
    %v9238 = vmul.f32 %v9206, %v9222
    %v9239 = vmul.f32 %v9207, %v9223
    %v9240 = vmul.f32 %v9208, %v9224
    %v9241 = vmul.f32 %v9209, %v9225
    %v9242 = vmul.f32 %v9210, %v9226
    %v9243 = vmul.f32 %v9211, %v9227
    %v9244 = vmul.f32 %v9212, %v9228
    %v9245 = vmul.f32 %v9213, %v9229
    %v9246 = vmul.f32 %v9214, %v9230
    %v9247 = vmul.f32 %v9215, %v9231
    %v9248 = vmul.f32 %v9216, %v9232
    %v9249 = vmul.f32 %v9217, %v9233
    %v9250 = vmul.f32 %v9218, %v9234
    %v9251 = vmul.f32 %v9219, %v9235
    %v9252 = vadd.f32 %v28, %v9236
    %v9253 = vadd.f32 %v29, %v9237
    %v9254 = vadd.f32 %v30, %v9238
    %v9255 = vadd.f32 %v31, %v9239
    %v9256 = vadd.f32 %v32, %v9240
    %v9257 = vadd.f32 %v33, %v9241
    %v9258 = vadd.f32 %v34, %v9242
    %v9259 = vadd.f32 %v35, %v9243
    %v9260 = vadd.f32 %v36, %v9244
    %v9261 = vadd.f32 %v37, %v9245
    %v9262 = vadd.f32 %v38, %v9246
    %v9263 = vadd.f32 %v39, %v9247
    %v9264 = vadd.f32 %v40, %v9248
    %v9265 = vadd.f32 %v41, %v9249
    %v9266 = vadd.f32 %v42, %v9250
    %v9267 = vadd.f32 %v43, %v9251
    %9268 = vst.msk [vmem:[#allocation5] sm:$0xff] %vm82, %v9252
    %9269 = vst.msk [vmem:[#allocation5 + $0x8] sm:$0xff] %vm82, %v9253
    %9270 = vst.msk [vmem:[#allocation5 + $0x10] sm:$0xff] %vm82, %v9254
    %9271 = vst.msk [vmem:[#allocation5 + $0x18] sm:$0xff] %vm82, %v9255
    %9272 = vst.msk [vmem:[#allocation5 + $0x20] sm:$0xff] %vm82, %v9256
    %9273 = vst.msk [vmem:[#allocation5 + $0x28] sm:$0xff] %vm82, %v9257
    %9274 = vst.msk [vmem:[#allocation5 + $0x30] sm:$0xff] %vm82, %v9258
    %9275 = vst.msk [vmem:[#allocation5 + $0x38] sm:$0xff] %vm82, %v9259
    %9276 = vst.msk [vmem:[#allocation5 + $0x40] sm:$0xff] %vm82, %v9260
    %9277 = vst.msk [vmem:[#allocation5 + $0x48] sm:$0xff] %vm82, %v9261
    %9278 = vst.msk [vmem:[#allocation5 + $0x50] sm:$0xff] %vm82, %v9262
    %9279 = vst.msk [vmem:[#allocation5 + $0x58] sm:$0xff] %vm82, %v9263
    %9280 = vst.msk [vmem:[#allocation5 + $0x60] sm:$0xff] %vm82, %v9264
    %9281 = vst.msk [vmem:[#allocation5 + $0x68] sm:$0xff] %vm82, %v9265
    %9282 = vst.msk [vmem:[#allocation5 + $0x70] sm:$0xff] %vm82, %v9266
    %9283 = vst.msk [vmem:[#allocation5 + $0x78] sm:$0xff] %vm82, %v9267
    // Predicated region
    $region30: #{transformer_forward.1} parent=1 // pred_check
      _
    $region31: #{transformer_forward.1} parent=1 // pred_check_branch
      %9285 = sbr.rel (0) target = $region33
    $region32: #{transformer_forward.1} parent=1 // pred_region
      %s9287 = ssub.s32 2048, 2048
      %9288 = vsyncadd [#allocation6], %s9287
      %s9289 = sshll.u32 [#allocation5], 4
      %s9290 = int_to_ptr.vmem [resolvable:$true] %s9289
      %9295 = dma.vmem_to_hbm [thread:$0]  %s9290, 2048, %s7, [#allocation6], 128, 128, 8
    $region33: #{transformer_forward.1} parent=1 // pred_fallthru
      _
    // Predicated region
    $region34: #{transformer_forward.1} parent=1 // pred_check
      _
    $region35: #{transformer_forward.1} parent=1 // pred_check_branch
      %9297 = sbr.rel (0) target = $region37
    $region36: #{transformer_forward.1} parent=1 // pred_region
      %9298 = dma.done [#allocation6], 2048
    $region37: #{transformer_forward.1} parent=1 // pred_fallthru
      _
    %9299 = vsyncpa [#allocation6], 1

</llo_original>
